<compile_context>
chip_gen: v7x
topology: tpu7x:2x2x1
jax: 0.10.0
libtpu: 0.0.40
codegen_flags: <defaults>
</compile_context>

<pallas_src>
import jax
import jax.numpy as jnp
from jax.experimental import pallas as pl
from jax.experimental.pallas import tpu as pltpu


# --------------------------------------------------------------------------
# helpers
# --------------------------------------------------------------------------
def _round_up(n, m):
    return ((n + m - 1) // m) * m


def _pad_gate_cols(w, H, Hp):
    """w: (rows, 4H) gate order [i,f,g,o] -> (rows, 4*Hp), zero-pad each gate."""
    rows = w.shape[0]
    w4 = jnp.pad(w.reshape(rows, 4, H), ((0, 0), (0, 0), (0, Hp - H)))
    return w4.reshape(rows, 4 * Hp)


def _vmem_phys_bytes():
    try:
        return int(pltpu.get_tpu_info().vmem_capacity_bytes)
    except Exception:
        return 64 * 1024 * 1024        # conservative (v7x per-core VMEM)


def _choose_tb(T, Bp, Ip, Hp, Op, num_layers, budget_bytes, max_tb=64):
    """Largest chunk length whose VMEM footprint fits the budget; prefer Tb | T."""
    def usage(tb):
        rows = tb * Bp
        x_chunk = rows * Ip * 2 * 2                       # bf16 chunk, 2 buffers
        gx = rows * 4 * Hp * 4                            # f32 transient
        seq = rows * Hp * 2 if num_layers > 1 else 0      # bf16 inter-layer buf
        w = 2 * (Ip * 4 * Hp + (num_layers - 1) * Hp * 4 * Hp   # wih
                 + num_layers * Hp * 4 * Hp                     # whh
                 + Hp * Op)                                      # fc
        b = num_layers * 4 * Hp * 4 + Op * 4
        carry = num_layers * Bp * Hp * (2 + 4)            # h bf16 + c f32
        out = Bp * Op * 4
        return x_chunk + gx + seq + w + b + carry + out

    hi = max(1, min(T, max_tb))
    fit = [t for t in range(1, hi + 1) if usage(t) <= budget_bytes]
    best = fit[-1] if fit else 1
    for t in range(best, 0, -1):       # prefer a divisor of T (no ragged tail)
        if T % t == 0:
            if 2 * t >= best:
                return t
            break
    return best


# --------------------------------------------------------------------------
# fused multi-layer LSTM + FC kernel
# --------------------------------------------------------------------------
def make_fused_kernel(num_layers, Tb, Bp, Hp, seq_len):
    rem = seq_len % Tb                 # valid steps in the last chunk (0 == full)
    mask_tail = rem != 0

    def kernel(*refs):
        n_in = 1 + 3 * num_layers + 2
        x_ref = refs[0]
        layer_w = [(refs[1 + 3 * l], refs[2 + 3 * l], refs[3 + 3 * l])
                   for l in range(num_layers)]
        wfc_ref = refs[n_in - 2]
        bfc_ref = refs[n_in - 1]
        out_ref = refs[n_in]
        scratch = refs[n_in + 1:]
        h_refs = scratch[0:num_layers]                       # (Bp, Hp) bf16
        c_refs = scratch[num_layers:2 * num_layers]          # (Bp, Hp) f32
        seq_ref = scratch[2 * num_layers] if num_layers > 1 else None

        chunk = pl.program_id(0)
        last = pl.num_programs(0) - 1

        @pl.when(chunk == 0)
        def _():
            for l in range(num_layers):
                h_refs[l][...] = jnp.zeros_like(h_refs[l])
                c_refs[l][...] = jnp.zeros_like(c_refs[l])
            out_ref[...] = jnp.zeros_like(out_ref)

        def run_layer(l, gx, whh, nsteps, store_seq):
            h = h_refs[l][...]                               # bf16
            c = c_refs[l][...]                               # f32
            for t in range(nsteps):                          # unrolled recurrence
                g = gx[t * Bp:(t + 1) * Bp, :] + jnp.dot(
                    h, whh, preferred_element_type=jnp.float32)   # (Bp, 4Hp) f32
                i_g = jax.nn.sigmoid(g[:, 0 * Hp:1 * Hp])
                f_g = jax.nn.sigmoid(g[:, 1 * Hp:2 * Hp])
                g_g = jnp.tanh(g[:, 2 * Hp:3 * Hp])
                o_g = jax.nn.sigmoid(g[:, 3 * Hp:4 * Hp])
                c = f_g * c + i_g * g_g                      # f32 elementwise
                h = (o_g * jnp.tanh(c)).astype(jnp.bfloat16)
                if store_seq:
                    seq_ref[t * Bp:(t + 1) * Bp, :] = h
            h_refs[l][...] = h
            c_refs[l][...] = c

        def run_chunk(nsteps):
            for l in range(num_layers):
                wih_ref, whh_ref, b_ref = layer_w[l]
                src = x_ref[...] if l == 0 else seq_ref[...]
                # hoisted chunk-level input projection: one big GEMM per layer
                gx = jnp.dot(src, wih_ref[...],
                             preferred_element_type=jnp.float32) + b_ref[...]
                run_layer(l, gx, whh_ref[...], nsteps,
                          store_seq=(l < num_layers - 1))

        if mask_tail:
            @pl.when(chunk != last)
            def _():
                run_chunk(Tb)

            @pl.when(chunk == last)
            def _():
                run_chunk(rem)        # only valid steps; no per-step select masks
        else:
            run_chunk(Tb)

        @pl.when(chunk == last)
        def _():
            # Dropout(0.2) is identity at inference; fuse the Linear head here.
            # TODO(synk): training-mode dropout (Bernoulli mask via pltpu.prng_*).
            out_ref[...] = (jnp.dot(h_refs[num_layers - 1][...], wfc_ref[...],
                                    preferred_element_type=jnp.float32)
                            + bfc_ref[...])

    return kernel


# --------------------------------------------------------------------------
# pallas_call wrapper
# --------------------------------------------------------------------------
def lstm_regressor_forward(x_bti, params, *, single_buffer_weights=True):
    """x_bti: (B, T, input_size) f32 -> (B, output_size) f32."""
    B, T, I = x_bti.shape
    layers = params["lstm"]
    num_layers = len(layers)
    Ip = layers[0]["wih_t"].shape[0]
    Hp = layers[0]["whh_t"].shape[0]
    Op = params["fc_w_t"].shape[1]

    Bp = _round_up(B, 16)                       # full bf16 (16,128) tiles
    phys = _vmem_phys_bytes()
    Tb = _choose_tb(T, Bp, Ip, Hp, Op, num_layers, budget_bytes=phys // 2)
    Tp = _round_up(T, Tb)

    # time-major, pad time/batch/features, flatten to (Tp*Bp, Ip), cast bf16
    x = jnp.transpose(x_bti, (1, 0, 2))                       # (T, B, I)
    x = jnp.pad(x, ((0, Tp - T), (0, Bp - B), (0, Ip - I)))
    x = x.reshape(Tp * Bp, Ip).astype(jnp.bfloat16)

    def w_spec(shape):
        kw = {}
        if single_buffer_weights:
            kw["pipeline_mode"] = pl.Buffered(1)   # grid-invariant: 1 buffer
        return pl.BlockSpec(shape, lambda c: (0,) * len(shape), **kw)

    in_specs = [pl.BlockSpec((Tb * Bp, Ip), lambda c: (c, 0))]
    args = [x]
    for l, layer in enumerate(layers):
        in_dim = Ip if l == 0 else Hp
        in_specs += [w_spec((in_dim, 4 * Hp)),
                     w_spec((Hp, 4 * Hp)),
                     w_spec((1, 4 * Hp))]
        args += [layer["wih_t"], layer["whh_t"], layer["b"]]
    in_specs += [w_spec((Hp, Op)), w_spec((1, Op))]
    args += [params["fc_w_t"], params["fc_b"]]

    scratch = ([pltpu.VMEM((Bp, Hp), jnp.bfloat16) for _ in range(num_layers)]
               + [pltpu.VMEM((Bp, Hp), jnp.float32) for _ in range(num_layers)])
    if num_layers > 1:
        scratch.append(pltpu.VMEM((Tb * Bp, Hp), jnp.bfloat16))

    out_pad = pl.pallas_call(
        make_fused_kernel(num_layers, Tb, Bp, Hp, T),
        out_shape=jax.ShapeDtypeStruct((Bp, Op), jnp.float32),
        grid_spec=pltpu.PrefetchScalarGridSpec(
            num_scalar_prefetch=0,
            grid=(Tp // Tb,),
            in_specs=in_specs,
            out_specs=pl.BlockSpec((Bp, Op), lambda c: (0, 0)),
            scratch_shapes=scratch,
        ),
        compiler_params=pltpu.CompilerParams(
            dimension_semantics=("arbitrary",),
            vmem_limit_bytes=int(phys * 0.7),
        ),
    )(*args)
    return out_pad[:B, :params["output_size"]]


# --------------------------------------------------------------------------
# Parameter init (mirrors nn.LSTM / nn.Linear; padded + bf16 for the kernel)
# --------------------------------------------------------------------------
def init_params(key, input_size, hidden_size, num_layers, output_size):
    H = hidden_size
    Hp = _round_up(H, 128)
    Ip = _round_up(input_size, 128)
    Op = _round_up(output_size, 128)
    bound = H ** -0.5

    raw_layers, kern_layers = [], []
    for layer in range(num_layers):
        in_sz = input_size if layer == 0 else H
        in_pad = Ip if layer == 0 else Hp
        key, k1, k2, k3, k4 = jax.random.split(key, 5)
        w_ih = jax.random.uniform(k1, (4 * H, in_sz), jnp.float32, -bound, bound)
        w_hh = jax.random.uniform(k2, (4 * H, H), jnp.float32, -bound, bound)
        b_ih = jax.random.uniform(k3, (4 * H,), jnp.float32, -bound, bound)
        b_hh = jax.random.uniform(k4, (4 * H,), jnp.float32, -bound, bound)
        b = b_ih + b_hh
        raw_layers.append((w_ih, w_hh, b))

        wih_t = _pad_gate_cols(w_ih.T, H, Hp)                    # (in_sz, 4Hp)
        wih_t = jnp.pad(wih_t, ((0, in_pad - in_sz), (0, 0)))    # (in_pad, 4Hp)
        whh_t = _pad_gate_cols(w_hh.T, H, Hp)                    # (H, 4Hp)
        whh_t = jnp.pad(whh_t, ((0, Hp - H), (0, 0)))            # (Hp, 4Hp)
        b_p = _pad_gate_cols(b[None, :], H, Hp)                  # (1, 4Hp)
        kern_layers.append({
            "wih_t": wih_t.astype(jnp.bfloat16),
            "whh_t": whh_t.astype(jnp.bfloat16),
            "b": b_p.astype(jnp.float32),
        })

    key, k5, k6 = jax.random.split(key, 3)
    fc_w = jax.random.uniform(k5, (output_size, H), jnp.float32, -bound, bound)
    fc_b = jax.random.uniform(k6, (output_size,), jnp.float32, -bound, bound)
    fc_w_t = jnp.pad(fc_w.T, ((0, Hp - H), (0, Op - output_size)))   # (Hp, Op)
    fc_b_p = jnp.pad(fc_b, (0, Op - output_size))[None, :]           # (1, Op)

    params = {
        "lstm": kern_layers,
        "fc_w_t": fc_w_t.astype(jnp.bfloat16),
        "fc_b": fc_b_p.astype(jnp.float32),
        "output_size": output_size,
    }
    raw = {"lstm": raw_layers, "fc_w": fc_w, "fc_b": fc_b}
    return raw, params


# --------------------------------------------------------------------------
# Pure-JAX reference (same bf16 casts as the kernel) for a sanity check
# --------------------------------------------------------------------------
def reference_forward(x_bti, raw):
    x_seq = x_bti.astype(jnp.bfloat16)          # (B, T, feat)
    B, T, _ = x_bti.shape
    h_last = None
    for (w_ih, w_hh, b) in raw["lstm"]:
        H = w_hh.shape[1]
        wih_t = w_ih.T.astype(jnp.bfloat16)
        whh_t = w_hh.T.astype(jnp.bfloat16)
        h = jnp.zeros((B, H), jnp.bfloat16)
        c = jnp.zeros((B, H), jnp.float32)
        outs = []
        for t in range(T):
            g = (jnp.dot(x_seq[:, t, :], wih_t, preferred_element_type=jnp.float32)
                 + jnp.dot(h, whh_t, preferred_element_type=jnp.float32)
                 + b)
            i_g = jax.nn.sigmoid(g[:, 0 * H:1 * H])
            f_g = jax.nn.sigmoid(g[:, 1 * H:2 * H])
            g_g = jnp.tanh(g[:, 2 * H:3 * H])
            o_g = jax.nn.sigmoid(g[:, 3 * H:4 * H])
            c = f_g * c + i_g * g_g
            h = (o_g * jnp.tanh(c)).astype(jnp.bfloat16)
            outs.append(h)
        x_seq = jnp.stack(outs, axis=1)
        h_last = h
    return (jnp.dot(h_last, raw["fc_w"].T.astype(jnp.bfloat16),
                    preferred_element_type=jnp.float32)
            + raw["fc_b"][None, :])


# --------------------------------------------------------------------------
if __name__ == "__main__":
    B, T = 2, 8
    input_size, hidden_size, num_layers, output_size = 4, 32, 2, 1

    key = jax.random.PRNGKey(0)
    key, kx = jax.random.split(key)
    x = jax.random.normal(kx, (B, T, input_size), jnp.float32)

    raw, params = init_params(key, input_size, hidden_size, num_layers, output_size)

    def run(single_buffer):
        f = jax.jit(lambda xb: lstm_regressor_forward(
            xb, params, single_buffer_weights=single_buffer))
        out = f(x)
        jax.block_until_ready(out)
        return out

    try:
        out = run(True)
    except Exception:
        # pipeline_mode=pl.Buffered may be unsupported on older jax; retry
        # with default double-buffered weights.
        out = run(False)

    assert out.shape == (B, output_size)

    ref = reference_forward(x, raw)
    assert jnp.allclose(out, ref, atol=1e-2, rtol=1e-2), (out, ref)

    print("KERNEL_OK")
</pallas_src>

<mosaic_0001>
module attributes {stable_mosaic.version = 11 : i64} {
  func.func @kernel(%arg0: i32, %arg1: memref<128x128xbf16, #tpu.memory_space<vmem>>, %arg2: memref<128x512xbf16, #tpu.memory_space<vmem>>, %arg3: memref<128x512xbf16, #tpu.memory_space<vmem>>, %arg4: memref<1x512xf32, #tpu.memory_space<vmem>>, %arg5: memref<128x512xbf16, #tpu.memory_space<vmem>>, %arg6: memref<128x512xbf16, #tpu.memory_space<vmem>>, %arg7: memref<1x512xf32, #tpu.memory_space<vmem>>, %arg8: memref<128x128xbf16, #tpu.memory_space<vmem>>, %arg9: memref<1x128xf32, #tpu.memory_space<vmem>>, %arg10: memref<16x128xf32, #tpu.memory_space<vmem>>, %arg11: memref<16x128xbf16, #tpu.memory_space<vmem>>, %arg12: memref<16x128xbf16, #tpu.memory_space<vmem>>, %arg13: memref<16x128xf32, #tpu.memory_space<vmem>>, %arg14: memref<16x128xf32, #tpu.memory_space<vmem>>, %arg15: memref<128x128xbf16, #tpu.memory_space<vmem>>) attributes {dimension_semantics = [#tpu.dimension_semantics<arbitrary>], iteration_bounds = array<i64: 1>, scalar_prefetch = 0 : i64, scratch_operands = 5 : i64, tpu.core_type = #tpu.core_type<tc>, window_params = [{transform_indices = @transform_0, window_bounds = array<i64: 128, 128>}, {pipeline_mode = #tpu.pipeline_mode<synchronous>, transform_indices = @transform_1, window_bounds = array<i64: 128, 512>}, {pipeline_mode = #tpu.pipeline_mode<synchronous>, transform_indices = @transform_2, window_bounds = array<i64: 128, 512>}, {pipeline_mode = #tpu.pipeline_mode<synchronous>, transform_indices = @transform_3, window_bounds = array<i64: 1, 512>}, {pipeline_mode = #tpu.pipeline_mode<synchronous>, transform_indices = @transform_4, window_bounds = array<i64: 128, 512>}, {pipeline_mode = #tpu.pipeline_mode<synchronous>, transform_indices = @transform_5, window_bounds = array<i64: 128, 512>}, {pipeline_mode = #tpu.pipeline_mode<synchronous>, transform_indices = @transform_6, window_bounds = array<i64: 1, 512>}, {pipeline_mode = #tpu.pipeline_mode<synchronous>, transform_indices = @transform_7, window_bounds = array<i64: 128, 128>}, {pipeline_mode = #tpu.pipeline_mode<synchronous>, transform_indices = @transform_8, window_bounds = array<i64: 1, 128>}, {pipeline_mode = #tpu.pipeline_mode<synchronous>, transform_indices = @transform_9, window_bounds = array<i64: 16, 128>}]} {
    %c0_i32 = arith.constant 0 : i32
    %0 = arith.cmpi eq, %arg0, %c0_i32 : i32
    %1 = arith.extui %0 : i1 to i32
    %c0_i32_0 = arith.constant 0 : i32
    %2 = arith.cmpi ne, %1, %c0_i32_0 : i32
    scf.if %2 {
      %cst_108 = arith.constant 0.000000e+00 : bf16
      %500 = vector.broadcast %cst_108 : bf16 to vector<16x128xbf16>
      %c0_109 = arith.constant 0 : index
      %c0_110 = arith.constant 0 : index
      %501 = vector.load %arg11[%c0_109, %c0_110] : memref<16x128xbf16, #tpu.memory_space<vmem>>, vector<16x128xbf16>
      tpu.vector_store %arg11[%c0_109, %c0_110], %500 {strides = array<i32>} : memref<16x128xbf16, #tpu.memory_space<vmem>>, vector<16x128xbf16>,
      %cst_111 = arith.constant 0.000000e+00 : f32
      %502 = vector.broadcast %cst_111 : f32 to vector<16x128xf32>
      %c0_112 = arith.constant 0 : index
      %c0_113 = arith.constant 0 : index
      %503 = vector.load %arg13[%c0_112, %c0_113] : memref<16x128xf32, #tpu.memory_space<vmem>>, vector<16x128xf32>
      tpu.vector_store %arg13[%c0_112, %c0_113], %502 {strides = array<i32>} : memref<16x128xf32, #tpu.memory_space<vmem>>, vector<16x128xf32>,
      %cst_114 = arith.constant 0.000000e+00 : bf16
      %504 = vector.broadcast %cst_114 : bf16 to vector<16x128xbf16>
      %c0_115 = arith.constant 0 : index
      %c0_116 = arith.constant 0 : index
      %505 = vector.load %arg12[%c0_115, %c0_116] : memref<16x128xbf16, #tpu.memory_space<vmem>>, vector<16x128xbf16>
      tpu.vector_store %arg12[%c0_115, %c0_116], %504 {strides = array<i32>} : memref<16x128xbf16, #tpu.memory_space<vmem>>, vector<16x128xbf16>,
      %cst_117 = arith.constant 0.000000e+00 : f32
      %506 = vector.broadcast %cst_117 : f32 to vector<16x128xf32>
      %c0_118 = arith.constant 0 : index
      %c0_119 = arith.constant 0 : index
      %507 = vector.load %arg14[%c0_118, %c0_119] : memref<16x128xf32, #tpu.memory_space<vmem>>, vector<16x128xf32>
      tpu.vector_store %arg14[%c0_118, %c0_119], %506 {strides = array<i32>} : memref<16x128xf32, #tpu.memory_space<vmem>>, vector<16x128xf32>,
      %cst_120 = arith.constant 0.000000e+00 : f32
      %508 = vector.broadcast %cst_120 : f32 to vector<16x128xf32>
      %c0_121 = arith.constant 0 : index
      %c0_122 = arith.constant 0 : index
      %509 = vector.load %arg10[%c0_121, %c0_122] : memref<16x128xf32, #tpu.memory_space<vmem>>, vector<16x128xf32>
      tpu.vector_store %arg10[%c0_121, %c0_122], %508 {strides = array<i32>} : memref<16x128xf32, #tpu.memory_space<vmem>>, vector<16x128xf32>,
    } else {
    }
    %c0 = arith.constant 0 : index
    %c0_1 = arith.constant 0 : index
    %3 = vector.load %arg1[%c0, %c0_1] : memref<128x128xbf16, #tpu.memory_space<vmem>>, vector<128x128xbf16>
    %c0_2 = arith.constant 0 : index
    %c0_3 = arith.constant 0 : index
    %4 = vector.load %arg2[%c0_2, %c0_3] : memref<128x512xbf16, #tpu.memory_space<vmem>>, vector<128x512xbf16>
    %cst = arith.constant dense<0.000000e+00> : vector<128x512xf32>
    %5 = tpu.matmul %3, %4, %cst {dimension_numbers = #tpu.dot_dimension_numbers<[1], [0], [0], [1], [0, 0, 1, 1], [], []>} : vector<128x128xbf16>, vector<128x512xbf16>, vector<128x512xf32> -> vector<128x512xf32>
    %c0_4 = arith.constant 0 : index
    %c0_5 = arith.constant 0 : index
    %6 = vector.load %arg4[%c0_4, %c0_5] : memref<1x512xf32, #tpu.memory_space<vmem>>, vector<1x512xf32>
    %7 = vector.broadcast %6 : vector<1x512xf32> to vector<128x512xf32>
    %8 = arith.addf %5, %7 : vector<128x512xf32>
    %c0_6 = arith.constant 0 : index
    %c0_7 = arith.constant 0 : index
    %9 = vector.load %arg3[%c0_6, %c0_7] : memref<128x512xbf16, #tpu.memory_space<vmem>>, vector<128x512xbf16>
    %c0_8 = arith.constant 0 : index
    %c0_9 = arith.constant 0 : index
    %10 = vector.load %arg11[%c0_8, %c0_9] : memref<16x128xbf16, #tpu.memory_space<vmem>>, vector<16x128xbf16>
    %c0_10 = arith.constant 0 : index
    %c0_11 = arith.constant 0 : index
    %11 = vector.load %arg13[%c0_10, %c0_11] : memref<16x128xf32, #tpu.memory_space<vmem>>, vector<16x128xf32>
    %12 = vector.extract_strided_slice %8 {offsets = [0, 0], sizes = [16, 512], strides = [1, 1]} : vector<128x512xf32> to vector<16x512xf32>
    %cst_12 = arith.constant dense<0.000000e+00> : vector<16x512xf32>
    %13 = tpu.matmul %10, %9, %cst_12 {dimension_numbers = #tpu.dot_dimension_numbers<[1], [0], [0], [1], [0, 0, 1, 1], [], []>} : vector<16x128xbf16>, vector<128x512xbf16>, vector<16x512xf32> -> vector<16x512xf32>
    %14 = arith.addf %12, %13 : vector<16x512xf32>
    %15 = vector.extract_strided_slice %14 {offsets = [0, 0], sizes = [16, 128], strides = [1, 1]} : vector<16x512xf32> to vector<16x128xf32>
    %16 = arith.negf %15 : vector<16x128xf32>
    %17 = math.exp %16 : vector<16x128xf32>
    %cst_13 = arith.constant 1.000000e+00 : f32
    %18 = vector.broadcast %cst_13 : f32 to vector<16x128xf32>
    %19 = arith.addf %18, %17 : vector<16x128xf32>
    %20 = arith.divf %18, %19 : vector<16x128xf32>
    %21 = vector.extract_strided_slice %14 {offsets = [0, 128], sizes = [16, 128], strides = [1, 1]} : vector<16x512xf32> to vector<16x128xf32>
    %22 = arith.negf %21 : vector<16x128xf32>
    %23 = math.exp %22 : vector<16x128xf32>
    %cst_14 = arith.constant 1.000000e+00 : f32
    %24 = vector.broadcast %cst_14 : f32 to vector<16x128xf32>
    %25 = arith.addf %24, %23 : vector<16x128xf32>
    %26 = arith.divf %24, %25 : vector<16x128xf32>
    %27 = vector.extract_strided_slice %14 {offsets = [0, 256], sizes = [16, 128], strides = [1, 1]} : vector<16x512xf32> to vector<16x128xf32>
    %28 = math.tanh %27 : vector<16x128xf32>
    %29 = vector.extract_strided_slice %14 {offsets = [0, 384], sizes = [16, 128], strides = [1, 1]} : vector<16x512xf32> to vector<16x128xf32>
    %30 = arith.negf %29 : vector<16x128xf32>
    %31 = math.exp %30 : vector<16x128xf32>
    %cst_15 = arith.constant 1.000000e+00 : f32
    %32 = vector.broadcast %cst_15 : f32 to vector<16x128xf32>
    %33 = arith.addf %32, %31 : vector<16x128xf32>
    %34 = arith.divf %32, %33 : vector<16x128xf32>
    %35 = arith.mulf %26, %11 : vector<16x128xf32>
    %36 = arith.mulf %20, %28 : vector<16x128xf32>
    %37 = arith.addf %35, %36 : vector<16x128xf32>
    %38 = math.tanh %37 : vector<16x128xf32>
    %39 = arith.mulf %34, %38 : vector<16x128xf32>
    %40 = arith.truncf %39 : vector<16x128xf32> to vector<16x128xbf16>
    %c0_16 = arith.constant 0 : index
    %c0_17 = arith.constant 0 : index
    %41 = vector.load %arg15[%c0_16, %c0_17] : memref<128x128xbf16, #tpu.memory_space<vmem>>, vector<16x128xbf16>
    tpu.vector_store %arg15[%c0_16, %c0_17], %40 {strides = array<i32>} : memref<128x128xbf16, #tpu.memory_space<vmem>>, vector<16x128xbf16>,
    %42 = vector.extract_strided_slice %8 {offsets = [16, 0], sizes = [16, 512], strides = [1, 1]} : vector<128x512xf32> to vector<16x512xf32>
    %cst_18 = arith.constant dense<0.000000e+00> : vector<16x512xf32>
    %43 = tpu.matmul %40, %9, %cst_18 {dimension_numbers = #tpu.dot_dimension_numbers<[1], [0], [0], [1], [0, 0, 1, 1], [], []>} : vector<16x128xbf16>, vector<128x512xbf16>, vector<16x512xf32> -> vector<16x512xf32>
    %44 = arith.addf %42, %43 : vector<16x512xf32>
    %45 = vector.extract_strided_slice %44 {offsets = [0, 0], sizes = [16, 128], strides = [1, 1]} : vector<16x512xf32> to vector<16x128xf32>
    %46 = arith.negf %45 : vector<16x128xf32>
    %47 = math.exp %46 : vector<16x128xf32>
    %cst_19 = arith.constant 1.000000e+00 : f32
    %48 = vector.broadcast %cst_19 : f32 to vector<16x128xf32>
    %49 = arith.addf %48, %47 : vector<16x128xf32>
    %50 = arith.divf %48, %49 : vector<16x128xf32>
    %51 = vector.extract_strided_slice %44 {offsets = [0, 128], sizes = [16, 128], strides = [1, 1]} : vector<16x512xf32> to vector<16x128xf32>
    %52 = arith.negf %51 : vector<16x128xf32>
    %53 = math.exp %52 : vector<16x128xf32>
    %cst_20 = arith.constant 1.000000e+00 : f32
    %54 = vector.broadcast %cst_20 : f32 to vector<16x128xf32>
    %55 = arith.addf %54, %53 : vector<16x128xf32>
    %56 = arith.divf %54, %55 : vector<16x128xf32>
    %57 = vector.extract_strided_slice %44 {offsets = [0, 256], sizes = [16, 128], strides = [1, 1]} : vector<16x512xf32> to vector<16x128xf32>
    %58 = math.tanh %57 : vector<16x128xf32>
    %59 = vector.extract_strided_slice %44 {offsets = [0, 384], sizes = [16, 128], strides = [1, 1]} : vector<16x512xf32> to vector<16x128xf32>
    %60 = arith.negf %59 : vector<16x128xf32>
    %61 = math.exp %60 : vector<16x128xf32>
    %cst_21 = arith.constant 1.000000e+00 : f32
    %62 = vector.broadcast %cst_21 : f32 to vector<16x128xf32>
    %63 = arith.addf %62, %61 : vector<16x128xf32>
    %64 = arith.divf %62, %63 : vector<16x128xf32>
    %65 = arith.mulf %56, %37 : vector<16x128xf32>
    %66 = arith.mulf %50, %58 : vector<16x128xf32>
    %67 = arith.addf %65, %66 : vector<16x128xf32>
    %68 = math.tanh %67 : vector<16x128xf32>
    %69 = arith.mulf %64, %68 : vector<16x128xf32>
    %70 = arith.truncf %69 : vector<16x128xf32> to vector<16x128xbf16>
    %c16 = arith.constant 16 : index
    %c0_22 = arith.constant 0 : index
    %71 = vector.load %arg15[%c16, %c0_22] : memref<128x128xbf16, #tpu.memory_space<vmem>>, vector<16x128xbf16>
    tpu.vector_store %arg15[%c16, %c0_22], %70 {strides = array<i32>} : memref<128x128xbf16, #tpu.memory_space<vmem>>, vector<16x128xbf16>,
    %72 = vector.extract_strided_slice %8 {offsets = [32, 0], sizes = [16, 512], strides = [1, 1]} : vector<128x512xf32> to vector<16x512xf32>
    %cst_23 = arith.constant dense<0.000000e+00> : vector<16x512xf32>
    %73 = tpu.matmul %70, %9, %cst_23 {dimension_numbers = #tpu.dot_dimension_numbers<[1], [0], [0], [1], [0, 0, 1, 1], [], []>} : vector<16x128xbf16>, vector<128x512xbf16>, vector<16x512xf32> -> vector<16x512xf32>
    %74 = arith.addf %72, %73 : vector<16x512xf32>
    %75 = vector.extract_strided_slice %74 {offsets = [0, 0], sizes = [16, 128], strides = [1, 1]} : vector<16x512xf32> to vector<16x128xf32>
    %76 = arith.negf %75 : vector<16x128xf32>
    %77 = math.exp %76 : vector<16x128xf32>
    %cst_24 = arith.constant 1.000000e+00 : f32
    %78 = vector.broadcast %cst_24 : f32 to vector<16x128xf32>
    %79 = arith.addf %78, %77 : vector<16x128xf32>
    %80 = arith.divf %78, %79 : vector<16x128xf32>
    %81 = vector.extract_strided_slice %74 {offsets = [0, 128], sizes = [16, 128], strides = [1, 1]} : vector<16x512xf32> to vector<16x128xf32>
    %82 = arith.negf %81 : vector<16x128xf32>
    %83 = math.exp %82 : vector<16x128xf32>
    %cst_25 = arith.constant 1.000000e+00 : f32
    %84 = vector.broadcast %cst_25 : f32 to vector<16x128xf32>
    %85 = arith.addf %84, %83 : vector<16x128xf32>
    %86 = arith.divf %84, %85 : vector<16x128xf32>
    %87 = vector.extract_strided_slice %74 {offsets = [0, 256], sizes = [16, 128], strides = [1, 1]} : vector<16x512xf32> to vector<16x128xf32>
    %88 = math.tanh %87 : vector<16x128xf32>
    %89 = vector.extract_strided_slice %74 {offsets = [0, 384], sizes = [16, 128], strides = [1, 1]} : vector<16x512xf32> to vector<16x128xf32>
    %90 = arith.negf %89 : vector<16x128xf32>
    %91 = math.exp %90 : vector<16x128xf32>
    %cst_26 = arith.constant 1.000000e+00 : f32
    %92 = vector.broadcast %cst_26 : f32 to vector<16x128xf32>
    %93 = arith.addf %92, %91 : vector<16x128xf32>
    %94 = arith.divf %92, %93 : vector<16x128xf32>
    %95 = arith.mulf %86, %67 : vector<16x128xf32>
    %96 = arith.mulf %80, %88 : vector<16x128xf32>
    %97 = arith.addf %95, %96 : vector<16x128xf32>
    %98 = math.tanh %97 : vector<16x128xf32>
    %99 = arith.mulf %94, %98 : vector<16x128xf32>
    %100 = arith.truncf %99 : vector<16x128xf32> to vector<16x128xbf16>
    %c32 = arith.constant 32 : index
    %c0_27 = arith.constant 0 : index
    %101 = vector.load %arg15[%c32, %c0_27] : memref<128x128xbf16, #tpu.memory_space<vmem>>, vector<16x128xbf16>
    tpu.vector_store %arg15[%c32, %c0_27], %100 {strides = array<i32>} : memref<128x128xbf16, #tpu.memory_space<vmem>>, vector<16x128xbf16>,
    %102 = vector.extract_strided_slice %8 {offsets = [48, 0], sizes = [16, 512], strides = [1, 1]} : vector<128x512xf32> to vector<16x512xf32>
    %cst_28 = arith.constant dense<0.000000e+00> : vector<16x512xf32>
    %103 = tpu.matmul %100, %9, %cst_28 {dimension_numbers = #tpu.dot_dimension_numbers<[1], [0], [0], [1], [0, 0, 1, 1], [], []>} : vector<16x128xbf16>, vector<128x512xbf16>, vector<16x512xf32> -> vector<16x512xf32>
    %104 = arith.addf %102, %103 : vector<16x512xf32>
    %105 = vector.extract_strided_slice %104 {offsets = [0, 0], sizes = [16, 128], strides = [1, 1]} : vector<16x512xf32> to vector<16x128xf32>
    %106 = arith.negf %105 : vector<16x128xf32>
    %107 = math.exp %106 : vector<16x128xf32>
    %cst_29 = arith.constant 1.000000e+00 : f32
    %108 = vector.broadcast %cst_29 : f32 to vector<16x128xf32>
    %109 = arith.addf %108, %107 : vector<16x128xf32>
    %110 = arith.divf %108, %109 : vector<16x128xf32>
    %111 = vector.extract_strided_slice %104 {offsets = [0, 128], sizes = [16, 128], strides = [1, 1]} : vector<16x512xf32> to vector<16x128xf32>
    %112 = arith.negf %111 : vector<16x128xf32>
    %113 = math.exp %112 : vector<16x128xf32>
    %cst_30 = arith.constant 1.000000e+00 : f32
    %114 = vector.broadcast %cst_30 : f32 to vector<16x128xf32>
    %115 = arith.addf %114, %113 : vector<16x128xf32>
    %116 = arith.divf %114, %115 : vector<16x128xf32>
    %117 = vector.extract_strided_slice %104 {offsets = [0, 256], sizes = [16, 128], strides = [1, 1]} : vector<16x512xf32> to vector<16x128xf32>
    %118 = math.tanh %117 : vector<16x128xf32>
    %119 = vector.extract_strided_slice %104 {offsets = [0, 384], sizes = [16, 128], strides = [1, 1]} : vector<16x512xf32> to vector<16x128xf32>
    %120 = arith.negf %119 : vector<16x128xf32>
    %121 = math.exp %120 : vector<16x128xf32>
    %cst_31 = arith.constant 1.000000e+00 : f32
    %122 = vector.broadcast %cst_31 : f32 to vector<16x128xf32>
    %123 = arith.addf %122, %121 : vector<16x128xf32>
    %124 = arith.divf %122, %123 : vector<16x128xf32>
    %125 = arith.mulf %116, %97 : vector<16x128xf32>
    %126 = arith.mulf %110, %118 : vector<16x128xf32>
    %127 = arith.addf %125, %126 : vector<16x128xf32>
    %128 = math.tanh %127 : vector<16x128xf32>
    %129 = arith.mulf %124, %128 : vector<16x128xf32>
    %130 = arith.truncf %129 : vector<16x128xf32> to vector<16x128xbf16>
    %c48 = arith.constant 48 : index
    %c0_32 = arith.constant 0 : index
    %131 = vector.load %arg15[%c48, %c0_32] : memref<128x128xbf16, #tpu.memory_space<vmem>>, vector<16x128xbf16>
    tpu.vector_store %arg15[%c48, %c0_32], %130 {strides = array<i32>} : memref<128x128xbf16, #tpu.memory_space<vmem>>, vector<16x128xbf16>,
    %132 = vector.extract_strided_slice %8 {offsets = [64, 0], sizes = [16, 512], strides = [1, 1]} : vector<128x512xf32> to vector<16x512xf32>
    %cst_33 = arith.constant dense<0.000000e+00> : vector<16x512xf32>
    %133 = tpu.matmul %130, %9, %cst_33 {dimension_numbers = #tpu.dot_dimension_numbers<[1], [0], [0], [1], [0, 0, 1, 1], [], []>} : vector<16x128xbf16>, vector<128x512xbf16>, vector<16x512xf32> -> vector<16x512xf32>
    %134 = arith.addf %132, %133 : vector<16x512xf32>
    %135 = vector.extract_strided_slice %134 {offsets = [0, 0], sizes = [16, 128], strides = [1, 1]} : vector<16x512xf32> to vector<16x128xf32>
    %136 = arith.negf %135 : vector<16x128xf32>
    %137 = math.exp %136 : vector<16x128xf32>
    %cst_34 = arith.constant 1.000000e+00 : f32
    %138 = vector.broadcast %cst_34 : f32 to vector<16x128xf32>
    %139 = arith.addf %138, %137 : vector<16x128xf32>
    %140 = arith.divf %138, %139 : vector<16x128xf32>
    %141 = vector.extract_strided_slice %134 {offsets = [0, 128], sizes = [16, 128], strides = [1, 1]} : vector<16x512xf32> to vector<16x128xf32>
    %142 = arith.negf %141 : vector<16x128xf32>
    %143 = math.exp %142 : vector<16x128xf32>
    %cst_35 = arith.constant 1.000000e+00 : f32
    %144 = vector.broadcast %cst_35 : f32 to vector<16x128xf32>
    %145 = arith.addf %144, %143 : vector<16x128xf32>
    %146 = arith.divf %144, %145 : vector<16x128xf32>
    %147 = vector.extract_strided_slice %134 {offsets = [0, 256], sizes = [16, 128], strides = [1, 1]} : vector<16x512xf32> to vector<16x128xf32>
    %148 = math.tanh %147 : vector<16x128xf32>
    %149 = vector.extract_strided_slice %134 {offsets = [0, 384], sizes = [16, 128], strides = [1, 1]} : vector<16x512xf32> to vector<16x128xf32>
    %150 = arith.negf %149 : vector<16x128xf32>
    %151 = math.exp %150 : vector<16x128xf32>
    %cst_36 = arith.constant 1.000000e+00 : f32
    %152 = vector.broadcast %cst_36 : f32 to vector<16x128xf32>
    %153 = arith.addf %152, %151 : vector<16x128xf32>
    %154 = arith.divf %152, %153 : vector<16x128xf32>
    %155 = arith.mulf %146, %127 : vector<16x128xf32>
    %156 = arith.mulf %140, %148 : vector<16x128xf32>
    %157 = arith.addf %155, %156 : vector<16x128xf32>
    %158 = math.tanh %157 : vector<16x128xf32>
    %159 = arith.mulf %154, %158 : vector<16x128xf32>
    %160 = arith.truncf %159 : vector<16x128xf32> to vector<16x128xbf16>
    %c64 = arith.constant 64 : index
    %c0_37 = arith.constant 0 : index
    %161 = vector.load %arg15[%c64, %c0_37] : memref<128x128xbf16, #tpu.memory_space<vmem>>, vector<16x128xbf16>
    tpu.vector_store %arg15[%c64, %c0_37], %160 {strides = array<i32>} : memref<128x128xbf16, #tpu.memory_space<vmem>>, vector<16x128xbf16>,
    %162 = vector.extract_strided_slice %8 {offsets = [80, 0], sizes = [16, 512], strides = [1, 1]} : vector<128x512xf32> to vector<16x512xf32>
    %cst_38 = arith.constant dense<0.000000e+00> : vector<16x512xf32>
    %163 = tpu.matmul %160, %9, %cst_38 {dimension_numbers = #tpu.dot_dimension_numbers<[1], [0], [0], [1], [0, 0, 1, 1], [], []>} : vector<16x128xbf16>, vector<128x512xbf16>, vector<16x512xf32> -> vector<16x512xf32>
    %164 = arith.addf %162, %163 : vector<16x512xf32>
    %165 = vector.extract_strided_slice %164 {offsets = [0, 0], sizes = [16, 128], strides = [1, 1]} : vector<16x512xf32> to vector<16x128xf32>
    %166 = arith.negf %165 : vector<16x128xf32>
    %167 = math.exp %166 : vector<16x128xf32>
    %cst_39 = arith.constant 1.000000e+00 : f32
    %168 = vector.broadcast %cst_39 : f32 to vector<16x128xf32>
    %169 = arith.addf %168, %167 : vector<16x128xf32>
    %170 = arith.divf %168, %169 : vector<16x128xf32>
    %171 = vector.extract_strided_slice %164 {offsets = [0, 128], sizes = [16, 128], strides = [1, 1]} : vector<16x512xf32> to vector<16x128xf32>
    %172 = arith.negf %171 : vector<16x128xf32>
    %173 = math.exp %172 : vector<16x128xf32>
    %cst_40 = arith.constant 1.000000e+00 : f32
    %174 = vector.broadcast %cst_40 : f32 to vector<16x128xf32>
    %175 = arith.addf %174, %173 : vector<16x128xf32>
    %176 = arith.divf %174, %175 : vector<16x128xf32>
    %177 = vector.extract_strided_slice %164 {offsets = [0, 256], sizes = [16, 128], strides = [1, 1]} : vector<16x512xf32> to vector<16x128xf32>
    %178 = math.tanh %177 : vector<16x128xf32>
    %179 = vector.extract_strided_slice %164 {offsets = [0, 384], sizes = [16, 128], strides = [1, 1]} : vector<16x512xf32> to vector<16x128xf32>
    %180 = arith.negf %179 : vector<16x128xf32>
    %181 = math.exp %180 : vector<16x128xf32>
    %cst_41 = arith.constant 1.000000e+00 : f32
    %182 = vector.broadcast %cst_41 : f32 to vector<16x128xf32>
    %183 = arith.addf %182, %181 : vector<16x128xf32>
    %184 = arith.divf %182, %183 : vector<16x128xf32>
    %185 = arith.mulf %176, %157 : vector<16x128xf32>
    %186 = arith.mulf %170, %178 : vector<16x128xf32>
    %187 = arith.addf %185, %186 : vector<16x128xf32>
    %188 = math.tanh %187 : vector<16x128xf32>
    %189 = arith.mulf %184, %188 : vector<16x128xf32>
    %190 = arith.truncf %189 : vector<16x128xf32> to vector<16x128xbf16>
    %c80 = arith.constant 80 : index
    %c0_42 = arith.constant 0 : index
    %191 = vector.load %arg15[%c80, %c0_42] : memref<128x128xbf16, #tpu.memory_space<vmem>>, vector<16x128xbf16>
    tpu.vector_store %arg15[%c80, %c0_42], %190 {strides = array<i32>} : memref<128x128xbf16, #tpu.memory_space<vmem>>, vector<16x128xbf16>,
    %192 = vector.extract_strided_slice %8 {offsets = [96, 0], sizes = [16, 512], strides = [1, 1]} : vector<128x512xf32> to vector<16x512xf32>
    %cst_43 = arith.constant dense<0.000000e+00> : vector<16x512xf32>
    %193 = tpu.matmul %190, %9, %cst_43 {dimension_numbers = #tpu.dot_dimension_numbers<[1], [0], [0], [1], [0, 0, 1, 1], [], []>} : vector<16x128xbf16>, vector<128x512xbf16>, vector<16x512xf32> -> vector<16x512xf32>
    %194 = arith.addf %192, %193 : vector<16x512xf32>
    %195 = vector.extract_strided_slice %194 {offsets = [0, 0], sizes = [16, 128], strides = [1, 1]} : vector<16x512xf32> to vector<16x128xf32>
    %196 = arith.negf %195 : vector<16x128xf32>
    %197 = math.exp %196 : vector<16x128xf32>
    %cst_44 = arith.constant 1.000000e+00 : f32
    %198 = vector.broadcast %cst_44 : f32 to vector<16x128xf32>
    %199 = arith.addf %198, %197 : vector<16x128xf32>
    %200 = arith.divf %198, %199 : vector<16x128xf32>
    %201 = vector.extract_strided_slice %194 {offsets = [0, 128], sizes = [16, 128], strides = [1, 1]} : vector<16x512xf32> to vector<16x128xf32>
    %202 = arith.negf %201 : vector<16x128xf32>
    %203 = math.exp %202 : vector<16x128xf32>
    %cst_45 = arith.constant 1.000000e+00 : f32
    %204 = vector.broadcast %cst_45 : f32 to vector<16x128xf32>
    %205 = arith.addf %204, %203 : vector<16x128xf32>
    %206 = arith.divf %204, %205 : vector<16x128xf32>
    %207 = vector.extract_strided_slice %194 {offsets = [0, 256], sizes = [16, 128], strides = [1, 1]} : vector<16x512xf32> to vector<16x128xf32>
    %208 = math.tanh %207 : vector<16x128xf32>
    %209 = vector.extract_strided_slice %194 {offsets = [0, 384], sizes = [16, 128], strides = [1, 1]} : vector<16x512xf32> to vector<16x128xf32>
    %210 = arith.negf %209 : vector<16x128xf32>
    %211 = math.exp %210 : vector<16x128xf32>
    %cst_46 = arith.constant 1.000000e+00 : f32
    %212 = vector.broadcast %cst_46 : f32 to vector<16x128xf32>
    %213 = arith.addf %212, %211 : vector<16x128xf32>
    %214 = arith.divf %212, %213 : vector<16x128xf32>
    %215 = arith.mulf %206, %187 : vector<16x128xf32>
    %216 = arith.mulf %200, %208 : vector<16x128xf32>
    %217 = arith.addf %215, %216 : vector<16x128xf32>
    %218 = math.tanh %217 : vector<16x128xf32>
    %219 = arith.mulf %214, %218 : vector<16x128xf32>
    %220 = arith.truncf %219 : vector<16x128xf32> to vector<16x128xbf16>
    %c96 = arith.constant 96 : index
    %c0_47 = arith.constant 0 : index
    %221 = vector.load %arg15[%c96, %c0_47] : memref<128x128xbf16, #tpu.memory_space<vmem>>, vector<16x128xbf16>
    tpu.vector_store %arg15[%c96, %c0_47], %220 {strides = array<i32>} : memref<128x128xbf16, #tpu.memory_space<vmem>>, vector<16x128xbf16>,
    %222 = vector.extract_strided_slice %8 {offsets = [112, 0], sizes = [16, 512], strides = [1, 1]} : vector<128x512xf32> to vector<16x512xf32>
    %cst_48 = arith.constant dense<0.000000e+00> : vector<16x512xf32>
    %223 = tpu.matmul %220, %9, %cst_48 {dimension_numbers = #tpu.dot_dimension_numbers<[1], [0], [0], [1], [0, 0, 1, 1], [], []>} : vector<16x128xbf16>, vector<128x512xbf16>, vector<16x512xf32> -> vector<16x512xf32>
    %224 = arith.addf %222, %223 : vector<16x512xf32>
    %225 = vector.extract_strided_slice %224 {offsets = [0, 0], sizes = [16, 128], strides = [1, 1]} : vector<16x512xf32> to vector<16x128xf32>
    %226 = arith.negf %225 : vector<16x128xf32>
    %227 = math.exp %226 : vector<16x128xf32>
    %cst_49 = arith.constant 1.000000e+00 : f32
    %228 = vector.broadcast %cst_49 : f32 to vector<16x128xf32>
    %229 = arith.addf %228, %227 : vector<16x128xf32>
    %230 = arith.divf %228, %229 : vector<16x128xf32>
    %231 = vector.extract_strided_slice %224 {offsets = [0, 128], sizes = [16, 128], strides = [1, 1]} : vector<16x512xf32> to vector<16x128xf32>
    %232 = arith.negf %231 : vector<16x128xf32>
    %233 = math.exp %232 : vector<16x128xf32>
    %cst_50 = arith.constant 1.000000e+00 : f32
    %234 = vector.broadcast %cst_50 : f32 to vector<16x128xf32>
    %235 = arith.addf %234, %233 : vector<16x128xf32>
    %236 = arith.divf %234, %235 : vector<16x128xf32>
    %237 = vector.extract_strided_slice %224 {offsets = [0, 256], sizes = [16, 128], strides = [1, 1]} : vector<16x512xf32> to vector<16x128xf32>
    %238 = math.tanh %237 : vector<16x128xf32>
    %239 = vector.extract_strided_slice %224 {offsets = [0, 384], sizes = [16, 128], strides = [1, 1]} : vector<16x512xf32> to vector<16x128xf32>
    %240 = arith.negf %239 : vector<16x128xf32>
    %241 = math.exp %240 : vector<16x128xf32>
    %cst_51 = arith.constant 1.000000e+00 : f32
    %242 = vector.broadcast %cst_51 : f32 to vector<16x128xf32>
    %243 = arith.addf %242, %241 : vector<16x128xf32>
    %244 = arith.divf %242, %243 : vector<16x128xf32>
    %245 = arith.mulf %236, %217 : vector<16x128xf32>
    %246 = arith.mulf %230, %238 : vector<16x128xf32>
    %247 = arith.addf %245, %246 : vector<16x128xf32>
    %248 = math.tanh %247 : vector<16x128xf32>
    %249 = arith.mulf %244, %248 : vector<16x128xf32>
    %250 = arith.truncf %249 : vector<16x128xf32> to vector<16x128xbf16>
    %c112 = arith.constant 112 : index
    %c0_52 = arith.constant 0 : index
    %251 = vector.load %arg15[%c112, %c0_52] : memref<128x128xbf16, #tpu.memory_space<vmem>>, vector<16x128xbf16>
    tpu.vector_store %arg15[%c112, %c0_52], %250 {strides = array<i32>} : memref<128x128xbf16, #tpu.memory_space<vmem>>, vector<16x128xbf16>,
    %c0_53 = arith.constant 0 : index
    %c0_54 = arith.constant 0 : index
    %252 = vector.load %arg11[%c0_53, %c0_54] : memref<16x128xbf16, #tpu.memory_space<vmem>>, vector<16x128xbf16>
    tpu.vector_store %arg11[%c0_53, %c0_54], %250 {strides = array<i32>} : memref<16x128xbf16, #tpu.memory_space<vmem>>, vector<16x128xbf16>,
    %c0_55 = arith.constant 0 : index
    %c0_56 = arith.constant 0 : index
    %253 = vector.load %arg13[%c0_55, %c0_56] : memref<16x128xf32, #tpu.memory_space<vmem>>, vector<16x128xf32>
    tpu.vector_store %arg13[%c0_55, %c0_56], %247 {strides = array<i32>} : memref<16x128xf32, #tpu.memory_space<vmem>>, vector<16x128xf32>,
    %c0_57 = arith.constant 0 : index
    %c0_58 = arith.constant 0 : index
    %254 = vector.load %arg15[%c0_57, %c0_58] : memref<128x128xbf16, #tpu.memory_space<vmem>>, vector<128x128xbf16>
    %c0_59 = arith.constant 0 : index
    %c0_60 = arith.constant 0 : index
    %255 = vector.load %arg5[%c0_59, %c0_60] : memref<128x512xbf16, #tpu.memory_space<vmem>>, vector<128x512xbf16>
    %cst_61 = arith.constant dense<0.000000e+00> : vector<128x512xf32>
    %256 = tpu.matmul %254, %255, %cst_61 {dimension_numbers = #tpu.dot_dimension_numbers<[1], [0], [0], [1], [0, 0, 1, 1], [], []>} : vector<128x128xbf16>, vector<128x512xbf16>, vector<128x512xf32> -> vector<128x512xf32>
    %c0_62 = arith.constant 0 : index
    %c0_63 = arith.constant 0 : index
    %257 = vector.load %arg7[%c0_62, %c0_63] : memref<1x512xf32, #tpu.memory_space<vmem>>, vector<1x512xf32>
    %258 = vector.broadcast %257 : vector<1x512xf32> to vector<128x512xf32>
    %259 = arith.addf %256, %258 : vector<128x512xf32>
    %c0_64 = arith.constant 0 : index
    %c0_65 = arith.constant 0 : index
    %260 = vector.load %arg6[%c0_64, %c0_65] : memref<128x512xbf16, #tpu.memory_space<vmem>>, vector<128x512xbf16>
    %c0_66 = arith.constant 0 : index
    %c0_67 = arith.constant 0 : index
    %261 = vector.load %arg12[%c0_66, %c0_67] : memref<16x128xbf16, #tpu.memory_space<vmem>>, vector<16x128xbf16>
    %c0_68 = arith.constant 0 : index
    %c0_69 = arith.constant 0 : index
    %262 = vector.load %arg14[%c0_68, %c0_69] : memref<16x128xf32, #tpu.memory_space<vmem>>, vector<16x128xf32>
    %263 = vector.extract_strided_slice %259 {offsets = [0, 0], sizes = [16, 512], strides = [1, 1]} : vector<128x512xf32> to vector<16x512xf32>
    %cst_70 = arith.constant dense<0.000000e+00> : vector<16x512xf32>
    %264 = tpu.matmul %261, %260, %cst_70 {dimension_numbers = #tpu.dot_dimension_numbers<[1], [0], [0], [1], [0, 0, 1, 1], [], []>} : vector<16x128xbf16>, vector<128x512xbf16>, vector<16x512xf32> -> vector<16x512xf32>
    %265 = arith.addf %263, %264 : vector<16x512xf32>
    %266 = vector.extract_strided_slice %265 {offsets = [0, 0], sizes = [16, 128], strides = [1, 1]} : vector<16x512xf32> to vector<16x128xf32>
    %267 = arith.negf %266 : vector<16x128xf32>
    %268 = math.exp %267 : vector<16x128xf32>
    %cst_71 = arith.constant 1.000000e+00 : f32
    %269 = vector.broadcast %cst_71 : f32 to vector<16x128xf32>
    %270 = arith.addf %269, %268 : vector<16x128xf32>
    %271 = arith.divf %269, %270 : vector<16x128xf32>
    %272 = vector.extract_strided_slice %265 {offsets = [0, 128], sizes = [16, 128], strides = [1, 1]} : vector<16x512xf32> to vector<16x128xf32>
    %273 = arith.negf %272 : vector<16x128xf32>
    %274 = math.exp %273 : vector<16x128xf32>
    %cst_72 = arith.constant 1.000000e+00 : f32
    %275 = vector.broadcast %cst_72 : f32 to vector<16x128xf32>
    %276 = arith.addf %275, %274 : vector<16x128xf32>
    %277 = arith.divf %275, %276 : vector<16x128xf32>
    %278 = vector.extract_strided_slice %265 {offsets = [0, 256], sizes = [16, 128], strides = [1, 1]} : vector<16x512xf32> to vector<16x128xf32>
    %279 = math.tanh %278 : vector<16x128xf32>
    %280 = vector.extract_strided_slice %265 {offsets = [0, 384], sizes = [16, 128], strides = [1, 1]} : vector<16x512xf32> to vector<16x128xf32>
    %281 = arith.negf %280 : vector<16x128xf32>
    %282 = math.exp %281 : vector<16x128xf32>
    %cst_73 = arith.constant 1.000000e+00 : f32
    %283 = vector.broadcast %cst_73 : f32 to vector<16x128xf32>
    %284 = arith.addf %283, %282 : vector<16x128xf32>
    %285 = arith.divf %283, %284 : vector<16x128xf32>
    %286 = arith.mulf %277, %262 : vector<16x128xf32>
    %287 = arith.mulf %271, %279 : vector<16x128xf32>
    %288 = arith.addf %286, %287 : vector<16x128xf32>
    %289 = math.tanh %288 : vector<16x128xf32>
    %290 = arith.mulf %285, %289 : vector<16x128xf32>
    %291 = arith.truncf %290 : vector<16x128xf32> to vector<16x128xbf16>
    %292 = vector.extract_strided_slice %259 {offsets = [16, 0], sizes = [16, 512], strides = [1, 1]} : vector<128x512xf32> to vector<16x512xf32>
    %cst_74 = arith.constant dense<0.000000e+00> : vector<16x512xf32>
    %293 = tpu.matmul %291, %260, %cst_74 {dimension_numbers = #tpu.dot_dimension_numbers<[1], [0], [0], [1], [0, 0, 1, 1], [], []>} : vector<16x128xbf16>, vector<128x512xbf16>, vector<16x512xf32> -> vector<16x512xf32>
    %294 = arith.addf %292, %293 : vector<16x512xf32>
    %295 = vector.extract_strided_slice %294 {offsets = [0, 0], sizes = [16, 128], strides = [1, 1]} : vector<16x512xf32> to vector<16x128xf32>
    %296 = arith.negf %295 : vector<16x128xf32>
    %297 = math.exp %296 : vector<16x128xf32>
    %cst_75 = arith.constant 1.000000e+00 : f32
    %298 = vector.broadcast %cst_75 : f32 to vector<16x128xf32>
    %299 = arith.addf %298, %297 : vector<16x128xf32>
    %300 = arith.divf %298, %299 : vector<16x128xf32>
    %301 = vector.extract_strided_slice %294 {offsets = [0, 128], sizes = [16, 128], strides = [1, 1]} : vector<16x512xf32> to vector<16x128xf32>
    %302 = arith.negf %301 : vector<16x128xf32>
    %303 = math.exp %302 : vector<16x128xf32>
    %cst_76 = arith.constant 1.000000e+00 : f32
    %304 = vector.broadcast %cst_76 : f32 to vector<16x128xf32>
    %305 = arith.addf %304, %303 : vector<16x128xf32>
    %306 = arith.divf %304, %305 : vector<16x128xf32>
    %307 = vector.extract_strided_slice %294 {offsets = [0, 256], sizes = [16, 128], strides = [1, 1]} : vector<16x512xf32> to vector<16x128xf32>
    %308 = math.tanh %307 : vector<16x128xf32>
    %309 = vector.extract_strided_slice %294 {offsets = [0, 384], sizes = [16, 128], strides = [1, 1]} : vector<16x512xf32> to vector<16x128xf32>
    %310 = arith.negf %309 : vector<16x128xf32>
    %311 = math.exp %310 : vector<16x128xf32>
    %cst_77 = arith.constant 1.000000e+00 : f32
    %312 = vector.broadcast %cst_77 : f32 to vector<16x128xf32>
    %313 = arith.addf %312, %311 : vector<16x128xf32>
    %314 = arith.divf %312, %313 : vector<16x128xf32>
    %315 = arith.mulf %306, %288 : vector<16x128xf32>
    %316 = arith.mulf %300, %308 : vector<16x128xf32>
    %317 = arith.addf %315, %316 : vector<16x128xf32>
    %318 = math.tanh %317 : vector<16x128xf32>
    %319 = arith.mulf %314, %318 : vector<16x128xf32>
    %320 = arith.truncf %319 : vector<16x128xf32> to vector<16x128xbf16>
    %321 = vector.extract_strided_slice %259 {offsets = [32, 0], sizes = [16, 512], strides = [1, 1]} : vector<128x512xf32> to vector<16x512xf32>
    %cst_78 = arith.constant dense<0.000000e+00> : vector<16x512xf32>
    %322 = tpu.matmul %320, %260, %cst_78 {dimension_numbers = #tpu.dot_dimension_numbers<[1], [0], [0], [1], [0, 0, 1, 1], [], []>} : vector<16x128xbf16>, vector<128x512xbf16>, vector<16x512xf32> -> vector<16x512xf32>
    %323 = arith.addf %321, %322 : vector<16x512xf32>
    %324 = vector.extract_strided_slice %323 {offsets = [0, 0], sizes = [16, 128], strides = [1, 1]} : vector<16x512xf32> to vector<16x128xf32>
    %325 = arith.negf %324 : vector<16x128xf32>
    %326 = math.exp %325 : vector<16x128xf32>
    %cst_79 = arith.constant 1.000000e+00 : f32
    %327 = vector.broadcast %cst_79 : f32 to vector<16x128xf32>
    %328 = arith.addf %327, %326 : vector<16x128xf32>
    %329 = arith.divf %327, %328 : vector<16x128xf32>
    %330 = vector.extract_strided_slice %323 {offsets = [0, 128], sizes = [16, 128], strides = [1, 1]} : vector<16x512xf32> to vector<16x128xf32>
    %331 = arith.negf %330 : vector<16x128xf32>
    %332 = math.exp %331 : vector<16x128xf32>
    %cst_80 = arith.constant 1.000000e+00 : f32
    %333 = vector.broadcast %cst_80 : f32 to vector<16x128xf32>
    %334 = arith.addf %333, %332 : vector<16x128xf32>
    %335 = arith.divf %333, %334 : vector<16x128xf32>
    %336 = vector.extract_strided_slice %323 {offsets = [0, 256], sizes = [16, 128], strides = [1, 1]} : vector<16x512xf32> to vector<16x128xf32>
    %337 = math.tanh %336 : vector<16x128xf32>
    %338 = vector.extract_strided_slice %323 {offsets = [0, 384], sizes = [16, 128], strides = [1, 1]} : vector<16x512xf32> to vector<16x128xf32>
    %339 = arith.negf %338 : vector<16x128xf32>
    %340 = math.exp %339 : vector<16x128xf32>
    %cst_81 = arith.constant 1.000000e+00 : f32
    %341 = vector.broadcast %cst_81 : f32 to vector<16x128xf32>
    %342 = arith.addf %341, %340 : vector<16x128xf32>
    %343 = arith.divf %341, %342 : vector<16x128xf32>
    %344 = arith.mulf %335, %317 : vector<16x128xf32>
    %345 = arith.mulf %329, %337 : vector<16x128xf32>
    %346 = arith.addf %344, %345 : vector<16x128xf32>
    %347 = math.tanh %346 : vector<16x128xf32>
    %348 = arith.mulf %343, %347 : vector<16x128xf32>
    %349 = arith.truncf %348 : vector<16x128xf32> to vector<16x128xbf16>
    %350 = vector.extract_strided_slice %259 {offsets = [48, 0], sizes = [16, 512], strides = [1, 1]} : vector<128x512xf32> to vector<16x512xf32>
    %cst_82 = arith.constant dense<0.000000e+00> : vector<16x512xf32>
    %351 = tpu.matmul %349, %260, %cst_82 {dimension_numbers = #tpu.dot_dimension_numbers<[1], [0], [0], [1], [0, 0, 1, 1], [], []>} : vector<16x128xbf16>, vector<128x512xbf16>, vector<16x512xf32> -> vector<16x512xf32>
    %352 = arith.addf %350, %351 : vector<16x512xf32>
    %353 = vector.extract_strided_slice %352 {offsets = [0, 0], sizes = [16, 128], strides = [1, 1]} : vector<16x512xf32> to vector<16x128xf32>
    %354 = arith.negf %353 : vector<16x128xf32>
    %355 = math.exp %354 : vector<16x128xf32>
    %cst_83 = arith.constant 1.000000e+00 : f32
    %356 = vector.broadcast %cst_83 : f32 to vector<16x128xf32>
    %357 = arith.addf %356, %355 : vector<16x128xf32>
    %358 = arith.divf %356, %357 : vector<16x128xf32>
    %359 = vector.extract_strided_slice %352 {offsets = [0, 128], sizes = [16, 128], strides = [1, 1]} : vector<16x512xf32> to vector<16x128xf32>
    %360 = arith.negf %359 : vector<16x128xf32>
    %361 = math.exp %360 : vector<16x128xf32>
    %cst_84 = arith.constant 1.000000e+00 : f32
    %362 = vector.broadcast %cst_84 : f32 to vector<16x128xf32>
    %363 = arith.addf %362, %361 : vector<16x128xf32>
    %364 = arith.divf %362, %363 : vector<16x128xf32>
    %365 = vector.extract_strided_slice %352 {offsets = [0, 256], sizes = [16, 128], strides = [1, 1]} : vector<16x512xf32> to vector<16x128xf32>
    %366 = math.tanh %365 : vector<16x128xf32>
    %367 = vector.extract_strided_slice %352 {offsets = [0, 384], sizes = [16, 128], strides = [1, 1]} : vector<16x512xf32> to vector<16x128xf32>
    %368 = arith.negf %367 : vector<16x128xf32>
    %369 = math.exp %368 : vector<16x128xf32>
    %cst_85 = arith.constant 1.000000e+00 : f32
    %370 = vector.broadcast %cst_85 : f32 to vector<16x128xf32>
    %371 = arith.addf %370, %369 : vector<16x128xf32>
    %372 = arith.divf %370, %371 : vector<16x128xf32>
    %373 = arith.mulf %364, %346 : vector<16x128xf32>
    %374 = arith.mulf %358, %366 : vector<16x128xf32>
    %375 = arith.addf %373, %374 : vector<16x128xf32>
    %376 = math.tanh %375 : vector<16x128xf32>
    %377 = arith.mulf %372, %376 : vector<16x128xf32>
    %378 = arith.truncf %377 : vector<16x128xf32> to vector<16x128xbf16>
    %379 = vector.extract_strided_slice %259 {offsets = [64, 0], sizes = [16, 512], strides = [1, 1]} : vector<128x512xf32> to vector<16x512xf32>
    %cst_86 = arith.constant dense<0.000000e+00> : vector<16x512xf32>
    %380 = tpu.matmul %378, %260, %cst_86 {dimension_numbers = #tpu.dot_dimension_numbers<[1], [0], [0], [1], [0, 0, 1, 1], [], []>} : vector<16x128xbf16>, vector<128x512xbf16>, vector<16x512xf32> -> vector<16x512xf32>
    %381 = arith.addf %379, %380 : vector<16x512xf32>
    %382 = vector.extract_strided_slice %381 {offsets = [0, 0], sizes = [16, 128], strides = [1, 1]} : vector<16x512xf32> to vector<16x128xf32>
    %383 = arith.negf %382 : vector<16x128xf32>
    %384 = math.exp %383 : vector<16x128xf32>
    %cst_87 = arith.constant 1.000000e+00 : f32
    %385 = vector.broadcast %cst_87 : f32 to vector<16x128xf32>
    %386 = arith.addf %385, %384 : vector<16x128xf32>
    %387 = arith.divf %385, %386 : vector<16x128xf32>
    %388 = vector.extract_strided_slice %381 {offsets = [0, 128], sizes = [16, 128], strides = [1, 1]} : vector<16x512xf32> to vector<16x128xf32>
    %389 = arith.negf %388 : vector<16x128xf32>
    %390 = math.exp %389 : vector<16x128xf32>
    %cst_88 = arith.constant 1.000000e+00 : f32
    %391 = vector.broadcast %cst_88 : f32 to vector<16x128xf32>
    %392 = arith.addf %391, %390 : vector<16x128xf32>
    %393 = arith.divf %391, %392 : vector<16x128xf32>
    %394 = vector.extract_strided_slice %381 {offsets = [0, 256], sizes = [16, 128], strides = [1, 1]} : vector<16x512xf32> to vector<16x128xf32>
    %395 = math.tanh %394 : vector<16x128xf32>
    %396 = vector.extract_strided_slice %381 {offsets = [0, 384], sizes = [16, 128], strides = [1, 1]} : vector<16x512xf32> to vector<16x128xf32>
    %397 = arith.negf %396 : vector<16x128xf32>
    %398 = math.exp %397 : vector<16x128xf32>
    %cst_89 = arith.constant 1.000000e+00 : f32
    %399 = vector.broadcast %cst_89 : f32 to vector<16x128xf32>
    %400 = arith.addf %399, %398 : vector<16x128xf32>
    %401 = arith.divf %399, %400 : vector<16x128xf32>
    %402 = arith.mulf %393, %375 : vector<16x128xf32>
    %403 = arith.mulf %387, %395 : vector<16x128xf32>
    %404 = arith.addf %402, %403 : vector<16x128xf32>
    %405 = math.tanh %404 : vector<16x128xf32>
    %406 = arith.mulf %401, %405 : vector<16x128xf32>
    %407 = arith.truncf %406 : vector<16x128xf32> to vector<16x128xbf16>
    %408 = vector.extract_strided_slice %259 {offsets = [80, 0], sizes = [16, 512], strides = [1, 1]} : vector<128x512xf32> to vector<16x512xf32>
    %cst_90 = arith.constant dense<0.000000e+00> : vector<16x512xf32>
    %409 = tpu.matmul %407, %260, %cst_90 {dimension_numbers = #tpu.dot_dimension_numbers<[1], [0], [0], [1], [0, 0, 1, 1], [], []>} : vector<16x128xbf16>, vector<128x512xbf16>, vector<16x512xf32> -> vector<16x512xf32>
    %410 = arith.addf %408, %409 : vector<16x512xf32>
    %411 = vector.extract_strided_slice %410 {offsets = [0, 0], sizes = [16, 128], strides = [1, 1]} : vector<16x512xf32> to vector<16x128xf32>
    %412 = arith.negf %411 : vector<16x128xf32>
    %413 = math.exp %412 : vector<16x128xf32>
    %cst_91 = arith.constant 1.000000e+00 : f32
    %414 = vector.broadcast %cst_91 : f32 to vector<16x128xf32>
    %415 = arith.addf %414, %413 : vector<16x128xf32>
    %416 = arith.divf %414, %415 : vector<16x128xf32>
    %417 = vector.extract_strided_slice %410 {offsets = [0, 128], sizes = [16, 128], strides = [1, 1]} : vector<16x512xf32> to vector<16x128xf32>
    %418 = arith.negf %417 : vector<16x128xf32>
    %419 = math.exp %418 : vector<16x128xf32>
    %cst_92 = arith.constant 1.000000e+00 : f32
    %420 = vector.broadcast %cst_92 : f32 to vector<16x128xf32>
    %421 = arith.addf %420, %419 : vector<16x128xf32>
    %422 = arith.divf %420, %421 : vector<16x128xf32>
    %423 = vector.extract_strided_slice %410 {offsets = [0, 256], sizes = [16, 128], strides = [1, 1]} : vector<16x512xf32> to vector<16x128xf32>
    %424 = math.tanh %423 : vector<16x128xf32>
    %425 = vector.extract_strided_slice %410 {offsets = [0, 384], sizes = [16, 128], strides = [1, 1]} : vector<16x512xf32> to vector<16x128xf32>
    %426 = arith.negf %425 : vector<16x128xf32>
    %427 = math.exp %426 : vector<16x128xf32>
    %cst_93 = arith.constant 1.000000e+00 : f32
    %428 = vector.broadcast %cst_93 : f32 to vector<16x128xf32>
    %429 = arith.addf %428, %427 : vector<16x128xf32>
    %430 = arith.divf %428, %429 : vector<16x128xf32>
    %431 = arith.mulf %422, %404 : vector<16x128xf32>
    %432 = arith.mulf %416, %424 : vector<16x128xf32>
    %433 = arith.addf %431, %432 : vector<16x128xf32>
    %434 = math.tanh %433 : vector<16x128xf32>
    %435 = arith.mulf %430, %434 : vector<16x128xf32>
    %436 = arith.truncf %435 : vector<16x128xf32> to vector<16x128xbf16>
    %437 = vector.extract_strided_slice %259 {offsets = [96, 0], sizes = [16, 512], strides = [1, 1]} : vector<128x512xf32> to vector<16x512xf32>
    %cst_94 = arith.constant dense<0.000000e+00> : vector<16x512xf32>
    %438 = tpu.matmul %436, %260, %cst_94 {dimension_numbers = #tpu.dot_dimension_numbers<[1], [0], [0], [1], [0, 0, 1, 1], [], []>} : vector<16x128xbf16>, vector<128x512xbf16>, vector<16x512xf32> -> vector<16x512xf32>
    %439 = arith.addf %437, %438 : vector<16x512xf32>
    %440 = vector.extract_strided_slice %439 {offsets = [0, 0], sizes = [16, 128], strides = [1, 1]} : vector<16x512xf32> to vector<16x128xf32>
    %441 = arith.negf %440 : vector<16x128xf32>
    %442 = math.exp %441 : vector<16x128xf32>
    %cst_95 = arith.constant 1.000000e+00 : f32
    %443 = vector.broadcast %cst_95 : f32 to vector<16x128xf32>
    %444 = arith.addf %443, %442 : vector<16x128xf32>
    %445 = arith.divf %443, %444 : vector<16x128xf32>
    %446 = vector.extract_strided_slice %439 {offsets = [0, 128], sizes = [16, 128], strides = [1, 1]} : vector<16x512xf32> to vector<16x128xf32>
    %447 = arith.negf %446 : vector<16x128xf32>
    %448 = math.exp %447 : vector<16x128xf32>
    %cst_96 = arith.constant 1.000000e+00 : f32
    %449 = vector.broadcast %cst_96 : f32 to vector<16x128xf32>
    %450 = arith.addf %449, %448 : vector<16x128xf32>
    %451 = arith.divf %449, %450 : vector<16x128xf32>
    %452 = vector.extract_strided_slice %439 {offsets = [0, 256], sizes = [16, 128], strides = [1, 1]} : vector<16x512xf32> to vector<16x128xf32>
    %453 = math.tanh %452 : vector<16x128xf32>
    %454 = vector.extract_strided_slice %439 {offsets = [0, 384], sizes = [16, 128], strides = [1, 1]} : vector<16x512xf32> to vector<16x128xf32>
    %455 = arith.negf %454 : vector<16x128xf32>
    %456 = math.exp %455 : vector<16x128xf32>
    %cst_97 = arith.constant 1.000000e+00 : f32
    %457 = vector.broadcast %cst_97 : f32 to vector<16x128xf32>
    %458 = arith.addf %457, %456 : vector<16x128xf32>
    %459 = arith.divf %457, %458 : vector<16x128xf32>
    %460 = arith.mulf %451, %433 : vector<16x128xf32>
    %461 = arith.mulf %445, %453 : vector<16x128xf32>
    %462 = arith.addf %460, %461 : vector<16x128xf32>
    %463 = math.tanh %462 : vector<16x128xf32>
    %464 = arith.mulf %459, %463 : vector<16x128xf32>
    %465 = arith.truncf %464 : vector<16x128xf32> to vector<16x128xbf16>
    %466 = vector.extract_strided_slice %259 {offsets = [112, 0], sizes = [16, 512], strides = [1, 1]} : vector<128x512xf32> to vector<16x512xf32>
    %cst_98 = arith.constant dense<0.000000e+00> : vector<16x512xf32>
    %467 = tpu.matmul %465, %260, %cst_98 {dimension_numbers = #tpu.dot_dimension_numbers<[1], [0], [0], [1], [0, 0, 1, 1], [], []>} : vector<16x128xbf16>, vector<128x512xbf16>, vector<16x512xf32> -> vector<16x512xf32>
    %468 = arith.addf %466, %467 : vector<16x512xf32>
    %469 = vector.extract_strided_slice %468 {offsets = [0, 0], sizes = [16, 128], strides = [1, 1]} : vector<16x512xf32> to vector<16x128xf32>
    %470 = arith.negf %469 : vector<16x128xf32>
    %471 = math.exp %470 : vector<16x128xf32>
    %cst_99 = arith.constant 1.000000e+00 : f32
    %472 = vector.broadcast %cst_99 : f32 to vector<16x128xf32>
    %473 = arith.addf %472, %471 : vector<16x128xf32>
    %474 = arith.divf %472, %473 : vector<16x128xf32>
    %475 = vector.extract_strided_slice %468 {offsets = [0, 128], sizes = [16, 128], strides = [1, 1]} : vector<16x512xf32> to vector<16x128xf32>
    %476 = arith.negf %475 : vector<16x128xf32>
    %477 = math.exp %476 : vector<16x128xf32>
    %cst_100 = arith.constant 1.000000e+00 : f32
    %478 = vector.broadcast %cst_100 : f32 to vector<16x128xf32>
    %479 = arith.addf %478, %477 : vector<16x128xf32>
    %480 = arith.divf %478, %479 : vector<16x128xf32>
    %481 = vector.extract_strided_slice %468 {offsets = [0, 256], sizes = [16, 128], strides = [1, 1]} : vector<16x512xf32> to vector<16x128xf32>
    %482 = math.tanh %481 : vector<16x128xf32>
    %483 = vector.extract_strided_slice %468 {offsets = [0, 384], sizes = [16, 128], strides = [1, 1]} : vector<16x512xf32> to vector<16x128xf32>
    %484 = arith.negf %483 : vector<16x128xf32>
    %485 = math.exp %484 : vector<16x128xf32>
    %cst_101 = arith.constant 1.000000e+00 : f32
    %486 = vector.broadcast %cst_101 : f32 to vector<16x128xf32>
    %487 = arith.addf %486, %485 : vector<16x128xf32>
    %488 = arith.divf %486, %487 : vector<16x128xf32>
    %489 = arith.mulf %480, %462 : vector<16x128xf32>
    %490 = arith.mulf %474, %482 : vector<16x128xf32>
    %491 = arith.addf %489, %490 : vector<16x128xf32>
    %492 = math.tanh %491 : vector<16x128xf32>
    %493 = arith.mulf %488, %492 : vector<16x128xf32>
    %494 = arith.truncf %493 : vector<16x128xf32> to vector<16x128xbf16>
    %c0_102 = arith.constant 0 : index
    %c0_103 = arith.constant 0 : index
    %495 = vector.load %arg12[%c0_102, %c0_103] : memref<16x128xbf16, #tpu.memory_space<vmem>>, vector<16x128xbf16>
    tpu.vector_store %arg12[%c0_102, %c0_103], %494 {strides = array<i32>} : memref<16x128xbf16, #tpu.memory_space<vmem>>, vector<16x128xbf16>,
    %c0_104 = arith.constant 0 : index
    %c0_105 = arith.constant 0 : index
    %496 = vector.load %arg14[%c0_104, %c0_105] : memref<16x128xf32, #tpu.memory_space<vmem>>, vector<16x128xf32>
    tpu.vector_store %arg14[%c0_104, %c0_105], %491 {strides = array<i32>} : memref<16x128xf32, #tpu.memory_space<vmem>>, vector<16x128xf32>,
    %c0_i32_106 = arith.constant 0 : i32
    %497 = arith.cmpi eq, %arg0, %c0_i32_106 : i32
    %498 = arith.extui %497 : i1 to i32
    %c0_i32_107 = arith.constant 0 : i32
    %499 = arith.cmpi ne, %498, %c0_i32_107 : i32
    scf.if %499 {
      %c0_108 = arith.constant 0 : index
      %c0_109 = arith.constant 0 : index
      %500 = vector.load %arg12[%c0_108, %c0_109] : memref<16x128xbf16, #tpu.memory_space<vmem>>, vector<16x128xbf16>
      %c0_110 = arith.constant 0 : index
      %c0_111 = arith.constant 0 : index
      %501 = vector.load %arg8[%c0_110, %c0_111] : memref<128x128xbf16, #tpu.memory_space<vmem>>, vector<128x128xbf16>
      %cst_112 = arith.constant dense<0.000000e+00> : vector<16x128xf32>
      %502 = tpu.matmul %500, %501, %cst_112 {dimension_numbers = #tpu.dot_dimension_numbers<[1], [0], [0], [1], [0, 0, 1, 1], [], []>} : vector<16x128xbf16>, vector<128x128xbf16>, vector<16x128xf32> -> vector<16x128xf32>
      %c0_113 = arith.constant 0 : index
      %c0_114 = arith.constant 0 : index
      %503 = vector.load %arg9[%c0_113, %c0_114] : memref<1x128xf32, #tpu.memory_space<vmem>>, vector<1x128xf32>
      %504 = vector.broadcast %503 : vector<1x128xf32> to vector<16x128xf32>
      %505 = arith.addf %502, %504 : vector<16x128xf32>
      %c0_115 = arith.constant 0 : index
      %c0_116 = arith.constant 0 : index
      %506 = vector.load %arg10[%c0_115, %c0_116] : memref<16x128xf32, #tpu.memory_space<vmem>>, vector<16x128xf32>
      tpu.vector_store %arg10[%c0_115, %c0_116], %505 {strides = array<i32>} : memref<16x128xf32, #tpu.memory_space<vmem>>, vector<16x128xf32>,
    } else {
    }
    return
  }
  func.func @transform_0(%arg0: i32) -> (i32, i32) {
    %c0_i32 = arith.constant 0 : i32
    %c0_i32_0 = arith.constant 0 : i32
    return %arg0, %c0_i32 : i32, i32
  }
  func.func @transform_1(%arg0: i32) -> (i32, i32) {
    %c0_i32 = arith.constant 0 : i32
    %c0_i32_0 = arith.constant 0 : i32
    %c0_i32_1 = arith.constant 0 : i32
    return %c0_i32, %c0_i32_0 : i32, i32
  }
  func.func @transform_2(%arg0: i32) -> (i32, i32) {
    %c0_i32 = arith.constant 0 : i32
    %c0_i32_0 = arith.constant 0 : i32
    %c0_i32_1 = arith.constant 0 : i32
    return %c0_i32, %c0_i32_0 : i32, i32
  }
  func.func @transform_3(%arg0: i32) -> (i32, i32) {
    %c0_i32 = arith.constant 0 : i32
    %c0_i32_0 = arith.constant 0 : i32
    %c0_i32_1 = arith.constant 0 : i32
    return %c0_i32, %c0_i32_0 : i32, i32
  }
  func.func @transform_4(%arg0: i32) -> (i32, i32) {
    %c0_i32 = arith.constant 0 : i32
    %c0_i32_0 = arith.constant 0 : i32
    %c0_i32_1 = arith.constant 0 : i32
    return %c0_i32, %c0_i32_0 : i32, i32
  }
  func.func @transform_5(%arg0: i32) -> (i32, i32) {
    %c0_i32 = arith.constant 0 : i32
    %c0_i32_0 = arith.constant 0 : i32
    %c0_i32_1 = arith.constant 0 : i32
    return %c0_i32, %c0_i32_0 : i32, i32
  }
  func.func @transform_6(%arg0: i32) -> (i32, i32) {
    %c0_i32 = arith.constant 0 : i32
    %c0_i32_0 = arith.constant 0 : i32
    %c0_i32_1 = arith.constant 0 : i32
    return %c0_i32, %c0_i32_0 : i32, i32
  }
  func.func @transform_7(%arg0: i32) -> (i32, i32) {
    %c0_i32 = arith.constant 0 : i32
    %c0_i32_0 = arith.constant 0 : i32
    %c0_i32_1 = arith.constant 0 : i32
    return %c0_i32, %c0_i32_0 : i32, i32
  }
  func.func @transform_8(%arg0: i32) -> (i32, i32) {
    %c0_i32 = arith.constant 0 : i32
    %c0_i32_0 = arith.constant 0 : i32
    %c0_i32_1 = arith.constant 0 : i32
    return %c0_i32, %c0_i32_0 : i32, i32
  }
  func.func @transform_9(%arg0: i32) -> (i32, i32) {
    %c0_i32 = arith.constant 0 : i32
    %c0_i32_0 = arith.constant 0 : i32
    %c0_i32_1 = arith.constant 0 : i32
    return %c0_i32, %c0_i32_0 : i32, i32
  }
}

module attributes {stable_mosaic.version = 11 : i64} {
  func.func @kernel(%arg0: i32, %arg1: memref<128x128xbf16, #tpu.memory_space<vmem>>, %arg2: memref<128x512xbf16, #tpu.memory_space<vmem>>, %arg3: memref<128x512xbf16, #tpu.memory_space<vmem>>, %arg4: memref<1x512xf32, #tpu.memory_space<vmem>>, %arg5: memref<128x512xbf16, #tpu.memory_space<vmem>>, %arg6: memref<128x512xbf16, #tpu.memory_space<vmem>>, %arg7: memref<1x512xf32, #tpu.memory_space<vmem>>, %arg8: memref<128x128xbf16, #tpu.memory_space<vmem>>, %arg9: memref<1x128xf32, #tpu.memory_space<vmem>>, %arg10: memref<16x128xf32, #tpu.memory_space<vmem>>, %arg11: memref<16x128xbf16, #tpu.memory_space<vmem>>, %arg12: memref<16x128xbf16, #tpu.memory_space<vmem>>, %arg13: memref<16x128xf32, #tpu.memory_space<vmem>>, %arg14: memref<16x128xf32, #tpu.memory_space<vmem>>, %arg15: memref<128x128xbf16, #tpu.memory_space<vmem>>) attributes {dimension_semantics = [#tpu.dimension_semantics<arbitrary>], iteration_bounds = array<i64: 1>, scalar_prefetch = 0 : i64, scratch_operands = 5 : i64, tpu.core_type = #tpu.core_type<tc>, window_params = [{transform_indices = @transform_0, window_bounds = array<i64: 128, 128>}, {pipeline_mode = #tpu.pipeline_mode<synchronous>, transform_indices = @transform_1, window_bounds = array<i64: 128, 512>}, {pipeline_mode = #tpu.pipeline_mode<synchronous>, transform_indices = @transform_2, window_bounds = array<i64: 128, 512>}, {pipeline_mode = #tpu.pipeline_mode<synchronous>, transform_indices = @transform_3, window_bounds = array<i64: 1, 512>}, {pipeline_mode = #tpu.pipeline_mode<synchronous>, transform_indices = @transform_4, window_bounds = array<i64: 128, 512>}, {pipeline_mode = #tpu.pipeline_mode<synchronous>, transform_indices = @transform_5, window_bounds = array<i64: 128, 512>}, {pipeline_mode = #tpu.pipeline_mode<synchronous>, transform_indices = @transform_6, window_bounds = array<i64: 1, 512>}, {pipeline_mode = #tpu.pipeline_mode<synchronous>, transform_indices = @transform_7, window_bounds = array<i64: 128, 128>}, {pipeline_mode = #tpu.pipeline_mode<synchronous>, transform_indices = @transform_8, window_bounds = array<i64: 1, 128>}, {pipeline_mode = #tpu.pipeline_mode<synchronous>, transform_indices = @transform_9, window_bounds = array<i64: 16, 128>}]} {
    %c0_i32 = arith.constant 0 : i32
    %0 = arith.cmpi eq, %arg0, %c0_i32 : i32
    %1 = arith.extui %0 : i1 to i32
    %c0_i32_0 = arith.constant 0 : i32
    %2 = arith.cmpi ne, %1, %c0_i32_0 : i32
    scf.if %2 {
      %cst_108 = arith.constant 0.000000e+00 : bf16
      %500 = vector.broadcast %cst_108 : bf16 to vector<16x128xbf16>
      %c0_109 = arith.constant 0 : index
      %c0_110 = arith.constant 0 : index
      %501 = vector.load %arg11[%c0_109, %c0_110] : memref<16x128xbf16, #tpu.memory_space<vmem>>, vector<16x128xbf16>
      tpu.vector_store %arg11[%c0_109, %c0_110], %500 {strides = array<i32>} : memref<16x128xbf16, #tpu.memory_space<vmem>>, vector<16x128xbf16>,
      %cst_111 = arith.constant 0.000000e+00 : f32
      %502 = vector.broadcast %cst_111 : f32 to vector<16x128xf32>
      %c0_112 = arith.constant 0 : index
      %c0_113 = arith.constant 0 : index
      %503 = vector.load %arg13[%c0_112, %c0_113] : memref<16x128xf32, #tpu.memory_space<vmem>>, vector<16x128xf32>
      tpu.vector_store %arg13[%c0_112, %c0_113], %502 {strides = array<i32>} : memref<16x128xf32, #tpu.memory_space<vmem>>, vector<16x128xf32>,
      %cst_114 = arith.constant 0.000000e+00 : bf16
      %504 = vector.broadcast %cst_114 : bf16 to vector<16x128xbf16>
      %c0_115 = arith.constant 0 : index
      %c0_116 = arith.constant 0 : index
      %505 = vector.load %arg12[%c0_115, %c0_116] : memref<16x128xbf16, #tpu.memory_space<vmem>>, vector<16x128xbf16>
      tpu.vector_store %arg12[%c0_115, %c0_116], %504 {strides = array<i32>} : memref<16x128xbf16, #tpu.memory_space<vmem>>, vector<16x128xbf16>,
      %cst_117 = arith.constant 0.000000e+00 : f32
      %506 = vector.broadcast %cst_117 : f32 to vector<16x128xf32>
      %c0_118 = arith.constant 0 : index
      %c0_119 = arith.constant 0 : index
      %507 = vector.load %arg14[%c0_118, %c0_119] : memref<16x128xf32, #tpu.memory_space<vmem>>, vector<16x128xf32>
      tpu.vector_store %arg14[%c0_118, %c0_119], %506 {strides = array<i32>} : memref<16x128xf32, #tpu.memory_space<vmem>>, vector<16x128xf32>,
      %cst_120 = arith.constant 0.000000e+00 : f32
      %508 = vector.broadcast %cst_120 : f32 to vector<16x128xf32>
      %c0_121 = arith.constant 0 : index
      %c0_122 = arith.constant 0 : index
      %509 = vector.load %arg10[%c0_121, %c0_122] : memref<16x128xf32, #tpu.memory_space<vmem>>, vector<16x128xf32>
      tpu.vector_store %arg10[%c0_121, %c0_122], %508 {strides = array<i32>} : memref<16x128xf32, #tpu.memory_space<vmem>>, vector<16x128xf32>,
    } else {
    }
    %c0 = arith.constant 0 : index
    %c0_1 = arith.constant 0 : index
    %3 = vector.load %arg1[%c0, %c0_1] : memref<128x128xbf16, #tpu.memory_space<vmem>>, vector<128x128xbf16>
    %c0_2 = arith.constant 0 : index
    %c0_3 = arith.constant 0 : index
    %4 = vector.load %arg2[%c0_2, %c0_3] : memref<128x512xbf16, #tpu.memory_space<vmem>>, vector<128x512xbf16>
    %cst = arith.constant dense<0.000000e+00> : vector<128x512xf32>
    %5 = tpu.matmul %3, %4, %cst {dimension_numbers = #tpu.dot_dimension_numbers<[1], [0], [0], [1], [0, 0, 1, 1], [], []>} : vector<128x128xbf16>, vector<128x512xbf16>, vector<128x512xf32> -> vector<128x512xf32>
    %c0_4 = arith.constant 0 : index
    %c0_5 = arith.constant 0 : index
    %6 = vector.load %arg4[%c0_4, %c0_5] : memref<1x512xf32, #tpu.memory_space<vmem>>, vector<1x512xf32>
    %7 = vector.broadcast %6 : vector<1x512xf32> to vector<128x512xf32>
    %8 = arith.addf %5, %7 : vector<128x512xf32>
    %c0_6 = arith.constant 0 : index
    %c0_7 = arith.constant 0 : index
    %9 = vector.load %arg3[%c0_6, %c0_7] : memref<128x512xbf16, #tpu.memory_space<vmem>>, vector<128x512xbf16>
    %c0_8 = arith.constant 0 : index
    %c0_9 = arith.constant 0 : index
    %10 = vector.load %arg11[%c0_8, %c0_9] : memref<16x128xbf16, #tpu.memory_space<vmem>>, vector<16x128xbf16>
    %c0_10 = arith.constant 0 : index
    %c0_11 = arith.constant 0 : index
    %11 = vector.load %arg13[%c0_10, %c0_11] : memref<16x128xf32, #tpu.memory_space<vmem>>, vector<16x128xf32>
    %12 = vector.extract_strided_slice %8 {offsets = [0, 0], sizes = [16, 512], strides = [1, 1]} : vector<128x512xf32> to vector<16x512xf32>
    %cst_12 = arith.constant dense<0.000000e+00> : vector<16x512xf32>
    %13 = tpu.matmul %10, %9, %cst_12 {dimension_numbers = #tpu.dot_dimension_numbers<[1], [0], [0], [1], [0, 0, 1, 1], [], []>} : vector<16x128xbf16>, vector<128x512xbf16>, vector<16x512xf32> -> vector<16x512xf32>
    %14 = arith.addf %12, %13 : vector<16x512xf32>
    %15 = vector.extract_strided_slice %14 {offsets = [0, 0], sizes = [16, 128], strides = [1, 1]} : vector<16x512xf32> to vector<16x128xf32>
    %16 = arith.negf %15 : vector<16x128xf32>
    %17 = math.exp %16 : vector<16x128xf32>
    %cst_13 = arith.constant 1.000000e+00 : f32
    %18 = vector.broadcast %cst_13 : f32 to vector<16x128xf32>
    %19 = arith.addf %18, %17 : vector<16x128xf32>
    %20 = arith.divf %18, %19 : vector<16x128xf32>
    %21 = vector.extract_strided_slice %14 {offsets = [0, 128], sizes = [16, 128], strides = [1, 1]} : vector<16x512xf32> to vector<16x128xf32>
    %22 = arith.negf %21 : vector<16x128xf32>
    %23 = math.exp %22 : vector<16x128xf32>
    %cst_14 = arith.constant 1.000000e+00 : f32
    %24 = vector.broadcast %cst_14 : f32 to vector<16x128xf32>
    %25 = arith.addf %24, %23 : vector<16x128xf32>
    %26 = arith.divf %24, %25 : vector<16x128xf32>
    %27 = vector.extract_strided_slice %14 {offsets = [0, 256], sizes = [16, 128], strides = [1, 1]} : vector<16x512xf32> to vector<16x128xf32>
    %28 = math.tanh %27 : vector<16x128xf32>
    %29 = vector.extract_strided_slice %14 {offsets = [0, 384], sizes = [16, 128], strides = [1, 1]} : vector<16x512xf32> to vector<16x128xf32>
    %30 = arith.negf %29 : vector<16x128xf32>
    %31 = math.exp %30 : vector<16x128xf32>
    %cst_15 = arith.constant 1.000000e+00 : f32
    %32 = vector.broadcast %cst_15 : f32 to vector<16x128xf32>
    %33 = arith.addf %32, %31 : vector<16x128xf32>
    %34 = arith.divf %32, %33 : vector<16x128xf32>
    %35 = arith.mulf %26, %11 : vector<16x128xf32>
    %36 = arith.mulf %20, %28 : vector<16x128xf32>
    %37 = arith.addf %35, %36 : vector<16x128xf32>
    %38 = math.tanh %37 : vector<16x128xf32>
    %39 = arith.mulf %34, %38 : vector<16x128xf32>
    %40 = arith.truncf %39 : vector<16x128xf32> to vector<16x128xbf16>
    %c0_16 = arith.constant 0 : index
    %c0_17 = arith.constant 0 : index
    %41 = vector.load %arg15[%c0_16, %c0_17] : memref<128x128xbf16, #tpu.memory_space<vmem>>, vector<16x128xbf16>
    tpu.vector_store %arg15[%c0_16, %c0_17], %40 {strides = array<i32>} : memref<128x128xbf16, #tpu.memory_space<vmem>>, vector<16x128xbf16>,
    %42 = vector.extract_strided_slice %8 {offsets = [16, 0], sizes = [16, 512], strides = [1, 1]} : vector<128x512xf32> to vector<16x512xf32>
    %cst_18 = arith.constant dense<0.000000e+00> : vector<16x512xf32>
    %43 = tpu.matmul %40, %9, %cst_18 {dimension_numbers = #tpu.dot_dimension_numbers<[1], [0], [0], [1], [0, 0, 1, 1], [], []>} : vector<16x128xbf16>, vector<128x512xbf16>, vector<16x512xf32> -> vector<16x512xf32>
    %44 = arith.addf %42, %43 : vector<16x512xf32>
    %45 = vector.extract_strided_slice %44 {offsets = [0, 0], sizes = [16, 128], strides = [1, 1]} : vector<16x512xf32> to vector<16x128xf32>
    %46 = arith.negf %45 : vector<16x128xf32>
    %47 = math.exp %46 : vector<16x128xf32>
    %cst_19 = arith.constant 1.000000e+00 : f32
    %48 = vector.broadcast %cst_19 : f32 to vector<16x128xf32>
    %49 = arith.addf %48, %47 : vector<16x128xf32>
    %50 = arith.divf %48, %49 : vector<16x128xf32>
    %51 = vector.extract_strided_slice %44 {offsets = [0, 128], sizes = [16, 128], strides = [1, 1]} : vector<16x512xf32> to vector<16x128xf32>
    %52 = arith.negf %51 : vector<16x128xf32>
    %53 = math.exp %52 : vector<16x128xf32>
    %cst_20 = arith.constant 1.000000e+00 : f32
    %54 = vector.broadcast %cst_20 : f32 to vector<16x128xf32>
    %55 = arith.addf %54, %53 : vector<16x128xf32>
    %56 = arith.divf %54, %55 : vector<16x128xf32>
    %57 = vector.extract_strided_slice %44 {offsets = [0, 256], sizes = [16, 128], strides = [1, 1]} : vector<16x512xf32> to vector<16x128xf32>
    %58 = math.tanh %57 : vector<16x128xf32>
    %59 = vector.extract_strided_slice %44 {offsets = [0, 384], sizes = [16, 128], strides = [1, 1]} : vector<16x512xf32> to vector<16x128xf32>
    %60 = arith.negf %59 : vector<16x128xf32>
    %61 = math.exp %60 : vector<16x128xf32>
    %cst_21 = arith.constant 1.000000e+00 : f32
    %62 = vector.broadcast %cst_21 : f32 to vector<16x128xf32>
    %63 = arith.addf %62, %61 : vector<16x128xf32>
    %64 = arith.divf %62, %63 : vector<16x128xf32>
    %65 = arith.mulf %56, %37 : vector<16x128xf32>
    %66 = arith.mulf %50, %58 : vector<16x128xf32>
    %67 = arith.addf %65, %66 : vector<16x128xf32>
    %68 = math.tanh %67 : vector<16x128xf32>
    %69 = arith.mulf %64, %68 : vector<16x128xf32>
    %70 = arith.truncf %69 : vector<16x128xf32> to vector<16x128xbf16>
    %c16 = arith.constant 16 : index
    %c0_22 = arith.constant 0 : index
    %71 = vector.load %arg15[%c16, %c0_22] : memref<128x128xbf16, #tpu.memory_space<vmem>>, vector<16x128xbf16>
    tpu.vector_store %arg15[%c16, %c0_22], %70 {strides = array<i32>} : memref<128x128xbf16, #tpu.memory_space<vmem>>, vector<16x128xbf16>,
    %72 = vector.extract_strided_slice %8 {offsets = [32, 0], sizes = [16, 512], strides = [1, 1]} : vector<128x512xf32> to vector<16x512xf32>
    %cst_23 = arith.constant dense<0.000000e+00> : vector<16x512xf32>
    %73 = tpu.matmul %70, %9, %cst_23 {dimension_numbers = #tpu.dot_dimension_numbers<[1], [0], [0], [1], [0, 0, 1, 1], [], []>} : vector<16x128xbf16>, vector<128x512xbf16>, vector<16x512xf32> -> vector<16x512xf32>
    %74 = arith.addf %72, %73 : vector<16x512xf32>
    %75 = vector.extract_strided_slice %74 {offsets = [0, 0], sizes = [16, 128], strides = [1, 1]} : vector<16x512xf32> to vector<16x128xf32>
    %76 = arith.negf %75 : vector<16x128xf32>
    %77 = math.exp %76 : vector<16x128xf32>
    %cst_24 = arith.constant 1.000000e+00 : f32
    %78 = vector.broadcast %cst_24 : f32 to vector<16x128xf32>
    %79 = arith.addf %78, %77 : vector<16x128xf32>
    %80 = arith.divf %78, %79 : vector<16x128xf32>
    %81 = vector.extract_strided_slice %74 {offsets = [0, 128], sizes = [16, 128], strides = [1, 1]} : vector<16x512xf32> to vector<16x128xf32>
    %82 = arith.negf %81 : vector<16x128xf32>
    %83 = math.exp %82 : vector<16x128xf32>
    %cst_25 = arith.constant 1.000000e+00 : f32
    %84 = vector.broadcast %cst_25 : f32 to vector<16x128xf32>
    %85 = arith.addf %84, %83 : vector<16x128xf32>
    %86 = arith.divf %84, %85 : vector<16x128xf32>
    %87 = vector.extract_strided_slice %74 {offsets = [0, 256], sizes = [16, 128], strides = [1, 1]} : vector<16x512xf32> to vector<16x128xf32>
    %88 = math.tanh %87 : vector<16x128xf32>
    %89 = vector.extract_strided_slice %74 {offsets = [0, 384], sizes = [16, 128], strides = [1, 1]} : vector<16x512xf32> to vector<16x128xf32>
    %90 = arith.negf %89 : vector<16x128xf32>
    %91 = math.exp %90 : vector<16x128xf32>
    %cst_26 = arith.constant 1.000000e+00 : f32
    %92 = vector.broadcast %cst_26 : f32 to vector<16x128xf32>
    %93 = arith.addf %92, %91 : vector<16x128xf32>
    %94 = arith.divf %92, %93 : vector<16x128xf32>
    %95 = arith.mulf %86, %67 : vector<16x128xf32>
    %96 = arith.mulf %80, %88 : vector<16x128xf32>
    %97 = arith.addf %95, %96 : vector<16x128xf32>
    %98 = math.tanh %97 : vector<16x128xf32>
    %99 = arith.mulf %94, %98 : vector<16x128xf32>
    %100 = arith.truncf %99 : vector<16x128xf32> to vector<16x128xbf16>
    %c32 = arith.constant 32 : index
    %c0_27 = arith.constant 0 : index
    %101 = vector.load %arg15[%c32, %c0_27] : memref<128x128xbf16, #tpu.memory_space<vmem>>, vector<16x128xbf16>
    tpu.vector_store %arg15[%c32, %c0_27], %100 {strides = array<i32>} : memref<128x128xbf16, #tpu.memory_space<vmem>>, vector<16x128xbf16>,
    %102 = vector.extract_strided_slice %8 {offsets = [48, 0], sizes = [16, 512], strides = [1, 1]} : vector<128x512xf32> to vector<16x512xf32>
    %cst_28 = arith.constant dense<0.000000e+00> : vector<16x512xf32>
    %103 = tpu.matmul %100, %9, %cst_28 {dimension_numbers = #tpu.dot_dimension_numbers<[1], [0], [0], [1], [0, 0, 1, 1], [], []>} : vector<16x128xbf16>, vector<128x512xbf16>, vector<16x512xf32> -> vector<16x512xf32>
    %104 = arith.addf %102, %103 : vector<16x512xf32>
    %105 = vector.extract_strided_slice %104 {offsets = [0, 0], sizes = [16, 128], strides = [1, 1]} : vector<16x512xf32> to vector<16x128xf32>
    %106 = arith.negf %105 : vector<16x128xf32>
    %107 = math.exp %106 : vector<16x128xf32>
    %cst_29 = arith.constant 1.000000e+00 : f32
    %108 = vector.broadcast %cst_29 : f32 to vector<16x128xf32>
    %109 = arith.addf %108, %107 : vector<16x128xf32>
    %110 = arith.divf %108, %109 : vector<16x128xf32>
    %111 = vector.extract_strided_slice %104 {offsets = [0, 128], sizes = [16, 128], strides = [1, 1]} : vector<16x512xf32> to vector<16x128xf32>
    %112 = arith.negf %111 : vector<16x128xf32>
    %113 = math.exp %112 : vector<16x128xf32>
    %cst_30 = arith.constant 1.000000e+00 : f32
    %114 = vector.broadcast %cst_30 : f32 to vector<16x128xf32>
    %115 = arith.addf %114, %113 : vector<16x128xf32>
    %116 = arith.divf %114, %115 : vector<16x128xf32>
    %117 = vector.extract_strided_slice %104 {offsets = [0, 256], sizes = [16, 128], strides = [1, 1]} : vector<16x512xf32> to vector<16x128xf32>
    %118 = math.tanh %117 : vector<16x128xf32>
    %119 = vector.extract_strided_slice %104 {offsets = [0, 384], sizes = [16, 128], strides = [1, 1]} : vector<16x512xf32> to vector<16x128xf32>
    %120 = arith.negf %119 : vector<16x128xf32>
    %121 = math.exp %120 : vector<16x128xf32>
    %cst_31 = arith.constant 1.000000e+00 : f32
    %122 = vector.broadcast %cst_31 : f32 to vector<16x128xf32>
    %123 = arith.addf %122, %121 : vector<16x128xf32>
    %124 = arith.divf %122, %123 : vector<16x128xf32>
    %125 = arith.mulf %116, %97 : vector<16x128xf32>
    %126 = arith.mulf %110, %118 : vector<16x128xf32>
    %127 = arith.addf %125, %126 : vector<16x128xf32>
    %128 = math.tanh %127 : vector<16x128xf32>
    %129 = arith.mulf %124, %128 : vector<16x128xf32>
    %130 = arith.truncf %129 : vector<16x128xf32> to vector<16x128xbf16>
    %c48 = arith.constant 48 : index
    %c0_32 = arith.constant 0 : index
    %131 = vector.load %arg15[%c48, %c0_32] : memref<128x128xbf16, #tpu.memory_space<vmem>>, vector<16x128xbf16>
    tpu.vector_store %arg15[%c48, %c0_32], %130 {strides = array<i32>} : memref<128x128xbf16, #tpu.memory_space<vmem>>, vector<16x128xbf16>,
    %132 = vector.extract_strided_slice %8 {offsets = [64, 0], sizes = [16, 512], strides = [1, 1]} : vector<128x512xf32> to vector<16x512xf32>
    %cst_33 = arith.constant dense<0.000000e+00> : vector<16x512xf32>
    %133 = tpu.matmul %130, %9, %cst_33 {dimension_numbers = #tpu.dot_dimension_numbers<[1], [0], [0], [1], [0, 0, 1, 1], [], []>} : vector<16x128xbf16>, vector<128x512xbf16>, vector<16x512xf32> -> vector<16x512xf32>
    %134 = arith.addf %132, %133 : vector<16x512xf32>
    %135 = vector.extract_strided_slice %134 {offsets = [0, 0], sizes = [16, 128], strides = [1, 1]} : vector<16x512xf32> to vector<16x128xf32>
    %136 = arith.negf %135 : vector<16x128xf32>
    %137 = math.exp %136 : vector<16x128xf32>
    %cst_34 = arith.constant 1.000000e+00 : f32
    %138 = vector.broadcast %cst_34 : f32 to vector<16x128xf32>
    %139 = arith.addf %138, %137 : vector<16x128xf32>
    %140 = arith.divf %138, %139 : vector<16x128xf32>
    %141 = vector.extract_strided_slice %134 {offsets = [0, 128], sizes = [16, 128], strides = [1, 1]} : vector<16x512xf32> to vector<16x128xf32>
    %142 = arith.negf %141 : vector<16x128xf32>
    %143 = math.exp %142 : vector<16x128xf32>
    %cst_35 = arith.constant 1.000000e+00 : f32
    %144 = vector.broadcast %cst_35 : f32 to vector<16x128xf32>
    %145 = arith.addf %144, %143 : vector<16x128xf32>
    %146 = arith.divf %144, %145 : vector<16x128xf32>
    %147 = vector.extract_strided_slice %134 {offsets = [0, 256], sizes = [16, 128], strides = [1, 1]} : vector<16x512xf32> to vector<16x128xf32>
    %148 = math.tanh %147 : vector<16x128xf32>
    %149 = vector.extract_strided_slice %134 {offsets = [0, 384], sizes = [16, 128], strides = [1, 1]} : vector<16x512xf32> to vector<16x128xf32>
    %150 = arith.negf %149 : vector<16x128xf32>
    %151 = math.exp %150 : vector<16x128xf32>
    %cst_36 = arith.constant 1.000000e+00 : f32
    %152 = vector.broadcast %cst_36 : f32 to vector<16x128xf32>
    %153 = arith.addf %152, %151 : vector<16x128xf32>
    %154 = arith.divf %152, %153 : vector<16x128xf32>
    %155 = arith.mulf %146, %127 : vector<16x128xf32>
    %156 = arith.mulf %140, %148 : vector<16x128xf32>
    %157 = arith.addf %155, %156 : vector<16x128xf32>
    %158 = math.tanh %157 : vector<16x128xf32>
    %159 = arith.mulf %154, %158 : vector<16x128xf32>
    %160 = arith.truncf %159 : vector<16x128xf32> to vector<16x128xbf16>
    %c64 = arith.constant 64 : index
    %c0_37 = arith.constant 0 : index
    %161 = vector.load %arg15[%c64, %c0_37] : memref<128x128xbf16, #tpu.memory_space<vmem>>, vector<16x128xbf16>
    tpu.vector_store %arg15[%c64, %c0_37], %160 {strides = array<i32>} : memref<128x128xbf16, #tpu.memory_space<vmem>>, vector<16x128xbf16>,
    %162 = vector.extract_strided_slice %8 {offsets = [80, 0], sizes = [16, 512], strides = [1, 1]} : vector<128x512xf32> to vector<16x512xf32>
    %cst_38 = arith.constant dense<0.000000e+00> : vector<16x512xf32>
    %163 = tpu.matmul %160, %9, %cst_38 {dimension_numbers = #tpu.dot_dimension_numbers<[1], [0], [0], [1], [0, 0, 1, 1], [], []>} : vector<16x128xbf16>, vector<128x512xbf16>, vector<16x512xf32> -> vector<16x512xf32>
    %164 = arith.addf %162, %163 : vector<16x512xf32>
    %165 = vector.extract_strided_slice %164 {offsets = [0, 0], sizes = [16, 128], strides = [1, 1]} : vector<16x512xf32> to vector<16x128xf32>
    %166 = arith.negf %165 : vector<16x128xf32>
    %167 = math.exp %166 : vector<16x128xf32>
    %cst_39 = arith.constant 1.000000e+00 : f32
    %168 = vector.broadcast %cst_39 : f32 to vector<16x128xf32>
    %169 = arith.addf %168, %167 : vector<16x128xf32>
    %170 = arith.divf %168, %169 : vector<16x128xf32>
    %171 = vector.extract_strided_slice %164 {offsets = [0, 128], sizes = [16, 128], strides = [1, 1]} : vector<16x512xf32> to vector<16x128xf32>
    %172 = arith.negf %171 : vector<16x128xf32>
    %173 = math.exp %172 : vector<16x128xf32>
    %cst_40 = arith.constant 1.000000e+00 : f32
    %174 = vector.broadcast %cst_40 : f32 to vector<16x128xf32>
    %175 = arith.addf %174, %173 : vector<16x128xf32>
    %176 = arith.divf %174, %175 : vector<16x128xf32>
    %177 = vector.extract_strided_slice %164 {offsets = [0, 256], sizes = [16, 128], strides = [1, 1]} : vector<16x512xf32> to vector<16x128xf32>
    %178 = math.tanh %177 : vector<16x128xf32>
    %179 = vector.extract_strided_slice %164 {offsets = [0, 384], sizes = [16, 128], strides = [1, 1]} : vector<16x512xf32> to vector<16x128xf32>
    %180 = arith.negf %179 : vector<16x128xf32>
    %181 = math.exp %180 : vector<16x128xf32>
    %cst_41 = arith.constant 1.000000e+00 : f32
    %182 = vector.broadcast %cst_41 : f32 to vector<16x128xf32>
    %183 = arith.addf %182, %181 : vector<16x128xf32>
    %184 = arith.divf %182, %183 : vector<16x128xf32>
    %185 = arith.mulf %176, %157 : vector<16x128xf32>
    %186 = arith.mulf %170, %178 : vector<16x128xf32>
    %187 = arith.addf %185, %186 : vector<16x128xf32>
    %188 = math.tanh %187 : vector<16x128xf32>
    %189 = arith.mulf %184, %188 : vector<16x128xf32>
    %190 = arith.truncf %189 : vector<16x128xf32> to vector<16x128xbf16>
    %c80 = arith.constant 80 : index
    %c0_42 = arith.constant 0 : index
    %191 = vector.load %arg15[%c80, %c0_42] : memref<128x128xbf16, #tpu.memory_space<vmem>>, vector<16x128xbf16>
    tpu.vector_store %arg15[%c80, %c0_42], %190 {strides = array<i32>} : memref<128x128xbf16, #tpu.memory_space<vmem>>, vector<16x128xbf16>,
    %192 = vector.extract_strided_slice %8 {offsets = [96, 0], sizes = [16, 512], strides = [1, 1]} : vector<128x512xf32> to vector<16x512xf32>
    %cst_43 = arith.constant dense<0.000000e+00> : vector<16x512xf32>
    %193 = tpu.matmul %190, %9, %cst_43 {dimension_numbers = #tpu.dot_dimension_numbers<[1], [0], [0], [1], [0, 0, 1, 1], [], []>} : vector<16x128xbf16>, vector<128x512xbf16>, vector<16x512xf32> -> vector<16x512xf32>
    %194 = arith.addf %192, %193 : vector<16x512xf32>
    %195 = vector.extract_strided_slice %194 {offsets = [0, 0], sizes = [16, 128], strides = [1, 1]} : vector<16x512xf32> to vector<16x128xf32>
    %196 = arith.negf %195 : vector<16x128xf32>
    %197 = math.exp %196 : vector<16x128xf32>
    %cst_44 = arith.constant 1.000000e+00 : f32
    %198 = vector.broadcast %cst_44 : f32 to vector<16x128xf32>
    %199 = arith.addf %198, %197 : vector<16x128xf32>
    %200 = arith.divf %198, %199 : vector<16x128xf32>
    %201 = vector.extract_strided_slice %194 {offsets = [0, 128], sizes = [16, 128], strides = [1, 1]} : vector<16x512xf32> to vector<16x128xf32>
    %202 = arith.negf %201 : vector<16x128xf32>
    %203 = math.exp %202 : vector<16x128xf32>
    %cst_45 = arith.constant 1.000000e+00 : f32
    %204 = vector.broadcast %cst_45 : f32 to vector<16x128xf32>
    %205 = arith.addf %204, %203 : vector<16x128xf32>
    %206 = arith.divf %204, %205 : vector<16x128xf32>
    %207 = vector.extract_strided_slice %194 {offsets = [0, 256], sizes = [16, 128], strides = [1, 1]} : vector<16x512xf32> to vector<16x128xf32>
    %208 = math.tanh %207 : vector<16x128xf32>
    %209 = vector.extract_strided_slice %194 {offsets = [0, 384], sizes = [16, 128], strides = [1, 1]} : vector<16x512xf32> to vector<16x128xf32>
    %210 = arith.negf %209 : vector<16x128xf32>
    %211 = math.exp %210 : vector<16x128xf32>
    %cst_46 = arith.constant 1.000000e+00 : f32
    %212 = vector.broadcast %cst_46 : f32 to vector<16x128xf32>
    %213 = arith.addf %212, %211 : vector<16x128xf32>
    %214 = arith.divf %212, %213 : vector<16x128xf32>
    %215 = arith.mulf %206, %187 : vector<16x128xf32>
    %216 = arith.mulf %200, %208 : vector<16x128xf32>
    %217 = arith.addf %215, %216 : vector<16x128xf32>
    %218 = math.tanh %217 : vector<16x128xf32>
    %219 = arith.mulf %214, %218 : vector<16x128xf32>
    %220 = arith.truncf %219 : vector<16x128xf32> to vector<16x128xbf16>
    %c96 = arith.constant 96 : index
    %c0_47 = arith.constant 0 : index
    %221 = vector.load %arg15[%c96, %c0_47] : memref<128x128xbf16, #tpu.memory_space<vmem>>, vector<16x128xbf16>
    tpu.vector_store %arg15[%c96, %c0_47], %220 {strides = array<i32>} : memref<128x128xbf16, #tpu.memory_space<vmem>>, vector<16x128xbf16>,
    %222 = vector.extract_strided_slice %8 {offsets = [112, 0], sizes = [16, 512], strides = [1, 1]} : vector<128x512xf32> to vector<16x512xf32>
    %cst_48 = arith.constant dense<0.000000e+00> : vector<16x512xf32>
    %223 = tpu.matmul %220, %9, %cst_48 {dimension_numbers = #tpu.dot_dimension_numbers<[1], [0], [0], [1], [0, 0, 1, 1], [], []>} : vector<16x128xbf16>, vector<128x512xbf16>, vector<16x512xf32> -> vector<16x512xf32>
    %224 = arith.addf %222, %223 : vector<16x512xf32>
    %225 = vector.extract_strided_slice %224 {offsets = [0, 0], sizes = [16, 128], strides = [1, 1]} : vector<16x512xf32> to vector<16x128xf32>
    %226 = arith.negf %225 : vector<16x128xf32>
    %227 = math.exp %226 : vector<16x128xf32>
    %cst_49 = arith.constant 1.000000e+00 : f32
    %228 = vector.broadcast %cst_49 : f32 to vector<16x128xf32>
    %229 = arith.addf %228, %227 : vector<16x128xf32>
    %230 = arith.divf %228, %229 : vector<16x128xf32>
    %231 = vector.extract_strided_slice %224 {offsets = [0, 128], sizes = [16, 128], strides = [1, 1]} : vector<16x512xf32> to vector<16x128xf32>
    %232 = arith.negf %231 : vector<16x128xf32>
    %233 = math.exp %232 : vector<16x128xf32>
    %cst_50 = arith.constant 1.000000e+00 : f32
    %234 = vector.broadcast %cst_50 : f32 to vector<16x128xf32>
    %235 = arith.addf %234, %233 : vector<16x128xf32>
    %236 = arith.divf %234, %235 : vector<16x128xf32>
    %237 = vector.extract_strided_slice %224 {offsets = [0, 256], sizes = [16, 128], strides = [1, 1]} : vector<16x512xf32> to vector<16x128xf32>
    %238 = math.tanh %237 : vector<16x128xf32>
    %239 = vector.extract_strided_slice %224 {offsets = [0, 384], sizes = [16, 128], strides = [1, 1]} : vector<16x512xf32> to vector<16x128xf32>
    %240 = arith.negf %239 : vector<16x128xf32>
    %241 = math.exp %240 : vector<16x128xf32>
    %cst_51 = arith.constant 1.000000e+00 : f32
    %242 = vector.broadcast %cst_51 : f32 to vector<16x128xf32>
    %243 = arith.addf %242, %241 : vector<16x128xf32>
    %244 = arith.divf %242, %243 : vector<16x128xf32>
    %245 = arith.mulf %236, %217 : vector<16x128xf32>
    %246 = arith.mulf %230, %238 : vector<16x128xf32>
    %247 = arith.addf %245, %246 : vector<16x128xf32>
    %248 = math.tanh %247 : vector<16x128xf32>
    %249 = arith.mulf %244, %248 : vector<16x128xf32>
    %250 = arith.truncf %249 : vector<16x128xf32> to vector<16x128xbf16>
    %c112 = arith.constant 112 : index
    %c0_52 = arith.constant 0 : index
    %251 = vector.load %arg15[%c112, %c0_52] : memref<128x128xbf16, #tpu.memory_space<vmem>>, vector<16x128xbf16>
    tpu.vector_store %arg15[%c112, %c0_52], %250 {strides = array<i32>} : memref<128x128xbf16, #tpu.memory_space<vmem>>, vector<16x128xbf16>,
    %c0_53 = arith.constant 0 : index
    %c0_54 = arith.constant 0 : index
    %252 = vector.load %arg11[%c0_53, %c0_54] : memref<16x128xbf16, #tpu.memory_space<vmem>>, vector<16x128xbf16>
    tpu.vector_store %arg11[%c0_53, %c0_54], %250 {strides = array<i32>} : memref<16x128xbf16, #tpu.memory_space<vmem>>, vector<16x128xbf16>,
    %c0_55 = arith.constant 0 : index
    %c0_56 = arith.constant 0 : index
    %253 = vector.load %arg13[%c0_55, %c0_56] : memref<16x128xf32, #tpu.memory_space<vmem>>, vector<16x128xf32>
    tpu.vector_store %arg13[%c0_55, %c0_56], %247 {strides = array<i32>} : memref<16x128xf32, #tpu.memory_space<vmem>>, vector<16x128xf32>,
    %c0_57 = arith.constant 0 : index
    %c0_58 = arith.constant 0 : index
    %254 = vector.load %arg15[%c0_57, %c0_58] : memref<128x128xbf16, #tpu.memory_space<vmem>>, vector<128x128xbf16>
    %c0_59 = arith.constant 0 : index
    %c0_60 = arith.constant 0 : index
    %255 = vector.load %arg5[%c0_59, %c0_60] : memref<128x512xbf16, #tpu.memory_space<vmem>>, vector<128x512xbf16>
    %cst_61 = arith.constant dense<0.000000e+00> : vector<128x512xf32>
    %256 = tpu.matmul %254, %255, %cst_61 {dimension_numbers = #tpu.dot_dimension_numbers<[1], [0], [0], [1], [0, 0, 1, 1], [], []>} : vector<128x128xbf16>, vector<128x512xbf16>, vector<128x512xf32> -> vector<128x512xf32>
    %c0_62 = arith.constant 0 : index
    %c0_63 = arith.constant 0 : index
    %257 = vector.load %arg7[%c0_62, %c0_63] : memref<1x512xf32, #tpu.memory_space<vmem>>, vector<1x512xf32>
    %258 = vector.broadcast %257 : vector<1x512xf32> to vector<128x512xf32>
    %259 = arith.addf %256, %258 : vector<128x512xf32>
    %c0_64 = arith.constant 0 : index
    %c0_65 = arith.constant 0 : index
    %260 = vector.load %arg6[%c0_64, %c0_65] : memref<128x512xbf16, #tpu.memory_space<vmem>>, vector<128x512xbf16>
    %c0_66 = arith.constant 0 : index
    %c0_67 = arith.constant 0 : index
    %261 = vector.load %arg12[%c0_66, %c0_67] : memref<16x128xbf16, #tpu.memory_space<vmem>>, vector<16x128xbf16>
    %c0_68 = arith.constant 0 : index
    %c0_69 = arith.constant 0 : index
    %262 = vector.load %arg14[%c0_68, %c0_69] : memref<16x128xf32, #tpu.memory_space<vmem>>, vector<16x128xf32>
    %263 = vector.extract_strided_slice %259 {offsets = [0, 0], sizes = [16, 512], strides = [1, 1]} : vector<128x512xf32> to vector<16x512xf32>
    %cst_70 = arith.constant dense<0.000000e+00> : vector<16x512xf32>
    %264 = tpu.matmul %261, %260, %cst_70 {dimension_numbers = #tpu.dot_dimension_numbers<[1], [0], [0], [1], [0, 0, 1, 1], [], []>} : vector<16x128xbf16>, vector<128x512xbf16>, vector<16x512xf32> -> vector<16x512xf32>
    %265 = arith.addf %263, %264 : vector<16x512xf32>
    %266 = vector.extract_strided_slice %265 {offsets = [0, 0], sizes = [16, 128], strides = [1, 1]} : vector<16x512xf32> to vector<16x128xf32>
    %267 = arith.negf %266 : vector<16x128xf32>
    %268 = math.exp %267 : vector<16x128xf32>
    %cst_71 = arith.constant 1.000000e+00 : f32
    %269 = vector.broadcast %cst_71 : f32 to vector<16x128xf32>
    %270 = arith.addf %269, %268 : vector<16x128xf32>
    %271 = arith.divf %269, %270 : vector<16x128xf32>
    %272 = vector.extract_strided_slice %265 {offsets = [0, 128], sizes = [16, 128], strides = [1, 1]} : vector<16x512xf32> to vector<16x128xf32>
    %273 = arith.negf %272 : vector<16x128xf32>
    %274 = math.exp %273 : vector<16x128xf32>
    %cst_72 = arith.constant 1.000000e+00 : f32
    %275 = vector.broadcast %cst_72 : f32 to vector<16x128xf32>
    %276 = arith.addf %275, %274 : vector<16x128xf32>
    %277 = arith.divf %275, %276 : vector<16x128xf32>
    %278 = vector.extract_strided_slice %265 {offsets = [0, 256], sizes = [16, 128], strides = [1, 1]} : vector<16x512xf32> to vector<16x128xf32>
    %279 = math.tanh %278 : vector<16x128xf32>
    %280 = vector.extract_strided_slice %265 {offsets = [0, 384], sizes = [16, 128], strides = [1, 1]} : vector<16x512xf32> to vector<16x128xf32>
    %281 = arith.negf %280 : vector<16x128xf32>
    %282 = math.exp %281 : vector<16x128xf32>
    %cst_73 = arith.constant 1.000000e+00 : f32
    %283 = vector.broadcast %cst_73 : f32 to vector<16x128xf32>
    %284 = arith.addf %283, %282 : vector<16x128xf32>
    %285 = arith.divf %283, %284 : vector<16x128xf32>
    %286 = arith.mulf %277, %262 : vector<16x128xf32>
    %287 = arith.mulf %271, %279 : vector<16x128xf32>
    %288 = arith.addf %286, %287 : vector<16x128xf32>
    %289 = math.tanh %288 : vector<16x128xf32>
    %290 = arith.mulf %285, %289 : vector<16x128xf32>
    %291 = arith.truncf %290 : vector<16x128xf32> to vector<16x128xbf16>
    %292 = vector.extract_strided_slice %259 {offsets = [16, 0], sizes = [16, 512], strides = [1, 1]} : vector<128x512xf32> to vector<16x512xf32>
    %cst_74 = arith.constant dense<0.000000e+00> : vector<16x512xf32>
    %293 = tpu.matmul %291, %260, %cst_74 {dimension_numbers = #tpu.dot_dimension_numbers<[1], [0], [0], [1], [0, 0, 1, 1], [], []>} : vector<16x128xbf16>, vector<128x512xbf16>, vector<16x512xf32> -> vector<16x512xf32>
    %294 = arith.addf %292, %293 : vector<16x512xf32>
    %295 = vector.extract_strided_slice %294 {offsets = [0, 0], sizes = [16, 128], strides = [1, 1]} : vector<16x512xf32> to vector<16x128xf32>
    %296 = arith.negf %295 : vector<16x128xf32>
    %297 = math.exp %296 : vector<16x128xf32>
    %cst_75 = arith.constant 1.000000e+00 : f32
    %298 = vector.broadcast %cst_75 : f32 to vector<16x128xf32>
    %299 = arith.addf %298, %297 : vector<16x128xf32>
    %300 = arith.divf %298, %299 : vector<16x128xf32>
    %301 = vector.extract_strided_slice %294 {offsets = [0, 128], sizes = [16, 128], strides = [1, 1]} : vector<16x512xf32> to vector<16x128xf32>
    %302 = arith.negf %301 : vector<16x128xf32>
    %303 = math.exp %302 : vector<16x128xf32>
    %cst_76 = arith.constant 1.000000e+00 : f32
    %304 = vector.broadcast %cst_76 : f32 to vector<16x128xf32>
    %305 = arith.addf %304, %303 : vector<16x128xf32>
    %306 = arith.divf %304, %305 : vector<16x128xf32>
    %307 = vector.extract_strided_slice %294 {offsets = [0, 256], sizes = [16, 128], strides = [1, 1]} : vector<16x512xf32> to vector<16x128xf32>
    %308 = math.tanh %307 : vector<16x128xf32>
    %309 = vector.extract_strided_slice %294 {offsets = [0, 384], sizes = [16, 128], strides = [1, 1]} : vector<16x512xf32> to vector<16x128xf32>
    %310 = arith.negf %309 : vector<16x128xf32>
    %311 = math.exp %310 : vector<16x128xf32>
    %cst_77 = arith.constant 1.000000e+00 : f32
    %312 = vector.broadcast %cst_77 : f32 to vector<16x128xf32>
    %313 = arith.addf %312, %311 : vector<16x128xf32>
    %314 = arith.divf %312, %313 : vector<16x128xf32>
    %315 = arith.mulf %306, %288 : vector<16x128xf32>
    %316 = arith.mulf %300, %308 : vector<16x128xf32>
    %317 = arith.addf %315, %316 : vector<16x128xf32>
    %318 = math.tanh %317 : vector<16x128xf32>
    %319 = arith.mulf %314, %318 : vector<16x128xf32>
    %320 = arith.truncf %319 : vector<16x128xf32> to vector<16x128xbf16>
    %321 = vector.extract_strided_slice %259 {offsets = [32, 0], sizes = [16, 512], strides = [1, 1]} : vector<128x512xf32> to vector<16x512xf32>
    %cst_78 = arith.constant dense<0.000000e+00> : vector<16x512xf32>
    %322 = tpu.matmul %320, %260, %cst_78 {dimension_numbers = #tpu.dot_dimension_numbers<[1], [0], [0], [1], [0, 0, 1, 1], [], []>} : vector<16x128xbf16>, vector<128x512xbf16>, vector<16x512xf32> -> vector<16x512xf32>
    %323 = arith.addf %321, %322 : vector<16x512xf32>
    %324 = vector.extract_strided_slice %323 {offsets = [0, 0], sizes = [16, 128], strides = [1, 1]} : vector<16x512xf32> to vector<16x128xf32>
    %325 = arith.negf %324 : vector<16x128xf32>
    %326 = math.exp %325 : vector<16x128xf32>
    %cst_79 = arith.constant 1.000000e+00 : f32
    %327 = vector.broadcast %cst_79 : f32 to vector<16x128xf32>
    %328 = arith.addf %327, %326 : vector<16x128xf32>
    %329 = arith.divf %327, %328 : vector<16x128xf32>
    %330 = vector.extract_strided_slice %323 {offsets = [0, 128], sizes = [16, 128], strides = [1, 1]} : vector<16x512xf32> to vector<16x128xf32>
    %331 = arith.negf %330 : vector<16x128xf32>
    %332 = math.exp %331 : vector<16x128xf32>
    %cst_80 = arith.constant 1.000000e+00 : f32
    %333 = vector.broadcast %cst_80 : f32 to vector<16x128xf32>
    %334 = arith.addf %333, %332 : vector<16x128xf32>
    %335 = arith.divf %333, %334 : vector<16x128xf32>
    %336 = vector.extract_strided_slice %323 {offsets = [0, 256], sizes = [16, 128], strides = [1, 1]} : vector<16x512xf32> to vector<16x128xf32>
    %337 = math.tanh %336 : vector<16x128xf32>
    %338 = vector.extract_strided_slice %323 {offsets = [0, 384], sizes = [16, 128], strides = [1, 1]} : vector<16x512xf32> to vector<16x128xf32>
    %339 = arith.negf %338 : vector<16x128xf32>
    %340 = math.exp %339 : vector<16x128xf32>
    %cst_81 = arith.constant 1.000000e+00 : f32
    %341 = vector.broadcast %cst_81 : f32 to vector<16x128xf32>
    %342 = arith.addf %341, %340 : vector<16x128xf32>
    %343 = arith.divf %341, %342 : vector<16x128xf32>
    %344 = arith.mulf %335, %317 : vector<16x128xf32>
    %345 = arith.mulf %329, %337 : vector<16x128xf32>
    %346 = arith.addf %344, %345 : vector<16x128xf32>
    %347 = math.tanh %346 : vector<16x128xf32>
    %348 = arith.mulf %343, %347 : vector<16x128xf32>
    %349 = arith.truncf %348 : vector<16x128xf32> to vector<16x128xbf16>
    %350 = vector.extract_strided_slice %259 {offsets = [48, 0], sizes = [16, 512], strides = [1, 1]} : vector<128x512xf32> to vector<16x512xf32>
    %cst_82 = arith.constant dense<0.000000e+00> : vector<16x512xf32>
    %351 = tpu.matmul %349, %260, %cst_82 {dimension_numbers = #tpu.dot_dimension_numbers<[1], [0], [0], [1], [0, 0, 1, 1], [], []>} : vector<16x128xbf16>, vector<128x512xbf16>, vector<16x512xf32> -> vector<16x512xf32>
    %352 = arith.addf %350, %351 : vector<16x512xf32>
    %353 = vector.extract_strided_slice %352 {offsets = [0, 0], sizes = [16, 128], strides = [1, 1]} : vector<16x512xf32> to vector<16x128xf32>
    %354 = arith.negf %353 : vector<16x128xf32>
    %355 = math.exp %354 : vector<16x128xf32>
    %cst_83 = arith.constant 1.000000e+00 : f32
    %356 = vector.broadcast %cst_83 : f32 to vector<16x128xf32>
    %357 = arith.addf %356, %355 : vector<16x128xf32>
    %358 = arith.divf %356, %357 : vector<16x128xf32>
    %359 = vector.extract_strided_slice %352 {offsets = [0, 128], sizes = [16, 128], strides = [1, 1]} : vector<16x512xf32> to vector<16x128xf32>
    %360 = arith.negf %359 : vector<16x128xf32>
    %361 = math.exp %360 : vector<16x128xf32>
    %cst_84 = arith.constant 1.000000e+00 : f32
    %362 = vector.broadcast %cst_84 : f32 to vector<16x128xf32>
    %363 = arith.addf %362, %361 : vector<16x128xf32>
    %364 = arith.divf %362, %363 : vector<16x128xf32>
    %365 = vector.extract_strided_slice %352 {offsets = [0, 256], sizes = [16, 128], strides = [1, 1]} : vector<16x512xf32> to vector<16x128xf32>
    %366 = math.tanh %365 : vector<16x128xf32>
    %367 = vector.extract_strided_slice %352 {offsets = [0, 384], sizes = [16, 128], strides = [1, 1]} : vector<16x512xf32> to vector<16x128xf32>
    %368 = arith.negf %367 : vector<16x128xf32>
    %369 = math.exp %368 : vector<16x128xf32>
    %cst_85 = arith.constant 1.000000e+00 : f32
    %370 = vector.broadcast %cst_85 : f32 to vector<16x128xf32>
    %371 = arith.addf %370, %369 : vector<16x128xf32>
    %372 = arith.divf %370, %371 : vector<16x128xf32>
    %373 = arith.mulf %364, %346 : vector<16x128xf32>
    %374 = arith.mulf %358, %366 : vector<16x128xf32>
    %375 = arith.addf %373, %374 : vector<16x128xf32>
    %376 = math.tanh %375 : vector<16x128xf32>
    %377 = arith.mulf %372, %376 : vector<16x128xf32>
    %378 = arith.truncf %377 : vector<16x128xf32> to vector<16x128xbf16>
    %379 = vector.extract_strided_slice %259 {offsets = [64, 0], sizes = [16, 512], strides = [1, 1]} : vector<128x512xf32> to vector<16x512xf32>
    %cst_86 = arith.constant dense<0.000000e+00> : vector<16x512xf32>
    %380 = tpu.matmul %378, %260, %cst_86 {dimension_numbers = #tpu.dot_dimension_numbers<[1], [0], [0], [1], [0, 0, 1, 1], [], []>} : vector<16x128xbf16>, vector<128x512xbf16>, vector<16x512xf32> -> vector<16x512xf32>
    %381 = arith.addf %379, %380 : vector<16x512xf32>
    %382 = vector.extract_strided_slice %381 {offsets = [0, 0], sizes = [16, 128], strides = [1, 1]} : vector<16x512xf32> to vector<16x128xf32>
    %383 = arith.negf %382 : vector<16x128xf32>
    %384 = math.exp %383 : vector<16x128xf32>
    %cst_87 = arith.constant 1.000000e+00 : f32
    %385 = vector.broadcast %cst_87 : f32 to vector<16x128xf32>
    %386 = arith.addf %385, %384 : vector<16x128xf32>
    %387 = arith.divf %385, %386 : vector<16x128xf32>
    %388 = vector.extract_strided_slice %381 {offsets = [0, 128], sizes = [16, 128], strides = [1, 1]} : vector<16x512xf32> to vector<16x128xf32>
    %389 = arith.negf %388 : vector<16x128xf32>
    %390 = math.exp %389 : vector<16x128xf32>
    %cst_88 = arith.constant 1.000000e+00 : f32
    %391 = vector.broadcast %cst_88 : f32 to vector<16x128xf32>
    %392 = arith.addf %391, %390 : vector<16x128xf32>
    %393 = arith.divf %391, %392 : vector<16x128xf32>
    %394 = vector.extract_strided_slice %381 {offsets = [0, 256], sizes = [16, 128], strides = [1, 1]} : vector<16x512xf32> to vector<16x128xf32>
    %395 = math.tanh %394 : vector<16x128xf32>
    %396 = vector.extract_strided_slice %381 {offsets = [0, 384], sizes = [16, 128], strides = [1, 1]} : vector<16x512xf32> to vector<16x128xf32>
    %397 = arith.negf %396 : vector<16x128xf32>
    %398 = math.exp %397 : vector<16x128xf32>
    %cst_89 = arith.constant 1.000000e+00 : f32
    %399 = vector.broadcast %cst_89 : f32 to vector<16x128xf32>
    %400 = arith.addf %399, %398 : vector<16x128xf32>
    %401 = arith.divf %399, %400 : vector<16x128xf32>
    %402 = arith.mulf %393, %375 : vector<16x128xf32>
    %403 = arith.mulf %387, %395 : vector<16x128xf32>
    %404 = arith.addf %402, %403 : vector<16x128xf32>
    %405 = math.tanh %404 : vector<16x128xf32>
    %406 = arith.mulf %401, %405 : vector<16x128xf32>
    %407 = arith.truncf %406 : vector<16x128xf32> to vector<16x128xbf16>
    %408 = vector.extract_strided_slice %259 {offsets = [80, 0], sizes = [16, 512], strides = [1, 1]} : vector<128x512xf32> to vector<16x512xf32>
    %cst_90 = arith.constant dense<0.000000e+00> : vector<16x512xf32>
    %409 = tpu.matmul %407, %260, %cst_90 {dimension_numbers = #tpu.dot_dimension_numbers<[1], [0], [0], [1], [0, 0, 1, 1], [], []>} : vector<16x128xbf16>, vector<128x512xbf16>, vector<16x512xf32> -> vector<16x512xf32>
    %410 = arith.addf %408, %409 : vector<16x512xf32>
    %411 = vector.extract_strided_slice %410 {offsets = [0, 0], sizes = [16, 128], strides = [1, 1]} : vector<16x512xf32> to vector<16x128xf32>
    %412 = arith.negf %411 : vector<16x128xf32>
    %413 = math.exp %412 : vector<16x128xf32>
    %cst_91 = arith.constant 1.000000e+00 : f32
    %414 = vector.broadcast %cst_91 : f32 to vector<16x128xf32>
    %415 = arith.addf %414, %413 : vector<16x128xf32>
    %416 = arith.divf %414, %415 : vector<16x128xf32>
    %417 = vector.extract_strided_slice %410 {offsets = [0, 128], sizes = [16, 128], strides = [1, 1]} : vector<16x512xf32> to vector<16x128xf32>
    %418 = arith.negf %417 : vector<16x128xf32>
    %419 = math.exp %418 : vector<16x128xf32>
    %cst_92 = arith.constant 1.000000e+00 : f32
    %420 = vector.broadcast %cst_92 : f32 to vector<16x128xf32>
    %421 = arith.addf %420, %419 : vector<16x128xf32>
    %422 = arith.divf %420, %421 : vector<16x128xf32>
    %423 = vector.extract_strided_slice %410 {offsets = [0, 256], sizes = [16, 128], strides = [1, 1]} : vector<16x512xf32> to vector<16x128xf32>
    %424 = math.tanh %423 : vector<16x128xf32>
    %425 = vector.extract_strided_slice %410 {offsets = [0, 384], sizes = [16, 128], strides = [1, 1]} : vector<16x512xf32> to vector<16x128xf32>
    %426 = arith.negf %425 : vector<16x128xf32>
    %427 = math.exp %426 : vector<16x128xf32>
    %cst_93 = arith.constant 1.000000e+00 : f32
    %428 = vector.broadcast %cst_93 : f32 to vector<16x128xf32>
    %429 = arith.addf %428, %427 : vector<16x128xf32>
    %430 = arith.divf %428, %429 : vector<16x128xf32>
    %431 = arith.mulf %422, %404 : vector<16x128xf32>
    %432 = arith.mulf %416, %424 : vector<16x128xf32>
    %433 = arith.addf %431, %432 : vector<16x128xf32>
    %434 = math.tanh %433 : vector<16x128xf32>
    %435 = arith.mulf %430, %434 : vector<16x128xf32>
    %436 = arith.truncf %435 : vector<16x128xf32> to vector<16x128xbf16>
    %437 = vector.extract_strided_slice %259 {offsets = [96, 0], sizes = [16, 512], strides = [1, 1]} : vector<128x512xf32> to vector<16x512xf32>
    %cst_94 = arith.constant dense<0.000000e+00> : vector<16x512xf32>
    %438 = tpu.matmul %436, %260, %cst_94 {dimension_numbers = #tpu.dot_dimension_numbers<[1], [0], [0], [1], [0, 0, 1, 1], [], []>} : vector<16x128xbf16>, vector<128x512xbf16>, vector<16x512xf32> -> vector<16x512xf32>
    %439 = arith.addf %437, %438 : vector<16x512xf32>
    %440 = vector.extract_strided_slice %439 {offsets = [0, 0], sizes = [16, 128], strides = [1, 1]} : vector<16x512xf32> to vector<16x128xf32>
    %441 = arith.negf %440 : vector<16x128xf32>
    %442 = math.exp %441 : vector<16x128xf32>
    %cst_95 = arith.constant 1.000000e+00 : f32
    %443 = vector.broadcast %cst_95 : f32 to vector<16x128xf32>
    %444 = arith.addf %443, %442 : vector<16x128xf32>
    %445 = arith.divf %443, %444 : vector<16x128xf32>
    %446 = vector.extract_strided_slice %439 {offsets = [0, 128], sizes = [16, 128], strides = [1, 1]} : vector<16x512xf32> to vector<16x128xf32>
    %447 = arith.negf %446 : vector<16x128xf32>
    %448 = math.exp %447 : vector<16x128xf32>
    %cst_96 = arith.constant 1.000000e+00 : f32
    %449 = vector.broadcast %cst_96 : f32 to vector<16x128xf32>
    %450 = arith.addf %449, %448 : vector<16x128xf32>
    %451 = arith.divf %449, %450 : vector<16x128xf32>
    %452 = vector.extract_strided_slice %439 {offsets = [0, 256], sizes = [16, 128], strides = [1, 1]} : vector<16x512xf32> to vector<16x128xf32>
    %453 = math.tanh %452 : vector<16x128xf32>
    %454 = vector.extract_strided_slice %439 {offsets = [0, 384], sizes = [16, 128], strides = [1, 1]} : vector<16x512xf32> to vector<16x128xf32>
    %455 = arith.negf %454 : vector<16x128xf32>
    %456 = math.exp %455 : vector<16x128xf32>
    %cst_97 = arith.constant 1.000000e+00 : f32
    %457 = vector.broadcast %cst_97 : f32 to vector<16x128xf32>
    %458 = arith.addf %457, %456 : vector<16x128xf32>
    %459 = arith.divf %457, %458 : vector<16x128xf32>
    %460 = arith.mulf %451, %433 : vector<16x128xf32>
    %461 = arith.mulf %445, %453 : vector<16x128xf32>
    %462 = arith.addf %460, %461 : vector<16x128xf32>
    %463 = math.tanh %462 : vector<16x128xf32>
    %464 = arith.mulf %459, %463 : vector<16x128xf32>
    %465 = arith.truncf %464 : vector<16x128xf32> to vector<16x128xbf16>
    %466 = vector.extract_strided_slice %259 {offsets = [112, 0], sizes = [16, 512], strides = [1, 1]} : vector<128x512xf32> to vector<16x512xf32>
    %cst_98 = arith.constant dense<0.000000e+00> : vector<16x512xf32>
    %467 = tpu.matmul %465, %260, %cst_98 {dimension_numbers = #tpu.dot_dimension_numbers<[1], [0], [0], [1], [0, 0, 1, 1], [], []>} : vector<16x128xbf16>, vector<128x512xbf16>, vector<16x512xf32> -> vector<16x512xf32>
    %468 = arith.addf %466, %467 : vector<16x512xf32>
    %469 = vector.extract_strided_slice %468 {offsets = [0, 0], sizes = [16, 128], strides = [1, 1]} : vector<16x512xf32> to vector<16x128xf32>
    %470 = arith.negf %469 : vector<16x128xf32>
    %471 = math.exp %470 : vector<16x128xf32>
    %cst_99 = arith.constant 1.000000e+00 : f32
    %472 = vector.broadcast %cst_99 : f32 to vector<16x128xf32>
    %473 = arith.addf %472, %471 : vector<16x128xf32>
    %474 = arith.divf %472, %473 : vector<16x128xf32>
    %475 = vector.extract_strided_slice %468 {offsets = [0, 128], sizes = [16, 128], strides = [1, 1]} : vector<16x512xf32> to vector<16x128xf32>
    %476 = arith.negf %475 : vector<16x128xf32>
    %477 = math.exp %476 : vector<16x128xf32>
    %cst_100 = arith.constant 1.000000e+00 : f32
    %478 = vector.broadcast %cst_100 : f32 to vector<16x128xf32>
    %479 = arith.addf %478, %477 : vector<16x128xf32>
    %480 = arith.divf %478, %479 : vector<16x128xf32>
    %481 = vector.extract_strided_slice %468 {offsets = [0, 256], sizes = [16, 128], strides = [1, 1]} : vector<16x512xf32> to vector<16x128xf32>
    %482 = math.tanh %481 : vector<16x128xf32>
    %483 = vector.extract_strided_slice %468 {offsets = [0, 384], sizes = [16, 128], strides = [1, 1]} : vector<16x512xf32> to vector<16x128xf32>
    %484 = arith.negf %483 : vector<16x128xf32>
    %485 = math.exp %484 : vector<16x128xf32>
    %cst_101 = arith.constant 1.000000e+00 : f32
    %486 = vector.broadcast %cst_101 : f32 to vector<16x128xf32>
    %487 = arith.addf %486, %485 : vector<16x128xf32>
    %488 = arith.divf %486, %487 : vector<16x128xf32>
    %489 = arith.mulf %480, %462 : vector<16x128xf32>
    %490 = arith.mulf %474, %482 : vector<16x128xf32>
    %491 = arith.addf %489, %490 : vector<16x128xf32>
    %492 = math.tanh %491 : vector<16x128xf32>
    %493 = arith.mulf %488, %492 : vector<16x128xf32>
    %494 = arith.truncf %493 : vector<16x128xf32> to vector<16x128xbf16>
    %c0_102 = arith.constant 0 : index
    %c0_103 = arith.constant 0 : index
    %495 = vector.load %arg12[%c0_102, %c0_103] : memref<16x128xbf16, #tpu.memory_space<vmem>>, vector<16x128xbf16>
    tpu.vector_store %arg12[%c0_102, %c0_103], %494 {strides = array<i32>} : memref<16x128xbf16, #tpu.memory_space<vmem>>, vector<16x128xbf16>,
    %c0_104 = arith.constant 0 : index
    %c0_105 = arith.constant 0 : index
    %496 = vector.load %arg14[%c0_104, %c0_105] : memref<16x128xf32, #tpu.memory_space<vmem>>, vector<16x128xf32>
    tpu.vector_store %arg14[%c0_104, %c0_105], %491 {strides = array<i32>} : memref<16x128xf32, #tpu.memory_space<vmem>>, vector<16x128xf32>,
    %c0_i32_106 = arith.constant 0 : i32
    %497 = arith.cmpi eq, %arg0, %c0_i32_106 : i32
    %498 = arith.extui %497 : i1 to i32
    %c0_i32_107 = arith.constant 0 : i32
    %499 = arith.cmpi ne, %498, %c0_i32_107 : i32
    scf.if %499 {
      %c0_108 = arith.constant 0 : index
      %c0_109 = arith.constant 0 : index
      %500 = vector.load %arg12[%c0_108, %c0_109] : memref<16x128xbf16, #tpu.memory_space<vmem>>, vector<16x128xbf16>
      %c0_110 = arith.constant 0 : index
      %c0_111 = arith.constant 0 : index
      %501 = vector.load %arg8[%c0_110, %c0_111] : memref<128x128xbf16, #tpu.memory_space<vmem>>, vector<128x128xbf16>
      %cst_112 = arith.constant dense<0.000000e+00> : vector<16x128xf32>
      %502 = tpu.matmul %500, %501, %cst_112 {dimension_numbers = #tpu.dot_dimension_numbers<[1], [0], [0], [1], [0, 0, 1, 1], [], []>} : vector<16x128xbf16>, vector<128x128xbf16>, vector<16x128xf32> -> vector<16x128xf32>
      %c0_113 = arith.constant 0 : index
      %c0_114 = arith.constant 0 : index
      %503 = vector.load %arg9[%c0_113, %c0_114] : memref<1x128xf32, #tpu.memory_space<vmem>>, vector<1x128xf32>
      %504 = vector.broadcast %503 : vector<1x128xf32> to vector<16x128xf32>
      %505 = arith.addf %502, %504 : vector<16x128xf32>
      %c0_115 = arith.constant 0 : index
      %c0_116 = arith.constant 0 : index
      %506 = vector.load %arg10[%c0_115, %c0_116] : memref<16x128xf32, #tpu.memory_space<vmem>>, vector<16x128xf32>
      tpu.vector_store %arg10[%c0_115, %c0_116], %505 {strides = array<i32>} : memref<16x128xf32, #tpu.memory_space<vmem>>, vector<16x128xf32>,
    } else {
    }
    return
  }
  func.func @transform_0(%arg0: i32) -> (i32, i32) {
    %c0_i32 = arith.constant 0 : i32
    %c0_i32_0 = arith.constant 0 : i32
    return %arg0, %c0_i32 : i32, i32
  }
  func.func @transform_1(%arg0: i32) -> (i32, i32) {
    %c0_i32 = arith.constant 0 : i32
    %c0_i32_0 = arith.constant 0 : i32
    %c0_i32_1 = arith.constant 0 : i32
    return %c0_i32, %c0_i32_0 : i32, i32
  }
  func.func @transform_2(%arg0: i32) -> (i32, i32) {
    %c0_i32 = arith.constant 0 : i32
    %c0_i32_0 = arith.constant 0 : i32
    %c0_i32_1 = arith.constant 0 : i32
    return %c0_i32, %c0_i32_0 : i32, i32
  }
  func.func @transform_3(%arg0: i32) -> (i32, i32) {
    %c0_i32 = arith.constant 0 : i32
    %c0_i32_0 = arith.constant 0 : i32
    %c0_i32_1 = arith.constant 0 : i32
    return %c0_i32, %c0_i32_0 : i32, i32
  }
  func.func @transform_4(%arg0: i32) -> (i32, i32) {
    %c0_i32 = arith.constant 0 : i32
    %c0_i32_0 = arith.constant 0 : i32
    %c0_i32_1 = arith.constant 0 : i32
    return %c0_i32, %c0_i32_0 : i32, i32
  }
  func.func @transform_5(%arg0: i32) -> (i32, i32) {
    %c0_i32 = arith.constant 0 : i32
    %c0_i32_0 = arith.constant 0 : i32
    %c0_i32_1 = arith.constant 0 : i32
    return %c0_i32, %c0_i32_0 : i32, i32
  }
  func.func @transform_6(%arg0: i32) -> (i32, i32) {
    %c0_i32 = arith.constant 0 : i32
    %c0_i32_0 = arith.constant 0 : i32
    %c0_i32_1 = arith.constant 0 : i32
    return %c0_i32, %c0_i32_0 : i32, i32
  }
  func.func @transform_7(%arg0: i32) -> (i32, i32) {
    %c0_i32 = arith.constant 0 : i32
    %c0_i32_0 = arith.constant 0 : i32
    %c0_i32_1 = arith.constant 0 : i32
    return %c0_i32, %c0_i32_0 : i32, i32
  }
  func.func @transform_8(%arg0: i32) -> (i32, i32) {
    %c0_i32 = arith.constant 0 : i32
    %c0_i32_0 = arith.constant 0 : i32
    %c0_i32_1 = arith.constant 0 : i32
    return %c0_i32, %c0_i32_0 : i32, i32
  }
  func.func @transform_9(%arg0: i32) -> (i32, i32) {
    %c0_i32 = arith.constant 0 : i32
    %c0_i32_0 = arith.constant 0 : i32
    %c0_i32_1 = arith.constant 0 : i32
    return %c0_i32, %c0_i32_0 : i32, i32
  }
}

</mosaic_0001>

<llo_original>
// kernel: _lambda_.1
$region0: #{_lambda_.1}
  #allocation0 [shape = 'u32[]', space=smem, size = 0x4, offset = 0x4, fixed_abs, tag = 'smem constant byte address 0x4 - core index']
  #allocation1 [shape = 'u32[144,128]{1,0:T(1,128)}', space=vmem, size = 0x12000, scoped, tag = 'internal scratch']
  #allocation2 [shape = 'bf16[16,128]{1,0:T(16,128)(2,1)}', space=vmem, size = 0x1000, scoped, tag = 'scratch operand']
  #allocation3 [shape = 'bf16[16,128]{1,0:T(16,128)(2,1)}', space=vmem, size = 0x1000, scoped, tag = 'scratch operand']
  #allocation4 [shape = 'f32[16,128]{1,0:T(8,128)}', space=vmem, size = 0x2000, scoped, tag = 'scratch operand']
  #allocation5 [shape = 'f32[16,128]{1,0:T(8,128)}', space=vmem, size = 0x2000, scoped, tag = 'scratch operand']
  #allocation6 [shape = 'bf16[128,128]{1,0:T(16,128)(2,1)}', space=vmem, size = 0x8000, scoped, tag = 'scratch operand']
  %s0 = inlined_call_operand.vmem [shape: bf16[128,128], index: 0, kind: input, shape index: {}]
  %s1 = inlined_call_operand.vmem [shape: bf16[128,512], index: 1, kind: input, shape index: {}]
  %s2 = inlined_call_operand.vmem [shape: bf16[128,512], index: 2, kind: input, shape index: {}]
  %s3 = inlined_call_operand.vmem [shape: f32[1,512], index: 3, kind: input, shape index: {}]
  %s4 = inlined_call_operand.vmem [shape: bf16[128,512], index: 4, kind: input, shape index: {}]
  %s5 = inlined_call_operand.vmem [shape: bf16[128,512], index: 5, kind: input, shape index: {}]
  %s6 = inlined_call_operand.vmem [shape: f32[1,512], index: 6, kind: input, shape index: {}]
  %s7 = inlined_call_operand.vmem [shape: bf16[128,128], index: 7, kind: input, shape index: {}]
  %s8 = inlined_call_operand.vmem [shape: f32[1,128], index: 8, kind: input, shape index: {}]
  %s9 = inlined_call_operand.vmem [shape: f32[16,128], index: 9, kind: output, shape index: {}]
  %s10 = sld [smem:[#allocation0]]
  $region54: #{_lambda_.1} parent=0
    _
  %s12 = ssub.s32 1, %s10
  %s13 = scalar_select 0, %s12, %s10
  // Predicated region
  $region2: #{_lambda_.1} parent=0 // pred_check
    _
  $region3: #{_lambda_.1} parent=0 // pred_check_branch
    %15 = sbr.rel (0) target = $region5
  $region4: #{_lambda_.1} parent=0 // pred_region
    _
  $region5: #{_lambda_.1} parent=0 // pred_fallthru
    _
  // Predicated region
  $region6: #{_lambda_.1} parent=0 // pred_check
    _
  $region7: #{_lambda_.1} parent=0 // pred_check_branch
    %17 = sbr.rel (0) target = $region9
  $region8: #{_lambda_.1} parent=0 // pred_region
    _
  $region9: #{_lambda_.1} parent=0 // pred_fallthru
    _
  // Predicated region
  $region10: #{_lambda_.1} parent=0 // pred_check
    _
  $region11: #{_lambda_.1} parent=0 // pred_check_branch
    %19 = sbr.rel (0) target = $region13
  $region12: #{_lambda_.1} parent=0 // pred_region
    _
  $region13: #{_lambda_.1} parent=0 // pred_fallthru
    _
  // Predicated region
  $region14: #{_lambda_.1} parent=0 // pred_check
    _
  $region15: #{_lambda_.1} parent=0 // pred_check_branch
    %21 = sbr.rel (0) target = $region17
  $region16: #{_lambda_.1} parent=0 // pred_region
    _
  $region17: #{_lambda_.1} parent=0 // pred_fallthru
    _
  // Predicated region
  $region18: #{_lambda_.1} parent=0 // pred_check
    _
  $region19: #{_lambda_.1} parent=0 // pred_check_branch
    %23 = sbr.rel (0) target = $region21
  $region20: #{_lambda_.1} parent=0 // pred_region
    _
  $region21: #{_lambda_.1} parent=0 // pred_fallthru
    _
  // Predicated region
  $region22: #{_lambda_.1} parent=0 // pred_check
    _
  $region23: #{_lambda_.1} parent=0 // pred_check_branch
    %25 = sbr.rel (0) target = $region25
  $region24: #{_lambda_.1} parent=0 // pred_region
    _
  $region25: #{_lambda_.1} parent=0 // pred_fallthru
    _
  // Predicated region
  $region26: #{_lambda_.1} parent=0 // pred_check
    _
  $region27: #{_lambda_.1} parent=0 // pred_check_branch
    %27 = sbr.rel (0) target = $region29
  $region28: #{_lambda_.1} parent=0 // pred_region
    _
  $region29: #{_lambda_.1} parent=0 // pred_fallthru
    _
  // Predicated region
  $region30: #{_lambda_.1} parent=0 // pred_check
    _
  $region31: #{_lambda_.1} parent=0 // pred_check_branch
    %29 = sbr.rel (0) target = $region33
  $region32: #{_lambda_.1} parent=0 // pred_region
    _
  $region33: #{_lambda_.1} parent=0 // pred_fallthru
    _
  // Predicated region
  $region34: #{_lambda_.1} parent=0 // pred_check
    _
  $region35: #{_lambda_.1} parent=0 // pred_check_branch
    %31 = sbr.rel (0) target = $region37
  $region36: #{_lambda_.1} parent=0 // pred_region
    _
  $region37: #{_lambda_.1} parent=0 // pred_fallthru
    _
  %p33 = scmp.eq.s32.totalorder 0, 0
  // Predicated region
  $region38: #{_lambda_.1} parent=0 // pred_check
    %p34 = pneg %p33
  $region39: #{_lambda_.1} parent=0 // pred_check_branch
    %36 = sbr.rel (%p34) target = $region41
  $region40: #{_lambda_.1} parent=0 // pred_region
    %37 = vst [vmem:[#allocation2] sm:$0xff] 0
    %38 = vst [vmem:[#allocation4] sm:$0xff] 0.0
    %39 = vst [vmem:[#allocation4 + $0x8] sm:$0xff] 0.0
    %40 = vst [vmem:[#allocation3] sm:$0xff] 0
    %41 = vst [vmem:[#allocation5] sm:$0xff] 0.0
    %42 = vst [vmem:[#allocation5 + $0x8] sm:$0xff] 0.0
    %43 = vst [vmem:[%s9] sm:$0xff] 0.0
    %44 = vst [vmem:[%s9 + $0x8] sm:$0xff] 0.0
  $region41: #{_lambda_.1} parent=0 // pred_fallthru
    _
  %v45 = vld [vmem:[%s0] sm:$0xf]
  %v46 = vld [vmem:[%s0 + $0x4] sm:$0xf]
  %v47 = vld [vmem:[%s0 + $0x8] sm:$0xf]
  %v48 = vld [vmem:[%s0 + $0xc] sm:$0xf]
  %v49 = vld [vmem:[%s0 + $0x10] sm:$0xf]
  %v50 = vld [vmem:[%s0 + $0x14] sm:$0xf]
  %v51 = vld [vmem:[%s0 + $0x18] sm:$0xf]
  %v52 = vld [vmem:[%s0 + $0x1c] sm:$0xf]
  %v53 = vld [vmem:[%s0 + $0x20] sm:$0xf]
  %v54 = vld [vmem:[%s0 + $0x24] sm:$0xf]
  %v55 = vld [vmem:[%s0 + $0x28] sm:$0xf]
  %v56 = vld [vmem:[%s0 + $0x2c] sm:$0xf]
  %v57 = vld [vmem:[%s0 + $0x30] sm:$0xf]
  %v58 = vld [vmem:[%s0 + $0x34] sm:$0xf]
  %v59 = vld [vmem:[%s0 + $0x38] sm:$0xf]
  %v60 = vld [vmem:[%s0 + $0x3c] sm:$0xf]
  %v61 = vld [vmem:[%s1] sm:$0xff]
  %v62 = vld [vmem:[%s1 + $0x8] sm:$0xff]
  %v63 = vld [vmem:[%s1 + $0x10] sm:$0xff]
  %v64 = vld [vmem:[%s1 + $0x18] sm:$0xff]
  %v65 = vld [vmem:[%s1 + $0x20] sm:$0xff]
  %v66 = vld [vmem:[%s1 + $0x28] sm:$0xff]
  %v67 = vld [vmem:[%s1 + $0x30] sm:$0xff]
  %v68 = vld [vmem:[%s1 + $0x38] sm:$0xff]
  %v69 = vld [vmem:[%s1 + $0x40] sm:$0xff]
  %v70 = vld [vmem:[%s1 + $0x48] sm:$0xff]
  %v71 = vld [vmem:[%s1 + $0x50] sm:$0xff]
  %v72 = vld [vmem:[%s1 + $0x58] sm:$0xff]
  %v73 = vld [vmem:[%s1 + $0x60] sm:$0xff]
  %v74 = vld [vmem:[%s1 + $0x68] sm:$0xff]
  %v75 = vld [vmem:[%s1 + $0x70] sm:$0xff]
  %v76 = vld [vmem:[%s1 + $0x78] sm:$0xff]
  %v77 = vld [vmem:[%s1 + $0x80] sm:$0xff]
  %v78 = vld [vmem:[%s1 + $0x88] sm:$0xff]
  %v79 = vld [vmem:[%s1 + $0x90] sm:$0xff]
  %v80 = vld [vmem:[%s1 + $0x98] sm:$0xff]
  %v81 = vld [vmem:[%s1 + $0xa0] sm:$0xff]
  %v82 = vld [vmem:[%s1 + $0xa8] sm:$0xff]
  %v83 = vld [vmem:[%s1 + $0xb0] sm:$0xff]
  %v84 = vld [vmem:[%s1 + $0xb8] sm:$0xff]
  %v85 = vld [vmem:[%s1 + $0xc0] sm:$0xff]
  %v86 = vld [vmem:[%s1 + $0xc8] sm:$0xff]
  %v87 = vld [vmem:[%s1 + $0xd0] sm:$0xff]
  %v88 = vld [vmem:[%s1 + $0xd8] sm:$0xff]
  %v89 = vld [vmem:[%s1 + $0xe0] sm:$0xff]
  %v90 = vld [vmem:[%s1 + $0xe8] sm:$0xff]
  %v91 = vld [vmem:[%s1 + $0xf0] sm:$0xff]
  %v92 = vld [vmem:[%s1 + $0xf8] sm:$0xff]
  %v93 = vld [vmem:[%s3] sm:$0xf]
  %v95 = vlaneseq
  %v96 = vshrl.u32 %v95, 7
  %v97 = vsub.s32 0, %v96
  %v98 = vrot.slane %v93, %v97
  %v99 = vlaneseq
  %v100 = vshrl.u32 %v99, 7
  %v101 = vsub.s32 1, %v100
  %v102 = vrot.slane %v93, %v101
  %v103 = vlaneseq
  %v104 = vshrl.u32 %v103, 7
  %v105 = vsub.s32 2, %v104
  %v106 = vrot.slane %v93, %v105
  %v107 = vlaneseq
  %v108 = vshrl.u32 %v107, 7
  %v109 = vsub.s32 3, %v108
  %v110 = vrot.slane %v93, %v109
  %v131 = vunpack.c.l.b16 %v45
  %v132 = vunpack.c.l.b16 %v46
  %v133 = vunpack.c.l.b16 %v47
  %v134 = vunpack.c.l.b16 %v48
  %v135 = vunpack.c.l.b16 %v49
  %v136 = vunpack.c.l.b16 %v50
  %v137 = vunpack.c.l.b16 %v51
  %v138 = vunpack.c.l.b16 %v52
  %v139 = vunpack.c.l.b16 %v53
  %v140 = vunpack.c.l.b16 %v54
  %v141 = vunpack.c.l.b16 %v55
  %v142 = vunpack.c.l.b16 %v56
  %v143 = vunpack.c.l.b16 %v57
  %v144 = vunpack.c.l.b16 %v58
  %v145 = vunpack.c.l.b16 %v59
  %v146 = vunpack.c.l.b16 %v60
  %v147 = vpack.c.b16 %v132, %v131
  %v148 = vpack.c.b16 %v134, %v133
  %v149 = vpack.c.b16 %v136, %v135
  %v150 = vpack.c.b16 %v138, %v137
  %v151 = vpack.c.b16 %v140, %v139
  %v152 = vpack.c.b16 %v142, %v141
  %v153 = vpack.c.b16 %v144, %v143
  %v154 = vpack.c.b16 %v146, %v145
  %v195 = vunpack.c.l.b16 %v61
  %v196 = vunpack.c.h.b16 %v61
  %v197 = vunpack.c.l.b16 %v62
  %v198 = vunpack.c.h.b16 %v62
  %v199 = vunpack.c.l.b16 %v63
  %v200 = vunpack.c.h.b16 %v63
  %v201 = vunpack.c.l.b16 %v64
  %v202 = vunpack.c.h.b16 %v64
  %v203 = vunpack.c.l.b16 %v65
  %v204 = vunpack.c.h.b16 %v65
  %v205 = vunpack.c.l.b16 %v66
  %v206 = vunpack.c.h.b16 %v66
  %v207 = vunpack.c.l.b16 %v67
  %v208 = vunpack.c.h.b16 %v67
  %v209 = vunpack.c.l.b16 %v68
  %v210 = vunpack.c.h.b16 %v68
  %v211 = vunpack.c.l.b16 %v69
  %v212 = vunpack.c.h.b16 %v69
  %v213 = vunpack.c.l.b16 %v70
  %v214 = vunpack.c.h.b16 %v70
  %v215 = vunpack.c.l.b16 %v71
  %v216 = vunpack.c.h.b16 %v71
  %v217 = vunpack.c.l.b16 %v72
  %v218 = vunpack.c.h.b16 %v72
  %v219 = vunpack.c.l.b16 %v73
  %v220 = vunpack.c.h.b16 %v73
  %v221 = vunpack.c.l.b16 %v74
  %v222 = vunpack.c.h.b16 %v74
  %v223 = vunpack.c.l.b16 %v75
  %v224 = vunpack.c.h.b16 %v75
  %v225 = vunpack.c.l.b16 %v76
  %v226 = vunpack.c.h.b16 %v76
  %v227 = vunpack.c.l.b16 %v77
  %v228 = vunpack.c.h.b16 %v77
  %v229 = vunpack.c.l.b16 %v78
  %v230 = vunpack.c.h.b16 %v78
  %v231 = vunpack.c.l.b16 %v79
  %v232 = vunpack.c.h.b16 %v79
  %v233 = vunpack.c.l.b16 %v80
  %v234 = vunpack.c.h.b16 %v80
  %v235 = vunpack.c.l.b16 %v81
  %v236 = vunpack.c.h.b16 %v81
  %v237 = vunpack.c.l.b16 %v82
  %v238 = vunpack.c.h.b16 %v82
  %v239 = vunpack.c.l.b16 %v83
  %v240 = vunpack.c.h.b16 %v83
  %v241 = vunpack.c.l.b16 %v84
  %v242 = vunpack.c.h.b16 %v84
  %v243 = vunpack.c.l.b16 %v85
  %v244 = vunpack.c.h.b16 %v85
  %v245 = vunpack.c.l.b16 %v86
  %v246 = vunpack.c.h.b16 %v86
  %v247 = vunpack.c.l.b16 %v87
  %v248 = vunpack.c.h.b16 %v87
  %v249 = vunpack.c.l.b16 %v88
  %v250 = vunpack.c.h.b16 %v88
  %v251 = vunpack.c.l.b16 %v89
  %v252 = vunpack.c.h.b16 %v89
  %v253 = vunpack.c.l.b16 %v90
  %v254 = vunpack.c.h.b16 %v90
  %v255 = vunpack.c.l.b16 %v91
  %v256 = vunpack.c.h.b16 %v91
  %v257 = vunpack.c.l.b16 %v92
  %v258 = vunpack.c.h.b16 %v92
  %v259 = vpack.c.b16 %v199, %v195
  %v260 = vpack.c.b16 %v200, %v196
  %v261 = vpack.c.b16 %v201, %v197
  %v262 = vpack.c.b16 %v202, %v198
  %v263 = vpack.c.b16 %v207, %v203
  %v264 = vpack.c.b16 %v208, %v204
  %v265 = vpack.c.b16 %v209, %v205
  %v266 = vpack.c.b16 %v210, %v206
  %v267 = vpack.c.b16 %v215, %v211
  %v268 = vpack.c.b16 %v216, %v212
  %v269 = vpack.c.b16 %v217, %v213
  %v270 = vpack.c.b16 %v218, %v214
  %v271 = vpack.c.b16 %v223, %v219
  %v272 = vpack.c.b16 %v224, %v220
  %v273 = vpack.c.b16 %v225, %v221
  %v274 = vpack.c.b16 %v226, %v222
  %v275 = vpack.c.b16 %v231, %v227
  %v276 = vpack.c.b16 %v232, %v228
  %v277 = vpack.c.b16 %v233, %v229
  %v278 = vpack.c.b16 %v234, %v230
  %v279 = vpack.c.b16 %v239, %v235
  %v280 = vpack.c.b16 %v240, %v236
  %v281 = vpack.c.b16 %v241, %v237
  %v282 = vpack.c.b16 %v242, %v238
  %v283 = vpack.c.b16 %v247, %v243
  %v284 = vpack.c.b16 %v248, %v244
  %v285 = vpack.c.b16 %v249, %v245
  %v286 = vpack.c.b16 %v250, %v246
  %v287 = vpack.c.b16 %v255, %v251
  %v288 = vpack.c.b16 %v256, %v252
  %v289 = vpack.c.b16 %v257, %v253
  %v290 = vpack.c.b16 %v258, %v254
  %323 = vmatprep.subr.bf16.mxu0 %v260
  %324 = vmatpush1.bf16.msra.mxu0 %v259
  %325 = vmatprep.subr.bf16.mxu0 %v264
  %326 = vmatpush1.bf16.msra.mxu0 %v263
  %327 = vmatprep.subr.bf16.mxu0 %v268
  %328 = vmatpush1.bf16.msra.mxu0 %v267
  %329 = vmatprep.subr.bf16.mxu0 %v272
  %330 = vmatpush1.bf16.msra.mxu0 %v271
  %331 = vmatprep.subr.bf16.mxu0 %v276
  %332 = vmatpush1.bf16.msra.mxu0 %v275
  %333 = vmatprep.subr.bf16.mxu0 %v280
  %334 = vmatpush1.bf16.msra.mxu0 %v279
  %335 = vmatprep.subr.bf16.mxu0 %v284
  %336 = vmatpush1.bf16.msra.mxu0 %v283
  %337 = vmatprep.subr.bf16.mxu0 %v288
  %338 = vmatpush1.bf16.msra.mxu0 %v287
  %339 = vmatprep.subr.bf16.mxu0 0
  %340 = vmatpush1.bf16.msra.mxu0 0
  %341 = vmatprep.subr.bf16.mxu0 0
  %342 = vmatpush1.bf16.msra.mxu0 0
  %343 = vmatprep.subr.bf16.mxu0 0
  %344 = vmatpush1.bf16.msra.mxu0 0
  %345 = vmatprep.subr.bf16.mxu0 0
  %346 = vmatpush1.bf16.msra.mxu0 0
  %347 = vmatprep.subr.bf16.mxu0 0
  %348 = vmatpush1.bf16.msra.mxu0 0
  %349 = vmatprep.subr.bf16.mxu0 0
  %350 = vmatpush1.bf16.msra.mxu0 0
  %351 = vmatprep.subr.bf16.mxu0 0
  %352 = vmatpush1.bf16.msra.mxu0 0
  %353 = vmatprep.subr.bf16.mxu0 0
  %354 = vmatpush1.bf16.msra.mxu0 0
  %355 = vmatprep.mubr.bf16.mxu0 0
  %356 = vmatmul.mubr.bf16.gmra.mrb[0].mxu0 %v147
  %v357 = vpop.f32.mrb[0].mxu0
  %v358 = vadd.f32 %v98, %v357
  %v359 = vpop.f32.mrb[0].mxu0
  %v360 = vadd.f32 %v102, %v359
  %v361 = vpop.f32.mrb[0].mxu0
  %v362 = vadd.f32 %v98, %v361
  %v363 = vpop.f32.mrb[0].mxu0
  %v364 = vadd.f32 %v102, %v363
  %365 = vmatprep.mubr.bf16.mxu0 0
  %366 = vmatmul.mubr.bf16.gmra.mrb[0].mxu0 %v148
  %v367 = vpop.f32.mrb[0].mxu0
  %v368 = vadd.f32 %v98, %v367
  %v369 = vpop.f32.mrb[0].mxu0
  %v370 = vadd.f32 %v102, %v369
  %v371 = vpop.f32.mrb[0].mxu0
  %v372 = vadd.f32 %v98, %v371
  %v373 = vpop.f32.mrb[0].mxu0
  %v374 = vadd.f32 %v102, %v373
  %375 = vmatprep.mubr.bf16.mxu0 0
  %376 = vmatmul.mubr.bf16.gmra.mrb[0].mxu0 %v149
  %v377 = vpop.f32.mrb[0].mxu0
  %v378 = vadd.f32 %v98, %v377
  %v379 = vpop.f32.mrb[0].mxu0
  %v380 = vadd.f32 %v102, %v379
  %v381 = vpop.f32.mrb[0].mxu0
  %v382 = vadd.f32 %v98, %v381
  %v383 = vpop.f32.mrb[0].mxu0
  %v384 = vadd.f32 %v102, %v383
  %385 = vmatprep.mubr.bf16.mxu0 0
  %386 = vmatmul.mubr.bf16.gmra.mrb[0].mxu0 %v150
  %v387 = vpop.f32.mrb[0].mxu0
  %v388 = vadd.f32 %v98, %v387
  %v389 = vpop.f32.mrb[0].mxu0
  %v390 = vadd.f32 %v102, %v389
  %v391 = vpop.f32.mrb[0].mxu0
  %v392 = vadd.f32 %v98, %v391
  %v393 = vpop.f32.mrb[0].mxu0
  %v394 = vadd.f32 %v102, %v393
  %395 = vmatprep.mubr.bf16.mxu0 0
  %396 = vmatmul.mubr.bf16.gmra.mrb[0].mxu0 %v151
  %v397 = vpop.f32.mrb[0].mxu0
  %v398 = vadd.f32 %v98, %v397
  %v399 = vpop.f32.mrb[0].mxu0
  %v400 = vadd.f32 %v102, %v399
  %v401 = vpop.f32.mrb[0].mxu0
  %v402 = vadd.f32 %v98, %v401
  %v403 = vpop.f32.mrb[0].mxu0
  %v404 = vadd.f32 %v102, %v403
  %405 = vmatprep.mubr.bf16.mxu0 0
  %406 = vmatmul.mubr.bf16.gmra.mrb[0].mxu0 %v152
  %v407 = vpop.f32.mrb[0].mxu0
  %v408 = vadd.f32 %v98, %v407
  %v409 = vpop.f32.mrb[0].mxu0
  %v410 = vadd.f32 %v102, %v409
  %v411 = vpop.f32.mrb[0].mxu0
  %v412 = vadd.f32 %v98, %v411
  %v413 = vpop.f32.mrb[0].mxu0
  %v414 = vadd.f32 %v102, %v413
  %415 = vmatprep.mubr.bf16.mxu0 0
  %416 = vmatmul.mubr.bf16.gmra.mrb[0].mxu0 %v153
  %v417 = vpop.f32.mrb[0].mxu0
  %v418 = vadd.f32 %v98, %v417
  %v419 = vpop.f32.mrb[0].mxu0
  %v420 = vadd.f32 %v102, %v419
  %v421 = vpop.f32.mrb[0].mxu0
  %v422 = vadd.f32 %v98, %v421
  %v423 = vpop.f32.mrb[0].mxu0
  %v424 = vadd.f32 %v102, %v423
  %425 = vmatprep.mubr.bf16.mxu0 0
  %426 = vmatmul.mubr.bf16.gmra.mrb[0].mxu0 %v154
  %v427 = vpop.f32.mrb[0].mxu0
  %v428 = vadd.f32 %v98, %v427
  %v429 = vpop.f32.mrb[0].mxu0
  %v430 = vadd.f32 %v102, %v429
  %v431 = vpop.f32.mrb[0].mxu0
  %v432 = vadd.f32 %v98, %v431
  %v433 = vpop.f32.mrb[0].mxu0
  %v434 = vadd.f32 %v102, %v433
  %435 = vdwg.mxu0
  %436 = vmatprep.subr.bf16.mxu0 %v262
  %437 = vmatpush1.bf16.msra.mxu0 %v261
  %438 = vmatprep.subr.bf16.mxu0 %v266
  %439 = vmatpush1.bf16.msra.mxu0 %v265
  %440 = vmatprep.subr.bf16.mxu0 %v270
  %441 = vmatpush1.bf16.msra.mxu0 %v269
  %442 = vmatprep.subr.bf16.mxu0 %v274
  %443 = vmatpush1.bf16.msra.mxu0 %v273
  %444 = vmatprep.subr.bf16.mxu0 %v278
  %445 = vmatpush1.bf16.msra.mxu0 %v277
  %446 = vmatprep.subr.bf16.mxu0 %v282
  %447 = vmatpush1.bf16.msra.mxu0 %v281
  %448 = vmatprep.subr.bf16.mxu0 %v286
  %449 = vmatpush1.bf16.msra.mxu0 %v285
  %450 = vmatprep.subr.bf16.mxu0 %v290
  %451 = vmatpush1.bf16.msra.mxu0 %v289
  %452 = vmatprep.subr.bf16.mxu0 0
  %453 = vmatpush1.bf16.msra.mxu0 0
  %454 = vmatprep.subr.bf16.mxu0 0
  %455 = vmatpush1.bf16.msra.mxu0 0
  %456 = vmatprep.subr.bf16.mxu0 0
  %457 = vmatpush1.bf16.msra.mxu0 0
  %458 = vmatprep.subr.bf16.mxu0 0
  %459 = vmatpush1.bf16.msra.mxu0 0
  %460 = vmatprep.subr.bf16.mxu0 0
  %461 = vmatpush1.bf16.msra.mxu0 0
  %462 = vmatprep.subr.bf16.mxu0 0
  %463 = vmatpush1.bf16.msra.mxu0 0
  %464 = vmatprep.subr.bf16.mxu0 0
  %465 = vmatpush1.bf16.msra.mxu0 0
  %466 = vmatprep.subr.bf16.mxu0 0
  %467 = vmatpush1.bf16.msra.mxu0 0
  %468 = vmatprep.mubr.bf16.mxu0 0
  %469 = vmatmul.mubr.bf16.gmra.mrb[0].mxu0 %v147
  %v470 = vpop.f32.mrb[0].mxu0
  %v471 = vadd.f32 %v106, %v470
  %v472 = vpop.f32.mrb[0].mxu0
  %v473 = vadd.f32 %v110, %v472
  %v474 = vpop.f32.mrb[0].mxu0
  %v475 = vadd.f32 %v106, %v474
  %v476 = vpop.f32.mrb[0].mxu0
  %v477 = vadd.f32 %v110, %v476
  %478 = vmatprep.mubr.bf16.mxu0 0
  %479 = vmatmul.mubr.bf16.gmra.mrb[0].mxu0 %v148
  %v480 = vpop.f32.mrb[0].mxu0
  %v481 = vadd.f32 %v106, %v480
  %v482 = vpop.f32.mrb[0].mxu0
  %v483 = vadd.f32 %v110, %v482
  %v484 = vpop.f32.mrb[0].mxu0
  %v485 = vadd.f32 %v106, %v484
  %v486 = vpop.f32.mrb[0].mxu0
  %v487 = vadd.f32 %v110, %v486
  %488 = vmatprep.mubr.bf16.mxu0 0
  %489 = vmatmul.mubr.bf16.gmra.mrb[0].mxu0 %v149
  %v490 = vpop.f32.mrb[0].mxu0
  %v491 = vadd.f32 %v106, %v490
  %v492 = vpop.f32.mrb[0].mxu0
  %v493 = vadd.f32 %v110, %v492
  %v494 = vpop.f32.mrb[0].mxu0
  %v495 = vadd.f32 %v106, %v494
  %v496 = vpop.f32.mrb[0].mxu0
  %v497 = vadd.f32 %v110, %v496
  %498 = vmatprep.mubr.bf16.mxu0 0
  %499 = vmatmul.mubr.bf16.gmra.mrb[0].mxu0 %v150
  %v500 = vpop.f32.mrb[0].mxu0
  %v501 = vadd.f32 %v106, %v500
  %v502 = vpop.f32.mrb[0].mxu0
  %v503 = vadd.f32 %v110, %v502
  %v504 = vpop.f32.mrb[0].mxu0
  %v505 = vadd.f32 %v106, %v504
  %v506 = vpop.f32.mrb[0].mxu0
  %v507 = vadd.f32 %v110, %v506
  %508 = vmatprep.mubr.bf16.mxu0 0
  %509 = vmatmul.mubr.bf16.gmra.mrb[0].mxu0 %v151
  %v510 = vpop.f32.mrb[0].mxu0
  %v511 = vadd.f32 %v106, %v510
  %v512 = vpop.f32.mrb[0].mxu0
  %v513 = vadd.f32 %v110, %v512
  %v514 = vpop.f32.mrb[0].mxu0
  %v515 = vadd.f32 %v106, %v514
  %v516 = vpop.f32.mrb[0].mxu0
  %v517 = vadd.f32 %v110, %v516
  %518 = vmatprep.mubr.bf16.mxu0 0
  %519 = vmatmul.mubr.bf16.gmra.mrb[0].mxu0 %v152
  %v520 = vpop.f32.mrb[0].mxu0
  %v521 = vadd.f32 %v106, %v520
  %v522 = vpop.f32.mrb[0].mxu0
  %v523 = vadd.f32 %v110, %v522
  %v524 = vpop.f32.mrb[0].mxu0
  %v525 = vadd.f32 %v106, %v524
  %v526 = vpop.f32.mrb[0].mxu0
  %v527 = vadd.f32 %v110, %v526
  %528 = vmatprep.mubr.bf16.mxu0 0
  %529 = vmatmul.mubr.bf16.gmra.mrb[0].mxu0 %v153
  %v530 = vpop.f32.mrb[0].mxu0
  %v531 = vadd.f32 %v106, %v530
  %v532 = vpop.f32.mrb[0].mxu0
  %v533 = vadd.f32 %v110, %v532
  %v534 = vpop.f32.mrb[0].mxu0
  %v535 = vadd.f32 %v106, %v534
  %v536 = vpop.f32.mrb[0].mxu0
  %v537 = vadd.f32 %v110, %v536
  %538 = vmatprep.mubr.bf16.mxu0 0
  %539 = vmatmul.mubr.bf16.gmra.mrb[0].mxu0 %v154
  %v540 = vpop.f32.mrb[0].mxu0
  %v541 = vadd.f32 %v106, %v540
  %v542 = vpop.f32.mrb[0].mxu0
  %v543 = vadd.f32 %v110, %v542
  %v544 = vpop.f32.mrb[0].mxu0
  %v545 = vadd.f32 %v106, %v544
  %v546 = vpop.f32.mrb[0].mxu0
  %v547 = vadd.f32 %v110, %v546
  %548 = vdwg.mxu0
  %v549 = vld [vmem:[%s2] sm:$0xff]
  %v550 = vld [vmem:[%s2 + $0x8] sm:$0xff]
  %v551 = vld [vmem:[%s2 + $0x10] sm:$0xff]
  %v552 = vld [vmem:[%s2 + $0x18] sm:$0xff]
  %v553 = vld [vmem:[%s2 + $0x20] sm:$0xff]
  %v554 = vld [vmem:[%s2 + $0x28] sm:$0xff]
  %v555 = vld [vmem:[%s2 + $0x30] sm:$0xff]
  %v556 = vld [vmem:[%s2 + $0x38] sm:$0xff]
  %v557 = vld [vmem:[%s2 + $0x40] sm:$0xff]
  %v558 = vld [vmem:[%s2 + $0x48] sm:$0xff]
  %v559 = vld [vmem:[%s2 + $0x50] sm:$0xff]
  %v560 = vld [vmem:[%s2 + $0x58] sm:$0xff]
  %v561 = vld [vmem:[%s2 + $0x60] sm:$0xff]
  %v562 = vld [vmem:[%s2 + $0x68] sm:$0xff]
  %v563 = vld [vmem:[%s2 + $0x70] sm:$0xff]
  %v564 = vld [vmem:[%s2 + $0x78] sm:$0xff]
  %v565 = vld [vmem:[%s2 + $0x80] sm:$0xff]
  %v566 = vld [vmem:[%s2 + $0x88] sm:$0xff]
  %v567 = vld [vmem:[%s2 + $0x90] sm:$0xff]
  %v568 = vld [vmem:[%s2 + $0x98] sm:$0xff]
  %v569 = vld [vmem:[%s2 + $0xa0] sm:$0xff]
  %v570 = vld [vmem:[%s2 + $0xa8] sm:$0xff]
  %v571 = vld [vmem:[%s2 + $0xb0] sm:$0xff]
  %v572 = vld [vmem:[%s2 + $0xb8] sm:$0xff]
  %v573 = vld [vmem:[%s2 + $0xc0] sm:$0xff]
  %v574 = vld [vmem:[%s2 + $0xc8] sm:$0xff]
  %v575 = vld [vmem:[%s2 + $0xd0] sm:$0xff]
  %v576 = vld [vmem:[%s2 + $0xd8] sm:$0xff]
  %v577 = vld [vmem:[%s2 + $0xe0] sm:$0xff]
  %v578 = vld [vmem:[%s2 + $0xe8] sm:$0xff]
  %v579 = vld [vmem:[%s2 + $0xf0] sm:$0xff]
  %v580 = vld [vmem:[%s2 + $0xf8] sm:$0xff]
  %v581 = vld [vmem:[#allocation2] sm:$0xff]
  %v582 = vld [vmem:[#allocation4] sm:$0xff]
  %v583 = vld [vmem:[#allocation4 + $0x8] sm:$0xff]
  %v616 = vunpack.c.l.b16 %v549
  %v617 = vunpack.c.h.b16 %v549
  %v618 = vunpack.c.l.b16 %v550
  %v619 = vunpack.c.h.b16 %v550
  %v620 = vunpack.c.l.b16 %v551
  %v621 = vunpack.c.h.b16 %v551
  %v622 = vunpack.c.l.b16 %v552
  %v623 = vunpack.c.h.b16 %v552
  %v624 = vunpack.c.l.b16 %v553
  %v625 = vunpack.c.h.b16 %v553
  %v626 = vunpack.c.l.b16 %v554
  %v627 = vunpack.c.h.b16 %v554
  %v628 = vunpack.c.l.b16 %v555
  %v629 = vunpack.c.h.b16 %v555
  %v630 = vunpack.c.l.b16 %v556
  %v631 = vunpack.c.h.b16 %v556
  %v632 = vunpack.c.l.b16 %v557
  %v633 = vunpack.c.h.b16 %v557
  %v634 = vunpack.c.l.b16 %v558
  %v635 = vunpack.c.h.b16 %v558
  %v636 = vunpack.c.l.b16 %v559
  %v637 = vunpack.c.h.b16 %v559
  %v638 = vunpack.c.l.b16 %v560
  %v639 = vunpack.c.h.b16 %v560
  %v640 = vunpack.c.l.b16 %v561
  %v641 = vunpack.c.h.b16 %v561
  %v642 = vunpack.c.l.b16 %v562
  %v643 = vunpack.c.h.b16 %v562
  %v644 = vunpack.c.l.b16 %v563
  %v645 = vunpack.c.h.b16 %v563
  %v646 = vunpack.c.l.b16 %v564
  %v647 = vunpack.c.h.b16 %v564
  %v648 = vunpack.c.l.b16 %v565
  %v649 = vunpack.c.h.b16 %v565
  %v650 = vunpack.c.l.b16 %v566
  %v651 = vunpack.c.h.b16 %v566
  %v652 = vunpack.c.l.b16 %v567
  %v653 = vunpack.c.h.b16 %v567
  %v654 = vunpack.c.l.b16 %v568
  %v655 = vunpack.c.h.b16 %v568
  %v656 = vunpack.c.l.b16 %v569
  %v657 = vunpack.c.h.b16 %v569
  %v658 = vunpack.c.l.b16 %v570
  %v659 = vunpack.c.h.b16 %v570
  %v660 = vunpack.c.l.b16 %v571
  %v661 = vunpack.c.h.b16 %v571
  %v662 = vunpack.c.l.b16 %v572
  %v663 = vunpack.c.h.b16 %v572
  %v664 = vunpack.c.l.b16 %v573
  %v665 = vunpack.c.h.b16 %v573
  %v666 = vunpack.c.l.b16 %v574
  %v667 = vunpack.c.h.b16 %v574
  %v668 = vunpack.c.l.b16 %v575
  %v669 = vunpack.c.h.b16 %v575
  %v670 = vunpack.c.l.b16 %v576
  %v671 = vunpack.c.h.b16 %v576
  %v672 = vunpack.c.l.b16 %v577
  %v673 = vunpack.c.h.b16 %v577
  %v674 = vunpack.c.l.b16 %v578
  %v675 = vunpack.c.h.b16 %v578
  %v676 = vunpack.c.l.b16 %v579
  %v677 = vunpack.c.h.b16 %v579
  %v678 = vunpack.c.l.b16 %v580
  %v679 = vunpack.c.h.b16 %v580
  %v680 = vpack.c.b16 %v620, %v616
  %v681 = vpack.c.b16 %v621, %v617
  %v682 = vpack.c.b16 %v622, %v618
  %v683 = vpack.c.b16 %v623, %v619
  %v684 = vpack.c.b16 %v628, %v624
  %v685 = vpack.c.b16 %v629, %v625
  %v686 = vpack.c.b16 %v630, %v626
  %v687 = vpack.c.b16 %v631, %v627
  %v688 = vpack.c.b16 %v636, %v632
  %v689 = vpack.c.b16 %v637, %v633
  %v690 = vpack.c.b16 %v638, %v634
  %v691 = vpack.c.b16 %v639, %v635
  %v692 = vpack.c.b16 %v644, %v640
  %v693 = vpack.c.b16 %v645, %v641
  %v694 = vpack.c.b16 %v646, %v642
  %v695 = vpack.c.b16 %v647, %v643
  %v696 = vpack.c.b16 %v652, %v648
  %v697 = vpack.c.b16 %v653, %v649
  %v698 = vpack.c.b16 %v654, %v650
  %v699 = vpack.c.b16 %v655, %v651
  %v700 = vpack.c.b16 %v660, %v656
  %v701 = vpack.c.b16 %v661, %v657
  %v702 = vpack.c.b16 %v662, %v658
  %v703 = vpack.c.b16 %v663, %v659
  %v704 = vpack.c.b16 %v668, %v664
  %v705 = vpack.c.b16 %v669, %v665
  %v706 = vpack.c.b16 %v670, %v666
  %v707 = vpack.c.b16 %v671, %v667
  %v708 = vpack.c.b16 %v676, %v672
  %v709 = vpack.c.b16 %v677, %v673
  %v710 = vpack.c.b16 %v678, %v674
  %v711 = vpack.c.b16 %v679, %v675
  %744 = vmatprep.subr.bf16.mxu0 %v681
  %745 = vmatpush1.bf16.msra.mxu0 %v680
  %746 = vmatprep.subr.bf16.mxu0 %v685
  %747 = vmatpush1.bf16.msra.mxu0 %v684
  %748 = vmatprep.subr.bf16.mxu0 %v689
  %749 = vmatpush1.bf16.msra.mxu0 %v688
  %750 = vmatprep.subr.bf16.mxu0 %v693
  %751 = vmatpush1.bf16.msra.mxu0 %v692
  %752 = vmatprep.subr.bf16.mxu0 %v697
  %753 = vmatpush1.bf16.msra.mxu0 %v696
  %754 = vmatprep.subr.bf16.mxu0 %v701
  %755 = vmatpush1.bf16.msra.mxu0 %v700
  %756 = vmatprep.subr.bf16.mxu0 %v705
  %757 = vmatpush1.bf16.msra.mxu0 %v704
  %758 = vmatprep.subr.bf16.mxu0 %v709
  %759 = vmatpush1.bf16.msra.mxu0 %v708
  %760 = vmatprep.subr.bf16.mxu0 0
  %761 = vmatpush1.bf16.msra.mxu0 0
  %762 = vmatprep.subr.bf16.mxu0 0
  %763 = vmatpush1.bf16.msra.mxu0 0
  %764 = vmatprep.subr.bf16.mxu0 0
  %765 = vmatpush1.bf16.msra.mxu0 0
  %766 = vmatprep.subr.bf16.mxu0 0
  %767 = vmatpush1.bf16.msra.mxu0 0
  %768 = vmatprep.subr.bf16.mxu0 0
  %769 = vmatpush1.bf16.msra.mxu0 0
  %770 = vmatprep.subr.bf16.mxu0 0
  %771 = vmatpush1.bf16.msra.mxu0 0
  %772 = vmatprep.subr.bf16.mxu0 0
  %773 = vmatpush1.bf16.msra.mxu0 0
  %774 = vmatprep.subr.bf16.mxu0 0
  %775 = vmatpush1.bf16.msra.mxu0 0
  %776 = vmatprep.mubr.bf16.mxu0 0
  %777 = vmatmul.mubr.bf16.gmra.mrb[0].mxu0 %v581
  %v778 = vpop.f32.mrb[0].mxu0
  %v779 = vadd.f32 0.0, %v778
  %v780 = vpop.f32.mrb[0].mxu0
  %v781 = vadd.f32 0.0, %v780
  %v782 = vpop.f32.mrb[0].mxu0
  %v783 = vadd.f32 0.0, %v782
  %v784 = vpop.f32.mrb[0].mxu0
  %v785 = vadd.f32 0.0, %v784
  %786 = vdwg.mxu0
  %787 = vmatprep.subr.bf16.mxu0 %v683
  %788 = vmatpush1.bf16.msra.mxu0 %v682
  %789 = vmatprep.subr.bf16.mxu0 %v687
  %790 = vmatpush1.bf16.msra.mxu0 %v686
  %791 = vmatprep.subr.bf16.mxu0 %v691
  %792 = vmatpush1.bf16.msra.mxu0 %v690
  %793 = vmatprep.subr.bf16.mxu0 %v695
  %794 = vmatpush1.bf16.msra.mxu0 %v694
  %795 = vmatprep.subr.bf16.mxu0 %v699
  %796 = vmatpush1.bf16.msra.mxu0 %v698
  %797 = vmatprep.subr.bf16.mxu0 %v703
  %798 = vmatpush1.bf16.msra.mxu0 %v702
  %799 = vmatprep.subr.bf16.mxu0 %v707
  %800 = vmatpush1.bf16.msra.mxu0 %v706
  %801 = vmatprep.subr.bf16.mxu0 %v711
  %802 = vmatpush1.bf16.msra.mxu0 %v710
  %803 = vmatprep.subr.bf16.mxu0 0
  %804 = vmatpush1.bf16.msra.mxu0 0
  %805 = vmatprep.subr.bf16.mxu0 0
  %806 = vmatpush1.bf16.msra.mxu0 0
  %807 = vmatprep.subr.bf16.mxu0 0
  %808 = vmatpush1.bf16.msra.mxu0 0
  %809 = vmatprep.subr.bf16.mxu0 0
  %810 = vmatpush1.bf16.msra.mxu0 0
  %811 = vmatprep.subr.bf16.mxu0 0
  %812 = vmatpush1.bf16.msra.mxu0 0
  %813 = vmatprep.subr.bf16.mxu0 0
  %814 = vmatpush1.bf16.msra.mxu0 0
  %815 = vmatprep.subr.bf16.mxu0 0
  %816 = vmatpush1.bf16.msra.mxu0 0
  %817 = vmatprep.subr.bf16.mxu0 0
  %818 = vmatpush1.bf16.msra.mxu0 0
  %819 = vmatprep.mubr.bf16.mxu0 0
  %820 = vmatmul.mubr.bf16.gmra.mrb[0].mxu0 %v581
  %v821 = vpop.f32.mrb[0].mxu0
  %v822 = vadd.f32 0.0, %v821
  %v823 = vpop.f32.mrb[0].mxu0
  %v824 = vadd.f32 0.0, %v823
  %v825 = vpop.f32.mrb[0].mxu0
  %v826 = vadd.f32 0.0, %v825
  %v827 = vpop.f32.mrb[0].mxu0
  %v828 = vadd.f32 0.0, %v827
  %829 = vdwg.mxu0
  %v830 = vadd.f32 %v358, %v779
  %v831 = vadd.f32 %v360, %v781
  %v832 = vadd.f32 %v471, %v822
  %v833 = vadd.f32 %v473, %v824
  %v834 = vadd.f32 %v362, %v783
  %v835 = vadd.f32 %v364, %v785
  %v836 = vadd.f32 %v475, %v826
  %v837 = vadd.f32 %v477, %v828
  %v838 = vxor.u32 %v830, 2147483648
  %v839 = vxor.u32 %v834, 2147483648
  %v840 = vmul.f32 %v838, 1.442695
  %v841 = vpow.pop %v840
  %v842 = vmul.f32 %v839, 1.442695
  %v843 = vpow.pop %v842
  %v844 = vadd.f32 %v841, 1.0
  %v845 = vadd.f32 %v843, 1.0
  %v846 = vrcp.pop %v844
  %v847 = vmul.f32 1.0, %v846
  %v848 = vrcp.pop %v845
  %v849 = vmul.f32 1.0, %v848
  %v850 = vxor.u32 %v831, 2147483648
  %v851 = vxor.u32 %v835, 2147483648
  %v852 = vmul.f32 %v850, 1.442695
  %v853 = vpow.pop %v852
  %v854 = vmul.f32 %v851, 1.442695
  %v855 = vpow.pop %v854
  %v856 = vadd.f32 %v853, 1.0
  %v857 = vadd.f32 %v855, 1.0
  %v858 = vrcp.pop %v856
  %v859 = vmul.f32 1.0, %v858
  %v860 = vrcp.pop %v857
  %v861 = vmul.f32 1.0, %v860
  %v862 = vtanh.pop %v832
  %v863 = vtanh.pop %v836
  %v864 = vxor.u32 %v833, 2147483648
  %v865 = vxor.u32 %v837, 2147483648
  %v866 = vmul.f32 %v864, 1.442695
  %v867 = vpow.pop %v866
  %v868 = vmul.f32 %v865, 1.442695
  %v869 = vpow.pop %v868
  %v870 = vadd.f32 %v867, 1.0
  %v871 = vadd.f32 %v869, 1.0
  %v872 = vrcp.pop %v870
  %v873 = vmul.f32 1.0, %v872
  %v874 = vrcp.pop %v871
  %v875 = vmul.f32 1.0, %v874
  %v876 = vmul.f32 %v859, %v582
  %v877 = vmul.f32 %v861, %v583
  %v878 = vmul.f32 %v847, %v862
  %v879 = vmul.f32 %v849, %v863
  %v880 = vadd.f32 %v876, %v878
  %v881 = vadd.f32 %v877, %v879
  %v882 = vtanh.pop %v880
  %v883 = vtanh.pop %v881
  %v884 = vmul.f32 %v873, %v882
  %v885 = vmul.f32 %v875, %v883
  %v886 = vpack.c.bf16 %v885, %v884
  %887 = vst [vmem:[#allocation6] sm:$0xff] %v886
  %888 = vmatprep.subr.bf16.mxu0 %v681
  %889 = vmatpush1.bf16.msra.mxu0 %v680
  %890 = vmatprep.subr.bf16.mxu0 %v685
  %891 = vmatpush1.bf16.msra.mxu0 %v684
  %892 = vmatprep.subr.bf16.mxu0 %v689
  %893 = vmatpush1.bf16.msra.mxu0 %v688
  %894 = vmatprep.subr.bf16.mxu0 %v693
  %895 = vmatpush1.bf16.msra.mxu0 %v692
  %896 = vmatprep.subr.bf16.mxu0 %v697
  %897 = vmatpush1.bf16.msra.mxu0 %v696
  %898 = vmatprep.subr.bf16.mxu0 %v701
  %899 = vmatpush1.bf16.msra.mxu0 %v700
  %900 = vmatprep.subr.bf16.mxu0 %v705
  %901 = vmatpush1.bf16.msra.mxu0 %v704
  %902 = vmatprep.subr.bf16.mxu0 %v709
  %903 = vmatpush1.bf16.msra.mxu0 %v708
  %904 = vmatprep.subr.bf16.mxu0 0
  %905 = vmatpush1.bf16.msra.mxu0 0
  %906 = vmatprep.subr.bf16.mxu0 0
  %907 = vmatpush1.bf16.msra.mxu0 0
  %908 = vmatprep.subr.bf16.mxu0 0
  %909 = vmatpush1.bf16.msra.mxu0 0
  %910 = vmatprep.subr.bf16.mxu0 0
  %911 = vmatpush1.bf16.msra.mxu0 0
  %912 = vmatprep.subr.bf16.mxu0 0
  %913 = vmatpush1.bf16.msra.mxu0 0
  %914 = vmatprep.subr.bf16.mxu0 0
  %915 = vmatpush1.bf16.msra.mxu0 0
  %916 = vmatprep.subr.bf16.mxu0 0
  %917 = vmatpush1.bf16.msra.mxu0 0
  %918 = vmatprep.subr.bf16.mxu0 0
  %919 = vmatpush1.bf16.msra.mxu0 0
  %920 = vmatprep.mubr.bf16.mxu0 0
  %921 = vmatmul.mubr.bf16.gmra.mrb[0].mxu0 %v886
  %v922 = vpop.f32.mrb[0].mxu0
  %v923 = vadd.f32 0.0, %v922
  %v924 = vpop.f32.mrb[0].mxu0
  %v925 = vadd.f32 0.0, %v924
  %v926 = vpop.f32.mrb[0].mxu0
  %v927 = vadd.f32 0.0, %v926
  %v928 = vpop.f32.mrb[0].mxu0
  %v929 = vadd.f32 0.0, %v928
  %930 = vdwg.mxu0
  %931 = vmatprep.subr.bf16.mxu0 %v683
  %932 = vmatpush1.bf16.msra.mxu0 %v682
  %933 = vmatprep.subr.bf16.mxu0 %v687
  %934 = vmatpush1.bf16.msra.mxu0 %v686
  %935 = vmatprep.subr.bf16.mxu0 %v691
  %936 = vmatpush1.bf16.msra.mxu0 %v690
  %937 = vmatprep.subr.bf16.mxu0 %v695
  %938 = vmatpush1.bf16.msra.mxu0 %v694
  %939 = vmatprep.subr.bf16.mxu0 %v699
  %940 = vmatpush1.bf16.msra.mxu0 %v698
  %941 = vmatprep.subr.bf16.mxu0 %v703
  %942 = vmatpush1.bf16.msra.mxu0 %v702
  %943 = vmatprep.subr.bf16.mxu0 %v707
  %944 = vmatpush1.bf16.msra.mxu0 %v706
  %945 = vmatprep.subr.bf16.mxu0 %v711
  %946 = vmatpush1.bf16.msra.mxu0 %v710
  %947 = vmatprep.subr.bf16.mxu0 0
  %948 = vmatpush1.bf16.msra.mxu0 0
  %949 = vmatprep.subr.bf16.mxu0 0
  %950 = vmatpush1.bf16.msra.mxu0 0
  %951 = vmatprep.subr.bf16.mxu0 0
  %952 = vmatpush1.bf16.msra.mxu0 0
  %953 = vmatprep.subr.bf16.mxu0 0
  %954 = vmatpush1.bf16.msra.mxu0 0
  %955 = vmatprep.subr.bf16.mxu0 0
  %956 = vmatpush1.bf16.msra.mxu0 0
  %957 = vmatprep.subr.bf16.mxu0 0
  %958 = vmatpush1.bf16.msra.mxu0 0
  %959 = vmatprep.subr.bf16.mxu0 0
  %960 = vmatpush1.bf16.msra.mxu0 0
  %961 = vmatprep.subr.bf16.mxu0 0
  %962 = vmatpush1.bf16.msra.mxu0 0
  %963 = vmatprep.mubr.bf16.mxu0 0
  %964 = vmatmul.mubr.bf16.gmra.mrb[0].mxu0 %v886
  %v965 = vpop.f32.mrb[0].mxu0
  %v966 = vadd.f32 0.0, %v965
  %v967 = vpop.f32.mrb[0].mxu0
  %v968 = vadd.f32 0.0, %v967
  %v969 = vpop.f32.mrb[0].mxu0
  %v970 = vadd.f32 0.0, %v969
  %v971 = vpop.f32.mrb[0].mxu0
  %v972 = vadd.f32 0.0, %v971
  %973 = vdwg.mxu0
  %v974 = vadd.f32 %v368, %v923
  %v975 = vadd.f32 %v370, %v925
  %v976 = vadd.f32 %v481, %v966
  %v977 = vadd.f32 %v483, %v968
  %v978 = vadd.f32 %v372, %v927
  %v979 = vadd.f32 %v374, %v929
  %v980 = vadd.f32 %v485, %v970
  %v981 = vadd.f32 %v487, %v972
  %v982 = vxor.u32 %v974, 2147483648
  %v983 = vxor.u32 %v978, 2147483648
  %v984 = vmul.f32 %v982, 1.442695
  %v985 = vpow.pop %v984
  %v986 = vmul.f32 %v983, 1.442695
  %v987 = vpow.pop %v986
  %v988 = vadd.f32 %v985, 1.0
  %v989 = vadd.f32 %v987, 1.0
  %v990 = vrcp.pop %v988
  %v991 = vmul.f32 1.0, %v990
  %v992 = vrcp.pop %v989
  %v993 = vmul.f32 1.0, %v992
  %v994 = vxor.u32 %v975, 2147483648
  %v995 = vxor.u32 %v979, 2147483648
  %v996 = vmul.f32 %v994, 1.442695
  %v997 = vpow.pop %v996
  %v998 = vmul.f32 %v995, 1.442695
  %v999 = vpow.pop %v998
  %v1000 = vadd.f32 %v997, 1.0
  %v1001 = vadd.f32 %v999, 1.0
  %v1002 = vrcp.pop %v1000
  %v1003 = vmul.f32 1.0, %v1002
  %v1004 = vrcp.pop %v1001
  %v1005 = vmul.f32 1.0, %v1004
  %v1006 = vtanh.pop %v976
  %v1007 = vtanh.pop %v980
  %v1008 = vxor.u32 %v977, 2147483648
  %v1009 = vxor.u32 %v981, 2147483648
  %v1010 = vmul.f32 %v1008, 1.442695
  %v1011 = vpow.pop %v1010
  %v1012 = vmul.f32 %v1009, 1.442695
  %v1013 = vpow.pop %v1012
  %v1014 = vadd.f32 %v1011, 1.0
  %v1015 = vadd.f32 %v1013, 1.0
  %v1016 = vrcp.pop %v1014
  %v1017 = vmul.f32 1.0, %v1016
  %v1018 = vrcp.pop %v1015
  %v1019 = vmul.f32 1.0, %v1018
  %v1020 = vmul.f32 %v1003, %v880
  %v1021 = vmul.f32 %v1005, %v881
  %v1022 = vmul.f32 %v991, %v1006
  %v1023 = vmul.f32 %v993, %v1007
  %v1024 = vadd.f32 %v1020, %v1022
  %v1025 = vadd.f32 %v1021, %v1023
  %v1026 = vtanh.pop %v1024
  %v1027 = vtanh.pop %v1025
  %v1028 = vmul.f32 %v1017, %v1026
  %v1029 = vmul.f32 %v1019, %v1027
  %v1030 = vpack.c.bf16 %v1029, %v1028
  %1031 = vst [vmem:[#allocation6 + $0x8] sm:$0xff] %v1030
  %1032 = vmatprep.subr.bf16.mxu0 %v681
  %1033 = vmatpush1.bf16.msra.mxu0 %v680
  %1034 = vmatprep.subr.bf16.mxu0 %v685
  %1035 = vmatpush1.bf16.msra.mxu0 %v684
  %1036 = vmatprep.subr.bf16.mxu0 %v689
  %1037 = vmatpush1.bf16.msra.mxu0 %v688
  %1038 = vmatprep.subr.bf16.mxu0 %v693
  %1039 = vmatpush1.bf16.msra.mxu0 %v692
  %1040 = vmatprep.subr.bf16.mxu0 %v697
  %1041 = vmatpush1.bf16.msra.mxu0 %v696
  %1042 = vmatprep.subr.bf16.mxu0 %v701
  %1043 = vmatpush1.bf16.msra.mxu0 %v700
  %1044 = vmatprep.subr.bf16.mxu0 %v705
  %1045 = vmatpush1.bf16.msra.mxu0 %v704
  %1046 = vmatprep.subr.bf16.mxu0 %v709
  %1047 = vmatpush1.bf16.msra.mxu0 %v708
  %1048 = vmatprep.subr.bf16.mxu0 0
  %1049 = vmatpush1.bf16.msra.mxu0 0
  %1050 = vmatprep.subr.bf16.mxu0 0
  %1051 = vmatpush1.bf16.msra.mxu0 0
  %1052 = vmatprep.subr.bf16.mxu0 0
  %1053 = vmatpush1.bf16.msra.mxu0 0
  %1054 = vmatprep.subr.bf16.mxu0 0
  %1055 = vmatpush1.bf16.msra.mxu0 0
  %1056 = vmatprep.subr.bf16.mxu0 0
  %1057 = vmatpush1.bf16.msra.mxu0 0
  %1058 = vmatprep.subr.bf16.mxu0 0
  %1059 = vmatpush1.bf16.msra.mxu0 0
  %1060 = vmatprep.subr.bf16.mxu0 0
  %1061 = vmatpush1.bf16.msra.mxu0 0
  %1062 = vmatprep.subr.bf16.mxu0 0
  %1063 = vmatpush1.bf16.msra.mxu0 0
  %1064 = vmatprep.mubr.bf16.mxu0 0
  %1065 = vmatmul.mubr.bf16.gmra.mrb[0].mxu0 %v1030
  %v1066 = vpop.f32.mrb[0].mxu0
  %v1067 = vadd.f32 0.0, %v1066
  %v1068 = vpop.f32.mrb[0].mxu0
  %v1069 = vadd.f32 0.0, %v1068
  %v1070 = vpop.f32.mrb[0].mxu0
  %v1071 = vadd.f32 0.0, %v1070
  %v1072 = vpop.f32.mrb[0].mxu0
  %v1073 = vadd.f32 0.0, %v1072
  %1074 = vdwg.mxu0
  %1075 = vmatprep.subr.bf16.mxu0 %v683
  %1076 = vmatpush1.bf16.msra.mxu0 %v682
  %1077 = vmatprep.subr.bf16.mxu0 %v687
  %1078 = vmatpush1.bf16.msra.mxu0 %v686
  %1079 = vmatprep.subr.bf16.mxu0 %v691
  %1080 = vmatpush1.bf16.msra.mxu0 %v690
  %1081 = vmatprep.subr.bf16.mxu0 %v695
  %1082 = vmatpush1.bf16.msra.mxu0 %v694
  %1083 = vmatprep.subr.bf16.mxu0 %v699
  %1084 = vmatpush1.bf16.msra.mxu0 %v698
  %1085 = vmatprep.subr.bf16.mxu0 %v703
  %1086 = vmatpush1.bf16.msra.mxu0 %v702
  %1087 = vmatprep.subr.bf16.mxu0 %v707
  %1088 = vmatpush1.bf16.msra.mxu0 %v706
  %1089 = vmatprep.subr.bf16.mxu0 %v711
  %1090 = vmatpush1.bf16.msra.mxu0 %v710
  %1091 = vmatprep.subr.bf16.mxu0 0
  %1092 = vmatpush1.bf16.msra.mxu0 0
  %1093 = vmatprep.subr.bf16.mxu0 0
  %1094 = vmatpush1.bf16.msra.mxu0 0
  %1095 = vmatprep.subr.bf16.mxu0 0
  %1096 = vmatpush1.bf16.msra.mxu0 0
  %1097 = vmatprep.subr.bf16.mxu0 0
  %1098 = vmatpush1.bf16.msra.mxu0 0
  %1099 = vmatprep.subr.bf16.mxu0 0
  %1100 = vmatpush1.bf16.msra.mxu0 0
  %1101 = vmatprep.subr.bf16.mxu0 0
  %1102 = vmatpush1.bf16.msra.mxu0 0
  %1103 = vmatprep.subr.bf16.mxu0 0
  %1104 = vmatpush1.bf16.msra.mxu0 0
  %1105 = vmatprep.subr.bf16.mxu0 0
  %1106 = vmatpush1.bf16.msra.mxu0 0
  %1107 = vmatprep.mubr.bf16.mxu0 0
  %1108 = vmatmul.mubr.bf16.gmra.mrb[0].mxu0 %v1030
  %v1109 = vpop.f32.mrb[0].mxu0
  %v1110 = vadd.f32 0.0, %v1109
  %v1111 = vpop.f32.mrb[0].mxu0
  %v1112 = vadd.f32 0.0, %v1111
  %v1113 = vpop.f32.mrb[0].mxu0
  %v1114 = vadd.f32 0.0, %v1113
  %v1115 = vpop.f32.mrb[0].mxu0
  %v1116 = vadd.f32 0.0, %v1115
  %1117 = vdwg.mxu0
  %v1118 = vadd.f32 %v378, %v1067
  %v1119 = vadd.f32 %v380, %v1069
  %v1120 = vadd.f32 %v491, %v1110
  %v1121 = vadd.f32 %v493, %v1112
  %v1122 = vadd.f32 %v382, %v1071
  %v1123 = vadd.f32 %v384, %v1073
  %v1124 = vadd.f32 %v495, %v1114
  %v1125 = vadd.f32 %v497, %v1116
  %v1126 = vxor.u32 %v1118, 2147483648
  %v1127 = vxor.u32 %v1122, 2147483648
  %v1128 = vmul.f32 %v1126, 1.442695
  %v1129 = vpow.pop %v1128
  %v1130 = vmul.f32 %v1127, 1.442695
  %v1131 = vpow.pop %v1130
  %v1132 = vadd.f32 %v1129, 1.0
  %v1133 = vadd.f32 %v1131, 1.0
  %v1134 = vrcp.pop %v1132
  %v1135 = vmul.f32 1.0, %v1134
  %v1136 = vrcp.pop %v1133
  %v1137 = vmul.f32 1.0, %v1136
  %v1138 = vxor.u32 %v1119, 2147483648
  %v1139 = vxor.u32 %v1123, 2147483648
  %v1140 = vmul.f32 %v1138, 1.442695
  %v1141 = vpow.pop %v1140
  %v1142 = vmul.f32 %v1139, 1.442695
  %v1143 = vpow.pop %v1142
  %v1144 = vadd.f32 %v1141, 1.0
  %v1145 = vadd.f32 %v1143, 1.0
  %v1146 = vrcp.pop %v1144
  %v1147 = vmul.f32 1.0, %v1146
  %v1148 = vrcp.pop %v1145
  %v1149 = vmul.f32 1.0, %v1148
  %v1150 = vtanh.pop %v1120
  %v1151 = vtanh.pop %v1124
  %v1152 = vxor.u32 %v1121, 2147483648
  %v1153 = vxor.u32 %v1125, 2147483648
  %v1154 = vmul.f32 %v1152, 1.442695
  %v1155 = vpow.pop %v1154
  %v1156 = vmul.f32 %v1153, 1.442695
  %v1157 = vpow.pop %v1156
  %v1158 = vadd.f32 %v1155, 1.0
  %v1159 = vadd.f32 %v1157, 1.0
  %v1160 = vrcp.pop %v1158
  %v1161 = vmul.f32 1.0, %v1160
  %v1162 = vrcp.pop %v1159
  %v1163 = vmul.f32 1.0, %v1162
  %v1164 = vmul.f32 %v1147, %v1024
  %v1165 = vmul.f32 %v1149, %v1025
  %v1166 = vmul.f32 %v1135, %v1150
  %v1167 = vmul.f32 %v1137, %v1151
  %v1168 = vadd.f32 %v1164, %v1166
  %v1169 = vadd.f32 %v1165, %v1167
  %v1170 = vtanh.pop %v1168
  %v1171 = vtanh.pop %v1169
  %v1172 = vmul.f32 %v1161, %v1170
  %v1173 = vmul.f32 %v1163, %v1171
  %v1174 = vpack.c.bf16 %v1173, %v1172
  %1175 = vst [vmem:[#allocation6 + $0x10] sm:$0xff] %v1174
  %1176 = vmatprep.subr.bf16.mxu0 %v681
  %1177 = vmatpush1.bf16.msra.mxu0 %v680
  %1178 = vmatprep.subr.bf16.mxu0 %v685
  %1179 = vmatpush1.bf16.msra.mxu0 %v684
  %1180 = vmatprep.subr.bf16.mxu0 %v689
  %1181 = vmatpush1.bf16.msra.mxu0 %v688
  %1182 = vmatprep.subr.bf16.mxu0 %v693
  %1183 = vmatpush1.bf16.msra.mxu0 %v692
  %1184 = vmatprep.subr.bf16.mxu0 %v697
  %1185 = vmatpush1.bf16.msra.mxu0 %v696
  %1186 = vmatprep.subr.bf16.mxu0 %v701
  %1187 = vmatpush1.bf16.msra.mxu0 %v700
  %1188 = vmatprep.subr.bf16.mxu0 %v705
  %1189 = vmatpush1.bf16.msra.mxu0 %v704
  %1190 = vmatprep.subr.bf16.mxu0 %v709
  %1191 = vmatpush1.bf16.msra.mxu0 %v708
  %1192 = vmatprep.subr.bf16.mxu0 0
  %1193 = vmatpush1.bf16.msra.mxu0 0
  %1194 = vmatprep.subr.bf16.mxu0 0
  %1195 = vmatpush1.bf16.msra.mxu0 0
  %1196 = vmatprep.subr.bf16.mxu0 0
  %1197 = vmatpush1.bf16.msra.mxu0 0
  %1198 = vmatprep.subr.bf16.mxu0 0
  %1199 = vmatpush1.bf16.msra.mxu0 0
  %1200 = vmatprep.subr.bf16.mxu0 0
  %1201 = vmatpush1.bf16.msra.mxu0 0
  %1202 = vmatprep.subr.bf16.mxu0 0
  %1203 = vmatpush1.bf16.msra.mxu0 0
  %1204 = vmatprep.subr.bf16.mxu0 0
  %1205 = vmatpush1.bf16.msra.mxu0 0
  %1206 = vmatprep.subr.bf16.mxu0 0
  %1207 = vmatpush1.bf16.msra.mxu0 0
  %1208 = vmatprep.mubr.bf16.mxu0 0
  %1209 = vmatmul.mubr.bf16.gmra.mrb[0].mxu0 %v1174
  %v1210 = vpop.f32.mrb[0].mxu0
  %v1211 = vadd.f32 0.0, %v1210
  %v1212 = vpop.f32.mrb[0].mxu0
  %v1213 = vadd.f32 0.0, %v1212
  %v1214 = vpop.f32.mrb[0].mxu0
  %v1215 = vadd.f32 0.0, %v1214
  %v1216 = vpop.f32.mrb[0].mxu0
  %v1217 = vadd.f32 0.0, %v1216
  %1218 = vdwg.mxu0
  %1219 = vmatprep.subr.bf16.mxu0 %v683
  %1220 = vmatpush1.bf16.msra.mxu0 %v682
  %1221 = vmatprep.subr.bf16.mxu0 %v687
  %1222 = vmatpush1.bf16.msra.mxu0 %v686
  %1223 = vmatprep.subr.bf16.mxu0 %v691
  %1224 = vmatpush1.bf16.msra.mxu0 %v690
  %1225 = vmatprep.subr.bf16.mxu0 %v695
  %1226 = vmatpush1.bf16.msra.mxu0 %v694
  %1227 = vmatprep.subr.bf16.mxu0 %v699
  %1228 = vmatpush1.bf16.msra.mxu0 %v698
  %1229 = vmatprep.subr.bf16.mxu0 %v703
  %1230 = vmatpush1.bf16.msra.mxu0 %v702
  %1231 = vmatprep.subr.bf16.mxu0 %v707
  %1232 = vmatpush1.bf16.msra.mxu0 %v706
  %1233 = vmatprep.subr.bf16.mxu0 %v711
  %1234 = vmatpush1.bf16.msra.mxu0 %v710
  %1235 = vmatprep.subr.bf16.mxu0 0
  %1236 = vmatpush1.bf16.msra.mxu0 0
  %1237 = vmatprep.subr.bf16.mxu0 0
  %1238 = vmatpush1.bf16.msra.mxu0 0
  %1239 = vmatprep.subr.bf16.mxu0 0
  %1240 = vmatpush1.bf16.msra.mxu0 0
  %1241 = vmatprep.subr.bf16.mxu0 0
  %1242 = vmatpush1.bf16.msra.mxu0 0
  %1243 = vmatprep.subr.bf16.mxu0 0
  %1244 = vmatpush1.bf16.msra.mxu0 0
  %1245 = vmatprep.subr.bf16.mxu0 0
  %1246 = vmatpush1.bf16.msra.mxu0 0
  %1247 = vmatprep.subr.bf16.mxu0 0
  %1248 = vmatpush1.bf16.msra.mxu0 0
  %1249 = vmatprep.subr.bf16.mxu0 0
  %1250 = vmatpush1.bf16.msra.mxu0 0
  %1251 = vmatprep.mubr.bf16.mxu0 0
  %1252 = vmatmul.mubr.bf16.gmra.mrb[0].mxu0 %v1174
  %v1253 = vpop.f32.mrb[0].mxu0
  %v1254 = vadd.f32 0.0, %v1253
  %v1255 = vpop.f32.mrb[0].mxu0
  %v1256 = vadd.f32 0.0, %v1255
  %v1257 = vpop.f32.mrb[0].mxu0
  %v1258 = vadd.f32 0.0, %v1257
  %v1259 = vpop.f32.mrb[0].mxu0
  %v1260 = vadd.f32 0.0, %v1259
  %1261 = vdwg.mxu0
  %v1262 = vadd.f32 %v388, %v1211
  %v1263 = vadd.f32 %v390, %v1213
  %v1264 = vadd.f32 %v501, %v1254
  %v1265 = vadd.f32 %v503, %v1256
  %v1266 = vadd.f32 %v392, %v1215
  %v1267 = vadd.f32 %v394, %v1217
  %v1268 = vadd.f32 %v505, %v1258
  %v1269 = vadd.f32 %v507, %v1260
  %v1270 = vxor.u32 %v1262, 2147483648
  %v1271 = vxor.u32 %v1266, 2147483648
  %v1272 = vmul.f32 %v1270, 1.442695
  %v1273 = vpow.pop %v1272
  %v1274 = vmul.f32 %v1271, 1.442695
  %v1275 = vpow.pop %v1274
  %v1276 = vadd.f32 %v1273, 1.0
  %v1277 = vadd.f32 %v1275, 1.0
  %v1278 = vrcp.pop %v1276
  %v1279 = vmul.f32 1.0, %v1278
  %v1280 = vrcp.pop %v1277
  %v1281 = vmul.f32 1.0, %v1280
  %v1282 = vxor.u32 %v1263, 2147483648
  %v1283 = vxor.u32 %v1267, 2147483648
  %v1284 = vmul.f32 %v1282, 1.442695
  %v1285 = vpow.pop %v1284
  %v1286 = vmul.f32 %v1283, 1.442695
  %v1287 = vpow.pop %v1286
  %v1288 = vadd.f32 %v1285, 1.0
  %v1289 = vadd.f32 %v1287, 1.0
  %v1290 = vrcp.pop %v1288
  %v1291 = vmul.f32 1.0, %v1290
  %v1292 = vrcp.pop %v1289
  %v1293 = vmul.f32 1.0, %v1292
  %v1294 = vtanh.pop %v1264
  %v1295 = vtanh.pop %v1268
  %v1296 = vxor.u32 %v1265, 2147483648
  %v1297 = vxor.u32 %v1269, 2147483648
  %v1298 = vmul.f32 %v1296, 1.442695
  %v1299 = vpow.pop %v1298
  %v1300 = vmul.f32 %v1297, 1.442695
  %v1301 = vpow.pop %v1300
  %v1302 = vadd.f32 %v1299, 1.0
  %v1303 = vadd.f32 %v1301, 1.0
  %v1304 = vrcp.pop %v1302
  %v1305 = vmul.f32 1.0, %v1304
  %v1306 = vrcp.pop %v1303
  %v1307 = vmul.f32 1.0, %v1306
  %v1308 = vmul.f32 %v1291, %v1168
  %v1309 = vmul.f32 %v1293, %v1169
  %v1310 = vmul.f32 %v1279, %v1294
  %v1311 = vmul.f32 %v1281, %v1295
  %v1312 = vadd.f32 %v1308, %v1310
  %v1313 = vadd.f32 %v1309, %v1311
  %v1314 = vtanh.pop %v1312
  %v1315 = vtanh.pop %v1313
  %v1316 = vmul.f32 %v1305, %v1314
  %v1317 = vmul.f32 %v1307, %v1315
  %v1318 = vpack.c.bf16 %v1317, %v1316
  %1319 = vst [vmem:[#allocation6 + $0x18] sm:$0xff] %v1318
  %1320 = vmatprep.subr.bf16.mxu0 %v681
  %1321 = vmatpush1.bf16.msra.mxu0 %v680
  %1322 = vmatprep.subr.bf16.mxu0 %v685
  %1323 = vmatpush1.bf16.msra.mxu0 %v684
  %1324 = vmatprep.subr.bf16.mxu0 %v689
  %1325 = vmatpush1.bf16.msra.mxu0 %v688
  %1326 = vmatprep.subr.bf16.mxu0 %v693
  %1327 = vmatpush1.bf16.msra.mxu0 %v692
  %1328 = vmatprep.subr.bf16.mxu0 %v697
  %1329 = vmatpush1.bf16.msra.mxu0 %v696
  %1330 = vmatprep.subr.bf16.mxu0 %v701
  %1331 = vmatpush1.bf16.msra.mxu0 %v700
  %1332 = vmatprep.subr.bf16.mxu0 %v705
  %1333 = vmatpush1.bf16.msra.mxu0 %v704
  %1334 = vmatprep.subr.bf16.mxu0 %v709
  %1335 = vmatpush1.bf16.msra.mxu0 %v708
  %1336 = vmatprep.subr.bf16.mxu0 0
  %1337 = vmatpush1.bf16.msra.mxu0 0
  %1338 = vmatprep.subr.bf16.mxu0 0
  %1339 = vmatpush1.bf16.msra.mxu0 0
  %1340 = vmatprep.subr.bf16.mxu0 0
  %1341 = vmatpush1.bf16.msra.mxu0 0
  %1342 = vmatprep.subr.bf16.mxu0 0
  %1343 = vmatpush1.bf16.msra.mxu0 0
  %1344 = vmatprep.subr.bf16.mxu0 0
  %1345 = vmatpush1.bf16.msra.mxu0 0
  %1346 = vmatprep.subr.bf16.mxu0 0
  %1347 = vmatpush1.bf16.msra.mxu0 0
  %1348 = vmatprep.subr.bf16.mxu0 0
  %1349 = vmatpush1.bf16.msra.mxu0 0
  %1350 = vmatprep.subr.bf16.mxu0 0
  %1351 = vmatpush1.bf16.msra.mxu0 0
  %1352 = vmatprep.mubr.bf16.mxu0 0
  %1353 = vmatmul.mubr.bf16.gmra.mrb[0].mxu0 %v1318
  %v1354 = vpop.f32.mrb[0].mxu0
  %v1355 = vadd.f32 0.0, %v1354
  %v1356 = vpop.f32.mrb[0].mxu0
  %v1357 = vadd.f32 0.0, %v1356
  %v1358 = vpop.f32.mrb[0].mxu0
  %v1359 = vadd.f32 0.0, %v1358
  %v1360 = vpop.f32.mrb[0].mxu0
  %v1361 = vadd.f32 0.0, %v1360
  %1362 = vdwg.mxu0
  %1363 = vmatprep.subr.bf16.mxu0 %v683
  %1364 = vmatpush1.bf16.msra.mxu0 %v682
  %1365 = vmatprep.subr.bf16.mxu0 %v687
  %1366 = vmatpush1.bf16.msra.mxu0 %v686
  %1367 = vmatprep.subr.bf16.mxu0 %v691
  %1368 = vmatpush1.bf16.msra.mxu0 %v690
  %1369 = vmatprep.subr.bf16.mxu0 %v695
  %1370 = vmatpush1.bf16.msra.mxu0 %v694
  %1371 = vmatprep.subr.bf16.mxu0 %v699
  %1372 = vmatpush1.bf16.msra.mxu0 %v698
  %1373 = vmatprep.subr.bf16.mxu0 %v703
  %1374 = vmatpush1.bf16.msra.mxu0 %v702
  %1375 = vmatprep.subr.bf16.mxu0 %v707
  %1376 = vmatpush1.bf16.msra.mxu0 %v706
  %1377 = vmatprep.subr.bf16.mxu0 %v711
  %1378 = vmatpush1.bf16.msra.mxu0 %v710
  %1379 = vmatprep.subr.bf16.mxu0 0
  %1380 = vmatpush1.bf16.msra.mxu0 0
  %1381 = vmatprep.subr.bf16.mxu0 0
  %1382 = vmatpush1.bf16.msra.mxu0 0
  %1383 = vmatprep.subr.bf16.mxu0 0
  %1384 = vmatpush1.bf16.msra.mxu0 0
  %1385 = vmatprep.subr.bf16.mxu0 0
  %1386 = vmatpush1.bf16.msra.mxu0 0
  %1387 = vmatprep.subr.bf16.mxu0 0
  %1388 = vmatpush1.bf16.msra.mxu0 0
  %1389 = vmatprep.subr.bf16.mxu0 0
  %1390 = vmatpush1.bf16.msra.mxu0 0
  %1391 = vmatprep.subr.bf16.mxu0 0
  %1392 = vmatpush1.bf16.msra.mxu0 0
  %1393 = vmatprep.subr.bf16.mxu0 0
  %1394 = vmatpush1.bf16.msra.mxu0 0
  %1395 = vmatprep.mubr.bf16.mxu0 0
  %1396 = vmatmul.mubr.bf16.gmra.mrb[0].mxu0 %v1318
  %v1397 = vpop.f32.mrb[0].mxu0
  %v1398 = vadd.f32 0.0, %v1397
  %v1399 = vpop.f32.mrb[0].mxu0
  %v1400 = vadd.f32 0.0, %v1399
  %v1401 = vpop.f32.mrb[0].mxu0
  %v1402 = vadd.f32 0.0, %v1401
  %v1403 = vpop.f32.mrb[0].mxu0
  %v1404 = vadd.f32 0.0, %v1403
  %1405 = vdwg.mxu0
  %v1406 = vadd.f32 %v398, %v1355
  %v1407 = vadd.f32 %v400, %v1357
  %v1408 = vadd.f32 %v511, %v1398
  %v1409 = vadd.f32 %v513, %v1400
  %v1410 = vadd.f32 %v402, %v1359
  %v1411 = vadd.f32 %v404, %v1361
  %v1412 = vadd.f32 %v515, %v1402
  %v1413 = vadd.f32 %v517, %v1404
  %v1414 = vxor.u32 %v1406, 2147483648
  %v1415 = vxor.u32 %v1410, 2147483648
  %v1416 = vmul.f32 %v1414, 1.442695
  %v1417 = vpow.pop %v1416
  %v1418 = vmul.f32 %v1415, 1.442695
  %v1419 = vpow.pop %v1418
  %v1420 = vadd.f32 %v1417, 1.0
  %v1421 = vadd.f32 %v1419, 1.0
  %v1422 = vrcp.pop %v1420
  %v1423 = vmul.f32 1.0, %v1422
  %v1424 = vrcp.pop %v1421
  %v1425 = vmul.f32 1.0, %v1424
  %v1426 = vxor.u32 %v1407, 2147483648
  %v1427 = vxor.u32 %v1411, 2147483648
  %v1428 = vmul.f32 %v1426, 1.442695
  %v1429 = vpow.pop %v1428
  %v1430 = vmul.f32 %v1427, 1.442695
  %v1431 = vpow.pop %v1430
  %v1432 = vadd.f32 %v1429, 1.0
  %v1433 = vadd.f32 %v1431, 1.0
  %v1434 = vrcp.pop %v1432
  %v1435 = vmul.f32 1.0, %v1434
  %v1436 = vrcp.pop %v1433
  %v1437 = vmul.f32 1.0, %v1436
  %v1438 = vtanh.pop %v1408
  %v1439 = vtanh.pop %v1412
  %v1440 = vxor.u32 %v1409, 2147483648
  %v1441 = vxor.u32 %v1413, 2147483648
  %v1442 = vmul.f32 %v1440, 1.442695
  %v1443 = vpow.pop %v1442
  %v1444 = vmul.f32 %v1441, 1.442695
  %v1445 = vpow.pop %v1444
  %v1446 = vadd.f32 %v1443, 1.0
  %v1447 = vadd.f32 %v1445, 1.0
  %v1448 = vrcp.pop %v1446
  %v1449 = vmul.f32 1.0, %v1448
  %v1450 = vrcp.pop %v1447
  %v1451 = vmul.f32 1.0, %v1450
  %v1452 = vmul.f32 %v1435, %v1312
  %v1453 = vmul.f32 %v1437, %v1313
  %v1454 = vmul.f32 %v1423, %v1438
  %v1455 = vmul.f32 %v1425, %v1439
  %v1456 = vadd.f32 %v1452, %v1454
  %v1457 = vadd.f32 %v1453, %v1455
  %v1458 = vtanh.pop %v1456
  %v1459 = vtanh.pop %v1457
  %v1460 = vmul.f32 %v1449, %v1458
  %v1461 = vmul.f32 %v1451, %v1459
  %v1462 = vpack.c.bf16 %v1461, %v1460
  %1463 = vst [vmem:[#allocation6 + $0x20] sm:$0xff] %v1462
  %1464 = vmatprep.subr.bf16.mxu0 %v681
  %1465 = vmatpush1.bf16.msra.mxu0 %v680
  %1466 = vmatprep.subr.bf16.mxu0 %v685
  %1467 = vmatpush1.bf16.msra.mxu0 %v684
  %1468 = vmatprep.subr.bf16.mxu0 %v689
  %1469 = vmatpush1.bf16.msra.mxu0 %v688
  %1470 = vmatprep.subr.bf16.mxu0 %v693
  %1471 = vmatpush1.bf16.msra.mxu0 %v692
  %1472 = vmatprep.subr.bf16.mxu0 %v697
  %1473 = vmatpush1.bf16.msra.mxu0 %v696
  %1474 = vmatprep.subr.bf16.mxu0 %v701
  %1475 = vmatpush1.bf16.msra.mxu0 %v700
  %1476 = vmatprep.subr.bf16.mxu0 %v705
  %1477 = vmatpush1.bf16.msra.mxu0 %v704
  %1478 = vmatprep.subr.bf16.mxu0 %v709
  %1479 = vmatpush1.bf16.msra.mxu0 %v708
  %1480 = vmatprep.subr.bf16.mxu0 0
  %1481 = vmatpush1.bf16.msra.mxu0 0
  %1482 = vmatprep.subr.bf16.mxu0 0
  %1483 = vmatpush1.bf16.msra.mxu0 0
  %1484 = vmatprep.subr.bf16.mxu0 0
  %1485 = vmatpush1.bf16.msra.mxu0 0
  %1486 = vmatprep.subr.bf16.mxu0 0
  %1487 = vmatpush1.bf16.msra.mxu0 0
  %1488 = vmatprep.subr.bf16.mxu0 0
  %1489 = vmatpush1.bf16.msra.mxu0 0
  %1490 = vmatprep.subr.bf16.mxu0 0
  %1491 = vmatpush1.bf16.msra.mxu0 0
  %1492 = vmatprep.subr.bf16.mxu0 0
  %1493 = vmatpush1.bf16.msra.mxu0 0
  %1494 = vmatprep.subr.bf16.mxu0 0
  %1495 = vmatpush1.bf16.msra.mxu0 0
  %1496 = vmatprep.mubr.bf16.mxu0 0
  %1497 = vmatmul.mubr.bf16.gmra.mrb[0].mxu0 %v1462
  %v1498 = vpop.f32.mrb[0].mxu0
  %v1499 = vadd.f32 0.0, %v1498
  %v1500 = vpop.f32.mrb[0].mxu0
  %v1501 = vadd.f32 0.0, %v1500
  %v1502 = vpop.f32.mrb[0].mxu0
  %v1503 = vadd.f32 0.0, %v1502
  %v1504 = vpop.f32.mrb[0].mxu0
  %v1505 = vadd.f32 0.0, %v1504
  %1506 = vdwg.mxu0
  %1507 = vmatprep.subr.bf16.mxu0 %v683
  %1508 = vmatpush1.bf16.msra.mxu0 %v682
  %1509 = vmatprep.subr.bf16.mxu0 %v687
  %1510 = vmatpush1.bf16.msra.mxu0 %v686
  %1511 = vmatprep.subr.bf16.mxu0 %v691
  %1512 = vmatpush1.bf16.msra.mxu0 %v690
  %1513 = vmatprep.subr.bf16.mxu0 %v695
  %1514 = vmatpush1.bf16.msra.mxu0 %v694
  %1515 = vmatprep.subr.bf16.mxu0 %v699
  %1516 = vmatpush1.bf16.msra.mxu0 %v698
  %1517 = vmatprep.subr.bf16.mxu0 %v703
  %1518 = vmatpush1.bf16.msra.mxu0 %v702
  %1519 = vmatprep.subr.bf16.mxu0 %v707
  %1520 = vmatpush1.bf16.msra.mxu0 %v706
  %1521 = vmatprep.subr.bf16.mxu0 %v711
  %1522 = vmatpush1.bf16.msra.mxu0 %v710
  %1523 = vmatprep.subr.bf16.mxu0 0
  %1524 = vmatpush1.bf16.msra.mxu0 0
  %1525 = vmatprep.subr.bf16.mxu0 0
  %1526 = vmatpush1.bf16.msra.mxu0 0
  %1527 = vmatprep.subr.bf16.mxu0 0
  %1528 = vmatpush1.bf16.msra.mxu0 0
  %1529 = vmatprep.subr.bf16.mxu0 0
  %1530 = vmatpush1.bf16.msra.mxu0 0
  %1531 = vmatprep.subr.bf16.mxu0 0
  %1532 = vmatpush1.bf16.msra.mxu0 0
  %1533 = vmatprep.subr.bf16.mxu0 0
  %1534 = vmatpush1.bf16.msra.mxu0 0
  %1535 = vmatprep.subr.bf16.mxu0 0
  %1536 = vmatpush1.bf16.msra.mxu0 0
  %1537 = vmatprep.subr.bf16.mxu0 0
  %1538 = vmatpush1.bf16.msra.mxu0 0
  %1539 = vmatprep.mubr.bf16.mxu0 0
  %1540 = vmatmul.mubr.bf16.gmra.mrb[0].mxu0 %v1462
  %v1541 = vpop.f32.mrb[0].mxu0
  %v1542 = vadd.f32 0.0, %v1541
  %v1543 = vpop.f32.mrb[0].mxu0
  %v1544 = vadd.f32 0.0, %v1543
  %v1545 = vpop.f32.mrb[0].mxu0
  %v1546 = vadd.f32 0.0, %v1545
  %v1547 = vpop.f32.mrb[0].mxu0
  %v1548 = vadd.f32 0.0, %v1547
  %1549 = vdwg.mxu0
  %v1550 = vadd.f32 %v408, %v1499
  %v1551 = vadd.f32 %v410, %v1501
  %v1552 = vadd.f32 %v521, %v1542
  %v1553 = vadd.f32 %v523, %v1544
  %v1554 = vadd.f32 %v412, %v1503
  %v1555 = vadd.f32 %v414, %v1505
  %v1556 = vadd.f32 %v525, %v1546
  %v1557 = vadd.f32 %v527, %v1548
  %v1558 = vxor.u32 %v1550, 2147483648
  %v1559 = vxor.u32 %v1554, 2147483648
  %v1560 = vmul.f32 %v1558, 1.442695
  %v1561 = vpow.pop %v1560
  %v1562 = vmul.f32 %v1559, 1.442695
  %v1563 = vpow.pop %v1562
  %v1564 = vadd.f32 %v1561, 1.0
  %v1565 = vadd.f32 %v1563, 1.0
  %v1566 = vrcp.pop %v1564
  %v1567 = vmul.f32 1.0, %v1566
  %v1568 = vrcp.pop %v1565
  %v1569 = vmul.f32 1.0, %v1568
  %v1570 = vxor.u32 %v1551, 2147483648
  %v1571 = vxor.u32 %v1555, 2147483648
  %v1572 = vmul.f32 %v1570, 1.442695
  %v1573 = vpow.pop %v1572
  %v1574 = vmul.f32 %v1571, 1.442695
  %v1575 = vpow.pop %v1574
  %v1576 = vadd.f32 %v1573, 1.0
  %v1577 = vadd.f32 %v1575, 1.0
  %v1578 = vrcp.pop %v1576
  %v1579 = vmul.f32 1.0, %v1578
  %v1580 = vrcp.pop %v1577
  %v1581 = vmul.f32 1.0, %v1580
  %v1582 = vtanh.pop %v1552
  %v1583 = vtanh.pop %v1556
  %v1584 = vxor.u32 %v1553, 2147483648
  %v1585 = vxor.u32 %v1557, 2147483648
  %v1586 = vmul.f32 %v1584, 1.442695
  %v1587 = vpow.pop %v1586
  %v1588 = vmul.f32 %v1585, 1.442695
  %v1589 = vpow.pop %v1588
  %v1590 = vadd.f32 %v1587, 1.0
  %v1591 = vadd.f32 %v1589, 1.0
  %v1592 = vrcp.pop %v1590
  %v1593 = vmul.f32 1.0, %v1592
  %v1594 = vrcp.pop %v1591
  %v1595 = vmul.f32 1.0, %v1594
  %v1596 = vmul.f32 %v1579, %v1456
  %v1597 = vmul.f32 %v1581, %v1457
  %v1598 = vmul.f32 %v1567, %v1582
  %v1599 = vmul.f32 %v1569, %v1583
  %v1600 = vadd.f32 %v1596, %v1598
  %v1601 = vadd.f32 %v1597, %v1599
  %v1602 = vtanh.pop %v1600
  %v1603 = vtanh.pop %v1601
  %v1604 = vmul.f32 %v1593, %v1602
  %v1605 = vmul.f32 %v1595, %v1603
  %v1606 = vpack.c.bf16 %v1605, %v1604
  %1607 = vst [vmem:[#allocation6 + $0x28] sm:$0xff] %v1606
  %1608 = vmatprep.subr.bf16.mxu0 %v681
  %1609 = vmatpush1.bf16.msra.mxu0 %v680
  %1610 = vmatprep.subr.bf16.mxu0 %v685
  %1611 = vmatpush1.bf16.msra.mxu0 %v684
  %1612 = vmatprep.subr.bf16.mxu0 %v689
  %1613 = vmatpush1.bf16.msra.mxu0 %v688
  %1614 = vmatprep.subr.bf16.mxu0 %v693
  %1615 = vmatpush1.bf16.msra.mxu0 %v692
  %1616 = vmatprep.subr.bf16.mxu0 %v697
  %1617 = vmatpush1.bf16.msra.mxu0 %v696
  %1618 = vmatprep.subr.bf16.mxu0 %v701
  %1619 = vmatpush1.bf16.msra.mxu0 %v700
  %1620 = vmatprep.subr.bf16.mxu0 %v705
  %1621 = vmatpush1.bf16.msra.mxu0 %v704
  %1622 = vmatprep.subr.bf16.mxu0 %v709
  %1623 = vmatpush1.bf16.msra.mxu0 %v708
  %1624 = vmatprep.subr.bf16.mxu0 0
  %1625 = vmatpush1.bf16.msra.mxu0 0
  %1626 = vmatprep.subr.bf16.mxu0 0
  %1627 = vmatpush1.bf16.msra.mxu0 0
  %1628 = vmatprep.subr.bf16.mxu0 0
  %1629 = vmatpush1.bf16.msra.mxu0 0
  %1630 = vmatprep.subr.bf16.mxu0 0
  %1631 = vmatpush1.bf16.msra.mxu0 0
  %1632 = vmatprep.subr.bf16.mxu0 0
  %1633 = vmatpush1.bf16.msra.mxu0 0
  %1634 = vmatprep.subr.bf16.mxu0 0
  %1635 = vmatpush1.bf16.msra.mxu0 0
  %1636 = vmatprep.subr.bf16.mxu0 0
  %1637 = vmatpush1.bf16.msra.mxu0 0
  %1638 = vmatprep.subr.bf16.mxu0 0
  %1639 = vmatpush1.bf16.msra.mxu0 0
  %1640 = vmatprep.mubr.bf16.mxu0 0
  %1641 = vmatmul.mubr.bf16.gmra.mrb[0].mxu0 %v1606
  %v1642 = vpop.f32.mrb[0].mxu0
  %v1643 = vadd.f32 0.0, %v1642
  %v1644 = vpop.f32.mrb[0].mxu0
  %v1645 = vadd.f32 0.0, %v1644
  %v1646 = vpop.f32.mrb[0].mxu0
  %v1647 = vadd.f32 0.0, %v1646
  %v1648 = vpop.f32.mrb[0].mxu0
  %v1649 = vadd.f32 0.0, %v1648
  %1650 = vdwg.mxu0
  %1651 = vmatprep.subr.bf16.mxu0 %v683
  %1652 = vmatpush1.bf16.msra.mxu0 %v682
  %1653 = vmatprep.subr.bf16.mxu0 %v687
  %1654 = vmatpush1.bf16.msra.mxu0 %v686
  %1655 = vmatprep.subr.bf16.mxu0 %v691
  %1656 = vmatpush1.bf16.msra.mxu0 %v690
  %1657 = vmatprep.subr.bf16.mxu0 %v695
  %1658 = vmatpush1.bf16.msra.mxu0 %v694
  %1659 = vmatprep.subr.bf16.mxu0 %v699
  %1660 = vmatpush1.bf16.msra.mxu0 %v698
  %1661 = vmatprep.subr.bf16.mxu0 %v703
  %1662 = vmatpush1.bf16.msra.mxu0 %v702
  %1663 = vmatprep.subr.bf16.mxu0 %v707
  %1664 = vmatpush1.bf16.msra.mxu0 %v706
  %1665 = vmatprep.subr.bf16.mxu0 %v711
  %1666 = vmatpush1.bf16.msra.mxu0 %v710
  %1667 = vmatprep.subr.bf16.mxu0 0
  %1668 = vmatpush1.bf16.msra.mxu0 0
  %1669 = vmatprep.subr.bf16.mxu0 0
  %1670 = vmatpush1.bf16.msra.mxu0 0
  %1671 = vmatprep.subr.bf16.mxu0 0
  %1672 = vmatpush1.bf16.msra.mxu0 0
  %1673 = vmatprep.subr.bf16.mxu0 0
  %1674 = vmatpush1.bf16.msra.mxu0 0
  %1675 = vmatprep.subr.bf16.mxu0 0
  %1676 = vmatpush1.bf16.msra.mxu0 0
  %1677 = vmatprep.subr.bf16.mxu0 0
  %1678 = vmatpush1.bf16.msra.mxu0 0
  %1679 = vmatprep.subr.bf16.mxu0 0
  %1680 = vmatpush1.bf16.msra.mxu0 0
  %1681 = vmatprep.subr.bf16.mxu0 0
  %1682 = vmatpush1.bf16.msra.mxu0 0
  %1683 = vmatprep.mubr.bf16.mxu0 0
  %1684 = vmatmul.mubr.bf16.gmra.mrb[0].mxu0 %v1606
  %v1685 = vpop.f32.mrb[0].mxu0
  %v1686 = vadd.f32 0.0, %v1685
  %v1687 = vpop.f32.mrb[0].mxu0
  %v1688 = vadd.f32 0.0, %v1687
  %v1689 = vpop.f32.mrb[0].mxu0
  %v1690 = vadd.f32 0.0, %v1689
  %v1691 = vpop.f32.mrb[0].mxu0
  %v1692 = vadd.f32 0.0, %v1691
  %1693 = vdwg.mxu0
  %v1694 = vadd.f32 %v418, %v1643
  %v1695 = vadd.f32 %v420, %v1645
  %v1696 = vadd.f32 %v531, %v1686
  %v1697 = vadd.f32 %v533, %v1688
  %v1698 = vadd.f32 %v422, %v1647
  %v1699 = vadd.f32 %v424, %v1649
  %v1700 = vadd.f32 %v535, %v1690
  %v1701 = vadd.f32 %v537, %v1692
  %v1702 = vxor.u32 %v1694, 2147483648
  %v1703 = vxor.u32 %v1698, 2147483648
  %v1704 = vmul.f32 %v1702, 1.442695
  %v1705 = vpow.pop %v1704
  %v1706 = vmul.f32 %v1703, 1.442695
  %v1707 = vpow.pop %v1706
  %v1708 = vadd.f32 %v1705, 1.0
  %v1709 = vadd.f32 %v1707, 1.0
  %v1710 = vrcp.pop %v1708
  %v1711 = vmul.f32 1.0, %v1710
  %v1712 = vrcp.pop %v1709
  %v1713 = vmul.f32 1.0, %v1712
  %v1714 = vxor.u32 %v1695, 2147483648
  %v1715 = vxor.u32 %v1699, 2147483648
  %v1716 = vmul.f32 %v1714, 1.442695
  %v1717 = vpow.pop %v1716
  %v1718 = vmul.f32 %v1715, 1.442695
  %v1719 = vpow.pop %v1718
  %v1720 = vadd.f32 %v1717, 1.0
  %v1721 = vadd.f32 %v1719, 1.0
  %v1722 = vrcp.pop %v1720
  %v1723 = vmul.f32 1.0, %v1722
  %v1724 = vrcp.pop %v1721
  %v1725 = vmul.f32 1.0, %v1724
  %v1726 = vtanh.pop %v1696
  %v1727 = vtanh.pop %v1700
  %v1728 = vxor.u32 %v1697, 2147483648
  %v1729 = vxor.u32 %v1701, 2147483648
  %v1730 = vmul.f32 %v1728, 1.442695
  %v1731 = vpow.pop %v1730
  %v1732 = vmul.f32 %v1729, 1.442695
  %v1733 = vpow.pop %v1732
  %v1734 = vadd.f32 %v1731, 1.0
  %v1735 = vadd.f32 %v1733, 1.0
  %v1736 = vrcp.pop %v1734
  %v1737 = vmul.f32 1.0, %v1736
  %v1738 = vrcp.pop %v1735
  %v1739 = vmul.f32 1.0, %v1738
  %v1740 = vmul.f32 %v1723, %v1600
  %v1741 = vmul.f32 %v1725, %v1601
  %v1742 = vmul.f32 %v1711, %v1726
  %v1743 = vmul.f32 %v1713, %v1727
  %v1744 = vadd.f32 %v1740, %v1742
  %v1745 = vadd.f32 %v1741, %v1743
  %v1746 = vtanh.pop %v1744
  %v1747 = vtanh.pop %v1745
  %v1748 = vmul.f32 %v1737, %v1746
  %v1749 = vmul.f32 %v1739, %v1747
  %v1750 = vpack.c.bf16 %v1749, %v1748
  %1751 = vst [vmem:[#allocation6 + $0x30] sm:$0xff] %v1750
  %1752 = vmatprep.subr.bf16.mxu0 %v681
  %1753 = vmatpush1.bf16.msra.mxu0 %v680
  %1754 = vmatprep.subr.bf16.mxu0 %v685
  %1755 = vmatpush1.bf16.msra.mxu0 %v684
  %1756 = vmatprep.subr.bf16.mxu0 %v689
  %1757 = vmatpush1.bf16.msra.mxu0 %v688
  %1758 = vmatprep.subr.bf16.mxu0 %v693
  %1759 = vmatpush1.bf16.msra.mxu0 %v692
  %1760 = vmatprep.subr.bf16.mxu0 %v697
  %1761 = vmatpush1.bf16.msra.mxu0 %v696
  %1762 = vmatprep.subr.bf16.mxu0 %v701
  %1763 = vmatpush1.bf16.msra.mxu0 %v700
  %1764 = vmatprep.subr.bf16.mxu0 %v705
  %1765 = vmatpush1.bf16.msra.mxu0 %v704
  %1766 = vmatprep.subr.bf16.mxu0 %v709
  %1767 = vmatpush1.bf16.msra.mxu0 %v708
  %1768 = vmatprep.subr.bf16.mxu0 0
  %1769 = vmatpush1.bf16.msra.mxu0 0
  %1770 = vmatprep.subr.bf16.mxu0 0
  %1771 = vmatpush1.bf16.msra.mxu0 0
  %1772 = vmatprep.subr.bf16.mxu0 0
  %1773 = vmatpush1.bf16.msra.mxu0 0
  %1774 = vmatprep.subr.bf16.mxu0 0
  %1775 = vmatpush1.bf16.msra.mxu0 0
  %1776 = vmatprep.subr.bf16.mxu0 0
  %1777 = vmatpush1.bf16.msra.mxu0 0
  %1778 = vmatprep.subr.bf16.mxu0 0
  %1779 = vmatpush1.bf16.msra.mxu0 0
  %1780 = vmatprep.subr.bf16.mxu0 0
  %1781 = vmatpush1.bf16.msra.mxu0 0
  %1782 = vmatprep.subr.bf16.mxu0 0
  %1783 = vmatpush1.bf16.msra.mxu0 0
  %1784 = vmatprep.mubr.bf16.mxu0 0
  %1785 = vmatmul.mubr.bf16.gmra.mrb[0].mxu0 %v1750
  %v1786 = vpop.f32.mrb[0].mxu0
  %v1787 = vadd.f32 0.0, %v1786
  %v1788 = vpop.f32.mrb[0].mxu0
  %v1789 = vadd.f32 0.0, %v1788
  %v1790 = vpop.f32.mrb[0].mxu0
  %v1791 = vadd.f32 0.0, %v1790
  %v1792 = vpop.f32.mrb[0].mxu0
  %v1793 = vadd.f32 0.0, %v1792
  %1794 = vdwg.mxu0
  %1795 = vmatprep.subr.bf16.mxu0 %v683
  %1796 = vmatpush1.bf16.msra.mxu0 %v682
  %1797 = vmatprep.subr.bf16.mxu0 %v687
  %1798 = vmatpush1.bf16.msra.mxu0 %v686
  %1799 = vmatprep.subr.bf16.mxu0 %v691
  %1800 = vmatpush1.bf16.msra.mxu0 %v690
  %1801 = vmatprep.subr.bf16.mxu0 %v695
  %1802 = vmatpush1.bf16.msra.mxu0 %v694
  %1803 = vmatprep.subr.bf16.mxu0 %v699
  %1804 = vmatpush1.bf16.msra.mxu0 %v698
  %1805 = vmatprep.subr.bf16.mxu0 %v703
  %1806 = vmatpush1.bf16.msra.mxu0 %v702
  %1807 = vmatprep.subr.bf16.mxu0 %v707
  %1808 = vmatpush1.bf16.msra.mxu0 %v706
  %1809 = vmatprep.subr.bf16.mxu0 %v711
  %1810 = vmatpush1.bf16.msra.mxu0 %v710
  %1811 = vmatprep.subr.bf16.mxu0 0
  %1812 = vmatpush1.bf16.msra.mxu0 0
  %1813 = vmatprep.subr.bf16.mxu0 0
  %1814 = vmatpush1.bf16.msra.mxu0 0
  %1815 = vmatprep.subr.bf16.mxu0 0
  %1816 = vmatpush1.bf16.msra.mxu0 0
  %1817 = vmatprep.subr.bf16.mxu0 0
  %1818 = vmatpush1.bf16.msra.mxu0 0
  %1819 = vmatprep.subr.bf16.mxu0 0
  %1820 = vmatpush1.bf16.msra.mxu0 0
  %1821 = vmatprep.subr.bf16.mxu0 0
  %1822 = vmatpush1.bf16.msra.mxu0 0
  %1823 = vmatprep.subr.bf16.mxu0 0
  %1824 = vmatpush1.bf16.msra.mxu0 0
  %1825 = vmatprep.subr.bf16.mxu0 0
  %1826 = vmatpush1.bf16.msra.mxu0 0
  %1827 = vmatprep.mubr.bf16.mxu0 0
  %1828 = vmatmul.mubr.bf16.gmra.mrb[0].mxu0 %v1750
  %v1829 = vpop.f32.mrb[0].mxu0
  %v1830 = vadd.f32 0.0, %v1829
  %v1831 = vpop.f32.mrb[0].mxu0
  %v1832 = vadd.f32 0.0, %v1831
  %v1833 = vpop.f32.mrb[0].mxu0
  %v1834 = vadd.f32 0.0, %v1833
  %v1835 = vpop.f32.mrb[0].mxu0
  %v1836 = vadd.f32 0.0, %v1835
  %1837 = vdwg.mxu0
  %v1838 = vadd.f32 %v428, %v1787
  %v1839 = vadd.f32 %v430, %v1789
  %v1840 = vadd.f32 %v541, %v1830
  %v1841 = vadd.f32 %v543, %v1832
  %v1842 = vadd.f32 %v432, %v1791
  %v1843 = vadd.f32 %v434, %v1793
  %v1844 = vadd.f32 %v545, %v1834
  %v1845 = vadd.f32 %v547, %v1836
  %v1846 = vxor.u32 %v1838, 2147483648
  %v1847 = vxor.u32 %v1842, 2147483648
  %v1848 = vmul.f32 %v1846, 1.442695
  %v1849 = vpow.pop %v1848
  %v1850 = vmul.f32 %v1847, 1.442695
  %v1851 = vpow.pop %v1850
  %v1852 = vadd.f32 %v1849, 1.0
  %v1853 = vadd.f32 %v1851, 1.0
  %v1854 = vrcp.pop %v1852
  %v1855 = vmul.f32 1.0, %v1854
  %v1856 = vrcp.pop %v1853
  %v1857 = vmul.f32 1.0, %v1856
  %v1858 = vxor.u32 %v1839, 2147483648
  %v1859 = vxor.u32 %v1843, 2147483648
  %v1860 = vmul.f32 %v1858, 1.442695
  %v1861 = vpow.pop %v1860
  %v1862 = vmul.f32 %v1859, 1.442695
  %v1863 = vpow.pop %v1862
  %v1864 = vadd.f32 %v1861, 1.0
  %v1865 = vadd.f32 %v1863, 1.0
  %v1866 = vrcp.pop %v1864
  %v1867 = vmul.f32 1.0, %v1866
  %v1868 = vrcp.pop %v1865
  %v1869 = vmul.f32 1.0, %v1868
  %v1870 = vtanh.pop %v1840
  %v1871 = vtanh.pop %v1844
  %v1872 = vxor.u32 %v1841, 2147483648
  %v1873 = vxor.u32 %v1845, 2147483648
  %v1874 = vmul.f32 %v1872, 1.442695
  %v1875 = vpow.pop %v1874
  %v1876 = vmul.f32 %v1873, 1.442695
  %v1877 = vpow.pop %v1876
  %v1878 = vadd.f32 %v1875, 1.0
  %v1879 = vadd.f32 %v1877, 1.0
  %v1880 = vrcp.pop %v1878
  %v1881 = vmul.f32 1.0, %v1880
  %v1882 = vrcp.pop %v1879
  %v1883 = vmul.f32 1.0, %v1882
  %v1884 = vmul.f32 %v1867, %v1744
  %v1885 = vmul.f32 %v1869, %v1745
  %v1886 = vmul.f32 %v1855, %v1870
  %v1887 = vmul.f32 %v1857, %v1871
  %v1888 = vadd.f32 %v1884, %v1886
  %v1889 = vadd.f32 %v1885, %v1887
  %v1890 = vtanh.pop %v1888
  %v1891 = vtanh.pop %v1889
  %v1892 = vmul.f32 %v1881, %v1890
  %v1893 = vmul.f32 %v1883, %v1891
  %v1894 = vpack.c.bf16 %v1893, %v1892
  %1895 = vst [vmem:[#allocation6 + $0x38] sm:$0xff] %v1894
  %1896 = vst [vmem:[#allocation2] sm:$0xff] %v1894
  %1897 = vst [vmem:[#allocation4] sm:$0xff] %v1888
  %1898 = vst [vmem:[#allocation4 + $0x8] sm:$0xff] %v1889
  %v1899 = vld [vmem:[#allocation6] sm:$0xff]
  %v1900 = vld [vmem:[#allocation6 + $0x8] sm:$0xff]
  %v1901 = vld [vmem:[#allocation6 + $0x10] sm:$0xff]
  %v1902 = vld [vmem:[#allocation6 + $0x18] sm:$0xff]
  %v1903 = vld [vmem:[#allocation6 + $0x20] sm:$0xff]
  %v1904 = vld [vmem:[#allocation6 + $0x28] sm:$0xff]
  %v1905 = vld [vmem:[#allocation6 + $0x30] sm:$0xff]
  %v1906 = vld [vmem:[#allocation6 + $0x38] sm:$0xff]
  %v1907 = vld [vmem:[%s4] sm:$0xff]
  %v1908 = vld [vmem:[%s4 + $0x8] sm:$0xff]
  %v1909 = vld [vmem:[%s4 + $0x10] sm:$0xff]
  %v1910 = vld [vmem:[%s4 + $0x18] sm:$0xff]
  %v1911 = vld [vmem:[%s4 + $0x20] sm:$0xff]
  %v1912 = vld [vmem:[%s4 + $0x28] sm:$0xff]
  %v1913 = vld [vmem:[%s4 + $0x30] sm:$0xff]
  %v1914 = vld [vmem:[%s4 + $0x38] sm:$0xff]
  %v1915 = vld [vmem:[%s4 + $0x40] sm:$0xff]
  %v1916 = vld [vmem:[%s4 + $0x48] sm:$0xff]
  %v1917 = vld [vmem:[%s4 + $0x50] sm:$0xff]
  %v1918 = vld [vmem:[%s4 + $0x58] sm:$0xff]
  %v1919 = vld [vmem:[%s4 + $0x60] sm:$0xff]
  %v1920 = vld [vmem:[%s4 + $0x68] sm:$0xff]
  %v1921 = vld [vmem:[%s4 + $0x70] sm:$0xff]
  %v1922 = vld [vmem:[%s4 + $0x78] sm:$0xff]
  %v1923 = vld [vmem:[%s4 + $0x80] sm:$0xff]
  %v1924 = vld [vmem:[%s4 + $0x88] sm:$0xff]
  %v1925 = vld [vmem:[%s4 + $0x90] sm:$0xff]
  %v1926 = vld [vmem:[%s4 + $0x98] sm:$0xff]
  %v1927 = vld [vmem:[%s4 + $0xa0] sm:$0xff]
  %v1928 = vld [vmem:[%s4 + $0xa8] sm:$0xff]
  %v1929 = vld [vmem:[%s4 + $0xb0] sm:$0xff]
  %v1930 = vld [vmem:[%s4 + $0xb8] sm:$0xff]
  %v1931 = vld [vmem:[%s4 + $0xc0] sm:$0xff]
  %v1932 = vld [vmem:[%s4 + $0xc8] sm:$0xff]
  %v1933 = vld [vmem:[%s4 + $0xd0] sm:$0xff]
  %v1934 = vld [vmem:[%s4 + $0xd8] sm:$0xff]
  %v1935 = vld [vmem:[%s4 + $0xe0] sm:$0xff]
  %v1936 = vld [vmem:[%s4 + $0xe8] sm:$0xff]
  %v1937 = vld [vmem:[%s4 + $0xf0] sm:$0xff]
  %v1938 = vld [vmem:[%s4 + $0xf8] sm:$0xff]
  %v1939 = vld [vmem:[%s6] sm:$0xf]
  %v1941 = vlaneseq
  %v1942 = vshrl.u32 %v1941, 7
  %v1943 = vsub.s32 0, %v1942
  %v1944 = vrot.slane %v1939, %v1943
  %v1945 = vlaneseq
  %v1946 = vshrl.u32 %v1945, 7
  %v1947 = vsub.s32 1, %v1946
  %v1948 = vrot.slane %v1939, %v1947
  %v1949 = vlaneseq
  %v1950 = vshrl.u32 %v1949, 7
  %v1951 = vsub.s32 2, %v1950
  %v1952 = vrot.slane %v1939, %v1951
  %v1953 = vlaneseq
  %v1954 = vshrl.u32 %v1953, 7
  %v1955 = vsub.s32 3, %v1954
  %v1956 = vrot.slane %v1939, %v1955
  %v1993 = vunpack.c.l.b16 %v1907
  %v1994 = vunpack.c.h.b16 %v1907
  %v1995 = vunpack.c.l.b16 %v1908
  %v1996 = vunpack.c.h.b16 %v1908
  %v1997 = vunpack.c.l.b16 %v1909
  %v1998 = vunpack.c.h.b16 %v1909
  %v1999 = vunpack.c.l.b16 %v1910
  %v2000 = vunpack.c.h.b16 %v1910
  %v2001 = vunpack.c.l.b16 %v1911
  %v2002 = vunpack.c.h.b16 %v1911
  %v2003 = vunpack.c.l.b16 %v1912
  %v2004 = vunpack.c.h.b16 %v1912
  %v2005 = vunpack.c.l.b16 %v1913
  %v2006 = vunpack.c.h.b16 %v1913
  %v2007 = vunpack.c.l.b16 %v1914
  %v2008 = vunpack.c.h.b16 %v1914
  %v2009 = vunpack.c.l.b16 %v1915
  %v2010 = vunpack.c.h.b16 %v1915
  %v2011 = vunpack.c.l.b16 %v1916
  %v2012 = vunpack.c.h.b16 %v1916
  %v2013 = vunpack.c.l.b16 %v1917
  %v2014 = vunpack.c.h.b16 %v1917
  %v2015 = vunpack.c.l.b16 %v1918
  %v2016 = vunpack.c.h.b16 %v1918
  %v2017 = vunpack.c.l.b16 %v1919
  %v2018 = vunpack.c.h.b16 %v1919
  %v2019 = vunpack.c.l.b16 %v1920
  %v2020 = vunpack.c.h.b16 %v1920
  %v2021 = vunpack.c.l.b16 %v1921
  %v2022 = vunpack.c.h.b16 %v1921
  %v2023 = vunpack.c.l.b16 %v1922
  %v2024 = vunpack.c.h.b16 %v1922
  %v2025 = vunpack.c.l.b16 %v1923
  %v2026 = vunpack.c.h.b16 %v1923
  %v2027 = vunpack.c.l.b16 %v1924
  %v2028 = vunpack.c.h.b16 %v1924
  %v2029 = vunpack.c.l.b16 %v1925
  %v2030 = vunpack.c.h.b16 %v1925
  %v2031 = vunpack.c.l.b16 %v1926
  %v2032 = vunpack.c.h.b16 %v1926
  %v2033 = vunpack.c.l.b16 %v1927
  %v2034 = vunpack.c.h.b16 %v1927
  %v2035 = vunpack.c.l.b16 %v1928
  %v2036 = vunpack.c.h.b16 %v1928
  %v2037 = vunpack.c.l.b16 %v1929
  %v2038 = vunpack.c.h.b16 %v1929
  %v2039 = vunpack.c.l.b16 %v1930
  %v2040 = vunpack.c.h.b16 %v1930
  %v2041 = vunpack.c.l.b16 %v1931
  %v2042 = vunpack.c.h.b16 %v1931
  %v2043 = vunpack.c.l.b16 %v1932
  %v2044 = vunpack.c.h.b16 %v1932
  %v2045 = vunpack.c.l.b16 %v1933
  %v2046 = vunpack.c.h.b16 %v1933
  %v2047 = vunpack.c.l.b16 %v1934
  %v2048 = vunpack.c.h.b16 %v1934
  %v2049 = vunpack.c.l.b16 %v1935
  %v2050 = vunpack.c.h.b16 %v1935
  %v2051 = vunpack.c.l.b16 %v1936
  %v2052 = vunpack.c.h.b16 %v1936
  %v2053 = vunpack.c.l.b16 %v1937
  %v2054 = vunpack.c.h.b16 %v1937
  %v2055 = vunpack.c.l.b16 %v1938
  %v2056 = vunpack.c.h.b16 %v1938
  %v2057 = vpack.c.b16 %v1997, %v1993
  %v2058 = vpack.c.b16 %v1998, %v1994
  %v2059 = vpack.c.b16 %v1999, %v1995
  %v2060 = vpack.c.b16 %v2000, %v1996
  %v2061 = vpack.c.b16 %v2005, %v2001
  %v2062 = vpack.c.b16 %v2006, %v2002
  %v2063 = vpack.c.b16 %v2007, %v2003
  %v2064 = vpack.c.b16 %v2008, %v2004
  %v2065 = vpack.c.b16 %v2013, %v2009
  %v2066 = vpack.c.b16 %v2014, %v2010
  %v2067 = vpack.c.b16 %v2015, %v2011
  %v2068 = vpack.c.b16 %v2016, %v2012
  %v2069 = vpack.c.b16 %v2021, %v2017
  %v2070 = vpack.c.b16 %v2022, %v2018
  %v2071 = vpack.c.b16 %v2023, %v2019
  %v2072 = vpack.c.b16 %v2024, %v2020
  %v2073 = vpack.c.b16 %v2029, %v2025
  %v2074 = vpack.c.b16 %v2030, %v2026
  %v2075 = vpack.c.b16 %v2031, %v2027
  %v2076 = vpack.c.b16 %v2032, %v2028
  %v2077 = vpack.c.b16 %v2037, %v2033
  %v2078 = vpack.c.b16 %v2038, %v2034
  %v2079 = vpack.c.b16 %v2039, %v2035
  %v2080 = vpack.c.b16 %v2040, %v2036
  %v2081 = vpack.c.b16 %v2045, %v2041
  %v2082 = vpack.c.b16 %v2046, %v2042
  %v2083 = vpack.c.b16 %v2047, %v2043
  %v2084 = vpack.c.b16 %v2048, %v2044
  %v2085 = vpack.c.b16 %v2053, %v2049
  %v2086 = vpack.c.b16 %v2054, %v2050
  %v2087 = vpack.c.b16 %v2055, %v2051
  %v2088 = vpack.c.b16 %v2056, %v2052
  %2121 = vmatprep.subr.bf16.mxu0 %v2058
  %2122 = vmatpush1.bf16.msra.mxu0 %v2057
  %2123 = vmatprep.subr.bf16.mxu0 %v2062
  %2124 = vmatpush1.bf16.msra.mxu0 %v2061
  %2125 = vmatprep.subr.bf16.mxu0 %v2066
  %2126 = vmatpush1.bf16.msra.mxu0 %v2065
  %2127 = vmatprep.subr.bf16.mxu0 %v2070
  %2128 = vmatpush1.bf16.msra.mxu0 %v2069
  %2129 = vmatprep.subr.bf16.mxu0 %v2074
  %2130 = vmatpush1.bf16.msra.mxu0 %v2073
  %2131 = vmatprep.subr.bf16.mxu0 %v2078
  %2132 = vmatpush1.bf16.msra.mxu0 %v2077
  %2133 = vmatprep.subr.bf16.mxu0 %v2082
  %2134 = vmatpush1.bf16.msra.mxu0 %v2081
  %2135 = vmatprep.subr.bf16.mxu0 %v2086
  %2136 = vmatpush1.bf16.msra.mxu0 %v2085
  %2137 = vmatprep.subr.bf16.mxu0 0
  %2138 = vmatpush1.bf16.msra.mxu0 0
  %2139 = vmatprep.subr.bf16.mxu0 0
  %2140 = vmatpush1.bf16.msra.mxu0 0
  %2141 = vmatprep.subr.bf16.mxu0 0
  %2142 = vmatpush1.bf16.msra.mxu0 0
  %2143 = vmatprep.subr.bf16.mxu0 0
  %2144 = vmatpush1.bf16.msra.mxu0 0
  %2145 = vmatprep.subr.bf16.mxu0 0
  %2146 = vmatpush1.bf16.msra.mxu0 0
  %2147 = vmatprep.subr.bf16.mxu0 0
  %2148 = vmatpush1.bf16.msra.mxu0 0
  %2149 = vmatprep.subr.bf16.mxu0 0
  %2150 = vmatpush1.bf16.msra.mxu0 0
  %2151 = vmatprep.subr.bf16.mxu0 0
  %2152 = vmatpush1.bf16.msra.mxu0 0
  %2153 = vmatprep.mubr.bf16.mxu0 0
  %2154 = vmatmul.mubr.bf16.gmra.mrb[0].mxu0 %v1899
  %v2155 = vpop.f32.mrb[0].mxu0
  %v2156 = vadd.f32 %v1944, %v2155
  %v2157 = vpop.f32.mrb[0].mxu0
  %v2158 = vadd.f32 %v1948, %v2157
  %v2159 = vpop.f32.mrb[0].mxu0
  %v2160 = vadd.f32 %v1944, %v2159
  %v2161 = vpop.f32.mrb[0].mxu0
  %v2162 = vadd.f32 %v1948, %v2161
  %2163 = vmatprep.mubr.bf16.mxu0 0
  %2164 = vmatmul.mubr.bf16.gmra.mrb[0].mxu0 %v1900
  %v2165 = vpop.f32.mrb[0].mxu0
  %v2166 = vadd.f32 %v1944, %v2165
  %v2167 = vpop.f32.mrb[0].mxu0
  %v2168 = vadd.f32 %v1948, %v2167
  %v2169 = vpop.f32.mrb[0].mxu0
  %v2170 = vadd.f32 %v1944, %v2169
  %v2171 = vpop.f32.mrb[0].mxu0
  %v2172 = vadd.f32 %v1948, %v2171
  %2173 = vmatprep.mubr.bf16.mxu0 0
  %2174 = vmatmul.mubr.bf16.gmra.mrb[0].mxu0 %v1901
  %v2175 = vpop.f32.mrb[0].mxu0
  %v2176 = vadd.f32 %v1944, %v2175
  %v2177 = vpop.f32.mrb[0].mxu0
  %v2178 = vadd.f32 %v1948, %v2177
  %v2179 = vpop.f32.mrb[0].mxu0
  %v2180 = vadd.f32 %v1944, %v2179
  %v2181 = vpop.f32.mrb[0].mxu0
  %v2182 = vadd.f32 %v1948, %v2181
  %2183 = vmatprep.mubr.bf16.mxu0 0
  %2184 = vmatmul.mubr.bf16.gmra.mrb[0].mxu0 %v1902
  %v2185 = vpop.f32.mrb[0].mxu0
  %v2186 = vadd.f32 %v1944, %v2185
  %v2187 = vpop.f32.mrb[0].mxu0
  %v2188 = vadd.f32 %v1948, %v2187
  %v2189 = vpop.f32.mrb[0].mxu0
  %v2190 = vadd.f32 %v1944, %v2189
  %v2191 = vpop.f32.mrb[0].mxu0
  %v2192 = vadd.f32 %v1948, %v2191
  %2193 = vmatprep.mubr.bf16.mxu0 0
  %2194 = vmatmul.mubr.bf16.gmra.mrb[0].mxu0 %v1903
  %v2195 = vpop.f32.mrb[0].mxu0
  %v2196 = vadd.f32 %v1944, %v2195
  %v2197 = vpop.f32.mrb[0].mxu0
  %v2198 = vadd.f32 %v1948, %v2197
  %v2199 = vpop.f32.mrb[0].mxu0
  %v2200 = vadd.f32 %v1944, %v2199
  %v2201 = vpop.f32.mrb[0].mxu0
  %v2202 = vadd.f32 %v1948, %v2201
  %2203 = vmatprep.mubr.bf16.mxu0 0
  %2204 = vmatmul.mubr.bf16.gmra.mrb[0].mxu0 %v1904
  %v2205 = vpop.f32.mrb[0].mxu0
  %v2206 = vadd.f32 %v1944, %v2205
  %v2207 = vpop.f32.mrb[0].mxu0
  %v2208 = vadd.f32 %v1948, %v2207
  %v2209 = vpop.f32.mrb[0].mxu0
  %v2210 = vadd.f32 %v1944, %v2209
  %v2211 = vpop.f32.mrb[0].mxu0
  %v2212 = vadd.f32 %v1948, %v2211
  %2213 = vmatprep.mubr.bf16.mxu0 0
  %2214 = vmatmul.mubr.bf16.gmra.mrb[0].mxu0 %v1905
  %v2215 = vpop.f32.mrb[0].mxu0
  %v2216 = vadd.f32 %v1944, %v2215
  %v2217 = vpop.f32.mrb[0].mxu0
  %v2218 = vadd.f32 %v1948, %v2217
  %v2219 = vpop.f32.mrb[0].mxu0
  %v2220 = vadd.f32 %v1944, %v2219
  %v2221 = vpop.f32.mrb[0].mxu0
  %v2222 = vadd.f32 %v1948, %v2221
  %2223 = vmatprep.mubr.bf16.mxu0 0
  %2224 = vmatmul.mubr.bf16.gmra.mrb[0].mxu0 %v1906
  %v2225 = vpop.f32.mrb[0].mxu0
  %v2226 = vadd.f32 %v1944, %v2225
  %v2227 = vpop.f32.mrb[0].mxu0
  %v2228 = vadd.f32 %v1948, %v2227
  %v2229 = vpop.f32.mrb[0].mxu0
  %v2230 = vadd.f32 %v1944, %v2229
  %v2231 = vpop.f32.mrb[0].mxu0
  %v2232 = vadd.f32 %v1948, %v2231
  %2233 = vdwg.mxu0
  %2234 = vmatprep.subr.bf16.mxu0 %v2060
  %2235 = vmatpush1.bf16.msra.mxu0 %v2059
  %2236 = vmatprep.subr.bf16.mxu0 %v2064
  %2237 = vmatpush1.bf16.msra.mxu0 %v2063
  %2238 = vmatprep.subr.bf16.mxu0 %v2068
  %2239 = vmatpush1.bf16.msra.mxu0 %v2067
  %2240 = vmatprep.subr.bf16.mxu0 %v2072
  %2241 = vmatpush1.bf16.msra.mxu0 %v2071
  %2242 = vmatprep.subr.bf16.mxu0 %v2076
  %2243 = vmatpush1.bf16.msra.mxu0 %v2075
  %2244 = vmatprep.subr.bf16.mxu0 %v2080
  %2245 = vmatpush1.bf16.msra.mxu0 %v2079
  %2246 = vmatprep.subr.bf16.mxu0 %v2084
  %2247 = vmatpush1.bf16.msra.mxu0 %v2083
  %2248 = vmatprep.subr.bf16.mxu0 %v2088
  %2249 = vmatpush1.bf16.msra.mxu0 %v2087
  %2250 = vmatprep.subr.bf16.mxu0 0
  %2251 = vmatpush1.bf16.msra.mxu0 0
  %2252 = vmatprep.subr.bf16.mxu0 0
  %2253 = vmatpush1.bf16.msra.mxu0 0
  %2254 = vmatprep.subr.bf16.mxu0 0
  %2255 = vmatpush1.bf16.msra.mxu0 0
  %2256 = vmatprep.subr.bf16.mxu0 0
  %2257 = vmatpush1.bf16.msra.mxu0 0
  %2258 = vmatprep.subr.bf16.mxu0 0
  %2259 = vmatpush1.bf16.msra.mxu0 0
  %2260 = vmatprep.subr.bf16.mxu0 0
  %2261 = vmatpush1.bf16.msra.mxu0 0
  %2262 = vmatprep.subr.bf16.mxu0 0
  %2263 = vmatpush1.bf16.msra.mxu0 0
  %2264 = vmatprep.subr.bf16.mxu0 0
  %2265 = vmatpush1.bf16.msra.mxu0 0
  %2266 = vmatprep.mubr.bf16.mxu0 0
  %2267 = vmatmul.mubr.bf16.gmra.mrb[0].mxu0 %v1899
  %v2268 = vpop.f32.mrb[0].mxu0
  %v2269 = vadd.f32 %v1952, %v2268
  %v2270 = vpop.f32.mrb[0].mxu0
  %v2271 = vadd.f32 %v1956, %v2270
  %v2272 = vpop.f32.mrb[0].mxu0
  %v2273 = vadd.f32 %v1952, %v2272
  %v2274 = vpop.f32.mrb[0].mxu0
  %v2275 = vadd.f32 %v1956, %v2274
  %2276 = vmatprep.mubr.bf16.mxu0 0
  %2277 = vmatmul.mubr.bf16.gmra.mrb[0].mxu0 %v1900
  %v2278 = vpop.f32.mrb[0].mxu0
  %v2279 = vadd.f32 %v1952, %v2278
  %v2280 = vpop.f32.mrb[0].mxu0
  %v2281 = vadd.f32 %v1956, %v2280
  %v2282 = vpop.f32.mrb[0].mxu0
  %v2283 = vadd.f32 %v1952, %v2282
  %v2284 = vpop.f32.mrb[0].mxu0
  %v2285 = vadd.f32 %v1956, %v2284
  %2286 = vmatprep.mubr.bf16.mxu0 0
  %2287 = vmatmul.mubr.bf16.gmra.mrb[0].mxu0 %v1901
  %v2288 = vpop.f32.mrb[0].mxu0
  %v2289 = vadd.f32 %v1952, %v2288
  %v2290 = vpop.f32.mrb[0].mxu0
  %v2291 = vadd.f32 %v1956, %v2290
  %v2292 = vpop.f32.mrb[0].mxu0
  %v2293 = vadd.f32 %v1952, %v2292
  %v2294 = vpop.f32.mrb[0].mxu0
  %v2295 = vadd.f32 %v1956, %v2294
  %2296 = vmatprep.mubr.bf16.mxu0 0
  %2297 = vmatmul.mubr.bf16.gmra.mrb[0].mxu0 %v1902
  %v2298 = vpop.f32.mrb[0].mxu0
  %v2299 = vadd.f32 %v1952, %v2298
  %v2300 = vpop.f32.mrb[0].mxu0
  %v2301 = vadd.f32 %v1956, %v2300
  %v2302 = vpop.f32.mrb[0].mxu0
  %v2303 = vadd.f32 %v1952, %v2302
  %v2304 = vpop.f32.mrb[0].mxu0
  %v2305 = vadd.f32 %v1956, %v2304
  %2306 = vmatprep.mubr.bf16.mxu0 0
  %2307 = vmatmul.mubr.bf16.gmra.mrb[0].mxu0 %v1903
  %v2308 = vpop.f32.mrb[0].mxu0
  %v2309 = vadd.f32 %v1952, %v2308
  %v2310 = vpop.f32.mrb[0].mxu0
  %v2311 = vadd.f32 %v1956, %v2310
  %v2312 = vpop.f32.mrb[0].mxu0
  %v2313 = vadd.f32 %v1952, %v2312
  %v2314 = vpop.f32.mrb[0].mxu0
  %v2315 = vadd.f32 %v1956, %v2314
  %2316 = vmatprep.mubr.bf16.mxu0 0
  %2317 = vmatmul.mubr.bf16.gmra.mrb[0].mxu0 %v1904
  %v2318 = vpop.f32.mrb[0].mxu0
  %v2319 = vadd.f32 %v1952, %v2318
  %v2320 = vpop.f32.mrb[0].mxu0
  %v2321 = vadd.f32 %v1956, %v2320
  %v2322 = vpop.f32.mrb[0].mxu0
  %v2323 = vadd.f32 %v1952, %v2322
  %v2324 = vpop.f32.mrb[0].mxu0
  %v2325 = vadd.f32 %v1956, %v2324
  %2326 = vmatprep.mubr.bf16.mxu0 0
  %2327 = vmatmul.mubr.bf16.gmra.mrb[0].mxu0 %v1905
  %v2328 = vpop.f32.mrb[0].mxu0
  %v2329 = vadd.f32 %v1952, %v2328
  %v2330 = vpop.f32.mrb[0].mxu0
  %v2331 = vadd.f32 %v1956, %v2330
  %v2332 = vpop.f32.mrb[0].mxu0
  %v2333 = vadd.f32 %v1952, %v2332
  %v2334 = vpop.f32.mrb[0].mxu0
  %v2335 = vadd.f32 %v1956, %v2334
  %2336 = vmatprep.mubr.bf16.mxu0 0
  %2337 = vmatmul.mubr.bf16.gmra.mrb[0].mxu0 %v1906
  %v2338 = vpop.f32.mrb[0].mxu0
  %v2339 = vadd.f32 %v1952, %v2338
  %v2340 = vpop.f32.mrb[0].mxu0
  %v2341 = vadd.f32 %v1956, %v2340
  %v2342 = vpop.f32.mrb[0].mxu0
  %v2343 = vadd.f32 %v1952, %v2342
  %v2344 = vpop.f32.mrb[0].mxu0
  %v2345 = vadd.f32 %v1956, %v2344
  %2346 = vdwg.mxu0
  %v2347 = vld [vmem:[%s5] sm:$0xff]
  %v2348 = vld [vmem:[%s5 + $0x8] sm:$0xff]
  %v2349 = vld [vmem:[%s5 + $0x10] sm:$0xff]
  %v2350 = vld [vmem:[%s5 + $0x18] sm:$0xff]
  %v2351 = vld [vmem:[%s5 + $0x20] sm:$0xff]
  %v2352 = vld [vmem:[%s5 + $0x28] sm:$0xff]
  %v2353 = vld [vmem:[%s5 + $0x30] sm:$0xff]
  %v2354 = vld [vmem:[%s5 + $0x38] sm:$0xff]
  %v2355 = vld [vmem:[%s5 + $0x40] sm:$0xff]
  %v2356 = vld [vmem:[%s5 + $0x48] sm:$0xff]
  %v2357 = vld [vmem:[%s5 + $0x50] sm:$0xff]
  %v2358 = vld [vmem:[%s5 + $0x58] sm:$0xff]
  %v2359 = vld [vmem:[%s5 + $0x60] sm:$0xff]
  %v2360 = vld [vmem:[%s5 + $0x68] sm:$0xff]
  %v2361 = vld [vmem:[%s5 + $0x70] sm:$0xff]
  %v2362 = vld [vmem:[%s5 + $0x78] sm:$0xff]
  %v2363 = vld [vmem:[%s5 + $0x80] sm:$0xff]
  %v2364 = vld [vmem:[%s5 + $0x88] sm:$0xff]
  %v2365 = vld [vmem:[%s5 + $0x90] sm:$0xff]
  %v2366 = vld [vmem:[%s5 + $0x98] sm:$0xff]
  %v2367 = vld [vmem:[%s5 + $0xa0] sm:$0xff]
  %v2368 = vld [vmem:[%s5 + $0xa8] sm:$0xff]
  %v2369 = vld [vmem:[%s5 + $0xb0] sm:$0xff]
  %v2370 = vld [vmem:[%s5 + $0xb8] sm:$0xff]
  %v2371 = vld [vmem:[%s5 + $0xc0] sm:$0xff]
  %v2372 = vld [vmem:[%s5 + $0xc8] sm:$0xff]
  %v2373 = vld [vmem:[%s5 + $0xd0] sm:$0xff]
  %v2374 = vld [vmem:[%s5 + $0xd8] sm:$0xff]
  %v2375 = vld [vmem:[%s5 + $0xe0] sm:$0xff]
  %v2376 = vld [vmem:[%s5 + $0xe8] sm:$0xff]
  %v2377 = vld [vmem:[%s5 + $0xf0] sm:$0xff]
  %v2378 = vld [vmem:[%s5 + $0xf8] sm:$0xff]
  %v2379 = vld [vmem:[#allocation3] sm:$0xff]
  %v2380 = vld [vmem:[#allocation5] sm:$0xff]
  %v2381 = vld [vmem:[#allocation5 + $0x8] sm:$0xff]
  %v2414 = vunpack.c.l.b16 %v2347
  %v2415 = vunpack.c.h.b16 %v2347
  %v2416 = vunpack.c.l.b16 %v2348
  %v2417 = vunpack.c.h.b16 %v2348
  %v2418 = vunpack.c.l.b16 %v2349
  %v2419 = vunpack.c.h.b16 %v2349
  %v2420 = vunpack.c.l.b16 %v2350
  %v2421 = vunpack.c.h.b16 %v2350
  %v2422 = vunpack.c.l.b16 %v2351
  %v2423 = vunpack.c.h.b16 %v2351
  %v2424 = vunpack.c.l.b16 %v2352
  %v2425 = vunpack.c.h.b16 %v2352
  %v2426 = vunpack.c.l.b16 %v2353
  %v2427 = vunpack.c.h.b16 %v2353
  %v2428 = vunpack.c.l.b16 %v2354
  %v2429 = vunpack.c.h.b16 %v2354
  %v2430 = vunpack.c.l.b16 %v2355
  %v2431 = vunpack.c.h.b16 %v2355
  %v2432 = vunpack.c.l.b16 %v2356
  %v2433 = vunpack.c.h.b16 %v2356
  %v2434 = vunpack.c.l.b16 %v2357
  %v2435 = vunpack.c.h.b16 %v2357
  %v2436 = vunpack.c.l.b16 %v2358
  %v2437 = vunpack.c.h.b16 %v2358
  %v2438 = vunpack.c.l.b16 %v2359
  %v2439 = vunpack.c.h.b16 %v2359
  %v2440 = vunpack.c.l.b16 %v2360
  %v2441 = vunpack.c.h.b16 %v2360
  %v2442 = vunpack.c.l.b16 %v2361
  %v2443 = vunpack.c.h.b16 %v2361
  %v2444 = vunpack.c.l.b16 %v2362
  %v2445 = vunpack.c.h.b16 %v2362
  %v2446 = vunpack.c.l.b16 %v2363
  %v2447 = vunpack.c.h.b16 %v2363
  %v2448 = vunpack.c.l.b16 %v2364
  %v2449 = vunpack.c.h.b16 %v2364
  %v2450 = vunpack.c.l.b16 %v2365
  %v2451 = vunpack.c.h.b16 %v2365
  %v2452 = vunpack.c.l.b16 %v2366
  %v2453 = vunpack.c.h.b16 %v2366
  %v2454 = vunpack.c.l.b16 %v2367
  %v2455 = vunpack.c.h.b16 %v2367
  %v2456 = vunpack.c.l.b16 %v2368
  %v2457 = vunpack.c.h.b16 %v2368
  %v2458 = vunpack.c.l.b16 %v2369
  %v2459 = vunpack.c.h.b16 %v2369
  %v2460 = vunpack.c.l.b16 %v2370
  %v2461 = vunpack.c.h.b16 %v2370
  %v2462 = vunpack.c.l.b16 %v2371
  %v2463 = vunpack.c.h.b16 %v2371
  %v2464 = vunpack.c.l.b16 %v2372
  %v2465 = vunpack.c.h.b16 %v2372
  %v2466 = vunpack.c.l.b16 %v2373
  %v2467 = vunpack.c.h.b16 %v2373
  %v2468 = vunpack.c.l.b16 %v2374
  %v2469 = vunpack.c.h.b16 %v2374
  %v2470 = vunpack.c.l.b16 %v2375
  %v2471 = vunpack.c.h.b16 %v2375
  %v2472 = vunpack.c.l.b16 %v2376
  %v2473 = vunpack.c.h.b16 %v2376
  %v2474 = vunpack.c.l.b16 %v2377
  %v2475 = vunpack.c.h.b16 %v2377
  %v2476 = vunpack.c.l.b16 %v2378
  %v2477 = vunpack.c.h.b16 %v2378
  %v2478 = vpack.c.b16 %v2418, %v2414
  %v2479 = vpack.c.b16 %v2419, %v2415
  %v2480 = vpack.c.b16 %v2420, %v2416
  %v2481 = vpack.c.b16 %v2421, %v2417
  %v2482 = vpack.c.b16 %v2426, %v2422
  %v2483 = vpack.c.b16 %v2427, %v2423
  %v2484 = vpack.c.b16 %v2428, %v2424
  %v2485 = vpack.c.b16 %v2429, %v2425
  %v2486 = vpack.c.b16 %v2434, %v2430
  %v2487 = vpack.c.b16 %v2435, %v2431
  %v2488 = vpack.c.b16 %v2436, %v2432
  %v2489 = vpack.c.b16 %v2437, %v2433
  %v2490 = vpack.c.b16 %v2442, %v2438
  %v2491 = vpack.c.b16 %v2443, %v2439
  %v2492 = vpack.c.b16 %v2444, %v2440
  %v2493 = vpack.c.b16 %v2445, %v2441
  %v2494 = vpack.c.b16 %v2450, %v2446
  %v2495 = vpack.c.b16 %v2451, %v2447
  %v2496 = vpack.c.b16 %v2452, %v2448
  %v2497 = vpack.c.b16 %v2453, %v2449
  %v2498 = vpack.c.b16 %v2458, %v2454
  %v2499 = vpack.c.b16 %v2459, %v2455
  %v2500 = vpack.c.b16 %v2460, %v2456
  %v2501 = vpack.c.b16 %v2461, %v2457
  %v2502 = vpack.c.b16 %v2466, %v2462
  %v2503 = vpack.c.b16 %v2467, %v2463
  %v2504 = vpack.c.b16 %v2468, %v2464
  %v2505 = vpack.c.b16 %v2469, %v2465
  %v2506 = vpack.c.b16 %v2474, %v2470
  %v2507 = vpack.c.b16 %v2475, %v2471
  %v2508 = vpack.c.b16 %v2476, %v2472
  %v2509 = vpack.c.b16 %v2477, %v2473
  %2542 = vmatprep.subr.bf16.mxu0 %v2479
  %2543 = vmatpush1.bf16.msra.mxu0 %v2478
  %2544 = vmatprep.subr.bf16.mxu0 %v2483
  %2545 = vmatpush1.bf16.msra.mxu0 %v2482
  %2546 = vmatprep.subr.bf16.mxu0 %v2487
  %2547 = vmatpush1.bf16.msra.mxu0 %v2486
  %2548 = vmatprep.subr.bf16.mxu0 %v2491
  %2549 = vmatpush1.bf16.msra.mxu0 %v2490
  %2550 = vmatprep.subr.bf16.mxu0 %v2495
  %2551 = vmatpush1.bf16.msra.mxu0 %v2494
  %2552 = vmatprep.subr.bf16.mxu0 %v2499
  %2553 = vmatpush1.bf16.msra.mxu0 %v2498
  %2554 = vmatprep.subr.bf16.mxu0 %v2503
  %2555 = vmatpush1.bf16.msra.mxu0 %v2502
  %2556 = vmatprep.subr.bf16.mxu0 %v2507
  %2557 = vmatpush1.bf16.msra.mxu0 %v2506
  %2558 = vmatprep.subr.bf16.mxu0 0
  %2559 = vmatpush1.bf16.msra.mxu0 0
  %2560 = vmatprep.subr.bf16.mxu0 0
  %2561 = vmatpush1.bf16.msra.mxu0 0
  %2562 = vmatprep.subr.bf16.mxu0 0
  %2563 = vmatpush1.bf16.msra.mxu0 0
  %2564 = vmatprep.subr.bf16.mxu0 0
  %2565 = vmatpush1.bf16.msra.mxu0 0
  %2566 = vmatprep.subr.bf16.mxu0 0
  %2567 = vmatpush1.bf16.msra.mxu0 0
  %2568 = vmatprep.subr.bf16.mxu0 0
  %2569 = vmatpush1.bf16.msra.mxu0 0
  %2570 = vmatprep.subr.bf16.mxu0 0
  %2571 = vmatpush1.bf16.msra.mxu0 0
  %2572 = vmatprep.subr.bf16.mxu0 0
  %2573 = vmatpush1.bf16.msra.mxu0 0
  %2574 = vmatprep.mubr.bf16.mxu0 0
  %2575 = vmatmul.mubr.bf16.gmra.mrb[0].mxu0 %v2379
  %v2576 = vpop.f32.mrb[0].mxu0
  %v2577 = vadd.f32 0.0, %v2576
  %v2578 = vpop.f32.mrb[0].mxu0
  %v2579 = vadd.f32 0.0, %v2578
  %v2580 = vpop.f32.mrb[0].mxu0
  %v2581 = vadd.f32 0.0, %v2580
  %v2582 = vpop.f32.mrb[0].mxu0
  %v2583 = vadd.f32 0.0, %v2582
  %2584 = vdwg.mxu0
  %2585 = vmatprep.subr.bf16.mxu0 %v2481
  %2586 = vmatpush1.bf16.msra.mxu0 %v2480
  %2587 = vmatprep.subr.bf16.mxu0 %v2485
  %2588 = vmatpush1.bf16.msra.mxu0 %v2484
  %2589 = vmatprep.subr.bf16.mxu0 %v2489
  %2590 = vmatpush1.bf16.msra.mxu0 %v2488
  %2591 = vmatprep.subr.bf16.mxu0 %v2493
  %2592 = vmatpush1.bf16.msra.mxu0 %v2492
  %2593 = vmatprep.subr.bf16.mxu0 %v2497
  %2594 = vmatpush1.bf16.msra.mxu0 %v2496
  %2595 = vmatprep.subr.bf16.mxu0 %v2501
  %2596 = vmatpush1.bf16.msra.mxu0 %v2500
  %2597 = vmatprep.subr.bf16.mxu0 %v2505
  %2598 = vmatpush1.bf16.msra.mxu0 %v2504
  %2599 = vmatprep.subr.bf16.mxu0 %v2509
  %2600 = vmatpush1.bf16.msra.mxu0 %v2508
  %2601 = vmatprep.subr.bf16.mxu0 0
  %2602 = vmatpush1.bf16.msra.mxu0 0
  %2603 = vmatprep.subr.bf16.mxu0 0
  %2604 = vmatpush1.bf16.msra.mxu0 0
  %2605 = vmatprep.subr.bf16.mxu0 0
  %2606 = vmatpush1.bf16.msra.mxu0 0
  %2607 = vmatprep.subr.bf16.mxu0 0
  %2608 = vmatpush1.bf16.msra.mxu0 0
  %2609 = vmatprep.subr.bf16.mxu0 0
  %2610 = vmatpush1.bf16.msra.mxu0 0
  %2611 = vmatprep.subr.bf16.mxu0 0
  %2612 = vmatpush1.bf16.msra.mxu0 0
  %2613 = vmatprep.subr.bf16.mxu0 0
  %2614 = vmatpush1.bf16.msra.mxu0 0
  %2615 = vmatprep.subr.bf16.mxu0 0
  %2616 = vmatpush1.bf16.msra.mxu0 0
  %2617 = vmatprep.mubr.bf16.mxu0 0
  %2618 = vmatmul.mubr.bf16.gmra.mrb[0].mxu0 %v2379
  %v2619 = vpop.f32.mrb[0].mxu0
  %v2620 = vadd.f32 0.0, %v2619
  %v2621 = vpop.f32.mrb[0].mxu0
  %v2622 = vadd.f32 0.0, %v2621
  %v2623 = vpop.f32.mrb[0].mxu0
  %v2624 = vadd.f32 0.0, %v2623
  %v2625 = vpop.f32.mrb[0].mxu0
  %v2626 = vadd.f32 0.0, %v2625
  %2627 = vdwg.mxu0
  %v2628 = vadd.f32 %v2156, %v2577
  %v2629 = vadd.f32 %v2158, %v2579
  %v2630 = vadd.f32 %v2269, %v2620
  %v2631 = vadd.f32 %v2271, %v2622
  %v2632 = vadd.f32 %v2160, %v2581
  %v2633 = vadd.f32 %v2162, %v2583
  %v2634 = vadd.f32 %v2273, %v2624
  %v2635 = vadd.f32 %v2275, %v2626
  %v2636 = vxor.u32 %v2628, 2147483648
  %v2637 = vxor.u32 %v2632, 2147483648
  %v2638 = vmul.f32 %v2636, 1.442695
  %v2639 = vpow.pop %v2638
  %v2640 = vmul.f32 %v2637, 1.442695
  %v2641 = vpow.pop %v2640
  %v2642 = vadd.f32 %v2639, 1.0
  %v2643 = vadd.f32 %v2641, 1.0
  %v2644 = vrcp.pop %v2642
  %v2645 = vmul.f32 1.0, %v2644
  %v2646 = vrcp.pop %v2643
  %v2647 = vmul.f32 1.0, %v2646
  %v2648 = vxor.u32 %v2629, 2147483648
  %v2649 = vxor.u32 %v2633, 2147483648
  %v2650 = vmul.f32 %v2648, 1.442695
  %v2651 = vpow.pop %v2650
  %v2652 = vmul.f32 %v2649, 1.442695
  %v2653 = vpow.pop %v2652
  %v2654 = vadd.f32 %v2651, 1.0
  %v2655 = vadd.f32 %v2653, 1.0
  %v2656 = vrcp.pop %v2654
  %v2657 = vmul.f32 1.0, %v2656
  %v2658 = vrcp.pop %v2655
  %v2659 = vmul.f32 1.0, %v2658
  %v2660 = vtanh.pop %v2630
  %v2661 = vtanh.pop %v2634
  %v2662 = vxor.u32 %v2631, 2147483648
  %v2663 = vxor.u32 %v2635, 2147483648
  %v2664 = vmul.f32 %v2662, 1.442695
  %v2665 = vpow.pop %v2664
  %v2666 = vmul.f32 %v2663, 1.442695
  %v2667 = vpow.pop %v2666
  %v2668 = vadd.f32 %v2665, 1.0
  %v2669 = vadd.f32 %v2667, 1.0
  %v2670 = vrcp.pop %v2668
  %v2671 = vmul.f32 1.0, %v2670
  %v2672 = vrcp.pop %v2669
  %v2673 = vmul.f32 1.0, %v2672
  %v2674 = vmul.f32 %v2657, %v2380
  %v2675 = vmul.f32 %v2659, %v2381
  %v2676 = vmul.f32 %v2645, %v2660
  %v2677 = vmul.f32 %v2647, %v2661
  %v2678 = vadd.f32 %v2674, %v2676
  %v2679 = vadd.f32 %v2675, %v2677
  %v2680 = vtanh.pop %v2678
  %v2681 = vtanh.pop %v2679
  %v2682 = vmul.f32 %v2671, %v2680
  %v2683 = vmul.f32 %v2673, %v2681
  %v2684 = vpack.c.bf16 %v2683, %v2682
  %2685 = vmatprep.subr.bf16.mxu0 %v2479
  %2686 = vmatpush1.bf16.msra.mxu0 %v2478
  %2687 = vmatprep.subr.bf16.mxu0 %v2483
  %2688 = vmatpush1.bf16.msra.mxu0 %v2482
  %2689 = vmatprep.subr.bf16.mxu0 %v2487
  %2690 = vmatpush1.bf16.msra.mxu0 %v2486
  %2691 = vmatprep.subr.bf16.mxu0 %v2491
  %2692 = vmatpush1.bf16.msra.mxu0 %v2490
  %2693 = vmatprep.subr.bf16.mxu0 %v2495
  %2694 = vmatpush1.bf16.msra.mxu0 %v2494
  %2695 = vmatprep.subr.bf16.mxu0 %v2499
  %2696 = vmatpush1.bf16.msra.mxu0 %v2498
  %2697 = vmatprep.subr.bf16.mxu0 %v2503
  %2698 = vmatpush1.bf16.msra.mxu0 %v2502
  %2699 = vmatprep.subr.bf16.mxu0 %v2507
  %2700 = vmatpush1.bf16.msra.mxu0 %v2506
  %2701 = vmatprep.subr.bf16.mxu0 0
  %2702 = vmatpush1.bf16.msra.mxu0 0
  %2703 = vmatprep.subr.bf16.mxu0 0
  %2704 = vmatpush1.bf16.msra.mxu0 0
  %2705 = vmatprep.subr.bf16.mxu0 0
  %2706 = vmatpush1.bf16.msra.mxu0 0
  %2707 = vmatprep.subr.bf16.mxu0 0
  %2708 = vmatpush1.bf16.msra.mxu0 0
  %2709 = vmatprep.subr.bf16.mxu0 0
  %2710 = vmatpush1.bf16.msra.mxu0 0
  %2711 = vmatprep.subr.bf16.mxu0 0
  %2712 = vmatpush1.bf16.msra.mxu0 0
  %2713 = vmatprep.subr.bf16.mxu0 0
  %2714 = vmatpush1.bf16.msra.mxu0 0
  %2715 = vmatprep.subr.bf16.mxu0 0
  %2716 = vmatpush1.bf16.msra.mxu0 0
  %2717 = vmatprep.mubr.bf16.mxu0 0
  %2718 = vmatmul.mubr.bf16.gmra.mrb[0].mxu0 %v2684
  %v2719 = vpop.f32.mrb[0].mxu0
  %v2720 = vadd.f32 0.0, %v2719
  %v2721 = vpop.f32.mrb[0].mxu0
  %v2722 = vadd.f32 0.0, %v2721
  %v2723 = vpop.f32.mrb[0].mxu0
  %v2724 = vadd.f32 0.0, %v2723
  %v2725 = vpop.f32.mrb[0].mxu0
  %v2726 = vadd.f32 0.0, %v2725
  %2727 = vdwg.mxu0
  %2728 = vmatprep.subr.bf16.mxu0 %v2481
  %2729 = vmatpush1.bf16.msra.mxu0 %v2480
  %2730 = vmatprep.subr.bf16.mxu0 %v2485
  %2731 = vmatpush1.bf16.msra.mxu0 %v2484
  %2732 = vmatprep.subr.bf16.mxu0 %v2489
  %2733 = vmatpush1.bf16.msra.mxu0 %v2488
  %2734 = vmatprep.subr.bf16.mxu0 %v2493
  %2735 = vmatpush1.bf16.msra.mxu0 %v2492
  %2736 = vmatprep.subr.bf16.mxu0 %v2497
  %2737 = vmatpush1.bf16.msra.mxu0 %v2496
  %2738 = vmatprep.subr.bf16.mxu0 %v2501
  %2739 = vmatpush1.bf16.msra.mxu0 %v2500
  %2740 = vmatprep.subr.bf16.mxu0 %v2505
  %2741 = vmatpush1.bf16.msra.mxu0 %v2504
  %2742 = vmatprep.subr.bf16.mxu0 %v2509
  %2743 = vmatpush1.bf16.msra.mxu0 %v2508
  %2744 = vmatprep.subr.bf16.mxu0 0
  %2745 = vmatpush1.bf16.msra.mxu0 0
  %2746 = vmatprep.subr.bf16.mxu0 0
  %2747 = vmatpush1.bf16.msra.mxu0 0
  %2748 = vmatprep.subr.bf16.mxu0 0
  %2749 = vmatpush1.bf16.msra.mxu0 0
  %2750 = vmatprep.subr.bf16.mxu0 0
  %2751 = vmatpush1.bf16.msra.mxu0 0
  %2752 = vmatprep.subr.bf16.mxu0 0
  %2753 = vmatpush1.bf16.msra.mxu0 0
  %2754 = vmatprep.subr.bf16.mxu0 0
  %2755 = vmatpush1.bf16.msra.mxu0 0
  %2756 = vmatprep.subr.bf16.mxu0 0
  %2757 = vmatpush1.bf16.msra.mxu0 0
  %2758 = vmatprep.subr.bf16.mxu0 0
  %2759 = vmatpush1.bf16.msra.mxu0 0
  %2760 = vmatprep.mubr.bf16.mxu0 0
  %2761 = vmatmul.mubr.bf16.gmra.mrb[0].mxu0 %v2684
  %v2762 = vpop.f32.mrb[0].mxu0
  %v2763 = vadd.f32 0.0, %v2762
  %v2764 = vpop.f32.mrb[0].mxu0
  %v2765 = vadd.f32 0.0, %v2764
  %v2766 = vpop.f32.mrb[0].mxu0
  %v2767 = vadd.f32 0.0, %v2766
  %v2768 = vpop.f32.mrb[0].mxu0
  %v2769 = vadd.f32 0.0, %v2768
  %2770 = vdwg.mxu0
  %v2771 = vadd.f32 %v2166, %v2720
  %v2772 = vadd.f32 %v2168, %v2722
  %v2773 = vadd.f32 %v2279, %v2763
  %v2774 = vadd.f32 %v2281, %v2765
  %v2775 = vadd.f32 %v2170, %v2724
  %v2776 = vadd.f32 %v2172, %v2726
  %v2777 = vadd.f32 %v2283, %v2767
  %v2778 = vadd.f32 %v2285, %v2769
  %v2779 = vxor.u32 %v2771, 2147483648
  %v2780 = vxor.u32 %v2775, 2147483648
  %v2781 = vmul.f32 %v2779, 1.442695
  %v2782 = vpow.pop %v2781
  %v2783 = vmul.f32 %v2780, 1.442695
  %v2784 = vpow.pop %v2783
  %v2785 = vadd.f32 %v2782, 1.0
  %v2786 = vadd.f32 %v2784, 1.0
  %v2787 = vrcp.pop %v2785
  %v2788 = vmul.f32 1.0, %v2787
  %v2789 = vrcp.pop %v2786
  %v2790 = vmul.f32 1.0, %v2789
  %v2791 = vxor.u32 %v2772, 2147483648
  %v2792 = vxor.u32 %v2776, 2147483648
  %v2793 = vmul.f32 %v2791, 1.442695
  %v2794 = vpow.pop %v2793
  %v2795 = vmul.f32 %v2792, 1.442695
  %v2796 = vpow.pop %v2795
  %v2797 = vadd.f32 %v2794, 1.0
  %v2798 = vadd.f32 %v2796, 1.0
  %v2799 = vrcp.pop %v2797
  %v2800 = vmul.f32 1.0, %v2799
  %v2801 = vrcp.pop %v2798
  %v2802 = vmul.f32 1.0, %v2801
  %v2803 = vtanh.pop %v2773
  %v2804 = vtanh.pop %v2777
  %v2805 = vxor.u32 %v2774, 2147483648
  %v2806 = vxor.u32 %v2778, 2147483648
  %v2807 = vmul.f32 %v2805, 1.442695
  %v2808 = vpow.pop %v2807
  %v2809 = vmul.f32 %v2806, 1.442695
  %v2810 = vpow.pop %v2809
  %v2811 = vadd.f32 %v2808, 1.0
  %v2812 = vadd.f32 %v2810, 1.0
  %v2813 = vrcp.pop %v2811
  %v2814 = vmul.f32 1.0, %v2813
  %v2815 = vrcp.pop %v2812
  %v2816 = vmul.f32 1.0, %v2815
  %v2817 = vmul.f32 %v2800, %v2678
  %v2818 = vmul.f32 %v2802, %v2679
  %v2819 = vmul.f32 %v2788, %v2803
  %v2820 = vmul.f32 %v2790, %v2804
  %v2821 = vadd.f32 %v2817, %v2819
  %v2822 = vadd.f32 %v2818, %v2820
  %v2823 = vtanh.pop %v2821
  %v2824 = vtanh.pop %v2822
  %v2825 = vmul.f32 %v2814, %v2823
  %v2826 = vmul.f32 %v2816, %v2824
  %v2827 = vpack.c.bf16 %v2826, %v2825
  %2828 = vmatprep.subr.bf16.mxu0 %v2479
  %2829 = vmatpush1.bf16.msra.mxu0 %v2478
  %2830 = vmatprep.subr.bf16.mxu0 %v2483
  %2831 = vmatpush1.bf16.msra.mxu0 %v2482
  %2832 = vmatprep.subr.bf16.mxu0 %v2487
  %2833 = vmatpush1.bf16.msra.mxu0 %v2486
  %2834 = vmatprep.subr.bf16.mxu0 %v2491
  %2835 = vmatpush1.bf16.msra.mxu0 %v2490
  %2836 = vmatprep.subr.bf16.mxu0 %v2495
  %2837 = vmatpush1.bf16.msra.mxu0 %v2494
  %2838 = vmatprep.subr.bf16.mxu0 %v2499
  %2839 = vmatpush1.bf16.msra.mxu0 %v2498
  %2840 = vmatprep.subr.bf16.mxu0 %v2503
  %2841 = vmatpush1.bf16.msra.mxu0 %v2502
  %2842 = vmatprep.subr.bf16.mxu0 %v2507
  %2843 = vmatpush1.bf16.msra.mxu0 %v2506
  %2844 = vmatprep.subr.bf16.mxu0 0
  %2845 = vmatpush1.bf16.msra.mxu0 0
  %2846 = vmatprep.subr.bf16.mxu0 0
  %2847 = vmatpush1.bf16.msra.mxu0 0
  %2848 = vmatprep.subr.bf16.mxu0 0
  %2849 = vmatpush1.bf16.msra.mxu0 0
  %2850 = vmatprep.subr.bf16.mxu0 0
  %2851 = vmatpush1.bf16.msra.mxu0 0
  %2852 = vmatprep.subr.bf16.mxu0 0
  %2853 = vmatpush1.bf16.msra.mxu0 0
  %2854 = vmatprep.subr.bf16.mxu0 0
  %2855 = vmatpush1.bf16.msra.mxu0 0
  %2856 = vmatprep.subr.bf16.mxu0 0
  %2857 = vmatpush1.bf16.msra.mxu0 0
  %2858 = vmatprep.subr.bf16.mxu0 0
  %2859 = vmatpush1.bf16.msra.mxu0 0
  %2860 = vmatprep.mubr.bf16.mxu0 0
  %2861 = vmatmul.mubr.bf16.gmra.mrb[0].mxu0 %v2827
  %v2862 = vpop.f32.mrb[0].mxu0
  %v2863 = vadd.f32 0.0, %v2862
  %v2864 = vpop.f32.mrb[0].mxu0
  %v2865 = vadd.f32 0.0, %v2864
  %v2866 = vpop.f32.mrb[0].mxu0
  %v2867 = vadd.f32 0.0, %v2866
  %v2868 = vpop.f32.mrb[0].mxu0
  %v2869 = vadd.f32 0.0, %v2868
  %2870 = vdwg.mxu0
  %2871 = vmatprep.subr.bf16.mxu0 %v2481
  %2872 = vmatpush1.bf16.msra.mxu0 %v2480
  %2873 = vmatprep.subr.bf16.mxu0 %v2485
  %2874 = vmatpush1.bf16.msra.mxu0 %v2484
  %2875 = vmatprep.subr.bf16.mxu0 %v2489
  %2876 = vmatpush1.bf16.msra.mxu0 %v2488
  %2877 = vmatprep.subr.bf16.mxu0 %v2493
  %2878 = vmatpush1.bf16.msra.mxu0 %v2492
  %2879 = vmatprep.subr.bf16.mxu0 %v2497
  %2880 = vmatpush1.bf16.msra.mxu0 %v2496
  %2881 = vmatprep.subr.bf16.mxu0 %v2501
  %2882 = vmatpush1.bf16.msra.mxu0 %v2500
  %2883 = vmatprep.subr.bf16.mxu0 %v2505
  %2884 = vmatpush1.bf16.msra.mxu0 %v2504
  %2885 = vmatprep.subr.bf16.mxu0 %v2509
  %2886 = vmatpush1.bf16.msra.mxu0 %v2508
  %2887 = vmatprep.subr.bf16.mxu0 0
  %2888 = vmatpush1.bf16.msra.mxu0 0
  %2889 = vmatprep.subr.bf16.mxu0 0
  %2890 = vmatpush1.bf16.msra.mxu0 0
  %2891 = vmatprep.subr.bf16.mxu0 0
  %2892 = vmatpush1.bf16.msra.mxu0 0
  %2893 = vmatprep.subr.bf16.mxu0 0
  %2894 = vmatpush1.bf16.msra.mxu0 0
  %2895 = vmatprep.subr.bf16.mxu0 0
  %2896 = vmatpush1.bf16.msra.mxu0 0
  %2897 = vmatprep.subr.bf16.mxu0 0
  %2898 = vmatpush1.bf16.msra.mxu0 0
  %2899 = vmatprep.subr.bf16.mxu0 0
  %2900 = vmatpush1.bf16.msra.mxu0 0
  %2901 = vmatprep.subr.bf16.mxu0 0
  %2902 = vmatpush1.bf16.msra.mxu0 0
  %2903 = vmatprep.mubr.bf16.mxu0 0
  %2904 = vmatmul.mubr.bf16.gmra.mrb[0].mxu0 %v2827
  %v2905 = vpop.f32.mrb[0].mxu0
  %v2906 = vadd.f32 0.0, %v2905
  %v2907 = vpop.f32.mrb[0].mxu0
  %v2908 = vadd.f32 0.0, %v2907
  %v2909 = vpop.f32.mrb[0].mxu0
  %v2910 = vadd.f32 0.0, %v2909
  %v2911 = vpop.f32.mrb[0].mxu0
  %v2912 = vadd.f32 0.0, %v2911
  %2913 = vdwg.mxu0
  %v2914 = vadd.f32 %v2176, %v2863
  %v2915 = vadd.f32 %v2178, %v2865
  %v2916 = vadd.f32 %v2289, %v2906
  %v2917 = vadd.f32 %v2291, %v2908
  %v2918 = vadd.f32 %v2180, %v2867
  %v2919 = vadd.f32 %v2182, %v2869
  %v2920 = vadd.f32 %v2293, %v2910
  %v2921 = vadd.f32 %v2295, %v2912
  %v2922 = vxor.u32 %v2914, 2147483648
  %v2923 = vxor.u32 %v2918, 2147483648
  %v2924 = vmul.f32 %v2922, 1.442695
  %v2925 = vpow.pop %v2924
  %v2926 = vmul.f32 %v2923, 1.442695
  %v2927 = vpow.pop %v2926
  %v2928 = vadd.f32 %v2925, 1.0
  %v2929 = vadd.f32 %v2927, 1.0
  %v2930 = vrcp.pop %v2928
  %v2931 = vmul.f32 1.0, %v2930
  %v2932 = vrcp.pop %v2929
  %v2933 = vmul.f32 1.0, %v2932
  %v2934 = vxor.u32 %v2915, 2147483648
  %v2935 = vxor.u32 %v2919, 2147483648
  %v2936 = vmul.f32 %v2934, 1.442695
  %v2937 = vpow.pop %v2936
  %v2938 = vmul.f32 %v2935, 1.442695
  %v2939 = vpow.pop %v2938
  %v2940 = vadd.f32 %v2937, 1.0
  %v2941 = vadd.f32 %v2939, 1.0
  %v2942 = vrcp.pop %v2940
  %v2943 = vmul.f32 1.0, %v2942
  %v2944 = vrcp.pop %v2941
  %v2945 = vmul.f32 1.0, %v2944
  %v2946 = vtanh.pop %v2916
  %v2947 = vtanh.pop %v2920
  %v2948 = vxor.u32 %v2917, 2147483648
  %v2949 = vxor.u32 %v2921, 2147483648
  %v2950 = vmul.f32 %v2948, 1.442695
  %v2951 = vpow.pop %v2950
  %v2952 = vmul.f32 %v2949, 1.442695
  %v2953 = vpow.pop %v2952
  %v2954 = vadd.f32 %v2951, 1.0
  %v2955 = vadd.f32 %v2953, 1.0
  %v2956 = vrcp.pop %v2954
  %v2957 = vmul.f32 1.0, %v2956
  %v2958 = vrcp.pop %v2955
  %v2959 = vmul.f32 1.0, %v2958
  %v2960 = vmul.f32 %v2943, %v2821
  %v2961 = vmul.f32 %v2945, %v2822
  %v2962 = vmul.f32 %v2931, %v2946
  %v2963 = vmul.f32 %v2933, %v2947
  %v2964 = vadd.f32 %v2960, %v2962
  %v2965 = vadd.f32 %v2961, %v2963
  %v2966 = vtanh.pop %v2964
  %v2967 = vtanh.pop %v2965
  %v2968 = vmul.f32 %v2957, %v2966
  %v2969 = vmul.f32 %v2959, %v2967
  %v2970 = vpack.c.bf16 %v2969, %v2968
  %2971 = vmatprep.subr.bf16.mxu0 %v2479
  %2972 = vmatpush1.bf16.msra.mxu0 %v2478
  %2973 = vmatprep.subr.bf16.mxu0 %v2483
  %2974 = vmatpush1.bf16.msra.mxu0 %v2482
  %2975 = vmatprep.subr.bf16.mxu0 %v2487
  %2976 = vmatpush1.bf16.msra.mxu0 %v2486
  %2977 = vmatprep.subr.bf16.mxu0 %v2491
  %2978 = vmatpush1.bf16.msra.mxu0 %v2490
  %2979 = vmatprep.subr.bf16.mxu0 %v2495
  %2980 = vmatpush1.bf16.msra.mxu0 %v2494
  %2981 = vmatprep.subr.bf16.mxu0 %v2499
  %2982 = vmatpush1.bf16.msra.mxu0 %v2498
  %2983 = vmatprep.subr.bf16.mxu0 %v2503
  %2984 = vmatpush1.bf16.msra.mxu0 %v2502
  %2985 = vmatprep.subr.bf16.mxu0 %v2507
  %2986 = vmatpush1.bf16.msra.mxu0 %v2506
  %2987 = vmatprep.subr.bf16.mxu0 0
  %2988 = vmatpush1.bf16.msra.mxu0 0
  %2989 = vmatprep.subr.bf16.mxu0 0
  %2990 = vmatpush1.bf16.msra.mxu0 0
  %2991 = vmatprep.subr.bf16.mxu0 0
  %2992 = vmatpush1.bf16.msra.mxu0 0
  %2993 = vmatprep.subr.bf16.mxu0 0
  %2994 = vmatpush1.bf16.msra.mxu0 0
  %2995 = vmatprep.subr.bf16.mxu0 0
  %2996 = vmatpush1.bf16.msra.mxu0 0
  %2997 = vmatprep.subr.bf16.mxu0 0
  %2998 = vmatpush1.bf16.msra.mxu0 0
  %2999 = vmatprep.subr.bf16.mxu0 0
  %3000 = vmatpush1.bf16.msra.mxu0 0
  %3001 = vmatprep.subr.bf16.mxu0 0
  %3002 = vmatpush1.bf16.msra.mxu0 0
  %3003 = vmatprep.mubr.bf16.mxu0 0
  %3004 = vmatmul.mubr.bf16.gmra.mrb[0].mxu0 %v2970
  %v3005 = vpop.f32.mrb[0].mxu0
  %v3006 = vadd.f32 0.0, %v3005
  %v3007 = vpop.f32.mrb[0].mxu0
  %v3008 = vadd.f32 0.0, %v3007
  %v3009 = vpop.f32.mrb[0].mxu0
  %v3010 = vadd.f32 0.0, %v3009
  %v3011 = vpop.f32.mrb[0].mxu0
  %v3012 = vadd.f32 0.0, %v3011
  %3013 = vdwg.mxu0
  %3014 = vmatprep.subr.bf16.mxu0 %v2481
  %3015 = vmatpush1.bf16.msra.mxu0 %v2480
  %3016 = vmatprep.subr.bf16.mxu0 %v2485
  %3017 = vmatpush1.bf16.msra.mxu0 %v2484
  %3018 = vmatprep.subr.bf16.mxu0 %v2489
  %3019 = vmatpush1.bf16.msra.mxu0 %v2488
  %3020 = vmatprep.subr.bf16.mxu0 %v2493
  %3021 = vmatpush1.bf16.msra.mxu0 %v2492
  %3022 = vmatprep.subr.bf16.mxu0 %v2497
  %3023 = vmatpush1.bf16.msra.mxu0 %v2496
  %3024 = vmatprep.subr.bf16.mxu0 %v2501
  %3025 = vmatpush1.bf16.msra.mxu0 %v2500
  %3026 = vmatprep.subr.bf16.mxu0 %v2505
  %3027 = vmatpush1.bf16.msra.mxu0 %v2504
  %3028 = vmatprep.subr.bf16.mxu0 %v2509
  %3029 = vmatpush1.bf16.msra.mxu0 %v2508
  %3030 = vmatprep.subr.bf16.mxu0 0
  %3031 = vmatpush1.bf16.msra.mxu0 0
  %3032 = vmatprep.subr.bf16.mxu0 0
  %3033 = vmatpush1.bf16.msra.mxu0 0
  %3034 = vmatprep.subr.bf16.mxu0 0
  %3035 = vmatpush1.bf16.msra.mxu0 0
  %3036 = vmatprep.subr.bf16.mxu0 0
  %3037 = vmatpush1.bf16.msra.mxu0 0
  %3038 = vmatprep.subr.bf16.mxu0 0
  %3039 = vmatpush1.bf16.msra.mxu0 0
  %3040 = vmatprep.subr.bf16.mxu0 0
  %3041 = vmatpush1.bf16.msra.mxu0 0
  %3042 = vmatprep.subr.bf16.mxu0 0
  %3043 = vmatpush1.bf16.msra.mxu0 0
  %3044 = vmatprep.subr.bf16.mxu0 0
  %3045 = vmatpush1.bf16.msra.mxu0 0
  %3046 = vmatprep.mubr.bf16.mxu0 0
  %3047 = vmatmul.mubr.bf16.gmra.mrb[0].mxu0 %v2970
  %v3048 = vpop.f32.mrb[0].mxu0
  %v3049 = vadd.f32 0.0, %v3048
  %v3050 = vpop.f32.mrb[0].mxu0
  %v3051 = vadd.f32 0.0, %v3050
  %v3052 = vpop.f32.mrb[0].mxu0
  %v3053 = vadd.f32 0.0, %v3052
  %v3054 = vpop.f32.mrb[0].mxu0
  %v3055 = vadd.f32 0.0, %v3054
  %3056 = vdwg.mxu0
  %v3057 = vadd.f32 %v2186, %v3006
  %v3058 = vadd.f32 %v2188, %v3008
  %v3059 = vadd.f32 %v2299, %v3049
  %v3060 = vadd.f32 %v2301, %v3051
  %v3061 = vadd.f32 %v2190, %v3010
  %v3062 = vadd.f32 %v2192, %v3012
  %v3063 = vadd.f32 %v2303, %v3053
  %v3064 = vadd.f32 %v2305, %v3055
  %v3065 = vxor.u32 %v3057, 2147483648
  %v3066 = vxor.u32 %v3061, 2147483648
  %v3067 = vmul.f32 %v3065, 1.442695
  %v3068 = vpow.pop %v3067
  %v3069 = vmul.f32 %v3066, 1.442695
  %v3070 = vpow.pop %v3069
  %v3071 = vadd.f32 %v3068, 1.0
  %v3072 = vadd.f32 %v3070, 1.0
  %v3073 = vrcp.pop %v3071
  %v3074 = vmul.f32 1.0, %v3073
  %v3075 = vrcp.pop %v3072
  %v3076 = vmul.f32 1.0, %v3075
  %v3077 = vxor.u32 %v3058, 2147483648
  %v3078 = vxor.u32 %v3062, 2147483648
  %v3079 = vmul.f32 %v3077, 1.442695
  %v3080 = vpow.pop %v3079
  %v3081 = vmul.f32 %v3078, 1.442695
  %v3082 = vpow.pop %v3081
  %v3083 = vadd.f32 %v3080, 1.0
  %v3084 = vadd.f32 %v3082, 1.0
  %v3085 = vrcp.pop %v3083
  %v3086 = vmul.f32 1.0, %v3085
  %v3087 = vrcp.pop %v3084
  %v3088 = vmul.f32 1.0, %v3087
  %v3089 = vtanh.pop %v3059
  %v3090 = vtanh.pop %v3063
  %v3091 = vxor.u32 %v3060, 2147483648
  %v3092 = vxor.u32 %v3064, 2147483648
  %v3093 = vmul.f32 %v3091, 1.442695
  %v3094 = vpow.pop %v3093
  %v3095 = vmul.f32 %v3092, 1.442695
  %v3096 = vpow.pop %v3095
  %v3097 = vadd.f32 %v3094, 1.0
  %v3098 = vadd.f32 %v3096, 1.0
  %v3099 = vrcp.pop %v3097
  %v3100 = vmul.f32 1.0, %v3099
  %v3101 = vrcp.pop %v3098
  %v3102 = vmul.f32 1.0, %v3101
  %v3103 = vmul.f32 %v3086, %v2964
  %v3104 = vmul.f32 %v3088, %v2965
  %v3105 = vmul.f32 %v3074, %v3089
  %v3106 = vmul.f32 %v3076, %v3090
  %v3107 = vadd.f32 %v3103, %v3105
  %v3108 = vadd.f32 %v3104, %v3106
  %v3109 = vtanh.pop %v3107
  %v3110 = vtanh.pop %v3108
  %v3111 = vmul.f32 %v3100, %v3109
  %v3112 = vmul.f32 %v3102, %v3110
  %v3113 = vpack.c.bf16 %v3112, %v3111
  %3114 = vmatprep.subr.bf16.mxu0 %v2479
  %3115 = vmatpush1.bf16.msra.mxu0 %v2478
  %3116 = vmatprep.subr.bf16.mxu0 %v2483
  %3117 = vmatpush1.bf16.msra.mxu0 %v2482
  %3118 = vmatprep.subr.bf16.mxu0 %v2487
  %3119 = vmatpush1.bf16.msra.mxu0 %v2486
  %3120 = vmatprep.subr.bf16.mxu0 %v2491
  %3121 = vmatpush1.bf16.msra.mxu0 %v2490
  %3122 = vmatprep.subr.bf16.mxu0 %v2495
  %3123 = vmatpush1.bf16.msra.mxu0 %v2494
  %3124 = vmatprep.subr.bf16.mxu0 %v2499
  %3125 = vmatpush1.bf16.msra.mxu0 %v2498
  %3126 = vmatprep.subr.bf16.mxu0 %v2503
  %3127 = vmatpush1.bf16.msra.mxu0 %v2502
  %3128 = vmatprep.subr.bf16.mxu0 %v2507
  %3129 = vmatpush1.bf16.msra.mxu0 %v2506
  %3130 = vmatprep.subr.bf16.mxu0 0
  %3131 = vmatpush1.bf16.msra.mxu0 0
  %3132 = vmatprep.subr.bf16.mxu0 0
  %3133 = vmatpush1.bf16.msra.mxu0 0
  %3134 = vmatprep.subr.bf16.mxu0 0
  %3135 = vmatpush1.bf16.msra.mxu0 0
  %3136 = vmatprep.subr.bf16.mxu0 0
  %3137 = vmatpush1.bf16.msra.mxu0 0
  %3138 = vmatprep.subr.bf16.mxu0 0
  %3139 = vmatpush1.bf16.msra.mxu0 0
  %3140 = vmatprep.subr.bf16.mxu0 0
  %3141 = vmatpush1.bf16.msra.mxu0 0
  %3142 = vmatprep.subr.bf16.mxu0 0
  %3143 = vmatpush1.bf16.msra.mxu0 0
  %3144 = vmatprep.subr.bf16.mxu0 0
  %3145 = vmatpush1.bf16.msra.mxu0 0
  %3146 = vmatprep.mubr.bf16.mxu0 0
  %3147 = vmatmul.mubr.bf16.gmra.mrb[0].mxu0 %v3113
  %v3148 = vpop.f32.mrb[0].mxu0
  %v3149 = vadd.f32 0.0, %v3148
  %v3150 = vpop.f32.mrb[0].mxu0
  %v3151 = vadd.f32 0.0, %v3150
  %v3152 = vpop.f32.mrb[0].mxu0
  %v3153 = vadd.f32 0.0, %v3152
  %v3154 = vpop.f32.mrb[0].mxu0
  %v3155 = vadd.f32 0.0, %v3154
  %3156 = vdwg.mxu0
  %3157 = vmatprep.subr.bf16.mxu0 %v2481
  %3158 = vmatpush1.bf16.msra.mxu0 %v2480
  %3159 = vmatprep.subr.bf16.mxu0 %v2485
  %3160 = vmatpush1.bf16.msra.mxu0 %v2484
  %3161 = vmatprep.subr.bf16.mxu0 %v2489
  %3162 = vmatpush1.bf16.msra.mxu0 %v2488
  %3163 = vmatprep.subr.bf16.mxu0 %v2493
  %3164 = vmatpush1.bf16.msra.mxu0 %v2492
  %3165 = vmatprep.subr.bf16.mxu0 %v2497
  %3166 = vmatpush1.bf16.msra.mxu0 %v2496
  %3167 = vmatprep.subr.bf16.mxu0 %v2501
  %3168 = vmatpush1.bf16.msra.mxu0 %v2500
  %3169 = vmatprep.subr.bf16.mxu0 %v2505
  %3170 = vmatpush1.bf16.msra.mxu0 %v2504
  %3171 = vmatprep.subr.bf16.mxu0 %v2509
  %3172 = vmatpush1.bf16.msra.mxu0 %v2508
  %3173 = vmatprep.subr.bf16.mxu0 0
  %3174 = vmatpush1.bf16.msra.mxu0 0
  %3175 = vmatprep.subr.bf16.mxu0 0
  %3176 = vmatpush1.bf16.msra.mxu0 0
  %3177 = vmatprep.subr.bf16.mxu0 0
  %3178 = vmatpush1.bf16.msra.mxu0 0
  %3179 = vmatprep.subr.bf16.mxu0 0
  %3180 = vmatpush1.bf16.msra.mxu0 0
  %3181 = vmatprep.subr.bf16.mxu0 0
  %3182 = vmatpush1.bf16.msra.mxu0 0
  %3183 = vmatprep.subr.bf16.mxu0 0
  %3184 = vmatpush1.bf16.msra.mxu0 0
  %3185 = vmatprep.subr.bf16.mxu0 0
  %3186 = vmatpush1.bf16.msra.mxu0 0
  %3187 = vmatprep.subr.bf16.mxu0 0
  %3188 = vmatpush1.bf16.msra.mxu0 0
  %3189 = vmatprep.mubr.bf16.mxu0 0
  %3190 = vmatmul.mubr.bf16.gmra.mrb[0].mxu0 %v3113
  %v3191 = vpop.f32.mrb[0].mxu0
  %v3192 = vadd.f32 0.0, %v3191
  %v3193 = vpop.f32.mrb[0].mxu0
  %v3194 = vadd.f32 0.0, %v3193
  %v3195 = vpop.f32.mrb[0].mxu0
  %v3196 = vadd.f32 0.0, %v3195
  %v3197 = vpop.f32.mrb[0].mxu0
  %v3198 = vadd.f32 0.0, %v3197
  %3199 = vdwg.mxu0
  %v3200 = vadd.f32 %v2196, %v3149
  %v3201 = vadd.f32 %v2198, %v3151
  %v3202 = vadd.f32 %v2309, %v3192
  %v3203 = vadd.f32 %v2311, %v3194
  %v3204 = vadd.f32 %v2200, %v3153
  %v3205 = vadd.f32 %v2202, %v3155
  %v3206 = vadd.f32 %v2313, %v3196
  %v3207 = vadd.f32 %v2315, %v3198
  %v3208 = vxor.u32 %v3200, 2147483648
  %v3209 = vxor.u32 %v3204, 2147483648
  %v3210 = vmul.f32 %v3208, 1.442695
  %v3211 = vpow.pop %v3210
  %v3212 = vmul.f32 %v3209, 1.442695
  %v3213 = vpow.pop %v3212
  %v3214 = vadd.f32 %v3211, 1.0
  %v3215 = vadd.f32 %v3213, 1.0
  %v3216 = vrcp.pop %v3214
  %v3217 = vmul.f32 1.0, %v3216
  %v3218 = vrcp.pop %v3215
  %v3219 = vmul.f32 1.0, %v3218
  %v3220 = vxor.u32 %v3201, 2147483648
  %v3221 = vxor.u32 %v3205, 2147483648
  %v3222 = vmul.f32 %v3220, 1.442695
  %v3223 = vpow.pop %v3222
  %v3224 = vmul.f32 %v3221, 1.442695
  %v3225 = vpow.pop %v3224
  %v3226 = vadd.f32 %v3223, 1.0
  %v3227 = vadd.f32 %v3225, 1.0
  %v3228 = vrcp.pop %v3226
  %v3229 = vmul.f32 1.0, %v3228
  %v3230 = vrcp.pop %v3227
  %v3231 = vmul.f32 1.0, %v3230
  %v3232 = vtanh.pop %v3202
  %v3233 = vtanh.pop %v3206
  %v3234 = vxor.u32 %v3203, 2147483648
  %v3235 = vxor.u32 %v3207, 2147483648
  %v3236 = vmul.f32 %v3234, 1.442695
  %v3237 = vpow.pop %v3236
  %v3238 = vmul.f32 %v3235, 1.442695
  %v3239 = vpow.pop %v3238
  %v3240 = vadd.f32 %v3237, 1.0
  %v3241 = vadd.f32 %v3239, 1.0
  %v3242 = vrcp.pop %v3240
  %v3243 = vmul.f32 1.0, %v3242
  %v3244 = vrcp.pop %v3241
  %v3245 = vmul.f32 1.0, %v3244
  %v3246 = vmul.f32 %v3229, %v3107
  %v3247 = vmul.f32 %v3231, %v3108
  %v3248 = vmul.f32 %v3217, %v3232
  %v3249 = vmul.f32 %v3219, %v3233
  %v3250 = vadd.f32 %v3246, %v3248
  %v3251 = vadd.f32 %v3247, %v3249
  %v3252 = vtanh.pop %v3250
  %v3253 = vtanh.pop %v3251
  %v3254 = vmul.f32 %v3243, %v3252
  %v3255 = vmul.f32 %v3245, %v3253
  %v3256 = vpack.c.bf16 %v3255, %v3254
  %3257 = vmatprep.subr.bf16.mxu0 %v2479
  %3258 = vmatpush1.bf16.msra.mxu0 %v2478
  %3259 = vmatprep.subr.bf16.mxu0 %v2483
  %3260 = vmatpush1.bf16.msra.mxu0 %v2482
  %3261 = vmatprep.subr.bf16.mxu0 %v2487
  %3262 = vmatpush1.bf16.msra.mxu0 %v2486
  %3263 = vmatprep.subr.bf16.mxu0 %v2491
  %3264 = vmatpush1.bf16.msra.mxu0 %v2490
  %3265 = vmatprep.subr.bf16.mxu0 %v2495
  %3266 = vmatpush1.bf16.msra.mxu0 %v2494
  %3267 = vmatprep.subr.bf16.mxu0 %v2499
  %3268 = vmatpush1.bf16.msra.mxu0 %v2498
  %3269 = vmatprep.subr.bf16.mxu0 %v2503
  %3270 = vmatpush1.bf16.msra.mxu0 %v2502
  %3271 = vmatprep.subr.bf16.mxu0 %v2507
  %3272 = vmatpush1.bf16.msra.mxu0 %v2506
  %3273 = vmatprep.subr.bf16.mxu0 0
  %3274 = vmatpush1.bf16.msra.mxu0 0
  %3275 = vmatprep.subr.bf16.mxu0 0
  %3276 = vmatpush1.bf16.msra.mxu0 0
  %3277 = vmatprep.subr.bf16.mxu0 0
  %3278 = vmatpush1.bf16.msra.mxu0 0
  %3279 = vmatprep.subr.bf16.mxu0 0
  %3280 = vmatpush1.bf16.msra.mxu0 0
  %3281 = vmatprep.subr.bf16.mxu0 0
  %3282 = vmatpush1.bf16.msra.mxu0 0
  %3283 = vmatprep.subr.bf16.mxu0 0
  %3284 = vmatpush1.bf16.msra.mxu0 0
  %3285 = vmatprep.subr.bf16.mxu0 0
  %3286 = vmatpush1.bf16.msra.mxu0 0
  %3287 = vmatprep.subr.bf16.mxu0 0
  %3288 = vmatpush1.bf16.msra.mxu0 0
  %3289 = vmatprep.mubr.bf16.mxu0 0
  %3290 = vmatmul.mubr.bf16.gmra.mrb[0].mxu0 %v3256
  %v3291 = vpop.f32.mrb[0].mxu0
  %v3292 = vadd.f32 0.0, %v3291
  %v3293 = vpop.f32.mrb[0].mxu0
  %v3294 = vadd.f32 0.0, %v3293
  %v3295 = vpop.f32.mrb[0].mxu0
  %v3296 = vadd.f32 0.0, %v3295
  %v3297 = vpop.f32.mrb[0].mxu0
  %v3298 = vadd.f32 0.0, %v3297
  %3299 = vdwg.mxu0
  %3300 = vmatprep.subr.bf16.mxu0 %v2481
  %3301 = vmatpush1.bf16.msra.mxu0 %v2480
  %3302 = vmatprep.subr.bf16.mxu0 %v2485
  %3303 = vmatpush1.bf16.msra.mxu0 %v2484
  %3304 = vmatprep.subr.bf16.mxu0 %v2489
  %3305 = vmatpush1.bf16.msra.mxu0 %v2488
  %3306 = vmatprep.subr.bf16.mxu0 %v2493
  %3307 = vmatpush1.bf16.msra.mxu0 %v2492
  %3308 = vmatprep.subr.bf16.mxu0 %v2497
  %3309 = vmatpush1.bf16.msra.mxu0 %v2496
  %3310 = vmatprep.subr.bf16.mxu0 %v2501
  %3311 = vmatpush1.bf16.msra.mxu0 %v2500
  %3312 = vmatprep.subr.bf16.mxu0 %v2505
  %3313 = vmatpush1.bf16.msra.mxu0 %v2504
  %3314 = vmatprep.subr.bf16.mxu0 %v2509
  %3315 = vmatpush1.bf16.msra.mxu0 %v2508
  %3316 = vmatprep.subr.bf16.mxu0 0
  %3317 = vmatpush1.bf16.msra.mxu0 0
  %3318 = vmatprep.subr.bf16.mxu0 0
  %3319 = vmatpush1.bf16.msra.mxu0 0
  %3320 = vmatprep.subr.bf16.mxu0 0
  %3321 = vmatpush1.bf16.msra.mxu0 0
  %3322 = vmatprep.subr.bf16.mxu0 0
  %3323 = vmatpush1.bf16.msra.mxu0 0
  %3324 = vmatprep.subr.bf16.mxu0 0
  %3325 = vmatpush1.bf16.msra.mxu0 0
  %3326 = vmatprep.subr.bf16.mxu0 0
  %3327 = vmatpush1.bf16.msra.mxu0 0
  %3328 = vmatprep.subr.bf16.mxu0 0
  %3329 = vmatpush1.bf16.msra.mxu0 0
  %3330 = vmatprep.subr.bf16.mxu0 0
  %3331 = vmatpush1.bf16.msra.mxu0 0
  %3332 = vmatprep.mubr.bf16.mxu0 0
  %3333 = vmatmul.mubr.bf16.gmra.mrb[0].mxu0 %v3256
  %v3334 = vpop.f32.mrb[0].mxu0
  %v3335 = vadd.f32 0.0, %v3334
  %v3336 = vpop.f32.mrb[0].mxu0
  %v3337 = vadd.f32 0.0, %v3336
  %v3338 = vpop.f32.mrb[0].mxu0
  %v3339 = vadd.f32 0.0, %v3338
  %v3340 = vpop.f32.mrb[0].mxu0
  %v3341 = vadd.f32 0.0, %v3340
  %3342 = vdwg.mxu0
  %v3343 = vadd.f32 %v2206, %v3292
  %v3344 = vadd.f32 %v2208, %v3294
  %v3345 = vadd.f32 %v2319, %v3335
  %v3346 = vadd.f32 %v2321, %v3337
  %v3347 = vadd.f32 %v2210, %v3296
  %v3348 = vadd.f32 %v2212, %v3298
  %v3349 = vadd.f32 %v2323, %v3339
  %v3350 = vadd.f32 %v2325, %v3341
  %v3351 = vxor.u32 %v3343, 2147483648
  %v3352 = vxor.u32 %v3347, 2147483648
  %v3353 = vmul.f32 %v3351, 1.442695
  %v3354 = vpow.pop %v3353
  %v3355 = vmul.f32 %v3352, 1.442695
  %v3356 = vpow.pop %v3355
  %v3357 = vadd.f32 %v3354, 1.0
  %v3358 = vadd.f32 %v3356, 1.0
  %v3359 = vrcp.pop %v3357
  %v3360 = vmul.f32 1.0, %v3359
  %v3361 = vrcp.pop %v3358
  %v3362 = vmul.f32 1.0, %v3361
  %v3363 = vxor.u32 %v3344, 2147483648
  %v3364 = vxor.u32 %v3348, 2147483648
  %v3365 = vmul.f32 %v3363, 1.442695
  %v3366 = vpow.pop %v3365
  %v3367 = vmul.f32 %v3364, 1.442695
  %v3368 = vpow.pop %v3367
  %v3369 = vadd.f32 %v3366, 1.0
  %v3370 = vadd.f32 %v3368, 1.0
  %v3371 = vrcp.pop %v3369
  %v3372 = vmul.f32 1.0, %v3371
  %v3373 = vrcp.pop %v3370
  %v3374 = vmul.f32 1.0, %v3373
  %v3375 = vtanh.pop %v3345
  %v3376 = vtanh.pop %v3349
  %v3377 = vxor.u32 %v3346, 2147483648
  %v3378 = vxor.u32 %v3350, 2147483648
  %v3379 = vmul.f32 %v3377, 1.442695
  %v3380 = vpow.pop %v3379
  %v3381 = vmul.f32 %v3378, 1.442695
  %v3382 = vpow.pop %v3381
  %v3383 = vadd.f32 %v3380, 1.0
  %v3384 = vadd.f32 %v3382, 1.0
  %v3385 = vrcp.pop %v3383
  %v3386 = vmul.f32 1.0, %v3385
  %v3387 = vrcp.pop %v3384
  %v3388 = vmul.f32 1.0, %v3387
  %v3389 = vmul.f32 %v3372, %v3250
  %v3390 = vmul.f32 %v3374, %v3251
  %v3391 = vmul.f32 %v3360, %v3375
  %v3392 = vmul.f32 %v3362, %v3376
  %v3393 = vadd.f32 %v3389, %v3391
  %v3394 = vadd.f32 %v3390, %v3392
  %v3395 = vtanh.pop %v3393
  %v3396 = vtanh.pop %v3394
  %v3397 = vmul.f32 %v3386, %v3395
  %v3398 = vmul.f32 %v3388, %v3396
  %v3399 = vpack.c.bf16 %v3398, %v3397
  %3400 = vmatprep.subr.bf16.mxu0 %v2479
  %3401 = vmatpush1.bf16.msra.mxu0 %v2478
  %3402 = vmatprep.subr.bf16.mxu0 %v2483
  %3403 = vmatpush1.bf16.msra.mxu0 %v2482
  %3404 = vmatprep.subr.bf16.mxu0 %v2487
  %3405 = vmatpush1.bf16.msra.mxu0 %v2486
  %3406 = vmatprep.subr.bf16.mxu0 %v2491
  %3407 = vmatpush1.bf16.msra.mxu0 %v2490
  %3408 = vmatprep.subr.bf16.mxu0 %v2495
  %3409 = vmatpush1.bf16.msra.mxu0 %v2494
  %3410 = vmatprep.subr.bf16.mxu0 %v2499
  %3411 = vmatpush1.bf16.msra.mxu0 %v2498
  %3412 = vmatprep.subr.bf16.mxu0 %v2503
  %3413 = vmatpush1.bf16.msra.mxu0 %v2502
  %3414 = vmatprep.subr.bf16.mxu0 %v2507
  %3415 = vmatpush1.bf16.msra.mxu0 %v2506
  %3416 = vmatprep.subr.bf16.mxu0 0
  %3417 = vmatpush1.bf16.msra.mxu0 0
  %3418 = vmatprep.subr.bf16.mxu0 0
  %3419 = vmatpush1.bf16.msra.mxu0 0
  %3420 = vmatprep.subr.bf16.mxu0 0
  %3421 = vmatpush1.bf16.msra.mxu0 0
  %3422 = vmatprep.subr.bf16.mxu0 0
  %3423 = vmatpush1.bf16.msra.mxu0 0
  %3424 = vmatprep.subr.bf16.mxu0 0
  %3425 = vmatpush1.bf16.msra.mxu0 0
  %3426 = vmatprep.subr.bf16.mxu0 0
  %3427 = vmatpush1.bf16.msra.mxu0 0
  %3428 = vmatprep.subr.bf16.mxu0 0
  %3429 = vmatpush1.bf16.msra.mxu0 0
  %3430 = vmatprep.subr.bf16.mxu0 0
  %3431 = vmatpush1.bf16.msra.mxu0 0
  %3432 = vmatprep.mubr.bf16.mxu0 0
  %3433 = vmatmul.mubr.bf16.gmra.mrb[0].mxu0 %v3399
  %v3434 = vpop.f32.mrb[0].mxu0
  %v3435 = vadd.f32 0.0, %v3434
  %v3436 = vpop.f32.mrb[0].mxu0
  %v3437 = vadd.f32 0.0, %v3436
  %v3438 = vpop.f32.mrb[0].mxu0
  %v3439 = vadd.f32 0.0, %v3438
  %v3440 = vpop.f32.mrb[0].mxu0
  %v3441 = vadd.f32 0.0, %v3440
  %3442 = vdwg.mxu0
  %3443 = vmatprep.subr.bf16.mxu0 %v2481
  %3444 = vmatpush1.bf16.msra.mxu0 %v2480
  %3445 = vmatprep.subr.bf16.mxu0 %v2485
  %3446 = vmatpush1.bf16.msra.mxu0 %v2484
  %3447 = vmatprep.subr.bf16.mxu0 %v2489
  %3448 = vmatpush1.bf16.msra.mxu0 %v2488
  %3449 = vmatprep.subr.bf16.mxu0 %v2493
  %3450 = vmatpush1.bf16.msra.mxu0 %v2492
  %3451 = vmatprep.subr.bf16.mxu0 %v2497
  %3452 = vmatpush1.bf16.msra.mxu0 %v2496
  %3453 = vmatprep.subr.bf16.mxu0 %v2501
  %3454 = vmatpush1.bf16.msra.mxu0 %v2500
  %3455 = vmatprep.subr.bf16.mxu0 %v2505
  %3456 = vmatpush1.bf16.msra.mxu0 %v2504
  %3457 = vmatprep.subr.bf16.mxu0 %v2509
  %3458 = vmatpush1.bf16.msra.mxu0 %v2508
  %3459 = vmatprep.subr.bf16.mxu0 0
  %3460 = vmatpush1.bf16.msra.mxu0 0
  %3461 = vmatprep.subr.bf16.mxu0 0
  %3462 = vmatpush1.bf16.msra.mxu0 0
  %3463 = vmatprep.subr.bf16.mxu0 0
  %3464 = vmatpush1.bf16.msra.mxu0 0
  %3465 = vmatprep.subr.bf16.mxu0 0
  %3466 = vmatpush1.bf16.msra.mxu0 0
  %3467 = vmatprep.subr.bf16.mxu0 0
  %3468 = vmatpush1.bf16.msra.mxu0 0
  %3469 = vmatprep.subr.bf16.mxu0 0
  %3470 = vmatpush1.bf16.msra.mxu0 0
  %3471 = vmatprep.subr.bf16.mxu0 0
  %3472 = vmatpush1.bf16.msra.mxu0 0
  %3473 = vmatprep.subr.bf16.mxu0 0
  %3474 = vmatpush1.bf16.msra.mxu0 0
  %3475 = vmatprep.mubr.bf16.mxu0 0
  %3476 = vmatmul.mubr.bf16.gmra.mrb[0].mxu0 %v3399
  %v3477 = vpop.f32.mrb[0].mxu0
  %v3478 = vadd.f32 0.0, %v3477
  %v3479 = vpop.f32.mrb[0].mxu0
  %v3480 = vadd.f32 0.0, %v3479
  %v3481 = vpop.f32.mrb[0].mxu0
  %v3482 = vadd.f32 0.0, %v3481
  %v3483 = vpop.f32.mrb[0].mxu0
  %v3484 = vadd.f32 0.0, %v3483
  %3485 = vdwg.mxu0
  %v3486 = vadd.f32 %v2216, %v3435
  %v3487 = vadd.f32 %v2218, %v3437
  %v3488 = vadd.f32 %v2329, %v3478
  %v3489 = vadd.f32 %v2331, %v3480
  %v3490 = vadd.f32 %v2220, %v3439
  %v3491 = vadd.f32 %v2222, %v3441
  %v3492 = vadd.f32 %v2333, %v3482
  %v3493 = vadd.f32 %v2335, %v3484
  %v3494 = vxor.u32 %v3486, 2147483648
  %v3495 = vxor.u32 %v3490, 2147483648
  %v3496 = vmul.f32 %v3494, 1.442695
  %v3497 = vpow.pop %v3496
  %v3498 = vmul.f32 %v3495, 1.442695
  %v3499 = vpow.pop %v3498
  %v3500 = vadd.f32 %v3497, 1.0
  %v3501 = vadd.f32 %v3499, 1.0
  %v3502 = vrcp.pop %v3500
  %v3503 = vmul.f32 1.0, %v3502
  %v3504 = vrcp.pop %v3501
  %v3505 = vmul.f32 1.0, %v3504
  %v3506 = vxor.u32 %v3487, 2147483648
  %v3507 = vxor.u32 %v3491, 2147483648
  %v3508 = vmul.f32 %v3506, 1.442695
  %v3509 = vpow.pop %v3508
  %v3510 = vmul.f32 %v3507, 1.442695
  %v3511 = vpow.pop %v3510
  %v3512 = vadd.f32 %v3509, 1.0
  %v3513 = vadd.f32 %v3511, 1.0
  %v3514 = vrcp.pop %v3512
  %v3515 = vmul.f32 1.0, %v3514
  %v3516 = vrcp.pop %v3513
  %v3517 = vmul.f32 1.0, %v3516
  %v3518 = vtanh.pop %v3488
  %v3519 = vtanh.pop %v3492
  %v3520 = vxor.u32 %v3489, 2147483648
  %v3521 = vxor.u32 %v3493, 2147483648
  %v3522 = vmul.f32 %v3520, 1.442695
  %v3523 = vpow.pop %v3522
  %v3524 = vmul.f32 %v3521, 1.442695
  %v3525 = vpow.pop %v3524
  %v3526 = vadd.f32 %v3523, 1.0
  %v3527 = vadd.f32 %v3525, 1.0
  %v3528 = vrcp.pop %v3526
  %v3529 = vmul.f32 1.0, %v3528
  %v3530 = vrcp.pop %v3527
  %v3531 = vmul.f32 1.0, %v3530
  %v3532 = vmul.f32 %v3515, %v3393
  %v3533 = vmul.f32 %v3517, %v3394
  %v3534 = vmul.f32 %v3503, %v3518
  %v3535 = vmul.f32 %v3505, %v3519
  %v3536 = vadd.f32 %v3532, %v3534
  %v3537 = vadd.f32 %v3533, %v3535
  %v3538 = vtanh.pop %v3536
  %v3539 = vtanh.pop %v3537
  %v3540 = vmul.f32 %v3529, %v3538
  %v3541 = vmul.f32 %v3531, %v3539
  %v3542 = vpack.c.bf16 %v3541, %v3540
  %3543 = vmatprep.subr.bf16.mxu0 %v2479
  %3544 = vmatpush1.bf16.msra.mxu0 %v2478
  %3545 = vmatprep.subr.bf16.mxu0 %v2483
  %3546 = vmatpush1.bf16.msra.mxu0 %v2482
  %3547 = vmatprep.subr.bf16.mxu0 %v2487
  %3548 = vmatpush1.bf16.msra.mxu0 %v2486
  %3549 = vmatprep.subr.bf16.mxu0 %v2491
  %3550 = vmatpush1.bf16.msra.mxu0 %v2490
  %3551 = vmatprep.subr.bf16.mxu0 %v2495
  %3552 = vmatpush1.bf16.msra.mxu0 %v2494
  %3553 = vmatprep.subr.bf16.mxu0 %v2499
  %3554 = vmatpush1.bf16.msra.mxu0 %v2498
  %3555 = vmatprep.subr.bf16.mxu0 %v2503
  %3556 = vmatpush1.bf16.msra.mxu0 %v2502
  %3557 = vmatprep.subr.bf16.mxu0 %v2507
  %3558 = vmatpush1.bf16.msra.mxu0 %v2506
  %3559 = vmatprep.subr.bf16.mxu0 0
  %3560 = vmatpush1.bf16.msra.mxu0 0
  %3561 = vmatprep.subr.bf16.mxu0 0
  %3562 = vmatpush1.bf16.msra.mxu0 0
  %3563 = vmatprep.subr.bf16.mxu0 0
  %3564 = vmatpush1.bf16.msra.mxu0 0
  %3565 = vmatprep.subr.bf16.mxu0 0
  %3566 = vmatpush1.bf16.msra.mxu0 0
  %3567 = vmatprep.subr.bf16.mxu0 0
  %3568 = vmatpush1.bf16.msra.mxu0 0
  %3569 = vmatprep.subr.bf16.mxu0 0
  %3570 = vmatpush1.bf16.msra.mxu0 0
  %3571 = vmatprep.subr.bf16.mxu0 0
  %3572 = vmatpush1.bf16.msra.mxu0 0
  %3573 = vmatprep.subr.bf16.mxu0 0
  %3574 = vmatpush1.bf16.msra.mxu0 0
  %3575 = vmatprep.mubr.bf16.mxu0 0
  %3576 = vmatmul.mubr.bf16.gmra.mrb[0].mxu0 %v3542
  %v3577 = vpop.f32.mrb[0].mxu0
  %v3578 = vadd.f32 0.0, %v3577
  %v3579 = vpop.f32.mrb[0].mxu0
  %v3580 = vadd.f32 0.0, %v3579
  %v3581 = vpop.f32.mrb[0].mxu0
  %v3582 = vadd.f32 0.0, %v3581
  %v3583 = vpop.f32.mrb[0].mxu0
  %v3584 = vadd.f32 0.0, %v3583
  %3585 = vdwg.mxu0
  %3586 = vmatprep.subr.bf16.mxu0 %v2481
  %3587 = vmatpush1.bf16.msra.mxu0 %v2480
  %3588 = vmatprep.subr.bf16.mxu0 %v2485
  %3589 = vmatpush1.bf16.msra.mxu0 %v2484
  %3590 = vmatprep.subr.bf16.mxu0 %v2489
  %3591 = vmatpush1.bf16.msra.mxu0 %v2488
  %3592 = vmatprep.subr.bf16.mxu0 %v2493
  %3593 = vmatpush1.bf16.msra.mxu0 %v2492
  %3594 = vmatprep.subr.bf16.mxu0 %v2497
  %3595 = vmatpush1.bf16.msra.mxu0 %v2496
  %3596 = vmatprep.subr.bf16.mxu0 %v2501
  %3597 = vmatpush1.bf16.msra.mxu0 %v2500
  %3598 = vmatprep.subr.bf16.mxu0 %v2505
  %3599 = vmatpush1.bf16.msra.mxu0 %v2504
  %3600 = vmatprep.subr.bf16.mxu0 %v2509
  %3601 = vmatpush1.bf16.msra.mxu0 %v2508
  %3602 = vmatprep.subr.bf16.mxu0 0
  %3603 = vmatpush1.bf16.msra.mxu0 0
  %3604 = vmatprep.subr.bf16.mxu0 0
  %3605 = vmatpush1.bf16.msra.mxu0 0
  %3606 = vmatprep.subr.bf16.mxu0 0
  %3607 = vmatpush1.bf16.msra.mxu0 0
  %3608 = vmatprep.subr.bf16.mxu0 0
  %3609 = vmatpush1.bf16.msra.mxu0 0
  %3610 = vmatprep.subr.bf16.mxu0 0
  %3611 = vmatpush1.bf16.msra.mxu0 0
  %3612 = vmatprep.subr.bf16.mxu0 0
  %3613 = vmatpush1.bf16.msra.mxu0 0
  %3614 = vmatprep.subr.bf16.mxu0 0
  %3615 = vmatpush1.bf16.msra.mxu0 0
  %3616 = vmatprep.subr.bf16.mxu0 0
  %3617 = vmatpush1.bf16.msra.mxu0 0
  %3618 = vmatprep.mubr.bf16.mxu0 0
  %3619 = vmatmul.mubr.bf16.gmra.mrb[0].mxu0 %v3542
  %v3620 = vpop.f32.mrb[0].mxu0
  %v3621 = vadd.f32 0.0, %v3620
  %v3622 = vpop.f32.mrb[0].mxu0
  %v3623 = vadd.f32 0.0, %v3622
  %v3624 = vpop.f32.mrb[0].mxu0
  %v3625 = vadd.f32 0.0, %v3624
  %v3626 = vpop.f32.mrb[0].mxu0
  %v3627 = vadd.f32 0.0, %v3626
  %3628 = vdwg.mxu0
  %v3629 = vadd.f32 %v2226, %v3578
  %v3630 = vadd.f32 %v2228, %v3580
  %v3631 = vadd.f32 %v2339, %v3621
  %v3632 = vadd.f32 %v2341, %v3623
  %v3633 = vadd.f32 %v2230, %v3582
  %v3634 = vadd.f32 %v2232, %v3584
  %v3635 = vadd.f32 %v2343, %v3625
  %v3636 = vadd.f32 %v2345, %v3627
  %v3637 = vxor.u32 %v3629, 2147483648
  %v3638 = vxor.u32 %v3633, 2147483648
  %v3639 = vmul.f32 %v3637, 1.442695
  %v3640 = vpow.pop %v3639
  %v3641 = vmul.f32 %v3638, 1.442695
  %v3642 = vpow.pop %v3641
  %v3643 = vadd.f32 %v3640, 1.0
  %v3644 = vadd.f32 %v3642, 1.0
  %v3645 = vrcp.pop %v3643
  %v3646 = vmul.f32 1.0, %v3645
  %v3647 = vrcp.pop %v3644
  %v3648 = vmul.f32 1.0, %v3647
  %v3649 = vxor.u32 %v3630, 2147483648
  %v3650 = vxor.u32 %v3634, 2147483648
  %v3651 = vmul.f32 %v3649, 1.442695
  %v3652 = vpow.pop %v3651
  %v3653 = vmul.f32 %v3650, 1.442695
  %v3654 = vpow.pop %v3653
  %v3655 = vadd.f32 %v3652, 1.0
  %v3656 = vadd.f32 %v3654, 1.0
  %v3657 = vrcp.pop %v3655
  %v3658 = vmul.f32 1.0, %v3657
  %v3659 = vrcp.pop %v3656
  %v3660 = vmul.f32 1.0, %v3659
  %v3661 = vtanh.pop %v3631
  %v3662 = vtanh.pop %v3635
  %v3663 = vxor.u32 %v3632, 2147483648
  %v3664 = vxor.u32 %v3636, 2147483648
  %v3665 = vmul.f32 %v3663, 1.442695
  %v3666 = vpow.pop %v3665
  %v3667 = vmul.f32 %v3664, 1.442695
  %v3668 = vpow.pop %v3667
  %v3669 = vadd.f32 %v3666, 1.0
  %v3670 = vadd.f32 %v3668, 1.0
  %v3671 = vrcp.pop %v3669
  %v3672 = vmul.f32 1.0, %v3671
  %v3673 = vrcp.pop %v3670
  %v3674 = vmul.f32 1.0, %v3673
  %v3675 = vmul.f32 %v3658, %v3536
  %v3676 = vmul.f32 %v3660, %v3537
  %v3677 = vmul.f32 %v3646, %v3661
  %v3678 = vmul.f32 %v3648, %v3662
  %v3679 = vadd.f32 %v3675, %v3677
  %v3680 = vadd.f32 %v3676, %v3678
  %v3681 = vtanh.pop %v3679
  %v3682 = vtanh.pop %v3680
  %v3683 = vmul.f32 %v3672, %v3681
  %v3684 = vmul.f32 %v3674, %v3682
  %v3685 = vpack.c.bf16 %v3684, %v3683
  %3686 = vst [vmem:[#allocation3] sm:$0xff] %v3685
  %3687 = vst [vmem:[#allocation5] sm:$0xff] %v3679
  %3688 = vst [vmem:[#allocation5 + $0x8] sm:$0xff] %v3680
  // Predicated region
  $region42: #{_lambda_.1} parent=0 // pred_check
    %p3689 = pneg %p33
  $region43: #{_lambda_.1} parent=0 // pred_check_branch
    %3691 = sbr.rel (%p3689) target = $region45
  $region44: #{_lambda_.1} parent=0 // pred_region
    %v3692 = vld [vmem:[#allocation3] sm:$0xff]
    %v3693 = vld [vmem:[%s7] sm:$0xf]
    %v3694 = vld [vmem:[%s7 + $0x4] sm:$0xf]
    %v3695 = vld [vmem:[%s7 + $0x8] sm:$0xf]
    %v3696 = vld [vmem:[%s7 + $0xc] sm:$0xf]
    %v3697 = vld [vmem:[%s7 + $0x10] sm:$0xf]
    %v3698 = vld [vmem:[%s7 + $0x14] sm:$0xf]
    %v3699 = vld [vmem:[%s7 + $0x18] sm:$0xf]
    %v3700 = vld [vmem:[%s7 + $0x1c] sm:$0xf]
    %v3701 = vld [vmem:[%s7 + $0x20] sm:$0xf]
    %v3702 = vld [vmem:[%s7 + $0x24] sm:$0xf]
    %v3703 = vld [vmem:[%s7 + $0x28] sm:$0xf]
    %v3704 = vld [vmem:[%s7 + $0x2c] sm:$0xf]
    %v3705 = vld [vmem:[%s7 + $0x30] sm:$0xf]
    %v3706 = vld [vmem:[%s7 + $0x34] sm:$0xf]
    %v3707 = vld [vmem:[%s7 + $0x38] sm:$0xf]
    %v3708 = vld [vmem:[%s7 + $0x3c] sm:$0xf]
    %v3709 = vld [vmem:[%s8] sm:$0x1]
    %v3711 = vlaneseq
    %v3712 = vshrl.u32 %v3711, 7
    %v3713 = vsub.s32 0, %v3712
    %v3714 = vrot.slane %v3709, %v3713
    %v3732 = vunpack.c.l.b16 %v3693
    %v3733 = vunpack.c.l.b16 %v3694
    %v3734 = vunpack.c.l.b16 %v3695
    %v3735 = vunpack.c.l.b16 %v3696
    %v3736 = vunpack.c.l.b16 %v3697
    %v3737 = vunpack.c.l.b16 %v3698
    %v3738 = vunpack.c.l.b16 %v3699
    %v3739 = vunpack.c.l.b16 %v3700
    %v3740 = vunpack.c.l.b16 %v3701
    %v3741 = vunpack.c.l.b16 %v3702
    %v3742 = vunpack.c.l.b16 %v3703
    %v3743 = vunpack.c.l.b16 %v3704
    %v3744 = vunpack.c.l.b16 %v3705
    %v3745 = vunpack.c.l.b16 %v3706
    %v3746 = vunpack.c.l.b16 %v3707
    %v3747 = vunpack.c.l.b16 %v3708
    %v3748 = vpack.c.b16 %v3733, %v3732
    %v3749 = vpack.c.b16 %v3735, %v3734
    %v3750 = vpack.c.b16 %v3737, %v3736
    %v3751 = vpack.c.b16 %v3739, %v3738
    %v3752 = vpack.c.b16 %v3741, %v3740
    %v3753 = vpack.c.b16 %v3743, %v3742
    %v3754 = vpack.c.b16 %v3745, %v3744
    %v3755 = vpack.c.b16 %v3747, %v3746
    %3764 = vmatprep.subr.bf16.mxu0 0
    %3765 = vmatpush1.bf16.msra.mxu0 %v3748
    %3766 = vmatprep.subr.bf16.mxu0 0
    %3767 = vmatpush1.bf16.msra.mxu0 %v3749
    %3768 = vmatprep.subr.bf16.mxu0 0
    %3769 = vmatpush1.bf16.msra.mxu0 %v3750
    %3770 = vmatprep.subr.bf16.mxu0 0
    %3771 = vmatpush1.bf16.msra.mxu0 %v3751
    %3772 = vmatprep.subr.bf16.mxu0 0
    %3773 = vmatpush1.bf16.msra.mxu0 %v3752
    %3774 = vmatprep.subr.bf16.mxu0 0
    %3775 = vmatpush1.bf16.msra.mxu0 %v3753
    %3776 = vmatprep.subr.bf16.mxu0 0
    %3777 = vmatpush1.bf16.msra.mxu0 %v3754
    %3778 = vmatprep.subr.bf16.mxu0 0
    %3779 = vmatpush1.bf16.msra.mxu0 %v3755
    %3780 = vmatprep.subr.bf16.mxu0 0
    %3781 = vmatpush1.bf16.msra.mxu0 0
    %3782 = vmatprep.subr.bf16.mxu0 0
    %3783 = vmatpush1.bf16.msra.mxu0 0
    %3784 = vmatprep.subr.bf16.mxu0 0
    %3785 = vmatpush1.bf16.msra.mxu0 0
    %3786 = vmatprep.subr.bf16.mxu0 0
    %3787 = vmatpush1.bf16.msra.mxu0 0
    %3788 = vmatprep.subr.bf16.mxu0 0
    %3789 = vmatpush1.bf16.msra.mxu0 0
    %3790 = vmatprep.subr.bf16.mxu0 0
    %3791 = vmatpush1.bf16.msra.mxu0 0
    %3792 = vmatprep.subr.bf16.mxu0 0
    %3793 = vmatpush1.bf16.msra.mxu0 0
    %3794 = vmatprep.subr.bf16.mxu0 0
    %3795 = vmatpush1.bf16.msra.mxu0 0
    %3796 = vmatprep.mubr.bf16.mxu0 0
    %3797 = vmatmul.mubr.bf16.gmra.mrb[0].mxu0 %v3692
    %v3798 = vpop.f32.mrb[0].mxu0
    %v3799 = vadd.f32 %v3714, %v3798
    %v3800 = vpop.f32.mrb[0].mxu0
    %v3801 = vpop.f32.mrb[0].mxu0
    %v3802 = vadd.f32 %v3714, %v3801
    %v3803 = vpop.f32.mrb[0].mxu0
    %3804 = vdwg.mxu0
    %3805 = vst [vmem:[%s9] sm:$0xff] %v3799
    %3806 = vst [vmem:[%s9 + $0x8] sm:$0xff] %v3802
  $region45: #{_lambda_.1} parent=0 // pred_fallthru
    _
  // Predicated region
  $region46: #{_lambda_.1} parent=0 // pred_check
    _
  $region47: #{_lambda_.1} parent=0 // pred_check_branch
    %3808 = sbr.rel (0) target = $region49
  $region48: #{_lambda_.1} parent=0 // pred_region
    _
  $region49: #{_lambda_.1} parent=0 // pred_fallthru
    _
  // Predicated region
  $region50: #{_lambda_.1} parent=0 // pred_check
    _
  $region51: #{_lambda_.1} parent=0 // pred_check_branch
    %3810 = sbr.rel (0) target = $region53
  $region52: #{_lambda_.1} parent=0 // pred_region
    _
  $region53: #{_lambda_.1} parent=0 // pred_fallthru
    _

// kernel: _lambda_.1
$region0: #{_lambda_.1}
  #allocation0 [shape = 'u32[]', space=smem, size = 0x4, offset = 0x4, fixed_abs, tag = 'smem constant byte address 0x4 - core index']
  #allocation1 [shape = 'u32[144,128]{1,0:T(1,128)}', space=vmem, size = 0x12000, scoped, tag = 'internal scratch']
  #allocation2 [shape = 'bf16[16,128]{1,0:T(16,128)(2,1)}', space=vmem, size = 0x1000, scoped, tag = 'scratch operand']
  #allocation3 [shape = 'bf16[16,128]{1,0:T(16,128)(2,1)}', space=vmem, size = 0x1000, scoped, tag = 'scratch operand']
  #allocation4 [shape = 'f32[16,128]{1,0:T(8,128)}', space=vmem, size = 0x2000, scoped, tag = 'scratch operand']
  #allocation5 [shape = 'f32[16,128]{1,0:T(8,128)}', space=vmem, size = 0x2000, scoped, tag = 'scratch operand']
  #allocation6 [shape = 'bf16[128,128]{1,0:T(16,128)(2,1)}', space=vmem, size = 0x8000, scoped, tag = 'scratch operand']
  %s0 = inlined_call_operand.vmem [shape: bf16[128,128], index: 0, kind: input, shape index: {}]
  %s1 = inlined_call_operand.vmem [shape: bf16[128,512], index: 1, kind: input, shape index: {}]
  %s2 = inlined_call_operand.vmem [shape: bf16[128,512], index: 2, kind: input, shape index: {}]
  %s3 = inlined_call_operand.vmem [shape: f32[1,512], index: 3, kind: input, shape index: {}]
  %s4 = inlined_call_operand.vmem [shape: bf16[128,512], index: 4, kind: input, shape index: {}]
  %s5 = inlined_call_operand.vmem [shape: bf16[128,512], index: 5, kind: input, shape index: {}]
  %s6 = inlined_call_operand.vmem [shape: f32[1,512], index: 6, kind: input, shape index: {}]
  %s7 = inlined_call_operand.vmem [shape: bf16[128,128], index: 7, kind: input, shape index: {}]
  %s8 = inlined_call_operand.vmem [shape: f32[1,128], index: 8, kind: input, shape index: {}]
  %s9 = inlined_call_operand.vmem [shape: f32[16,128], index: 9, kind: output, shape index: {}]
  %s10 = sld [smem:[#allocation0]]
  $region54: #{_lambda_.1} parent=0
    _
  %s12 = ssub.s32 1, %s10
  %s13 = scalar_select 0, %s12, %s10
  // Predicated region
  $region2: #{_lambda_.1} parent=0 // pred_check
    _
  $region3: #{_lambda_.1} parent=0 // pred_check_branch
    %15 = sbr.rel (0) target = $region5
  $region4: #{_lambda_.1} parent=0 // pred_region
    _
  $region5: #{_lambda_.1} parent=0 // pred_fallthru
    _
  // Predicated region
  $region6: #{_lambda_.1} parent=0 // pred_check
    _
  $region7: #{_lambda_.1} parent=0 // pred_check_branch
    %17 = sbr.rel (0) target = $region9
  $region8: #{_lambda_.1} parent=0 // pred_region
    _
  $region9: #{_lambda_.1} parent=0 // pred_fallthru
    _
  // Predicated region
  $region10: #{_lambda_.1} parent=0 // pred_check
    _
  $region11: #{_lambda_.1} parent=0 // pred_check_branch
    %19 = sbr.rel (0) target = $region13
  $region12: #{_lambda_.1} parent=0 // pred_region
    _
  $region13: #{_lambda_.1} parent=0 // pred_fallthru
    _
  // Predicated region
  $region14: #{_lambda_.1} parent=0 // pred_check
    _
  $region15: #{_lambda_.1} parent=0 // pred_check_branch
    %21 = sbr.rel (0) target = $region17
  $region16: #{_lambda_.1} parent=0 // pred_region
    _
  $region17: #{_lambda_.1} parent=0 // pred_fallthru
    _
  // Predicated region
  $region18: #{_lambda_.1} parent=0 // pred_check
    _
  $region19: #{_lambda_.1} parent=0 // pred_check_branch
    %23 = sbr.rel (0) target = $region21
  $region20: #{_lambda_.1} parent=0 // pred_region
    _
  $region21: #{_lambda_.1} parent=0 // pred_fallthru
    _
  // Predicated region
  $region22: #{_lambda_.1} parent=0 // pred_check
    _
  $region23: #{_lambda_.1} parent=0 // pred_check_branch
    %25 = sbr.rel (0) target = $region25
  $region24: #{_lambda_.1} parent=0 // pred_region
    _
  $region25: #{_lambda_.1} parent=0 // pred_fallthru
    _
  // Predicated region
  $region26: #{_lambda_.1} parent=0 // pred_check
    _
  $region27: #{_lambda_.1} parent=0 // pred_check_branch
    %27 = sbr.rel (0) target = $region29
  $region28: #{_lambda_.1} parent=0 // pred_region
    _
  $region29: #{_lambda_.1} parent=0 // pred_fallthru
    _
  // Predicated region
  $region30: #{_lambda_.1} parent=0 // pred_check
    _
  $region31: #{_lambda_.1} parent=0 // pred_check_branch
    %29 = sbr.rel (0) target = $region33
  $region32: #{_lambda_.1} parent=0 // pred_region
    _
  $region33: #{_lambda_.1} parent=0 // pred_fallthru
    _
  // Predicated region
  $region34: #{_lambda_.1} parent=0 // pred_check
    _
  $region35: #{_lambda_.1} parent=0 // pred_check_branch
    %31 = sbr.rel (0) target = $region37
  $region36: #{_lambda_.1} parent=0 // pred_region
    _
  $region37: #{_lambda_.1} parent=0 // pred_fallthru
    _
  %p33 = scmp.eq.s32.totalorder 0, 0
  // Predicated region
  $region38: #{_lambda_.1} parent=0 // pred_check
    %p34 = pneg %p33
  $region39: #{_lambda_.1} parent=0 // pred_check_branch
    %36 = sbr.rel (%p34) target = $region41
  $region40: #{_lambda_.1} parent=0 // pred_region
    %37 = vst [vmem:[#allocation2] sm:$0xff] 0
    %38 = vst [vmem:[#allocation4] sm:$0xff] 0.0
    %39 = vst [vmem:[#allocation4 + $0x8] sm:$0xff] 0.0
    %40 = vst [vmem:[#allocation3] sm:$0xff] 0
    %41 = vst [vmem:[#allocation5] sm:$0xff] 0.0
    %42 = vst [vmem:[#allocation5 + $0x8] sm:$0xff] 0.0
    %43 = vst [vmem:[%s9] sm:$0xff] 0.0
    %44 = vst [vmem:[%s9 + $0x8] sm:$0xff] 0.0
  $region41: #{_lambda_.1} parent=0 // pred_fallthru
    _
  %v45 = vld [vmem:[%s0] sm:$0xf]
  %v46 = vld [vmem:[%s0 + $0x4] sm:$0xf]
  %v47 = vld [vmem:[%s0 + $0x8] sm:$0xf]
  %v48 = vld [vmem:[%s0 + $0xc] sm:$0xf]
  %v49 = vld [vmem:[%s0 + $0x10] sm:$0xf]
  %v50 = vld [vmem:[%s0 + $0x14] sm:$0xf]
  %v51 = vld [vmem:[%s0 + $0x18] sm:$0xf]
  %v52 = vld [vmem:[%s0 + $0x1c] sm:$0xf]
  %v53 = vld [vmem:[%s0 + $0x20] sm:$0xf]
  %v54 = vld [vmem:[%s0 + $0x24] sm:$0xf]
  %v55 = vld [vmem:[%s0 + $0x28] sm:$0xf]
  %v56 = vld [vmem:[%s0 + $0x2c] sm:$0xf]
  %v57 = vld [vmem:[%s0 + $0x30] sm:$0xf]
  %v58 = vld [vmem:[%s0 + $0x34] sm:$0xf]
  %v59 = vld [vmem:[%s0 + $0x38] sm:$0xf]
  %v60 = vld [vmem:[%s0 + $0x3c] sm:$0xf]
  %v61 = vld [vmem:[%s1] sm:$0xff]
  %v62 = vld [vmem:[%s1 + $0x8] sm:$0xff]
  %v63 = vld [vmem:[%s1 + $0x10] sm:$0xff]
  %v64 = vld [vmem:[%s1 + $0x18] sm:$0xff]
  %v65 = vld [vmem:[%s1 + $0x20] sm:$0xff]
  %v66 = vld [vmem:[%s1 + $0x28] sm:$0xff]
  %v67 = vld [vmem:[%s1 + $0x30] sm:$0xff]
  %v68 = vld [vmem:[%s1 + $0x38] sm:$0xff]
  %v69 = vld [vmem:[%s1 + $0x40] sm:$0xff]
  %v70 = vld [vmem:[%s1 + $0x48] sm:$0xff]
  %v71 = vld [vmem:[%s1 + $0x50] sm:$0xff]
  %v72 = vld [vmem:[%s1 + $0x58] sm:$0xff]
  %v73 = vld [vmem:[%s1 + $0x60] sm:$0xff]
  %v74 = vld [vmem:[%s1 + $0x68] sm:$0xff]
  %v75 = vld [vmem:[%s1 + $0x70] sm:$0xff]
  %v76 = vld [vmem:[%s1 + $0x78] sm:$0xff]
  %v77 = vld [vmem:[%s1 + $0x80] sm:$0xff]
  %v78 = vld [vmem:[%s1 + $0x88] sm:$0xff]
  %v79 = vld [vmem:[%s1 + $0x90] sm:$0xff]
  %v80 = vld [vmem:[%s1 + $0x98] sm:$0xff]
  %v81 = vld [vmem:[%s1 + $0xa0] sm:$0xff]
  %v82 = vld [vmem:[%s1 + $0xa8] sm:$0xff]
  %v83 = vld [vmem:[%s1 + $0xb0] sm:$0xff]
  %v84 = vld [vmem:[%s1 + $0xb8] sm:$0xff]
  %v85 = vld [vmem:[%s1 + $0xc0] sm:$0xff]
  %v86 = vld [vmem:[%s1 + $0xc8] sm:$0xff]
  %v87 = vld [vmem:[%s1 + $0xd0] sm:$0xff]
  %v88 = vld [vmem:[%s1 + $0xd8] sm:$0xff]
  %v89 = vld [vmem:[%s1 + $0xe0] sm:$0xff]
  %v90 = vld [vmem:[%s1 + $0xe8] sm:$0xff]
  %v91 = vld [vmem:[%s1 + $0xf0] sm:$0xff]
  %v92 = vld [vmem:[%s1 + $0xf8] sm:$0xff]
  %v93 = vld [vmem:[%s3] sm:$0xf]
  %v95 = vlaneseq
  %v96 = vshrl.u32 %v95, 7
  %v97 = vsub.s32 0, %v96
  %v98 = vrot.slane %v93, %v97
  %v99 = vlaneseq
  %v100 = vshrl.u32 %v99, 7
  %v101 = vsub.s32 1, %v100
  %v102 = vrot.slane %v93, %v101
  %v103 = vlaneseq
  %v104 = vshrl.u32 %v103, 7
  %v105 = vsub.s32 2, %v104
  %v106 = vrot.slane %v93, %v105
  %v107 = vlaneseq
  %v108 = vshrl.u32 %v107, 7
  %v109 = vsub.s32 3, %v108
  %v110 = vrot.slane %v93, %v109
  %v131 = vunpack.c.l.b16 %v45
  %v132 = vunpack.c.l.b16 %v46
  %v133 = vunpack.c.l.b16 %v47
  %v134 = vunpack.c.l.b16 %v48
  %v135 = vunpack.c.l.b16 %v49
  %v136 = vunpack.c.l.b16 %v50
  %v137 = vunpack.c.l.b16 %v51
  %v138 = vunpack.c.l.b16 %v52
  %v139 = vunpack.c.l.b16 %v53
  %v140 = vunpack.c.l.b16 %v54
  %v141 = vunpack.c.l.b16 %v55
  %v142 = vunpack.c.l.b16 %v56
  %v143 = vunpack.c.l.b16 %v57
  %v144 = vunpack.c.l.b16 %v58
  %v145 = vunpack.c.l.b16 %v59
  %v146 = vunpack.c.l.b16 %v60
  %v147 = vpack.c.b16 %v132, %v131
  %v148 = vpack.c.b16 %v134, %v133
  %v149 = vpack.c.b16 %v136, %v135
  %v150 = vpack.c.b16 %v138, %v137
  %v151 = vpack.c.b16 %v140, %v139
  %v152 = vpack.c.b16 %v142, %v141
  %v153 = vpack.c.b16 %v144, %v143
  %v154 = vpack.c.b16 %v146, %v145
  %v195 = vunpack.c.l.b16 %v61
  %v196 = vunpack.c.h.b16 %v61
  %v197 = vunpack.c.l.b16 %v62
  %v198 = vunpack.c.h.b16 %v62
  %v199 = vunpack.c.l.b16 %v63
  %v200 = vunpack.c.h.b16 %v63
  %v201 = vunpack.c.l.b16 %v64
  %v202 = vunpack.c.h.b16 %v64
  %v203 = vunpack.c.l.b16 %v65
  %v204 = vunpack.c.h.b16 %v65
  %v205 = vunpack.c.l.b16 %v66
  %v206 = vunpack.c.h.b16 %v66
  %v207 = vunpack.c.l.b16 %v67
  %v208 = vunpack.c.h.b16 %v67
  %v209 = vunpack.c.l.b16 %v68
  %v210 = vunpack.c.h.b16 %v68
  %v211 = vunpack.c.l.b16 %v69
  %v212 = vunpack.c.h.b16 %v69
  %v213 = vunpack.c.l.b16 %v70
  %v214 = vunpack.c.h.b16 %v70
  %v215 = vunpack.c.l.b16 %v71
  %v216 = vunpack.c.h.b16 %v71
  %v217 = vunpack.c.l.b16 %v72
  %v218 = vunpack.c.h.b16 %v72
  %v219 = vunpack.c.l.b16 %v73
  %v220 = vunpack.c.h.b16 %v73
  %v221 = vunpack.c.l.b16 %v74
  %v222 = vunpack.c.h.b16 %v74
  %v223 = vunpack.c.l.b16 %v75
  %v224 = vunpack.c.h.b16 %v75
  %v225 = vunpack.c.l.b16 %v76
  %v226 = vunpack.c.h.b16 %v76
  %v227 = vunpack.c.l.b16 %v77
  %v228 = vunpack.c.h.b16 %v77
  %v229 = vunpack.c.l.b16 %v78
  %v230 = vunpack.c.h.b16 %v78
  %v231 = vunpack.c.l.b16 %v79
  %v232 = vunpack.c.h.b16 %v79
  %v233 = vunpack.c.l.b16 %v80
  %v234 = vunpack.c.h.b16 %v80
  %v235 = vunpack.c.l.b16 %v81
  %v236 = vunpack.c.h.b16 %v81
  %v237 = vunpack.c.l.b16 %v82
  %v238 = vunpack.c.h.b16 %v82
  %v239 = vunpack.c.l.b16 %v83
  %v240 = vunpack.c.h.b16 %v83
  %v241 = vunpack.c.l.b16 %v84
  %v242 = vunpack.c.h.b16 %v84
  %v243 = vunpack.c.l.b16 %v85
  %v244 = vunpack.c.h.b16 %v85
  %v245 = vunpack.c.l.b16 %v86
  %v246 = vunpack.c.h.b16 %v86
  %v247 = vunpack.c.l.b16 %v87
  %v248 = vunpack.c.h.b16 %v87
  %v249 = vunpack.c.l.b16 %v88
  %v250 = vunpack.c.h.b16 %v88
  %v251 = vunpack.c.l.b16 %v89
  %v252 = vunpack.c.h.b16 %v89
  %v253 = vunpack.c.l.b16 %v90
  %v254 = vunpack.c.h.b16 %v90
  %v255 = vunpack.c.l.b16 %v91
  %v256 = vunpack.c.h.b16 %v91
  %v257 = vunpack.c.l.b16 %v92
  %v258 = vunpack.c.h.b16 %v92
  %v259 = vpack.c.b16 %v199, %v195
  %v260 = vpack.c.b16 %v200, %v196
  %v261 = vpack.c.b16 %v201, %v197
  %v262 = vpack.c.b16 %v202, %v198
  %v263 = vpack.c.b16 %v207, %v203
  %v264 = vpack.c.b16 %v208, %v204
  %v265 = vpack.c.b16 %v209, %v205
  %v266 = vpack.c.b16 %v210, %v206
  %v267 = vpack.c.b16 %v215, %v211
  %v268 = vpack.c.b16 %v216, %v212
  %v269 = vpack.c.b16 %v217, %v213
  %v270 = vpack.c.b16 %v218, %v214
  %v271 = vpack.c.b16 %v223, %v219
  %v272 = vpack.c.b16 %v224, %v220
  %v273 = vpack.c.b16 %v225, %v221
  %v274 = vpack.c.b16 %v226, %v222
  %v275 = vpack.c.b16 %v231, %v227
  %v276 = vpack.c.b16 %v232, %v228
  %v277 = vpack.c.b16 %v233, %v229
  %v278 = vpack.c.b16 %v234, %v230
  %v279 = vpack.c.b16 %v239, %v235
  %v280 = vpack.c.b16 %v240, %v236
  %v281 = vpack.c.b16 %v241, %v237
  %v282 = vpack.c.b16 %v242, %v238
  %v283 = vpack.c.b16 %v247, %v243
  %v284 = vpack.c.b16 %v248, %v244
  %v285 = vpack.c.b16 %v249, %v245
  %v286 = vpack.c.b16 %v250, %v246
  %v287 = vpack.c.b16 %v255, %v251
  %v288 = vpack.c.b16 %v256, %v252
  %v289 = vpack.c.b16 %v257, %v253
  %v290 = vpack.c.b16 %v258, %v254
  %323 = vmatprep.subr.bf16.mxu0 %v260
  %324 = vmatpush1.bf16.msra.mxu0 %v259
  %325 = vmatprep.subr.bf16.mxu0 %v264
  %326 = vmatpush1.bf16.msra.mxu0 %v263
  %327 = vmatprep.subr.bf16.mxu0 %v268
  %328 = vmatpush1.bf16.msra.mxu0 %v267
  %329 = vmatprep.subr.bf16.mxu0 %v272
  %330 = vmatpush1.bf16.msra.mxu0 %v271
  %331 = vmatprep.subr.bf16.mxu0 %v276
  %332 = vmatpush1.bf16.msra.mxu0 %v275
  %333 = vmatprep.subr.bf16.mxu0 %v280
  %334 = vmatpush1.bf16.msra.mxu0 %v279
  %335 = vmatprep.subr.bf16.mxu0 %v284
  %336 = vmatpush1.bf16.msra.mxu0 %v283
  %337 = vmatprep.subr.bf16.mxu0 %v288
  %338 = vmatpush1.bf16.msra.mxu0 %v287
  %339 = vmatprep.subr.bf16.mxu0 0
  %340 = vmatpush1.bf16.msra.mxu0 0
  %341 = vmatprep.subr.bf16.mxu0 0
  %342 = vmatpush1.bf16.msra.mxu0 0
  %343 = vmatprep.subr.bf16.mxu0 0
  %344 = vmatpush1.bf16.msra.mxu0 0
  %345 = vmatprep.subr.bf16.mxu0 0
  %346 = vmatpush1.bf16.msra.mxu0 0
  %347 = vmatprep.subr.bf16.mxu0 0
  %348 = vmatpush1.bf16.msra.mxu0 0
  %349 = vmatprep.subr.bf16.mxu0 0
  %350 = vmatpush1.bf16.msra.mxu0 0
  %351 = vmatprep.subr.bf16.mxu0 0
  %352 = vmatpush1.bf16.msra.mxu0 0
  %353 = vmatprep.subr.bf16.mxu0 0
  %354 = vmatpush1.bf16.msra.mxu0 0
  %355 = vmatprep.mubr.bf16.mxu0 0
  %356 = vmatmul.mubr.bf16.gmra.mrb[0].mxu0 %v147
  %v357 = vpop.f32.mrb[0].mxu0
  %v358 = vadd.f32 %v98, %v357
  %v359 = vpop.f32.mrb[0].mxu0
  %v360 = vadd.f32 %v102, %v359
  %v361 = vpop.f32.mrb[0].mxu0
  %v362 = vadd.f32 %v98, %v361
  %v363 = vpop.f32.mrb[0].mxu0
  %v364 = vadd.f32 %v102, %v363
  %365 = vmatprep.mubr.bf16.mxu0 0
  %366 = vmatmul.mubr.bf16.gmra.mrb[0].mxu0 %v148
  %v367 = vpop.f32.mrb[0].mxu0
  %v368 = vadd.f32 %v98, %v367
  %v369 = vpop.f32.mrb[0].mxu0
  %v370 = vadd.f32 %v102, %v369
  %v371 = vpop.f32.mrb[0].mxu0
  %v372 = vadd.f32 %v98, %v371
  %v373 = vpop.f32.mrb[0].mxu0
  %v374 = vadd.f32 %v102, %v373
  %375 = vmatprep.mubr.bf16.mxu0 0
  %376 = vmatmul.mubr.bf16.gmra.mrb[0].mxu0 %v149
  %v377 = vpop.f32.mrb[0].mxu0
  %v378 = vadd.f32 %v98, %v377
  %v379 = vpop.f32.mrb[0].mxu0
  %v380 = vadd.f32 %v102, %v379
  %v381 = vpop.f32.mrb[0].mxu0
  %v382 = vadd.f32 %v98, %v381
  %v383 = vpop.f32.mrb[0].mxu0
  %v384 = vadd.f32 %v102, %v383
  %385 = vmatprep.mubr.bf16.mxu0 0
  %386 = vmatmul.mubr.bf16.gmra.mrb[0].mxu0 %v150
  %v387 = vpop.f32.mrb[0].mxu0
  %v388 = vadd.f32 %v98, %v387
  %v389 = vpop.f32.mrb[0].mxu0
  %v390 = vadd.f32 %v102, %v389
  %v391 = vpop.f32.mrb[0].mxu0
  %v392 = vadd.f32 %v98, %v391
  %v393 = vpop.f32.mrb[0].mxu0
  %v394 = vadd.f32 %v102, %v393
  %395 = vmatprep.mubr.bf16.mxu0 0
  %396 = vmatmul.mubr.bf16.gmra.mrb[0].mxu0 %v151
  %v397 = vpop.f32.mrb[0].mxu0
  %v398 = vadd.f32 %v98, %v397
  %v399 = vpop.f32.mrb[0].mxu0
  %v400 = vadd.f32 %v102, %v399
  %v401 = vpop.f32.mrb[0].mxu0
  %v402 = vadd.f32 %v98, %v401
  %v403 = vpop.f32.mrb[0].mxu0
  %v404 = vadd.f32 %v102, %v403
  %405 = vmatprep.mubr.bf16.mxu0 0
  %406 = vmatmul.mubr.bf16.gmra.mrb[0].mxu0 %v152
  %v407 = vpop.f32.mrb[0].mxu0
  %v408 = vadd.f32 %v98, %v407
  %v409 = vpop.f32.mrb[0].mxu0
  %v410 = vadd.f32 %v102, %v409
  %v411 = vpop.f32.mrb[0].mxu0
  %v412 = vadd.f32 %v98, %v411
  %v413 = vpop.f32.mrb[0].mxu0
  %v414 = vadd.f32 %v102, %v413
  %415 = vmatprep.mubr.bf16.mxu0 0
  %416 = vmatmul.mubr.bf16.gmra.mrb[0].mxu0 %v153
  %v417 = vpop.f32.mrb[0].mxu0
  %v418 = vadd.f32 %v98, %v417
  %v419 = vpop.f32.mrb[0].mxu0
  %v420 = vadd.f32 %v102, %v419
  %v421 = vpop.f32.mrb[0].mxu0
  %v422 = vadd.f32 %v98, %v421
  %v423 = vpop.f32.mrb[0].mxu0
  %v424 = vadd.f32 %v102, %v423
  %425 = vmatprep.mubr.bf16.mxu0 0
  %426 = vmatmul.mubr.bf16.gmra.mrb[0].mxu0 %v154
  %v427 = vpop.f32.mrb[0].mxu0
  %v428 = vadd.f32 %v98, %v427
  %v429 = vpop.f32.mrb[0].mxu0
  %v430 = vadd.f32 %v102, %v429
  %v431 = vpop.f32.mrb[0].mxu0
  %v432 = vadd.f32 %v98, %v431
  %v433 = vpop.f32.mrb[0].mxu0
  %v434 = vadd.f32 %v102, %v433
  %435 = vdwg.mxu0
  %436 = vmatprep.subr.bf16.mxu0 %v262
  %437 = vmatpush1.bf16.msra.mxu0 %v261
  %438 = vmatprep.subr.bf16.mxu0 %v266
  %439 = vmatpush1.bf16.msra.mxu0 %v265
  %440 = vmatprep.subr.bf16.mxu0 %v270
  %441 = vmatpush1.bf16.msra.mxu0 %v269
  %442 = vmatprep.subr.bf16.mxu0 %v274
  %443 = vmatpush1.bf16.msra.mxu0 %v273
  %444 = vmatprep.subr.bf16.mxu0 %v278
  %445 = vmatpush1.bf16.msra.mxu0 %v277
  %446 = vmatprep.subr.bf16.mxu0 %v282
  %447 = vmatpush1.bf16.msra.mxu0 %v281
  %448 = vmatprep.subr.bf16.mxu0 %v286
  %449 = vmatpush1.bf16.msra.mxu0 %v285
  %450 = vmatprep.subr.bf16.mxu0 %v290
  %451 = vmatpush1.bf16.msra.mxu0 %v289
  %452 = vmatprep.subr.bf16.mxu0 0
  %453 = vmatpush1.bf16.msra.mxu0 0
  %454 = vmatprep.subr.bf16.mxu0 0
  %455 = vmatpush1.bf16.msra.mxu0 0
  %456 = vmatprep.subr.bf16.mxu0 0
  %457 = vmatpush1.bf16.msra.mxu0 0
  %458 = vmatprep.subr.bf16.mxu0 0
  %459 = vmatpush1.bf16.msra.mxu0 0
  %460 = vmatprep.subr.bf16.mxu0 0
  %461 = vmatpush1.bf16.msra.mxu0 0
  %462 = vmatprep.subr.bf16.mxu0 0
  %463 = vmatpush1.bf16.msra.mxu0 0
  %464 = vmatprep.subr.bf16.mxu0 0
  %465 = vmatpush1.bf16.msra.mxu0 0
  %466 = vmatprep.subr.bf16.mxu0 0
  %467 = vmatpush1.bf16.msra.mxu0 0
  %468 = vmatprep.mubr.bf16.mxu0 0
  %469 = vmatmul.mubr.bf16.gmra.mrb[0].mxu0 %v147
  %v470 = vpop.f32.mrb[0].mxu0
  %v471 = vadd.f32 %v106, %v470
  %v472 = vpop.f32.mrb[0].mxu0
  %v473 = vadd.f32 %v110, %v472
  %v474 = vpop.f32.mrb[0].mxu0
  %v475 = vadd.f32 %v106, %v474
  %v476 = vpop.f32.mrb[0].mxu0
  %v477 = vadd.f32 %v110, %v476
  %478 = vmatprep.mubr.bf16.mxu0 0
  %479 = vmatmul.mubr.bf16.gmra.mrb[0].mxu0 %v148
  %v480 = vpop.f32.mrb[0].mxu0
  %v481 = vadd.f32 %v106, %v480
  %v482 = vpop.f32.mrb[0].mxu0
  %v483 = vadd.f32 %v110, %v482
  %v484 = vpop.f32.mrb[0].mxu0
  %v485 = vadd.f32 %v106, %v484
  %v486 = vpop.f32.mrb[0].mxu0
  %v487 = vadd.f32 %v110, %v486
  %488 = vmatprep.mubr.bf16.mxu0 0
  %489 = vmatmul.mubr.bf16.gmra.mrb[0].mxu0 %v149
  %v490 = vpop.f32.mrb[0].mxu0
  %v491 = vadd.f32 %v106, %v490
  %v492 = vpop.f32.mrb[0].mxu0
  %v493 = vadd.f32 %v110, %v492
  %v494 = vpop.f32.mrb[0].mxu0
  %v495 = vadd.f32 %v106, %v494
  %v496 = vpop.f32.mrb[0].mxu0
  %v497 = vadd.f32 %v110, %v496
  %498 = vmatprep.mubr.bf16.mxu0 0
  %499 = vmatmul.mubr.bf16.gmra.mrb[0].mxu0 %v150
  %v500 = vpop.f32.mrb[0].mxu0
  %v501 = vadd.f32 %v106, %v500
  %v502 = vpop.f32.mrb[0].mxu0
  %v503 = vadd.f32 %v110, %v502
  %v504 = vpop.f32.mrb[0].mxu0
  %v505 = vadd.f32 %v106, %v504
  %v506 = vpop.f32.mrb[0].mxu0
  %v507 = vadd.f32 %v110, %v506
  %508 = vmatprep.mubr.bf16.mxu0 0
  %509 = vmatmul.mubr.bf16.gmra.mrb[0].mxu0 %v151
  %v510 = vpop.f32.mrb[0].mxu0
  %v511 = vadd.f32 %v106, %v510
  %v512 = vpop.f32.mrb[0].mxu0
  %v513 = vadd.f32 %v110, %v512
  %v514 = vpop.f32.mrb[0].mxu0
  %v515 = vadd.f32 %v106, %v514
  %v516 = vpop.f32.mrb[0].mxu0
  %v517 = vadd.f32 %v110, %v516
  %518 = vmatprep.mubr.bf16.mxu0 0
  %519 = vmatmul.mubr.bf16.gmra.mrb[0].mxu0 %v152
  %v520 = vpop.f32.mrb[0].mxu0
  %v521 = vadd.f32 %v106, %v520
  %v522 = vpop.f32.mrb[0].mxu0
  %v523 = vadd.f32 %v110, %v522
  %v524 = vpop.f32.mrb[0].mxu0
  %v525 = vadd.f32 %v106, %v524
  %v526 = vpop.f32.mrb[0].mxu0
  %v527 = vadd.f32 %v110, %v526
  %528 = vmatprep.mubr.bf16.mxu0 0
  %529 = vmatmul.mubr.bf16.gmra.mrb[0].mxu0 %v153
  %v530 = vpop.f32.mrb[0].mxu0
  %v531 = vadd.f32 %v106, %v530
  %v532 = vpop.f32.mrb[0].mxu0
  %v533 = vadd.f32 %v110, %v532
  %v534 = vpop.f32.mrb[0].mxu0
  %v535 = vadd.f32 %v106, %v534
  %v536 = vpop.f32.mrb[0].mxu0
  %v537 = vadd.f32 %v110, %v536
  %538 = vmatprep.mubr.bf16.mxu0 0
  %539 = vmatmul.mubr.bf16.gmra.mrb[0].mxu0 %v154
  %v540 = vpop.f32.mrb[0].mxu0
  %v541 = vadd.f32 %v106, %v540
  %v542 = vpop.f32.mrb[0].mxu0
  %v543 = vadd.f32 %v110, %v542
  %v544 = vpop.f32.mrb[0].mxu0
  %v545 = vadd.f32 %v106, %v544
  %v546 = vpop.f32.mrb[0].mxu0
  %v547 = vadd.f32 %v110, %v546
  %548 = vdwg.mxu0
  %v549 = vld [vmem:[%s2] sm:$0xff]
  %v550 = vld [vmem:[%s2 + $0x8] sm:$0xff]
  %v551 = vld [vmem:[%s2 + $0x10] sm:$0xff]
  %v552 = vld [vmem:[%s2 + $0x18] sm:$0xff]
  %v553 = vld [vmem:[%s2 + $0x20] sm:$0xff]
  %v554 = vld [vmem:[%s2 + $0x28] sm:$0xff]
  %v555 = vld [vmem:[%s2 + $0x30] sm:$0xff]
  %v556 = vld [vmem:[%s2 + $0x38] sm:$0xff]
  %v557 = vld [vmem:[%s2 + $0x40] sm:$0xff]
  %v558 = vld [vmem:[%s2 + $0x48] sm:$0xff]
  %v559 = vld [vmem:[%s2 + $0x50] sm:$0xff]
  %v560 = vld [vmem:[%s2 + $0x58] sm:$0xff]
  %v561 = vld [vmem:[%s2 + $0x60] sm:$0xff]
  %v562 = vld [vmem:[%s2 + $0x68] sm:$0xff]
  %v563 = vld [vmem:[%s2 + $0x70] sm:$0xff]
  %v564 = vld [vmem:[%s2 + $0x78] sm:$0xff]
  %v565 = vld [vmem:[%s2 + $0x80] sm:$0xff]
  %v566 = vld [vmem:[%s2 + $0x88] sm:$0xff]
  %v567 = vld [vmem:[%s2 + $0x90] sm:$0xff]
  %v568 = vld [vmem:[%s2 + $0x98] sm:$0xff]
  %v569 = vld [vmem:[%s2 + $0xa0] sm:$0xff]
  %v570 = vld [vmem:[%s2 + $0xa8] sm:$0xff]
  %v571 = vld [vmem:[%s2 + $0xb0] sm:$0xff]
  %v572 = vld [vmem:[%s2 + $0xb8] sm:$0xff]
  %v573 = vld [vmem:[%s2 + $0xc0] sm:$0xff]
  %v574 = vld [vmem:[%s2 + $0xc8] sm:$0xff]
  %v575 = vld [vmem:[%s2 + $0xd0] sm:$0xff]
  %v576 = vld [vmem:[%s2 + $0xd8] sm:$0xff]
  %v577 = vld [vmem:[%s2 + $0xe0] sm:$0xff]
  %v578 = vld [vmem:[%s2 + $0xe8] sm:$0xff]
  %v579 = vld [vmem:[%s2 + $0xf0] sm:$0xff]
  %v580 = vld [vmem:[%s2 + $0xf8] sm:$0xff]
  %v581 = vld [vmem:[#allocation2] sm:$0xff]
  %v582 = vld [vmem:[#allocation4] sm:$0xff]
  %v583 = vld [vmem:[#allocation4 + $0x8] sm:$0xff]
  %v616 = vunpack.c.l.b16 %v549
  %v617 = vunpack.c.h.b16 %v549
  %v618 = vunpack.c.l.b16 %v550
  %v619 = vunpack.c.h.b16 %v550
  %v620 = vunpack.c.l.b16 %v551
  %v621 = vunpack.c.h.b16 %v551
  %v622 = vunpack.c.l.b16 %v552
  %v623 = vunpack.c.h.b16 %v552
  %v624 = vunpack.c.l.b16 %v553
  %v625 = vunpack.c.h.b16 %v553
  %v626 = vunpack.c.l.b16 %v554
  %v627 = vunpack.c.h.b16 %v554
  %v628 = vunpack.c.l.b16 %v555
  %v629 = vunpack.c.h.b16 %v555
  %v630 = vunpack.c.l.b16 %v556
  %v631 = vunpack.c.h.b16 %v556
  %v632 = vunpack.c.l.b16 %v557
  %v633 = vunpack.c.h.b16 %v557
  %v634 = vunpack.c.l.b16 %v558
  %v635 = vunpack.c.h.b16 %v558
  %v636 = vunpack.c.l.b16 %v559
  %v637 = vunpack.c.h.b16 %v559
  %v638 = vunpack.c.l.b16 %v560
  %v639 = vunpack.c.h.b16 %v560
  %v640 = vunpack.c.l.b16 %v561
  %v641 = vunpack.c.h.b16 %v561
  %v642 = vunpack.c.l.b16 %v562
  %v643 = vunpack.c.h.b16 %v562
  %v644 = vunpack.c.l.b16 %v563
  %v645 = vunpack.c.h.b16 %v563
  %v646 = vunpack.c.l.b16 %v564
  %v647 = vunpack.c.h.b16 %v564
  %v648 = vunpack.c.l.b16 %v565
  %v649 = vunpack.c.h.b16 %v565
  %v650 = vunpack.c.l.b16 %v566
  %v651 = vunpack.c.h.b16 %v566
  %v652 = vunpack.c.l.b16 %v567
  %v653 = vunpack.c.h.b16 %v567
  %v654 = vunpack.c.l.b16 %v568
  %v655 = vunpack.c.h.b16 %v568
  %v656 = vunpack.c.l.b16 %v569
  %v657 = vunpack.c.h.b16 %v569
  %v658 = vunpack.c.l.b16 %v570
  %v659 = vunpack.c.h.b16 %v570
  %v660 = vunpack.c.l.b16 %v571
  %v661 = vunpack.c.h.b16 %v571
  %v662 = vunpack.c.l.b16 %v572
  %v663 = vunpack.c.h.b16 %v572
  %v664 = vunpack.c.l.b16 %v573
  %v665 = vunpack.c.h.b16 %v573
  %v666 = vunpack.c.l.b16 %v574
  %v667 = vunpack.c.h.b16 %v574
  %v668 = vunpack.c.l.b16 %v575
  %v669 = vunpack.c.h.b16 %v575
  %v670 = vunpack.c.l.b16 %v576
  %v671 = vunpack.c.h.b16 %v576
  %v672 = vunpack.c.l.b16 %v577
  %v673 = vunpack.c.h.b16 %v577
  %v674 = vunpack.c.l.b16 %v578
  %v675 = vunpack.c.h.b16 %v578
  %v676 = vunpack.c.l.b16 %v579
  %v677 = vunpack.c.h.b16 %v579
  %v678 = vunpack.c.l.b16 %v580
  %v679 = vunpack.c.h.b16 %v580
  %v680 = vpack.c.b16 %v620, %v616
  %v681 = vpack.c.b16 %v621, %v617
  %v682 = vpack.c.b16 %v622, %v618
  %v683 = vpack.c.b16 %v623, %v619
  %v684 = vpack.c.b16 %v628, %v624
  %v685 = vpack.c.b16 %v629, %v625
  %v686 = vpack.c.b16 %v630, %v626
  %v687 = vpack.c.b16 %v631, %v627
  %v688 = vpack.c.b16 %v636, %v632
  %v689 = vpack.c.b16 %v637, %v633
  %v690 = vpack.c.b16 %v638, %v634
  %v691 = vpack.c.b16 %v639, %v635
  %v692 = vpack.c.b16 %v644, %v640
  %v693 = vpack.c.b16 %v645, %v641
  %v694 = vpack.c.b16 %v646, %v642
  %v695 = vpack.c.b16 %v647, %v643
  %v696 = vpack.c.b16 %v652, %v648
  %v697 = vpack.c.b16 %v653, %v649
  %v698 = vpack.c.b16 %v654, %v650
  %v699 = vpack.c.b16 %v655, %v651
  %v700 = vpack.c.b16 %v660, %v656
  %v701 = vpack.c.b16 %v661, %v657
  %v702 = vpack.c.b16 %v662, %v658
  %v703 = vpack.c.b16 %v663, %v659
  %v704 = vpack.c.b16 %v668, %v664
  %v705 = vpack.c.b16 %v669, %v665
  %v706 = vpack.c.b16 %v670, %v666
  %v707 = vpack.c.b16 %v671, %v667
  %v708 = vpack.c.b16 %v676, %v672
  %v709 = vpack.c.b16 %v677, %v673
  %v710 = vpack.c.b16 %v678, %v674
  %v711 = vpack.c.b16 %v679, %v675
  %744 = vmatprep.subr.bf16.mxu0 %v681
  %745 = vmatpush1.bf16.msra.mxu0 %v680
  %746 = vmatprep.subr.bf16.mxu0 %v685
  %747 = vmatpush1.bf16.msra.mxu0 %v684
  %748 = vmatprep.subr.bf16.mxu0 %v689
  %749 = vmatpush1.bf16.msra.mxu0 %v688
  %750 = vmatprep.subr.bf16.mxu0 %v693
  %751 = vmatpush1.bf16.msra.mxu0 %v692
  %752 = vmatprep.subr.bf16.mxu0 %v697
  %753 = vmatpush1.bf16.msra.mxu0 %v696
  %754 = vmatprep.subr.bf16.mxu0 %v701
  %755 = vmatpush1.bf16.msra.mxu0 %v700
  %756 = vmatprep.subr.bf16.mxu0 %v705
  %757 = vmatpush1.bf16.msra.mxu0 %v704
  %758 = vmatprep.subr.bf16.mxu0 %v709
  %759 = vmatpush1.bf16.msra.mxu0 %v708
  %760 = vmatprep.subr.bf16.mxu0 0
  %761 = vmatpush1.bf16.msra.mxu0 0
  %762 = vmatprep.subr.bf16.mxu0 0
  %763 = vmatpush1.bf16.msra.mxu0 0
  %764 = vmatprep.subr.bf16.mxu0 0
  %765 = vmatpush1.bf16.msra.mxu0 0
  %766 = vmatprep.subr.bf16.mxu0 0
  %767 = vmatpush1.bf16.msra.mxu0 0
  %768 = vmatprep.subr.bf16.mxu0 0
  %769 = vmatpush1.bf16.msra.mxu0 0
  %770 = vmatprep.subr.bf16.mxu0 0
  %771 = vmatpush1.bf16.msra.mxu0 0
  %772 = vmatprep.subr.bf16.mxu0 0
  %773 = vmatpush1.bf16.msra.mxu0 0
  %774 = vmatprep.subr.bf16.mxu0 0
  %775 = vmatpush1.bf16.msra.mxu0 0
  %776 = vmatprep.mubr.bf16.mxu0 0
  %777 = vmatmul.mubr.bf16.gmra.mrb[0].mxu0 %v581
  %v778 = vpop.f32.mrb[0].mxu0
  %v779 = vadd.f32 0.0, %v778
  %v780 = vpop.f32.mrb[0].mxu0
  %v781 = vadd.f32 0.0, %v780
  %v782 = vpop.f32.mrb[0].mxu0
  %v783 = vadd.f32 0.0, %v782
  %v784 = vpop.f32.mrb[0].mxu0
  %v785 = vadd.f32 0.0, %v784
  %786 = vdwg.mxu0
  %787 = vmatprep.subr.bf16.mxu0 %v683
  %788 = vmatpush1.bf16.msra.mxu0 %v682
  %789 = vmatprep.subr.bf16.mxu0 %v687
  %790 = vmatpush1.bf16.msra.mxu0 %v686
  %791 = vmatprep.subr.bf16.mxu0 %v691
  %792 = vmatpush1.bf16.msra.mxu0 %v690
  %793 = vmatprep.subr.bf16.mxu0 %v695
  %794 = vmatpush1.bf16.msra.mxu0 %v694
  %795 = vmatprep.subr.bf16.mxu0 %v699
  %796 = vmatpush1.bf16.msra.mxu0 %v698
  %797 = vmatprep.subr.bf16.mxu0 %v703
  %798 = vmatpush1.bf16.msra.mxu0 %v702
  %799 = vmatprep.subr.bf16.mxu0 %v707
  %800 = vmatpush1.bf16.msra.mxu0 %v706
  %801 = vmatprep.subr.bf16.mxu0 %v711
  %802 = vmatpush1.bf16.msra.mxu0 %v710
  %803 = vmatprep.subr.bf16.mxu0 0
  %804 = vmatpush1.bf16.msra.mxu0 0
  %805 = vmatprep.subr.bf16.mxu0 0
  %806 = vmatpush1.bf16.msra.mxu0 0
  %807 = vmatprep.subr.bf16.mxu0 0
  %808 = vmatpush1.bf16.msra.mxu0 0
  %809 = vmatprep.subr.bf16.mxu0 0
  %810 = vmatpush1.bf16.msra.mxu0 0
  %811 = vmatprep.subr.bf16.mxu0 0
  %812 = vmatpush1.bf16.msra.mxu0 0
  %813 = vmatprep.subr.bf16.mxu0 0
  %814 = vmatpush1.bf16.msra.mxu0 0
  %815 = vmatprep.subr.bf16.mxu0 0
  %816 = vmatpush1.bf16.msra.mxu0 0
  %817 = vmatprep.subr.bf16.mxu0 0
  %818 = vmatpush1.bf16.msra.mxu0 0
  %819 = vmatprep.mubr.bf16.mxu0 0
  %820 = vmatmul.mubr.bf16.gmra.mrb[0].mxu0 %v581
  %v821 = vpop.f32.mrb[0].mxu0
  %v822 = vadd.f32 0.0, %v821
  %v823 = vpop.f32.mrb[0].mxu0
  %v824 = vadd.f32 0.0, %v823
  %v825 = vpop.f32.mrb[0].mxu0
  %v826 = vadd.f32 0.0, %v825
  %v827 = vpop.f32.mrb[0].mxu0
  %v828 = vadd.f32 0.0, %v827
  %829 = vdwg.mxu0
  %v830 = vadd.f32 %v358, %v779
  %v831 = vadd.f32 %v360, %v781
  %v832 = vadd.f32 %v471, %v822
  %v833 = vadd.f32 %v473, %v824
  %v834 = vadd.f32 %v362, %v783
  %v835 = vadd.f32 %v364, %v785
  %v836 = vadd.f32 %v475, %v826
  %v837 = vadd.f32 %v477, %v828
  %v838 = vxor.u32 %v830, 2147483648
  %v839 = vxor.u32 %v834, 2147483648
  %v840 = vmul.f32 %v838, 1.442695
  %v841 = vpow.pop %v840
  %v842 = vmul.f32 %v839, 1.442695
  %v843 = vpow.pop %v842
  %v844 = vadd.f32 %v841, 1.0
  %v845 = vadd.f32 %v843, 1.0
  %v846 = vrcp.pop %v844
  %v847 = vmul.f32 1.0, %v846
  %v848 = vrcp.pop %v845
  %v849 = vmul.f32 1.0, %v848
  %v850 = vxor.u32 %v831, 2147483648
  %v851 = vxor.u32 %v835, 2147483648
  %v852 = vmul.f32 %v850, 1.442695
  %v853 = vpow.pop %v852
  %v854 = vmul.f32 %v851, 1.442695
  %v855 = vpow.pop %v854
  %v856 = vadd.f32 %v853, 1.0
  %v857 = vadd.f32 %v855, 1.0
  %v858 = vrcp.pop %v856
  %v859 = vmul.f32 1.0, %v858
  %v860 = vrcp.pop %v857
  %v861 = vmul.f32 1.0, %v860
  %v862 = vtanh.pop %v832
  %v863 = vtanh.pop %v836
  %v864 = vxor.u32 %v833, 2147483648
  %v865 = vxor.u32 %v837, 2147483648
  %v866 = vmul.f32 %v864, 1.442695
  %v867 = vpow.pop %v866
  %v868 = vmul.f32 %v865, 1.442695
  %v869 = vpow.pop %v868
  %v870 = vadd.f32 %v867, 1.0
  %v871 = vadd.f32 %v869, 1.0
  %v872 = vrcp.pop %v870
  %v873 = vmul.f32 1.0, %v872
  %v874 = vrcp.pop %v871
  %v875 = vmul.f32 1.0, %v874
  %v876 = vmul.f32 %v859, %v582
  %v877 = vmul.f32 %v861, %v583
  %v878 = vmul.f32 %v847, %v862
  %v879 = vmul.f32 %v849, %v863
  %v880 = vadd.f32 %v876, %v878
  %v881 = vadd.f32 %v877, %v879
  %v882 = vtanh.pop %v880
  %v883 = vtanh.pop %v881
  %v884 = vmul.f32 %v873, %v882
  %v885 = vmul.f32 %v875, %v883
  %v886 = vpack.c.bf16 %v885, %v884
  %887 = vst [vmem:[#allocation6] sm:$0xff] %v886
  %888 = vmatprep.subr.bf16.mxu0 %v681
  %889 = vmatpush1.bf16.msra.mxu0 %v680
  %890 = vmatprep.subr.bf16.mxu0 %v685
  %891 = vmatpush1.bf16.msra.mxu0 %v684
  %892 = vmatprep.subr.bf16.mxu0 %v689
  %893 = vmatpush1.bf16.msra.mxu0 %v688
  %894 = vmatprep.subr.bf16.mxu0 %v693
  %895 = vmatpush1.bf16.msra.mxu0 %v692
  %896 = vmatprep.subr.bf16.mxu0 %v697
  %897 = vmatpush1.bf16.msra.mxu0 %v696
  %898 = vmatprep.subr.bf16.mxu0 %v701
  %899 = vmatpush1.bf16.msra.mxu0 %v700
  %900 = vmatprep.subr.bf16.mxu0 %v705
  %901 = vmatpush1.bf16.msra.mxu0 %v704
  %902 = vmatprep.subr.bf16.mxu0 %v709
  %903 = vmatpush1.bf16.msra.mxu0 %v708
  %904 = vmatprep.subr.bf16.mxu0 0
  %905 = vmatpush1.bf16.msra.mxu0 0
  %906 = vmatprep.subr.bf16.mxu0 0
  %907 = vmatpush1.bf16.msra.mxu0 0
  %908 = vmatprep.subr.bf16.mxu0 0
  %909 = vmatpush1.bf16.msra.mxu0 0
  %910 = vmatprep.subr.bf16.mxu0 0
  %911 = vmatpush1.bf16.msra.mxu0 0
  %912 = vmatprep.subr.bf16.mxu0 0
  %913 = vmatpush1.bf16.msra.mxu0 0
  %914 = vmatprep.subr.bf16.mxu0 0
  %915 = vmatpush1.bf16.msra.mxu0 0
  %916 = vmatprep.subr.bf16.mxu0 0
  %917 = vmatpush1.bf16.msra.mxu0 0
  %918 = vmatprep.subr.bf16.mxu0 0
  %919 = vmatpush1.bf16.msra.mxu0 0
  %920 = vmatprep.mubr.bf16.mxu0 0
  %921 = vmatmul.mubr.bf16.gmra.mrb[0].mxu0 %v886
  %v922 = vpop.f32.mrb[0].mxu0
  %v923 = vadd.f32 0.0, %v922
  %v924 = vpop.f32.mrb[0].mxu0
  %v925 = vadd.f32 0.0, %v924
  %v926 = vpop.f32.mrb[0].mxu0
  %v927 = vadd.f32 0.0, %v926
  %v928 = vpop.f32.mrb[0].mxu0
  %v929 = vadd.f32 0.0, %v928
  %930 = vdwg.mxu0
  %931 = vmatprep.subr.bf16.mxu0 %v683
  %932 = vmatpush1.bf16.msra.mxu0 %v682
  %933 = vmatprep.subr.bf16.mxu0 %v687
  %934 = vmatpush1.bf16.msra.mxu0 %v686
  %935 = vmatprep.subr.bf16.mxu0 %v691
  %936 = vmatpush1.bf16.msra.mxu0 %v690
  %937 = vmatprep.subr.bf16.mxu0 %v695
  %938 = vmatpush1.bf16.msra.mxu0 %v694
  %939 = vmatprep.subr.bf16.mxu0 %v699
  %940 = vmatpush1.bf16.msra.mxu0 %v698
  %941 = vmatprep.subr.bf16.mxu0 %v703
  %942 = vmatpush1.bf16.msra.mxu0 %v702
  %943 = vmatprep.subr.bf16.mxu0 %v707
  %944 = vmatpush1.bf16.msra.mxu0 %v706
  %945 = vmatprep.subr.bf16.mxu0 %v711
  %946 = vmatpush1.bf16.msra.mxu0 %v710
  %947 = vmatprep.subr.bf16.mxu0 0
  %948 = vmatpush1.bf16.msra.mxu0 0
  %949 = vmatprep.subr.bf16.mxu0 0
  %950 = vmatpush1.bf16.msra.mxu0 0
  %951 = vmatprep.subr.bf16.mxu0 0
  %952 = vmatpush1.bf16.msra.mxu0 0
  %953 = vmatprep.subr.bf16.mxu0 0
  %954 = vmatpush1.bf16.msra.mxu0 0
  %955 = vmatprep.subr.bf16.mxu0 0
  %956 = vmatpush1.bf16.msra.mxu0 0
  %957 = vmatprep.subr.bf16.mxu0 0
  %958 = vmatpush1.bf16.msra.mxu0 0
  %959 = vmatprep.subr.bf16.mxu0 0
  %960 = vmatpush1.bf16.msra.mxu0 0
  %961 = vmatprep.subr.bf16.mxu0 0
  %962 = vmatpush1.bf16.msra.mxu0 0
  %963 = vmatprep.mubr.bf16.mxu0 0
  %964 = vmatmul.mubr.bf16.gmra.mrb[0].mxu0 %v886
  %v965 = vpop.f32.mrb[0].mxu0
  %v966 = vadd.f32 0.0, %v965
  %v967 = vpop.f32.mrb[0].mxu0
  %v968 = vadd.f32 0.0, %v967
  %v969 = vpop.f32.mrb[0].mxu0
  %v970 = vadd.f32 0.0, %v969
  %v971 = vpop.f32.mrb[0].mxu0
  %v972 = vadd.f32 0.0, %v971
  %973 = vdwg.mxu0
  %v974 = vadd.f32 %v368, %v923
  %v975 = vadd.f32 %v370, %v925
  %v976 = vadd.f32 %v481, %v966
  %v977 = vadd.f32 %v483, %v968
  %v978 = vadd.f32 %v372, %v927
  %v979 = vadd.f32 %v374, %v929
  %v980 = vadd.f32 %v485, %v970
  %v981 = vadd.f32 %v487, %v972
  %v982 = vxor.u32 %v974, 2147483648
  %v983 = vxor.u32 %v978, 2147483648
  %v984 = vmul.f32 %v982, 1.442695
  %v985 = vpow.pop %v984
  %v986 = vmul.f32 %v983, 1.442695
  %v987 = vpow.pop %v986
  %v988 = vadd.f32 %v985, 1.0
  %v989 = vadd.f32 %v987, 1.0
  %v990 = vrcp.pop %v988
  %v991 = vmul.f32 1.0, %v990
  %v992 = vrcp.pop %v989
  %v993 = vmul.f32 1.0, %v992
  %v994 = vxor.u32 %v975, 2147483648
  %v995 = vxor.u32 %v979, 2147483648
  %v996 = vmul.f32 %v994, 1.442695
  %v997 = vpow.pop %v996
  %v998 = vmul.f32 %v995, 1.442695
  %v999 = vpow.pop %v998
  %v1000 = vadd.f32 %v997, 1.0
  %v1001 = vadd.f32 %v999, 1.0
  %v1002 = vrcp.pop %v1000
  %v1003 = vmul.f32 1.0, %v1002
  %v1004 = vrcp.pop %v1001
  %v1005 = vmul.f32 1.0, %v1004
  %v1006 = vtanh.pop %v976
  %v1007 = vtanh.pop %v980
  %v1008 = vxor.u32 %v977, 2147483648
  %v1009 = vxor.u32 %v981, 2147483648
  %v1010 = vmul.f32 %v1008, 1.442695
  %v1011 = vpow.pop %v1010
  %v1012 = vmul.f32 %v1009, 1.442695
  %v1013 = vpow.pop %v1012
  %v1014 = vadd.f32 %v1011, 1.0
  %v1015 = vadd.f32 %v1013, 1.0
  %v1016 = vrcp.pop %v1014
  %v1017 = vmul.f32 1.0, %v1016
  %v1018 = vrcp.pop %v1015
  %v1019 = vmul.f32 1.0, %v1018
  %v1020 = vmul.f32 %v1003, %v880
  %v1021 = vmul.f32 %v1005, %v881
  %v1022 = vmul.f32 %v991, %v1006
  %v1023 = vmul.f32 %v993, %v1007
  %v1024 = vadd.f32 %v1020, %v1022
  %v1025 = vadd.f32 %v1021, %v1023
  %v1026 = vtanh.pop %v1024
  %v1027 = vtanh.pop %v1025
  %v1028 = vmul.f32 %v1017, %v1026
  %v1029 = vmul.f32 %v1019, %v1027
  %v1030 = vpack.c.bf16 %v1029, %v1028
  %1031 = vst [vmem:[#allocation6 + $0x8] sm:$0xff] %v1030
  %1032 = vmatprep.subr.bf16.mxu0 %v681
  %1033 = vmatpush1.bf16.msra.mxu0 %v680
  %1034 = vmatprep.subr.bf16.mxu0 %v685
  %1035 = vmatpush1.bf16.msra.mxu0 %v684
  %1036 = vmatprep.subr.bf16.mxu0 %v689
  %1037 = vmatpush1.bf16.msra.mxu0 %v688
  %1038 = vmatprep.subr.bf16.mxu0 %v693
  %1039 = vmatpush1.bf16.msra.mxu0 %v692
  %1040 = vmatprep.subr.bf16.mxu0 %v697
  %1041 = vmatpush1.bf16.msra.mxu0 %v696
  %1042 = vmatprep.subr.bf16.mxu0 %v701
  %1043 = vmatpush1.bf16.msra.mxu0 %v700
  %1044 = vmatprep.subr.bf16.mxu0 %v705
  %1045 = vmatpush1.bf16.msra.mxu0 %v704
  %1046 = vmatprep.subr.bf16.mxu0 %v709
  %1047 = vmatpush1.bf16.msra.mxu0 %v708
  %1048 = vmatprep.subr.bf16.mxu0 0
  %1049 = vmatpush1.bf16.msra.mxu0 0
  %1050 = vmatprep.subr.bf16.mxu0 0
  %1051 = vmatpush1.bf16.msra.mxu0 0
  %1052 = vmatprep.subr.bf16.mxu0 0
  %1053 = vmatpush1.bf16.msra.mxu0 0
  %1054 = vmatprep.subr.bf16.mxu0 0
  %1055 = vmatpush1.bf16.msra.mxu0 0
  %1056 = vmatprep.subr.bf16.mxu0 0
  %1057 = vmatpush1.bf16.msra.mxu0 0
  %1058 = vmatprep.subr.bf16.mxu0 0
  %1059 = vmatpush1.bf16.msra.mxu0 0
  %1060 = vmatprep.subr.bf16.mxu0 0
  %1061 = vmatpush1.bf16.msra.mxu0 0
  %1062 = vmatprep.subr.bf16.mxu0 0
  %1063 = vmatpush1.bf16.msra.mxu0 0
  %1064 = vmatprep.mubr.bf16.mxu0 0
  %1065 = vmatmul.mubr.bf16.gmra.mrb[0].mxu0 %v1030
  %v1066 = vpop.f32.mrb[0].mxu0
  %v1067 = vadd.f32 0.0, %v1066
  %v1068 = vpop.f32.mrb[0].mxu0
  %v1069 = vadd.f32 0.0, %v1068
  %v1070 = vpop.f32.mrb[0].mxu0
  %v1071 = vadd.f32 0.0, %v1070
  %v1072 = vpop.f32.mrb[0].mxu0
  %v1073 = vadd.f32 0.0, %v1072
  %1074 = vdwg.mxu0
  %1075 = vmatprep.subr.bf16.mxu0 %v683
  %1076 = vmatpush1.bf16.msra.mxu0 %v682
  %1077 = vmatprep.subr.bf16.mxu0 %v687
  %1078 = vmatpush1.bf16.msra.mxu0 %v686
  %1079 = vmatprep.subr.bf16.mxu0 %v691
  %1080 = vmatpush1.bf16.msra.mxu0 %v690
  %1081 = vmatprep.subr.bf16.mxu0 %v695
  %1082 = vmatpush1.bf16.msra.mxu0 %v694
  %1083 = vmatprep.subr.bf16.mxu0 %v699
  %1084 = vmatpush1.bf16.msra.mxu0 %v698
  %1085 = vmatprep.subr.bf16.mxu0 %v703
  %1086 = vmatpush1.bf16.msra.mxu0 %v702
  %1087 = vmatprep.subr.bf16.mxu0 %v707
  %1088 = vmatpush1.bf16.msra.mxu0 %v706
  %1089 = vmatprep.subr.bf16.mxu0 %v711
  %1090 = vmatpush1.bf16.msra.mxu0 %v710
  %1091 = vmatprep.subr.bf16.mxu0 0
  %1092 = vmatpush1.bf16.msra.mxu0 0
  %1093 = vmatprep.subr.bf16.mxu0 0
  %1094 = vmatpush1.bf16.msra.mxu0 0
  %1095 = vmatprep.subr.bf16.mxu0 0
  %1096 = vmatpush1.bf16.msra.mxu0 0
  %1097 = vmatprep.subr.bf16.mxu0 0
  %1098 = vmatpush1.bf16.msra.mxu0 0
  %1099 = vmatprep.subr.bf16.mxu0 0
  %1100 = vmatpush1.bf16.msra.mxu0 0
  %1101 = vmatprep.subr.bf16.mxu0 0
  %1102 = vmatpush1.bf16.msra.mxu0 0
  %1103 = vmatprep.subr.bf16.mxu0 0
  %1104 = vmatpush1.bf16.msra.mxu0 0
  %1105 = vmatprep.subr.bf16.mxu0 0
  %1106 = vmatpush1.bf16.msra.mxu0 0
  %1107 = vmatprep.mubr.bf16.mxu0 0
  %1108 = vmatmul.mubr.bf16.gmra.mrb[0].mxu0 %v1030
  %v1109 = vpop.f32.mrb[0].mxu0
  %v1110 = vadd.f32 0.0, %v1109
  %v1111 = vpop.f32.mrb[0].mxu0
  %v1112 = vadd.f32 0.0, %v1111
  %v1113 = vpop.f32.mrb[0].mxu0
  %v1114 = vadd.f32 0.0, %v1113
  %v1115 = vpop.f32.mrb[0].mxu0
  %v1116 = vadd.f32 0.0, %v1115
  %1117 = vdwg.mxu0
  %v1118 = vadd.f32 %v378, %v1067
  %v1119 = vadd.f32 %v380, %v1069
  %v1120 = vadd.f32 %v491, %v1110
  %v1121 = vadd.f32 %v493, %v1112
  %v1122 = vadd.f32 %v382, %v1071
  %v1123 = vadd.f32 %v384, %v1073
  %v1124 = vadd.f32 %v495, %v1114
  %v1125 = vadd.f32 %v497, %v1116
  %v1126 = vxor.u32 %v1118, 2147483648
  %v1127 = vxor.u32 %v1122, 2147483648
  %v1128 = vmul.f32 %v1126, 1.442695
  %v1129 = vpow.pop %v1128
  %v1130 = vmul.f32 %v1127, 1.442695
  %v1131 = vpow.pop %v1130
  %v1132 = vadd.f32 %v1129, 1.0
  %v1133 = vadd.f32 %v1131, 1.0
  %v1134 = vrcp.pop %v1132
  %v1135 = vmul.f32 1.0, %v1134
  %v1136 = vrcp.pop %v1133
  %v1137 = vmul.f32 1.0, %v1136
  %v1138 = vxor.u32 %v1119, 2147483648
  %v1139 = vxor.u32 %v1123, 2147483648
  %v1140 = vmul.f32 %v1138, 1.442695
  %v1141 = vpow.pop %v1140
  %v1142 = vmul.f32 %v1139, 1.442695
  %v1143 = vpow.pop %v1142
  %v1144 = vadd.f32 %v1141, 1.0
  %v1145 = vadd.f32 %v1143, 1.0
  %v1146 = vrcp.pop %v1144
  %v1147 = vmul.f32 1.0, %v1146
  %v1148 = vrcp.pop %v1145
  %v1149 = vmul.f32 1.0, %v1148
  %v1150 = vtanh.pop %v1120
  %v1151 = vtanh.pop %v1124
  %v1152 = vxor.u32 %v1121, 2147483648
  %v1153 = vxor.u32 %v1125, 2147483648
  %v1154 = vmul.f32 %v1152, 1.442695
  %v1155 = vpow.pop %v1154
  %v1156 = vmul.f32 %v1153, 1.442695
  %v1157 = vpow.pop %v1156
  %v1158 = vadd.f32 %v1155, 1.0
  %v1159 = vadd.f32 %v1157, 1.0
  %v1160 = vrcp.pop %v1158
  %v1161 = vmul.f32 1.0, %v1160
  %v1162 = vrcp.pop %v1159
  %v1163 = vmul.f32 1.0, %v1162
  %v1164 = vmul.f32 %v1147, %v1024
  %v1165 = vmul.f32 %v1149, %v1025
  %v1166 = vmul.f32 %v1135, %v1150
  %v1167 = vmul.f32 %v1137, %v1151
  %v1168 = vadd.f32 %v1164, %v1166
  %v1169 = vadd.f32 %v1165, %v1167
  %v1170 = vtanh.pop %v1168
  %v1171 = vtanh.pop %v1169
  %v1172 = vmul.f32 %v1161, %v1170
  %v1173 = vmul.f32 %v1163, %v1171
  %v1174 = vpack.c.bf16 %v1173, %v1172
  %1175 = vst [vmem:[#allocation6 + $0x10] sm:$0xff] %v1174
  %1176 = vmatprep.subr.bf16.mxu0 %v681
  %1177 = vmatpush1.bf16.msra.mxu0 %v680
  %1178 = vmatprep.subr.bf16.mxu0 %v685
  %1179 = vmatpush1.bf16.msra.mxu0 %v684
  %1180 = vmatprep.subr.bf16.mxu0 %v689
  %1181 = vmatpush1.bf16.msra.mxu0 %v688
  %1182 = vmatprep.subr.bf16.mxu0 %v693
  %1183 = vmatpush1.bf16.msra.mxu0 %v692
  %1184 = vmatprep.subr.bf16.mxu0 %v697
  %1185 = vmatpush1.bf16.msra.mxu0 %v696
  %1186 = vmatprep.subr.bf16.mxu0 %v701
  %1187 = vmatpush1.bf16.msra.mxu0 %v700
  %1188 = vmatprep.subr.bf16.mxu0 %v705
  %1189 = vmatpush1.bf16.msra.mxu0 %v704
  %1190 = vmatprep.subr.bf16.mxu0 %v709
  %1191 = vmatpush1.bf16.msra.mxu0 %v708
  %1192 = vmatprep.subr.bf16.mxu0 0
  %1193 = vmatpush1.bf16.msra.mxu0 0
  %1194 = vmatprep.subr.bf16.mxu0 0
  %1195 = vmatpush1.bf16.msra.mxu0 0
  %1196 = vmatprep.subr.bf16.mxu0 0
  %1197 = vmatpush1.bf16.msra.mxu0 0
  %1198 = vmatprep.subr.bf16.mxu0 0
  %1199 = vmatpush1.bf16.msra.mxu0 0
  %1200 = vmatprep.subr.bf16.mxu0 0
  %1201 = vmatpush1.bf16.msra.mxu0 0
  %1202 = vmatprep.subr.bf16.mxu0 0
  %1203 = vmatpush1.bf16.msra.mxu0 0
  %1204 = vmatprep.subr.bf16.mxu0 0
  %1205 = vmatpush1.bf16.msra.mxu0 0
  %1206 = vmatprep.subr.bf16.mxu0 0
  %1207 = vmatpush1.bf16.msra.mxu0 0
  %1208 = vmatprep.mubr.bf16.mxu0 0
  %1209 = vmatmul.mubr.bf16.gmra.mrb[0].mxu0 %v1174
  %v1210 = vpop.f32.mrb[0].mxu0
  %v1211 = vadd.f32 0.0, %v1210
  %v1212 = vpop.f32.mrb[0].mxu0
  %v1213 = vadd.f32 0.0, %v1212
  %v1214 = vpop.f32.mrb[0].mxu0
  %v1215 = vadd.f32 0.0, %v1214
  %v1216 = vpop.f32.mrb[0].mxu0
  %v1217 = vadd.f32 0.0, %v1216
  %1218 = vdwg.mxu0
  %1219 = vmatprep.subr.bf16.mxu0 %v683
  %1220 = vmatpush1.bf16.msra.mxu0 %v682
  %1221 = vmatprep.subr.bf16.mxu0 %v687
  %1222 = vmatpush1.bf16.msra.mxu0 %v686
  %1223 = vmatprep.subr.bf16.mxu0 %v691
  %1224 = vmatpush1.bf16.msra.mxu0 %v690
  %1225 = vmatprep.subr.bf16.mxu0 %v695
  %1226 = vmatpush1.bf16.msra.mxu0 %v694
  %1227 = vmatprep.subr.bf16.mxu0 %v699
  %1228 = vmatpush1.bf16.msra.mxu0 %v698
  %1229 = vmatprep.subr.bf16.mxu0 %v703
  %1230 = vmatpush1.bf16.msra.mxu0 %v702
  %1231 = vmatprep.subr.bf16.mxu0 %v707
  %1232 = vmatpush1.bf16.msra.mxu0 %v706
  %1233 = vmatprep.subr.bf16.mxu0 %v711
  %1234 = vmatpush1.bf16.msra.mxu0 %v710
  %1235 = vmatprep.subr.bf16.mxu0 0
  %1236 = vmatpush1.bf16.msra.mxu0 0
  %1237 = vmatprep.subr.bf16.mxu0 0
  %1238 = vmatpush1.bf16.msra.mxu0 0
  %1239 = vmatprep.subr.bf16.mxu0 0
  %1240 = vmatpush1.bf16.msra.mxu0 0
  %1241 = vmatprep.subr.bf16.mxu0 0
  %1242 = vmatpush1.bf16.msra.mxu0 0
  %1243 = vmatprep.subr.bf16.mxu0 0
  %1244 = vmatpush1.bf16.msra.mxu0 0
  %1245 = vmatprep.subr.bf16.mxu0 0
  %1246 = vmatpush1.bf16.msra.mxu0 0
  %1247 = vmatprep.subr.bf16.mxu0 0
  %1248 = vmatpush1.bf16.msra.mxu0 0
  %1249 = vmatprep.subr.bf16.mxu0 0
  %1250 = vmatpush1.bf16.msra.mxu0 0
  %1251 = vmatprep.mubr.bf16.mxu0 0
  %1252 = vmatmul.mubr.bf16.gmra.mrb[0].mxu0 %v1174
  %v1253 = vpop.f32.mrb[0].mxu0
  %v1254 = vadd.f32 0.0, %v1253
  %v1255 = vpop.f32.mrb[0].mxu0
  %v1256 = vadd.f32 0.0, %v1255
  %v1257 = vpop.f32.mrb[0].mxu0
  %v1258 = vadd.f32 0.0, %v1257
  %v1259 = vpop.f32.mrb[0].mxu0
  %v1260 = vadd.f32 0.0, %v1259
  %1261 = vdwg.mxu0
  %v1262 = vadd.f32 %v388, %v1211
  %v1263 = vadd.f32 %v390, %v1213
  %v1264 = vadd.f32 %v501, %v1254
  %v1265 = vadd.f32 %v503, %v1256
  %v1266 = vadd.f32 %v392, %v1215
  %v1267 = vadd.f32 %v394, %v1217
  %v1268 = vadd.f32 %v505, %v1258
  %v1269 = vadd.f32 %v507, %v1260
  %v1270 = vxor.u32 %v1262, 2147483648
  %v1271 = vxor.u32 %v1266, 2147483648
  %v1272 = vmul.f32 %v1270, 1.442695
  %v1273 = vpow.pop %v1272
  %v1274 = vmul.f32 %v1271, 1.442695
  %v1275 = vpow.pop %v1274
  %v1276 = vadd.f32 %v1273, 1.0
  %v1277 = vadd.f32 %v1275, 1.0
  %v1278 = vrcp.pop %v1276
  %v1279 = vmul.f32 1.0, %v1278
  %v1280 = vrcp.pop %v1277
  %v1281 = vmul.f32 1.0, %v1280
  %v1282 = vxor.u32 %v1263, 2147483648
  %v1283 = vxor.u32 %v1267, 2147483648
  %v1284 = vmul.f32 %v1282, 1.442695
  %v1285 = vpow.pop %v1284
  %v1286 = vmul.f32 %v1283, 1.442695
  %v1287 = vpow.pop %v1286
  %v1288 = vadd.f32 %v1285, 1.0
  %v1289 = vadd.f32 %v1287, 1.0
  %v1290 = vrcp.pop %v1288
  %v1291 = vmul.f32 1.0, %v1290
  %v1292 = vrcp.pop %v1289
  %v1293 = vmul.f32 1.0, %v1292
  %v1294 = vtanh.pop %v1264
  %v1295 = vtanh.pop %v1268
  %v1296 = vxor.u32 %v1265, 2147483648
  %v1297 = vxor.u32 %v1269, 2147483648
  %v1298 = vmul.f32 %v1296, 1.442695
  %v1299 = vpow.pop %v1298
  %v1300 = vmul.f32 %v1297, 1.442695
  %v1301 = vpow.pop %v1300
  %v1302 = vadd.f32 %v1299, 1.0
  %v1303 = vadd.f32 %v1301, 1.0
  %v1304 = vrcp.pop %v1302
  %v1305 = vmul.f32 1.0, %v1304
  %v1306 = vrcp.pop %v1303
  %v1307 = vmul.f32 1.0, %v1306
  %v1308 = vmul.f32 %v1291, %v1168
  %v1309 = vmul.f32 %v1293, %v1169
  %v1310 = vmul.f32 %v1279, %v1294
  %v1311 = vmul.f32 %v1281, %v1295
  %v1312 = vadd.f32 %v1308, %v1310
  %v1313 = vadd.f32 %v1309, %v1311
  %v1314 = vtanh.pop %v1312
  %v1315 = vtanh.pop %v1313
  %v1316 = vmul.f32 %v1305, %v1314
  %v1317 = vmul.f32 %v1307, %v1315
  %v1318 = vpack.c.bf16 %v1317, %v1316
  %1319 = vst [vmem:[#allocation6 + $0x18] sm:$0xff] %v1318
  %1320 = vmatprep.subr.bf16.mxu0 %v681
  %1321 = vmatpush1.bf16.msra.mxu0 %v680
  %1322 = vmatprep.subr.bf16.mxu0 %v685
  %1323 = vmatpush1.bf16.msra.mxu0 %v684
  %1324 = vmatprep.subr.bf16.mxu0 %v689
  %1325 = vmatpush1.bf16.msra.mxu0 %v688
  %1326 = vmatprep.subr.bf16.mxu0 %v693
  %1327 = vmatpush1.bf16.msra.mxu0 %v692
  %1328 = vmatprep.subr.bf16.mxu0 %v697
  %1329 = vmatpush1.bf16.msra.mxu0 %v696
  %1330 = vmatprep.subr.bf16.mxu0 %v701
  %1331 = vmatpush1.bf16.msra.mxu0 %v700
  %1332 = vmatprep.subr.bf16.mxu0 %v705
  %1333 = vmatpush1.bf16.msra.mxu0 %v704
  %1334 = vmatprep.subr.bf16.mxu0 %v709
  %1335 = vmatpush1.bf16.msra.mxu0 %v708
  %1336 = vmatprep.subr.bf16.mxu0 0
  %1337 = vmatpush1.bf16.msra.mxu0 0
  %1338 = vmatprep.subr.bf16.mxu0 0
  %1339 = vmatpush1.bf16.msra.mxu0 0
  %1340 = vmatprep.subr.bf16.mxu0 0
  %1341 = vmatpush1.bf16.msra.mxu0 0
  %1342 = vmatprep.subr.bf16.mxu0 0
  %1343 = vmatpush1.bf16.msra.mxu0 0
  %1344 = vmatprep.subr.bf16.mxu0 0
  %1345 = vmatpush1.bf16.msra.mxu0 0
  %1346 = vmatprep.subr.bf16.mxu0 0
  %1347 = vmatpush1.bf16.msra.mxu0 0
  %1348 = vmatprep.subr.bf16.mxu0 0
  %1349 = vmatpush1.bf16.msra.mxu0 0
  %1350 = vmatprep.subr.bf16.mxu0 0
  %1351 = vmatpush1.bf16.msra.mxu0 0
  %1352 = vmatprep.mubr.bf16.mxu0 0
  %1353 = vmatmul.mubr.bf16.gmra.mrb[0].mxu0 %v1318
  %v1354 = vpop.f32.mrb[0].mxu0
  %v1355 = vadd.f32 0.0, %v1354
  %v1356 = vpop.f32.mrb[0].mxu0
  %v1357 = vadd.f32 0.0, %v1356
  %v1358 = vpop.f32.mrb[0].mxu0
  %v1359 = vadd.f32 0.0, %v1358
  %v1360 = vpop.f32.mrb[0].mxu0
  %v1361 = vadd.f32 0.0, %v1360
  %1362 = vdwg.mxu0
  %1363 = vmatprep.subr.bf16.mxu0 %v683
  %1364 = vmatpush1.bf16.msra.mxu0 %v682
  %1365 = vmatprep.subr.bf16.mxu0 %v687
  %1366 = vmatpush1.bf16.msra.mxu0 %v686
  %1367 = vmatprep.subr.bf16.mxu0 %v691
  %1368 = vmatpush1.bf16.msra.mxu0 %v690
  %1369 = vmatprep.subr.bf16.mxu0 %v695
  %1370 = vmatpush1.bf16.msra.mxu0 %v694
  %1371 = vmatprep.subr.bf16.mxu0 %v699
  %1372 = vmatpush1.bf16.msra.mxu0 %v698
  %1373 = vmatprep.subr.bf16.mxu0 %v703
  %1374 = vmatpush1.bf16.msra.mxu0 %v702
  %1375 = vmatprep.subr.bf16.mxu0 %v707
  %1376 = vmatpush1.bf16.msra.mxu0 %v706
  %1377 = vmatprep.subr.bf16.mxu0 %v711
  %1378 = vmatpush1.bf16.msra.mxu0 %v710
  %1379 = vmatprep.subr.bf16.mxu0 0
  %1380 = vmatpush1.bf16.msra.mxu0 0
  %1381 = vmatprep.subr.bf16.mxu0 0
  %1382 = vmatpush1.bf16.msra.mxu0 0
  %1383 = vmatprep.subr.bf16.mxu0 0
  %1384 = vmatpush1.bf16.msra.mxu0 0
  %1385 = vmatprep.subr.bf16.mxu0 0
  %1386 = vmatpush1.bf16.msra.mxu0 0
  %1387 = vmatprep.subr.bf16.mxu0 0
  %1388 = vmatpush1.bf16.msra.mxu0 0
  %1389 = vmatprep.subr.bf16.mxu0 0
  %1390 = vmatpush1.bf16.msra.mxu0 0
  %1391 = vmatprep.subr.bf16.mxu0 0
  %1392 = vmatpush1.bf16.msra.mxu0 0
  %1393 = vmatprep.subr.bf16.mxu0 0
  %1394 = vmatpush1.bf16.msra.mxu0 0
  %1395 = vmatprep.mubr.bf16.mxu0 0
  %1396 = vmatmul.mubr.bf16.gmra.mrb[0].mxu0 %v1318
  %v1397 = vpop.f32.mrb[0].mxu0
  %v1398 = vadd.f32 0.0, %v1397
  %v1399 = vpop.f32.mrb[0].mxu0
  %v1400 = vadd.f32 0.0, %v1399
  %v1401 = vpop.f32.mrb[0].mxu0
  %v1402 = vadd.f32 0.0, %v1401
  %v1403 = vpop.f32.mrb[0].mxu0
  %v1404 = vadd.f32 0.0, %v1403
  %1405 = vdwg.mxu0
  %v1406 = vadd.f32 %v398, %v1355
  %v1407 = vadd.f32 %v400, %v1357
  %v1408 = vadd.f32 %v511, %v1398
  %v1409 = vadd.f32 %v513, %v1400
  %v1410 = vadd.f32 %v402, %v1359
  %v1411 = vadd.f32 %v404, %v1361
  %v1412 = vadd.f32 %v515, %v1402
  %v1413 = vadd.f32 %v517, %v1404
  %v1414 = vxor.u32 %v1406, 2147483648
  %v1415 = vxor.u32 %v1410, 2147483648
  %v1416 = vmul.f32 %v1414, 1.442695
  %v1417 = vpow.pop %v1416
  %v1418 = vmul.f32 %v1415, 1.442695
  %v1419 = vpow.pop %v1418
  %v1420 = vadd.f32 %v1417, 1.0
  %v1421 = vadd.f32 %v1419, 1.0
  %v1422 = vrcp.pop %v1420
  %v1423 = vmul.f32 1.0, %v1422
  %v1424 = vrcp.pop %v1421
  %v1425 = vmul.f32 1.0, %v1424
  %v1426 = vxor.u32 %v1407, 2147483648
  %v1427 = vxor.u32 %v1411, 2147483648
  %v1428 = vmul.f32 %v1426, 1.442695
  %v1429 = vpow.pop %v1428
  %v1430 = vmul.f32 %v1427, 1.442695
  %v1431 = vpow.pop %v1430
  %v1432 = vadd.f32 %v1429, 1.0
  %v1433 = vadd.f32 %v1431, 1.0
  %v1434 = vrcp.pop %v1432
  %v1435 = vmul.f32 1.0, %v1434
  %v1436 = vrcp.pop %v1433
  %v1437 = vmul.f32 1.0, %v1436
  %v1438 = vtanh.pop %v1408
  %v1439 = vtanh.pop %v1412
  %v1440 = vxor.u32 %v1409, 2147483648
  %v1441 = vxor.u32 %v1413, 2147483648
  %v1442 = vmul.f32 %v1440, 1.442695
  %v1443 = vpow.pop %v1442
  %v1444 = vmul.f32 %v1441, 1.442695
  %v1445 = vpow.pop %v1444
  %v1446 = vadd.f32 %v1443, 1.0
  %v1447 = vadd.f32 %v1445, 1.0
  %v1448 = vrcp.pop %v1446
  %v1449 = vmul.f32 1.0, %v1448
  %v1450 = vrcp.pop %v1447
  %v1451 = vmul.f32 1.0, %v1450
  %v1452 = vmul.f32 %v1435, %v1312
  %v1453 = vmul.f32 %v1437, %v1313
  %v1454 = vmul.f32 %v1423, %v1438
  %v1455 = vmul.f32 %v1425, %v1439
  %v1456 = vadd.f32 %v1452, %v1454
  %v1457 = vadd.f32 %v1453, %v1455
  %v1458 = vtanh.pop %v1456
  %v1459 = vtanh.pop %v1457
  %v1460 = vmul.f32 %v1449, %v1458
  %v1461 = vmul.f32 %v1451, %v1459
  %v1462 = vpack.c.bf16 %v1461, %v1460
  %1463 = vst [vmem:[#allocation6 + $0x20] sm:$0xff] %v1462
  %1464 = vmatprep.subr.bf16.mxu0 %v681
  %1465 = vmatpush1.bf16.msra.mxu0 %v680
  %1466 = vmatprep.subr.bf16.mxu0 %v685
  %1467 = vmatpush1.bf16.msra.mxu0 %v684
  %1468 = vmatprep.subr.bf16.mxu0 %v689
  %1469 = vmatpush1.bf16.msra.mxu0 %v688
  %1470 = vmatprep.subr.bf16.mxu0 %v693
  %1471 = vmatpush1.bf16.msra.mxu0 %v692
  %1472 = vmatprep.subr.bf16.mxu0 %v697
  %1473 = vmatpush1.bf16.msra.mxu0 %v696
  %1474 = vmatprep.subr.bf16.mxu0 %v701
  %1475 = vmatpush1.bf16.msra.mxu0 %v700
  %1476 = vmatprep.subr.bf16.mxu0 %v705
  %1477 = vmatpush1.bf16.msra.mxu0 %v704
  %1478 = vmatprep.subr.bf16.mxu0 %v709
  %1479 = vmatpush1.bf16.msra.mxu0 %v708
  %1480 = vmatprep.subr.bf16.mxu0 0
  %1481 = vmatpush1.bf16.msra.mxu0 0
  %1482 = vmatprep.subr.bf16.mxu0 0
  %1483 = vmatpush1.bf16.msra.mxu0 0
  %1484 = vmatprep.subr.bf16.mxu0 0
  %1485 = vmatpush1.bf16.msra.mxu0 0
  %1486 = vmatprep.subr.bf16.mxu0 0
  %1487 = vmatpush1.bf16.msra.mxu0 0
  %1488 = vmatprep.subr.bf16.mxu0 0
  %1489 = vmatpush1.bf16.msra.mxu0 0
  %1490 = vmatprep.subr.bf16.mxu0 0
  %1491 = vmatpush1.bf16.msra.mxu0 0
  %1492 = vmatprep.subr.bf16.mxu0 0
  %1493 = vmatpush1.bf16.msra.mxu0 0
  %1494 = vmatprep.subr.bf16.mxu0 0
  %1495 = vmatpush1.bf16.msra.mxu0 0
  %1496 = vmatprep.mubr.bf16.mxu0 0
  %1497 = vmatmul.mubr.bf16.gmra.mrb[0].mxu0 %v1462
  %v1498 = vpop.f32.mrb[0].mxu0
  %v1499 = vadd.f32 0.0, %v1498
  %v1500 = vpop.f32.mrb[0].mxu0
  %v1501 = vadd.f32 0.0, %v1500
  %v1502 = vpop.f32.mrb[0].mxu0
  %v1503 = vadd.f32 0.0, %v1502
  %v1504 = vpop.f32.mrb[0].mxu0
  %v1505 = vadd.f32 0.0, %v1504
  %1506 = vdwg.mxu0
  %1507 = vmatprep.subr.bf16.mxu0 %v683
  %1508 = vmatpush1.bf16.msra.mxu0 %v682
  %1509 = vmatprep.subr.bf16.mxu0 %v687
  %1510 = vmatpush1.bf16.msra.mxu0 %v686
  %1511 = vmatprep.subr.bf16.mxu0 %v691
  %1512 = vmatpush1.bf16.msra.mxu0 %v690
  %1513 = vmatprep.subr.bf16.mxu0 %v695
  %1514 = vmatpush1.bf16.msra.mxu0 %v694
  %1515 = vmatprep.subr.bf16.mxu0 %v699
  %1516 = vmatpush1.bf16.msra.mxu0 %v698
  %1517 = vmatprep.subr.bf16.mxu0 %v703
  %1518 = vmatpush1.bf16.msra.mxu0 %v702
  %1519 = vmatprep.subr.bf16.mxu0 %v707
  %1520 = vmatpush1.bf16.msra.mxu0 %v706
  %1521 = vmatprep.subr.bf16.mxu0 %v711
  %1522 = vmatpush1.bf16.msra.mxu0 %v710
  %1523 = vmatprep.subr.bf16.mxu0 0
  %1524 = vmatpush1.bf16.msra.mxu0 0
  %1525 = vmatprep.subr.bf16.mxu0 0
  %1526 = vmatpush1.bf16.msra.mxu0 0
  %1527 = vmatprep.subr.bf16.mxu0 0
  %1528 = vmatpush1.bf16.msra.mxu0 0
  %1529 = vmatprep.subr.bf16.mxu0 0
  %1530 = vmatpush1.bf16.msra.mxu0 0
  %1531 = vmatprep.subr.bf16.mxu0 0
  %1532 = vmatpush1.bf16.msra.mxu0 0
  %1533 = vmatprep.subr.bf16.mxu0 0
  %1534 = vmatpush1.bf16.msra.mxu0 0
  %1535 = vmatprep.subr.bf16.mxu0 0
  %1536 = vmatpush1.bf16.msra.mxu0 0
  %1537 = vmatprep.subr.bf16.mxu0 0
  %1538 = vmatpush1.bf16.msra.mxu0 0
  %1539 = vmatprep.mubr.bf16.mxu0 0
  %1540 = vmatmul.mubr.bf16.gmra.mrb[0].mxu0 %v1462
  %v1541 = vpop.f32.mrb[0].mxu0
  %v1542 = vadd.f32 0.0, %v1541
  %v1543 = vpop.f32.mrb[0].mxu0
  %v1544 = vadd.f32 0.0, %v1543
  %v1545 = vpop.f32.mrb[0].mxu0
  %v1546 = vadd.f32 0.0, %v1545
  %v1547 = vpop.f32.mrb[0].mxu0
  %v1548 = vadd.f32 0.0, %v1547
  %1549 = vdwg.mxu0
  %v1550 = vadd.f32 %v408, %v1499
  %v1551 = vadd.f32 %v410, %v1501
  %v1552 = vadd.f32 %v521, %v1542
  %v1553 = vadd.f32 %v523, %v1544
  %v1554 = vadd.f32 %v412, %v1503
  %v1555 = vadd.f32 %v414, %v1505
  %v1556 = vadd.f32 %v525, %v1546
  %v1557 = vadd.f32 %v527, %v1548
  %v1558 = vxor.u32 %v1550, 2147483648
  %v1559 = vxor.u32 %v1554, 2147483648
  %v1560 = vmul.f32 %v1558, 1.442695
  %v1561 = vpow.pop %v1560
  %v1562 = vmul.f32 %v1559, 1.442695
  %v1563 = vpow.pop %v1562
  %v1564 = vadd.f32 %v1561, 1.0
  %v1565 = vadd.f32 %v1563, 1.0
  %v1566 = vrcp.pop %v1564
  %v1567 = vmul.f32 1.0, %v1566
  %v1568 = vrcp.pop %v1565
  %v1569 = vmul.f32 1.0, %v1568
  %v1570 = vxor.u32 %v1551, 2147483648
  %v1571 = vxor.u32 %v1555, 2147483648
  %v1572 = vmul.f32 %v1570, 1.442695
  %v1573 = vpow.pop %v1572
  %v1574 = vmul.f32 %v1571, 1.442695
  %v1575 = vpow.pop %v1574
  %v1576 = vadd.f32 %v1573, 1.0
  %v1577 = vadd.f32 %v1575, 1.0
  %v1578 = vrcp.pop %v1576
  %v1579 = vmul.f32 1.0, %v1578
  %v1580 = vrcp.pop %v1577
  %v1581 = vmul.f32 1.0, %v1580
  %v1582 = vtanh.pop %v1552
  %v1583 = vtanh.pop %v1556
  %v1584 = vxor.u32 %v1553, 2147483648
  %v1585 = vxor.u32 %v1557, 2147483648
  %v1586 = vmul.f32 %v1584, 1.442695
  %v1587 = vpow.pop %v1586
  %v1588 = vmul.f32 %v1585, 1.442695
  %v1589 = vpow.pop %v1588
  %v1590 = vadd.f32 %v1587, 1.0
  %v1591 = vadd.f32 %v1589, 1.0
  %v1592 = vrcp.pop %v1590
  %v1593 = vmul.f32 1.0, %v1592
  %v1594 = vrcp.pop %v1591
  %v1595 = vmul.f32 1.0, %v1594
  %v1596 = vmul.f32 %v1579, %v1456
  %v1597 = vmul.f32 %v1581, %v1457
  %v1598 = vmul.f32 %v1567, %v1582
  %v1599 = vmul.f32 %v1569, %v1583
  %v1600 = vadd.f32 %v1596, %v1598
  %v1601 = vadd.f32 %v1597, %v1599
  %v1602 = vtanh.pop %v1600
  %v1603 = vtanh.pop %v1601
  %v1604 = vmul.f32 %v1593, %v1602
  %v1605 = vmul.f32 %v1595, %v1603
  %v1606 = vpack.c.bf16 %v1605, %v1604
  %1607 = vst [vmem:[#allocation6 + $0x28] sm:$0xff] %v1606
  %1608 = vmatprep.subr.bf16.mxu0 %v681
  %1609 = vmatpush1.bf16.msra.mxu0 %v680
  %1610 = vmatprep.subr.bf16.mxu0 %v685
  %1611 = vmatpush1.bf16.msra.mxu0 %v684
  %1612 = vmatprep.subr.bf16.mxu0 %v689
  %1613 = vmatpush1.bf16.msra.mxu0 %v688
  %1614 = vmatprep.subr.bf16.mxu0 %v693
  %1615 = vmatpush1.bf16.msra.mxu0 %v692
  %1616 = vmatprep.subr.bf16.mxu0 %v697
  %1617 = vmatpush1.bf16.msra.mxu0 %v696
  %1618 = vmatprep.subr.bf16.mxu0 %v701
  %1619 = vmatpush1.bf16.msra.mxu0 %v700
  %1620 = vmatprep.subr.bf16.mxu0 %v705
  %1621 = vmatpush1.bf16.msra.mxu0 %v704
  %1622 = vmatprep.subr.bf16.mxu0 %v709
  %1623 = vmatpush1.bf16.msra.mxu0 %v708
  %1624 = vmatprep.subr.bf16.mxu0 0
  %1625 = vmatpush1.bf16.msra.mxu0 0
  %1626 = vmatprep.subr.bf16.mxu0 0
  %1627 = vmatpush1.bf16.msra.mxu0 0
  %1628 = vmatprep.subr.bf16.mxu0 0
  %1629 = vmatpush1.bf16.msra.mxu0 0
  %1630 = vmatprep.subr.bf16.mxu0 0
  %1631 = vmatpush1.bf16.msra.mxu0 0
  %1632 = vmatprep.subr.bf16.mxu0 0
  %1633 = vmatpush1.bf16.msra.mxu0 0
  %1634 = vmatprep.subr.bf16.mxu0 0
  %1635 = vmatpush1.bf16.msra.mxu0 0
  %1636 = vmatprep.subr.bf16.mxu0 0
  %1637 = vmatpush1.bf16.msra.mxu0 0
  %1638 = vmatprep.subr.bf16.mxu0 0
  %1639 = vmatpush1.bf16.msra.mxu0 0
  %1640 = vmatprep.mubr.bf16.mxu0 0
  %1641 = vmatmul.mubr.bf16.gmra.mrb[0].mxu0 %v1606
  %v1642 = vpop.f32.mrb[0].mxu0
  %v1643 = vadd.f32 0.0, %v1642
  %v1644 = vpop.f32.mrb[0].mxu0
  %v1645 = vadd.f32 0.0, %v1644
  %v1646 = vpop.f32.mrb[0].mxu0
  %v1647 = vadd.f32 0.0, %v1646
  %v1648 = vpop.f32.mrb[0].mxu0
  %v1649 = vadd.f32 0.0, %v1648
  %1650 = vdwg.mxu0
  %1651 = vmatprep.subr.bf16.mxu0 %v683
  %1652 = vmatpush1.bf16.msra.mxu0 %v682
  %1653 = vmatprep.subr.bf16.mxu0 %v687
  %1654 = vmatpush1.bf16.msra.mxu0 %v686
  %1655 = vmatprep.subr.bf16.mxu0 %v691
  %1656 = vmatpush1.bf16.msra.mxu0 %v690
  %1657 = vmatprep.subr.bf16.mxu0 %v695
  %1658 = vmatpush1.bf16.msra.mxu0 %v694
  %1659 = vmatprep.subr.bf16.mxu0 %v699
  %1660 = vmatpush1.bf16.msra.mxu0 %v698
  %1661 = vmatprep.subr.bf16.mxu0 %v703
  %1662 = vmatpush1.bf16.msra.mxu0 %v702
  %1663 = vmatprep.subr.bf16.mxu0 %v707
  %1664 = vmatpush1.bf16.msra.mxu0 %v706
  %1665 = vmatprep.subr.bf16.mxu0 %v711
  %1666 = vmatpush1.bf16.msra.mxu0 %v710
  %1667 = vmatprep.subr.bf16.mxu0 0
  %1668 = vmatpush1.bf16.msra.mxu0 0
  %1669 = vmatprep.subr.bf16.mxu0 0
  %1670 = vmatpush1.bf16.msra.mxu0 0
  %1671 = vmatprep.subr.bf16.mxu0 0
  %1672 = vmatpush1.bf16.msra.mxu0 0
  %1673 = vmatprep.subr.bf16.mxu0 0
  %1674 = vmatpush1.bf16.msra.mxu0 0
  %1675 = vmatprep.subr.bf16.mxu0 0
  %1676 = vmatpush1.bf16.msra.mxu0 0
  %1677 = vmatprep.subr.bf16.mxu0 0
  %1678 = vmatpush1.bf16.msra.mxu0 0
  %1679 = vmatprep.subr.bf16.mxu0 0
  %1680 = vmatpush1.bf16.msra.mxu0 0
  %1681 = vmatprep.subr.bf16.mxu0 0
  %1682 = vmatpush1.bf16.msra.mxu0 0
  %1683 = vmatprep.mubr.bf16.mxu0 0
  %1684 = vmatmul.mubr.bf16.gmra.mrb[0].mxu0 %v1606
  %v1685 = vpop.f32.mrb[0].mxu0
  %v1686 = vadd.f32 0.0, %v1685
  %v1687 = vpop.f32.mrb[0].mxu0
  %v1688 = vadd.f32 0.0, %v1687
  %v1689 = vpop.f32.mrb[0].mxu0
  %v1690 = vadd.f32 0.0, %v1689
  %v1691 = vpop.f32.mrb[0].mxu0
  %v1692 = vadd.f32 0.0, %v1691
  %1693 = vdwg.mxu0
  %v1694 = vadd.f32 %v418, %v1643
  %v1695 = vadd.f32 %v420, %v1645
  %v1696 = vadd.f32 %v531, %v1686
  %v1697 = vadd.f32 %v533, %v1688
  %v1698 = vadd.f32 %v422, %v1647
  %v1699 = vadd.f32 %v424, %v1649
  %v1700 = vadd.f32 %v535, %v1690
  %v1701 = vadd.f32 %v537, %v1692
  %v1702 = vxor.u32 %v1694, 2147483648
  %v1703 = vxor.u32 %v1698, 2147483648
  %v1704 = vmul.f32 %v1702, 1.442695
  %v1705 = vpow.pop %v1704
  %v1706 = vmul.f32 %v1703, 1.442695
  %v1707 = vpow.pop %v1706
  %v1708 = vadd.f32 %v1705, 1.0
  %v1709 = vadd.f32 %v1707, 1.0
  %v1710 = vrcp.pop %v1708
  %v1711 = vmul.f32 1.0, %v1710
  %v1712 = vrcp.pop %v1709
  %v1713 = vmul.f32 1.0, %v1712
  %v1714 = vxor.u32 %v1695, 2147483648
  %v1715 = vxor.u32 %v1699, 2147483648
  %v1716 = vmul.f32 %v1714, 1.442695
  %v1717 = vpow.pop %v1716
  %v1718 = vmul.f32 %v1715, 1.442695
  %v1719 = vpow.pop %v1718
  %v1720 = vadd.f32 %v1717, 1.0
  %v1721 = vadd.f32 %v1719, 1.0
  %v1722 = vrcp.pop %v1720
  %v1723 = vmul.f32 1.0, %v1722
  %v1724 = vrcp.pop %v1721
  %v1725 = vmul.f32 1.0, %v1724
  %v1726 = vtanh.pop %v1696
  %v1727 = vtanh.pop %v1700
  %v1728 = vxor.u32 %v1697, 2147483648
  %v1729 = vxor.u32 %v1701, 2147483648
  %v1730 = vmul.f32 %v1728, 1.442695
  %v1731 = vpow.pop %v1730
  %v1732 = vmul.f32 %v1729, 1.442695
  %v1733 = vpow.pop %v1732
  %v1734 = vadd.f32 %v1731, 1.0
  %v1735 = vadd.f32 %v1733, 1.0
  %v1736 = vrcp.pop %v1734
  %v1737 = vmul.f32 1.0, %v1736
  %v1738 = vrcp.pop %v1735
  %v1739 = vmul.f32 1.0, %v1738
  %v1740 = vmul.f32 %v1723, %v1600
  %v1741 = vmul.f32 %v1725, %v1601
  %v1742 = vmul.f32 %v1711, %v1726
  %v1743 = vmul.f32 %v1713, %v1727
  %v1744 = vadd.f32 %v1740, %v1742
  %v1745 = vadd.f32 %v1741, %v1743
  %v1746 = vtanh.pop %v1744
  %v1747 = vtanh.pop %v1745
  %v1748 = vmul.f32 %v1737, %v1746
  %v1749 = vmul.f32 %v1739, %v1747
  %v1750 = vpack.c.bf16 %v1749, %v1748
  %1751 = vst [vmem:[#allocation6 + $0x30] sm:$0xff] %v1750
  %1752 = vmatprep.subr.bf16.mxu0 %v681
  %1753 = vmatpush1.bf16.msra.mxu0 %v680
  %1754 = vmatprep.subr.bf16.mxu0 %v685
  %1755 = vmatpush1.bf16.msra.mxu0 %v684
  %1756 = vmatprep.subr.bf16.mxu0 %v689
  %1757 = vmatpush1.bf16.msra.mxu0 %v688
  %1758 = vmatprep.subr.bf16.mxu0 %v693
  %1759 = vmatpush1.bf16.msra.mxu0 %v692
  %1760 = vmatprep.subr.bf16.mxu0 %v697
  %1761 = vmatpush1.bf16.msra.mxu0 %v696
  %1762 = vmatprep.subr.bf16.mxu0 %v701
  %1763 = vmatpush1.bf16.msra.mxu0 %v700
  %1764 = vmatprep.subr.bf16.mxu0 %v705
  %1765 = vmatpush1.bf16.msra.mxu0 %v704
  %1766 = vmatprep.subr.bf16.mxu0 %v709
  %1767 = vmatpush1.bf16.msra.mxu0 %v708
  %1768 = vmatprep.subr.bf16.mxu0 0
  %1769 = vmatpush1.bf16.msra.mxu0 0
  %1770 = vmatprep.subr.bf16.mxu0 0
  %1771 = vmatpush1.bf16.msra.mxu0 0
  %1772 = vmatprep.subr.bf16.mxu0 0
  %1773 = vmatpush1.bf16.msra.mxu0 0
  %1774 = vmatprep.subr.bf16.mxu0 0
  %1775 = vmatpush1.bf16.msra.mxu0 0
  %1776 = vmatprep.subr.bf16.mxu0 0
  %1777 = vmatpush1.bf16.msra.mxu0 0
  %1778 = vmatprep.subr.bf16.mxu0 0
  %1779 = vmatpush1.bf16.msra.mxu0 0
  %1780 = vmatprep.subr.bf16.mxu0 0
  %1781 = vmatpush1.bf16.msra.mxu0 0
  %1782 = vmatprep.subr.bf16.mxu0 0
  %1783 = vmatpush1.bf16.msra.mxu0 0
  %1784 = vmatprep.mubr.bf16.mxu0 0
  %1785 = vmatmul.mubr.bf16.gmra.mrb[0].mxu0 %v1750
  %v1786 = vpop.f32.mrb[0].mxu0
  %v1787 = vadd.f32 0.0, %v1786
  %v1788 = vpop.f32.mrb[0].mxu0
  %v1789 = vadd.f32 0.0, %v1788
  %v1790 = vpop.f32.mrb[0].mxu0
  %v1791 = vadd.f32 0.0, %v1790
  %v1792 = vpop.f32.mrb[0].mxu0
  %v1793 = vadd.f32 0.0, %v1792
  %1794 = vdwg.mxu0
  %1795 = vmatprep.subr.bf16.mxu0 %v683
  %1796 = vmatpush1.bf16.msra.mxu0 %v682
  %1797 = vmatprep.subr.bf16.mxu0 %v687
  %1798 = vmatpush1.bf16.msra.mxu0 %v686
  %1799 = vmatprep.subr.bf16.mxu0 %v691
  %1800 = vmatpush1.bf16.msra.mxu0 %v690
  %1801 = vmatprep.subr.bf16.mxu0 %v695
  %1802 = vmatpush1.bf16.msra.mxu0 %v694
  %1803 = vmatprep.subr.bf16.mxu0 %v699
  %1804 = vmatpush1.bf16.msra.mxu0 %v698
  %1805 = vmatprep.subr.bf16.mxu0 %v703
  %1806 = vmatpush1.bf16.msra.mxu0 %v702
  %1807 = vmatprep.subr.bf16.mxu0 %v707
  %1808 = vmatpush1.bf16.msra.mxu0 %v706
  %1809 = vmatprep.subr.bf16.mxu0 %v711
  %1810 = vmatpush1.bf16.msra.mxu0 %v710
  %1811 = vmatprep.subr.bf16.mxu0 0
  %1812 = vmatpush1.bf16.msra.mxu0 0
  %1813 = vmatprep.subr.bf16.mxu0 0
  %1814 = vmatpush1.bf16.msra.mxu0 0
  %1815 = vmatprep.subr.bf16.mxu0 0
  %1816 = vmatpush1.bf16.msra.mxu0 0
  %1817 = vmatprep.subr.bf16.mxu0 0
  %1818 = vmatpush1.bf16.msra.mxu0 0
  %1819 = vmatprep.subr.bf16.mxu0 0
  %1820 = vmatpush1.bf16.msra.mxu0 0
  %1821 = vmatprep.subr.bf16.mxu0 0
  %1822 = vmatpush1.bf16.msra.mxu0 0
  %1823 = vmatprep.subr.bf16.mxu0 0
  %1824 = vmatpush1.bf16.msra.mxu0 0
  %1825 = vmatprep.subr.bf16.mxu0 0
  %1826 = vmatpush1.bf16.msra.mxu0 0
  %1827 = vmatprep.mubr.bf16.mxu0 0
  %1828 = vmatmul.mubr.bf16.gmra.mrb[0].mxu0 %v1750
  %v1829 = vpop.f32.mrb[0].mxu0
  %v1830 = vadd.f32 0.0, %v1829
  %v1831 = vpop.f32.mrb[0].mxu0
  %v1832 = vadd.f32 0.0, %v1831
  %v1833 = vpop.f32.mrb[0].mxu0
  %v1834 = vadd.f32 0.0, %v1833
  %v1835 = vpop.f32.mrb[0].mxu0
  %v1836 = vadd.f32 0.0, %v1835
  %1837 = vdwg.mxu0
  %v1838 = vadd.f32 %v428, %v1787
  %v1839 = vadd.f32 %v430, %v1789
  %v1840 = vadd.f32 %v541, %v1830
  %v1841 = vadd.f32 %v543, %v1832
  %v1842 = vadd.f32 %v432, %v1791
  %v1843 = vadd.f32 %v434, %v1793
  %v1844 = vadd.f32 %v545, %v1834
  %v1845 = vadd.f32 %v547, %v1836
  %v1846 = vxor.u32 %v1838, 2147483648
  %v1847 = vxor.u32 %v1842, 2147483648
  %v1848 = vmul.f32 %v1846, 1.442695
  %v1849 = vpow.pop %v1848
  %v1850 = vmul.f32 %v1847, 1.442695
  %v1851 = vpow.pop %v1850
  %v1852 = vadd.f32 %v1849, 1.0
  %v1853 = vadd.f32 %v1851, 1.0
  %v1854 = vrcp.pop %v1852
  %v1855 = vmul.f32 1.0, %v1854
  %v1856 = vrcp.pop %v1853
  %v1857 = vmul.f32 1.0, %v1856
  %v1858 = vxor.u32 %v1839, 2147483648
  %v1859 = vxor.u32 %v1843, 2147483648
  %v1860 = vmul.f32 %v1858, 1.442695
  %v1861 = vpow.pop %v1860
  %v1862 = vmul.f32 %v1859, 1.442695
  %v1863 = vpow.pop %v1862
  %v1864 = vadd.f32 %v1861, 1.0
  %v1865 = vadd.f32 %v1863, 1.0
  %v1866 = vrcp.pop %v1864
  %v1867 = vmul.f32 1.0, %v1866
  %v1868 = vrcp.pop %v1865
  %v1869 = vmul.f32 1.0, %v1868
  %v1870 = vtanh.pop %v1840
  %v1871 = vtanh.pop %v1844
  %v1872 = vxor.u32 %v1841, 2147483648
  %v1873 = vxor.u32 %v1845, 2147483648
  %v1874 = vmul.f32 %v1872, 1.442695
  %v1875 = vpow.pop %v1874
  %v1876 = vmul.f32 %v1873, 1.442695
  %v1877 = vpow.pop %v1876
  %v1878 = vadd.f32 %v1875, 1.0
  %v1879 = vadd.f32 %v1877, 1.0
  %v1880 = vrcp.pop %v1878
  %v1881 = vmul.f32 1.0, %v1880
  %v1882 = vrcp.pop %v1879
  %v1883 = vmul.f32 1.0, %v1882
  %v1884 = vmul.f32 %v1867, %v1744
  %v1885 = vmul.f32 %v1869, %v1745
  %v1886 = vmul.f32 %v1855, %v1870
  %v1887 = vmul.f32 %v1857, %v1871
  %v1888 = vadd.f32 %v1884, %v1886
  %v1889 = vadd.f32 %v1885, %v1887
  %v1890 = vtanh.pop %v1888
  %v1891 = vtanh.pop %v1889
  %v1892 = vmul.f32 %v1881, %v1890
  %v1893 = vmul.f32 %v1883, %v1891
  %v1894 = vpack.c.bf16 %v1893, %v1892
  %1895 = vst [vmem:[#allocation6 + $0x38] sm:$0xff] %v1894
  %1896 = vst [vmem:[#allocation2] sm:$0xff] %v1894
  %1897 = vst [vmem:[#allocation4] sm:$0xff] %v1888
  %1898 = vst [vmem:[#allocation4 + $0x8] sm:$0xff] %v1889
  %v1899 = vld [vmem:[#allocation6] sm:$0xff]
  %v1900 = vld [vmem:[#allocation6 + $0x8] sm:$0xff]
  %v1901 = vld [vmem:[#allocation6 + $0x10] sm:$0xff]
  %v1902 = vld [vmem:[#allocation6 + $0x18] sm:$0xff]
  %v1903 = vld [vmem:[#allocation6 + $0x20] sm:$0xff]
  %v1904 = vld [vmem:[#allocation6 + $0x28] sm:$0xff]
  %v1905 = vld [vmem:[#allocation6 + $0x30] sm:$0xff]
  %v1906 = vld [vmem:[#allocation6 + $0x38] sm:$0xff]
  %v1907 = vld [vmem:[%s4] sm:$0xff]
  %v1908 = vld [vmem:[%s4 + $0x8] sm:$0xff]
  %v1909 = vld [vmem:[%s4 + $0x10] sm:$0xff]
  %v1910 = vld [vmem:[%s4 + $0x18] sm:$0xff]
  %v1911 = vld [vmem:[%s4 + $0x20] sm:$0xff]
  %v1912 = vld [vmem:[%s4 + $0x28] sm:$0xff]
  %v1913 = vld [vmem:[%s4 + $0x30] sm:$0xff]
  %v1914 = vld [vmem:[%s4 + $0x38] sm:$0xff]
  %v1915 = vld [vmem:[%s4 + $0x40] sm:$0xff]
  %v1916 = vld [vmem:[%s4 + $0x48] sm:$0xff]
  %v1917 = vld [vmem:[%s4 + $0x50] sm:$0xff]
  %v1918 = vld [vmem:[%s4 + $0x58] sm:$0xff]
  %v1919 = vld [vmem:[%s4 + $0x60] sm:$0xff]
  %v1920 = vld [vmem:[%s4 + $0x68] sm:$0xff]
  %v1921 = vld [vmem:[%s4 + $0x70] sm:$0xff]
  %v1922 = vld [vmem:[%s4 + $0x78] sm:$0xff]
  %v1923 = vld [vmem:[%s4 + $0x80] sm:$0xff]
  %v1924 = vld [vmem:[%s4 + $0x88] sm:$0xff]
  %v1925 = vld [vmem:[%s4 + $0x90] sm:$0xff]
  %v1926 = vld [vmem:[%s4 + $0x98] sm:$0xff]
  %v1927 = vld [vmem:[%s4 + $0xa0] sm:$0xff]
  %v1928 = vld [vmem:[%s4 + $0xa8] sm:$0xff]
  %v1929 = vld [vmem:[%s4 + $0xb0] sm:$0xff]
  %v1930 = vld [vmem:[%s4 + $0xb8] sm:$0xff]
  %v1931 = vld [vmem:[%s4 + $0xc0] sm:$0xff]
  %v1932 = vld [vmem:[%s4 + $0xc8] sm:$0xff]
  %v1933 = vld [vmem:[%s4 + $0xd0] sm:$0xff]
  %v1934 = vld [vmem:[%s4 + $0xd8] sm:$0xff]
  %v1935 = vld [vmem:[%s4 + $0xe0] sm:$0xff]
  %v1936 = vld [vmem:[%s4 + $0xe8] sm:$0xff]
  %v1937 = vld [vmem:[%s4 + $0xf0] sm:$0xff]
  %v1938 = vld [vmem:[%s4 + $0xf8] sm:$0xff]
  %v1939 = vld [vmem:[%s6] sm:$0xf]
  %v1941 = vlaneseq
  %v1942 = vshrl.u32 %v1941, 7
  %v1943 = vsub.s32 0, %v1942
  %v1944 = vrot.slane %v1939, %v1943
  %v1945 = vlaneseq
  %v1946 = vshrl.u32 %v1945, 7
  %v1947 = vsub.s32 1, %v1946
  %v1948 = vrot.slane %v1939, %v1947
  %v1949 = vlaneseq
  %v1950 = vshrl.u32 %v1949, 7
  %v1951 = vsub.s32 2, %v1950
  %v1952 = vrot.slane %v1939, %v1951
  %v1953 = vlaneseq
  %v1954 = vshrl.u32 %v1953, 7
  %v1955 = vsub.s32 3, %v1954
  %v1956 = vrot.slane %v1939, %v1955
  %v1993 = vunpack.c.l.b16 %v1907
  %v1994 = vunpack.c.h.b16 %v1907
  %v1995 = vunpack.c.l.b16 %v1908
  %v1996 = vunpack.c.h.b16 %v1908
  %v1997 = vunpack.c.l.b16 %v1909
  %v1998 = vunpack.c.h.b16 %v1909
  %v1999 = vunpack.c.l.b16 %v1910
  %v2000 = vunpack.c.h.b16 %v1910
  %v2001 = vunpack.c.l.b16 %v1911
  %v2002 = vunpack.c.h.b16 %v1911
  %v2003 = vunpack.c.l.b16 %v1912
  %v2004 = vunpack.c.h.b16 %v1912
  %v2005 = vunpack.c.l.b16 %v1913
  %v2006 = vunpack.c.h.b16 %v1913
  %v2007 = vunpack.c.l.b16 %v1914
  %v2008 = vunpack.c.h.b16 %v1914
  %v2009 = vunpack.c.l.b16 %v1915
  %v2010 = vunpack.c.h.b16 %v1915
  %v2011 = vunpack.c.l.b16 %v1916
  %v2012 = vunpack.c.h.b16 %v1916
  %v2013 = vunpack.c.l.b16 %v1917
  %v2014 = vunpack.c.h.b16 %v1917
  %v2015 = vunpack.c.l.b16 %v1918
  %v2016 = vunpack.c.h.b16 %v1918
  %v2017 = vunpack.c.l.b16 %v1919
  %v2018 = vunpack.c.h.b16 %v1919
  %v2019 = vunpack.c.l.b16 %v1920
  %v2020 = vunpack.c.h.b16 %v1920
  %v2021 = vunpack.c.l.b16 %v1921
  %v2022 = vunpack.c.h.b16 %v1921
  %v2023 = vunpack.c.l.b16 %v1922
  %v2024 = vunpack.c.h.b16 %v1922
  %v2025 = vunpack.c.l.b16 %v1923
  %v2026 = vunpack.c.h.b16 %v1923
  %v2027 = vunpack.c.l.b16 %v1924
  %v2028 = vunpack.c.h.b16 %v1924
  %v2029 = vunpack.c.l.b16 %v1925
  %v2030 = vunpack.c.h.b16 %v1925
  %v2031 = vunpack.c.l.b16 %v1926
  %v2032 = vunpack.c.h.b16 %v1926
  %v2033 = vunpack.c.l.b16 %v1927
  %v2034 = vunpack.c.h.b16 %v1927
  %v2035 = vunpack.c.l.b16 %v1928
  %v2036 = vunpack.c.h.b16 %v1928
  %v2037 = vunpack.c.l.b16 %v1929
  %v2038 = vunpack.c.h.b16 %v1929
  %v2039 = vunpack.c.l.b16 %v1930
  %v2040 = vunpack.c.h.b16 %v1930
  %v2041 = vunpack.c.l.b16 %v1931
  %v2042 = vunpack.c.h.b16 %v1931
  %v2043 = vunpack.c.l.b16 %v1932
  %v2044 = vunpack.c.h.b16 %v1932
  %v2045 = vunpack.c.l.b16 %v1933
  %v2046 = vunpack.c.h.b16 %v1933
  %v2047 = vunpack.c.l.b16 %v1934
  %v2048 = vunpack.c.h.b16 %v1934
  %v2049 = vunpack.c.l.b16 %v1935
  %v2050 = vunpack.c.h.b16 %v1935
  %v2051 = vunpack.c.l.b16 %v1936
  %v2052 = vunpack.c.h.b16 %v1936
  %v2053 = vunpack.c.l.b16 %v1937
  %v2054 = vunpack.c.h.b16 %v1937
  %v2055 = vunpack.c.l.b16 %v1938
  %v2056 = vunpack.c.h.b16 %v1938
  %v2057 = vpack.c.b16 %v1997, %v1993
  %v2058 = vpack.c.b16 %v1998, %v1994
  %v2059 = vpack.c.b16 %v1999, %v1995
  %v2060 = vpack.c.b16 %v2000, %v1996
  %v2061 = vpack.c.b16 %v2005, %v2001
  %v2062 = vpack.c.b16 %v2006, %v2002
  %v2063 = vpack.c.b16 %v2007, %v2003
  %v2064 = vpack.c.b16 %v2008, %v2004
  %v2065 = vpack.c.b16 %v2013, %v2009
  %v2066 = vpack.c.b16 %v2014, %v2010
  %v2067 = vpack.c.b16 %v2015, %v2011
  %v2068 = vpack.c.b16 %v2016, %v2012
  %v2069 = vpack.c.b16 %v2021, %v2017
  %v2070 = vpack.c.b16 %v2022, %v2018
  %v2071 = vpack.c.b16 %v2023, %v2019
  %v2072 = vpack.c.b16 %v2024, %v2020
  %v2073 = vpack.c.b16 %v2029, %v2025
  %v2074 = vpack.c.b16 %v2030, %v2026
  %v2075 = vpack.c.b16 %v2031, %v2027
  %v2076 = vpack.c.b16 %v2032, %v2028
  %v2077 = vpack.c.b16 %v2037, %v2033
  %v2078 = vpack.c.b16 %v2038, %v2034
  %v2079 = vpack.c.b16 %v2039, %v2035
  %v2080 = vpack.c.b16 %v2040, %v2036
  %v2081 = vpack.c.b16 %v2045, %v2041
  %v2082 = vpack.c.b16 %v2046, %v2042
  %v2083 = vpack.c.b16 %v2047, %v2043
  %v2084 = vpack.c.b16 %v2048, %v2044
  %v2085 = vpack.c.b16 %v2053, %v2049
  %v2086 = vpack.c.b16 %v2054, %v2050
  %v2087 = vpack.c.b16 %v2055, %v2051
  %v2088 = vpack.c.b16 %v2056, %v2052
  %2121 = vmatprep.subr.bf16.mxu0 %v2058
  %2122 = vmatpush1.bf16.msra.mxu0 %v2057
  %2123 = vmatprep.subr.bf16.mxu0 %v2062
  %2124 = vmatpush1.bf16.msra.mxu0 %v2061
  %2125 = vmatprep.subr.bf16.mxu0 %v2066
  %2126 = vmatpush1.bf16.msra.mxu0 %v2065
  %2127 = vmatprep.subr.bf16.mxu0 %v2070
  %2128 = vmatpush1.bf16.msra.mxu0 %v2069
  %2129 = vmatprep.subr.bf16.mxu0 %v2074
  %2130 = vmatpush1.bf16.msra.mxu0 %v2073
  %2131 = vmatprep.subr.bf16.mxu0 %v2078
  %2132 = vmatpush1.bf16.msra.mxu0 %v2077
  %2133 = vmatprep.subr.bf16.mxu0 %v2082
  %2134 = vmatpush1.bf16.msra.mxu0 %v2081
  %2135 = vmatprep.subr.bf16.mxu0 %v2086
  %2136 = vmatpush1.bf16.msra.mxu0 %v2085
  %2137 = vmatprep.subr.bf16.mxu0 0
  %2138 = vmatpush1.bf16.msra.mxu0 0
  %2139 = vmatprep.subr.bf16.mxu0 0
  %2140 = vmatpush1.bf16.msra.mxu0 0
  %2141 = vmatprep.subr.bf16.mxu0 0
  %2142 = vmatpush1.bf16.msra.mxu0 0
  %2143 = vmatprep.subr.bf16.mxu0 0
  %2144 = vmatpush1.bf16.msra.mxu0 0
  %2145 = vmatprep.subr.bf16.mxu0 0
  %2146 = vmatpush1.bf16.msra.mxu0 0
  %2147 = vmatprep.subr.bf16.mxu0 0
  %2148 = vmatpush1.bf16.msra.mxu0 0
  %2149 = vmatprep.subr.bf16.mxu0 0
  %2150 = vmatpush1.bf16.msra.mxu0 0
  %2151 = vmatprep.subr.bf16.mxu0 0
  %2152 = vmatpush1.bf16.msra.mxu0 0
  %2153 = vmatprep.mubr.bf16.mxu0 0
  %2154 = vmatmul.mubr.bf16.gmra.mrb[0].mxu0 %v1899
  %v2155 = vpop.f32.mrb[0].mxu0
  %v2156 = vadd.f32 %v1944, %v2155
  %v2157 = vpop.f32.mrb[0].mxu0
  %v2158 = vadd.f32 %v1948, %v2157
  %v2159 = vpop.f32.mrb[0].mxu0
  %v2160 = vadd.f32 %v1944, %v2159
  %v2161 = vpop.f32.mrb[0].mxu0
  %v2162 = vadd.f32 %v1948, %v2161
  %2163 = vmatprep.mubr.bf16.mxu0 0
  %2164 = vmatmul.mubr.bf16.gmra.mrb[0].mxu0 %v1900
  %v2165 = vpop.f32.mrb[0].mxu0
  %v2166 = vadd.f32 %v1944, %v2165
  %v2167 = vpop.f32.mrb[0].mxu0
  %v2168 = vadd.f32 %v1948, %v2167
  %v2169 = vpop.f32.mrb[0].mxu0
  %v2170 = vadd.f32 %v1944, %v2169
  %v2171 = vpop.f32.mrb[0].mxu0
  %v2172 = vadd.f32 %v1948, %v2171
  %2173 = vmatprep.mubr.bf16.mxu0 0
  %2174 = vmatmul.mubr.bf16.gmra.mrb[0].mxu0 %v1901
  %v2175 = vpop.f32.mrb[0].mxu0
  %v2176 = vadd.f32 %v1944, %v2175
  %v2177 = vpop.f32.mrb[0].mxu0
  %v2178 = vadd.f32 %v1948, %v2177
  %v2179 = vpop.f32.mrb[0].mxu0
  %v2180 = vadd.f32 %v1944, %v2179
  %v2181 = vpop.f32.mrb[0].mxu0
  %v2182 = vadd.f32 %v1948, %v2181
  %2183 = vmatprep.mubr.bf16.mxu0 0
  %2184 = vmatmul.mubr.bf16.gmra.mrb[0].mxu0 %v1902
  %v2185 = vpop.f32.mrb[0].mxu0
  %v2186 = vadd.f32 %v1944, %v2185
  %v2187 = vpop.f32.mrb[0].mxu0
  %v2188 = vadd.f32 %v1948, %v2187
  %v2189 = vpop.f32.mrb[0].mxu0
  %v2190 = vadd.f32 %v1944, %v2189
  %v2191 = vpop.f32.mrb[0].mxu0
  %v2192 = vadd.f32 %v1948, %v2191
  %2193 = vmatprep.mubr.bf16.mxu0 0
  %2194 = vmatmul.mubr.bf16.gmra.mrb[0].mxu0 %v1903
  %v2195 = vpop.f32.mrb[0].mxu0
  %v2196 = vadd.f32 %v1944, %v2195
  %v2197 = vpop.f32.mrb[0].mxu0
  %v2198 = vadd.f32 %v1948, %v2197
  %v2199 = vpop.f32.mrb[0].mxu0
  %v2200 = vadd.f32 %v1944, %v2199
  %v2201 = vpop.f32.mrb[0].mxu0
  %v2202 = vadd.f32 %v1948, %v2201
  %2203 = vmatprep.mubr.bf16.mxu0 0
  %2204 = vmatmul.mubr.bf16.gmra.mrb[0].mxu0 %v1904
  %v2205 = vpop.f32.mrb[0].mxu0
  %v2206 = vadd.f32 %v1944, %v2205
  %v2207 = vpop.f32.mrb[0].mxu0
  %v2208 = vadd.f32 %v1948, %v2207
  %v2209 = vpop.f32.mrb[0].mxu0
  %v2210 = vadd.f32 %v1944, %v2209
  %v2211 = vpop.f32.mrb[0].mxu0
  %v2212 = vadd.f32 %v1948, %v2211
  %2213 = vmatprep.mubr.bf16.mxu0 0
  %2214 = vmatmul.mubr.bf16.gmra.mrb[0].mxu0 %v1905
  %v2215 = vpop.f32.mrb[0].mxu0
  %v2216 = vadd.f32 %v1944, %v2215
  %v2217 = vpop.f32.mrb[0].mxu0
  %v2218 = vadd.f32 %v1948, %v2217
  %v2219 = vpop.f32.mrb[0].mxu0
  %v2220 = vadd.f32 %v1944, %v2219
  %v2221 = vpop.f32.mrb[0].mxu0
  %v2222 = vadd.f32 %v1948, %v2221
  %2223 = vmatprep.mubr.bf16.mxu0 0
  %2224 = vmatmul.mubr.bf16.gmra.mrb[0].mxu0 %v1906
  %v2225 = vpop.f32.mrb[0].mxu0
  %v2226 = vadd.f32 %v1944, %v2225
  %v2227 = vpop.f32.mrb[0].mxu0
  %v2228 = vadd.f32 %v1948, %v2227
  %v2229 = vpop.f32.mrb[0].mxu0
  %v2230 = vadd.f32 %v1944, %v2229
  %v2231 = vpop.f32.mrb[0].mxu0
  %v2232 = vadd.f32 %v1948, %v2231
  %2233 = vdwg.mxu0
  %2234 = vmatprep.subr.bf16.mxu0 %v2060
  %2235 = vmatpush1.bf16.msra.mxu0 %v2059
  %2236 = vmatprep.subr.bf16.mxu0 %v2064
  %2237 = vmatpush1.bf16.msra.mxu0 %v2063
  %2238 = vmatprep.subr.bf16.mxu0 %v2068
  %2239 = vmatpush1.bf16.msra.mxu0 %v2067
  %2240 = vmatprep.subr.bf16.mxu0 %v2072
  %2241 = vmatpush1.bf16.msra.mxu0 %v2071
  %2242 = vmatprep.subr.bf16.mxu0 %v2076
  %2243 = vmatpush1.bf16.msra.mxu0 %v2075
  %2244 = vmatprep.subr.bf16.mxu0 %v2080
  %2245 = vmatpush1.bf16.msra.mxu0 %v2079
  %2246 = vmatprep.subr.bf16.mxu0 %v2084
  %2247 = vmatpush1.bf16.msra.mxu0 %v2083
  %2248 = vmatprep.subr.bf16.mxu0 %v2088
  %2249 = vmatpush1.bf16.msra.mxu0 %v2087
  %2250 = vmatprep.subr.bf16.mxu0 0
  %2251 = vmatpush1.bf16.msra.mxu0 0
  %2252 = vmatprep.subr.bf16.mxu0 0
  %2253 = vmatpush1.bf16.msra.mxu0 0
  %2254 = vmatprep.subr.bf16.mxu0 0
  %2255 = vmatpush1.bf16.msra.mxu0 0
  %2256 = vmatprep.subr.bf16.mxu0 0
  %2257 = vmatpush1.bf16.msra.mxu0 0
  %2258 = vmatprep.subr.bf16.mxu0 0
  %2259 = vmatpush1.bf16.msra.mxu0 0
  %2260 = vmatprep.subr.bf16.mxu0 0
  %2261 = vmatpush1.bf16.msra.mxu0 0
  %2262 = vmatprep.subr.bf16.mxu0 0
  %2263 = vmatpush1.bf16.msra.mxu0 0
  %2264 = vmatprep.subr.bf16.mxu0 0
  %2265 = vmatpush1.bf16.msra.mxu0 0
  %2266 = vmatprep.mubr.bf16.mxu0 0
  %2267 = vmatmul.mubr.bf16.gmra.mrb[0].mxu0 %v1899
  %v2268 = vpop.f32.mrb[0].mxu0
  %v2269 = vadd.f32 %v1952, %v2268
  %v2270 = vpop.f32.mrb[0].mxu0
  %v2271 = vadd.f32 %v1956, %v2270
  %v2272 = vpop.f32.mrb[0].mxu0
  %v2273 = vadd.f32 %v1952, %v2272
  %v2274 = vpop.f32.mrb[0].mxu0
  %v2275 = vadd.f32 %v1956, %v2274
  %2276 = vmatprep.mubr.bf16.mxu0 0
  %2277 = vmatmul.mubr.bf16.gmra.mrb[0].mxu0 %v1900
  %v2278 = vpop.f32.mrb[0].mxu0
  %v2279 = vadd.f32 %v1952, %v2278
  %v2280 = vpop.f32.mrb[0].mxu0
  %v2281 = vadd.f32 %v1956, %v2280
  %v2282 = vpop.f32.mrb[0].mxu0
  %v2283 = vadd.f32 %v1952, %v2282
  %v2284 = vpop.f32.mrb[0].mxu0
  %v2285 = vadd.f32 %v1956, %v2284
  %2286 = vmatprep.mubr.bf16.mxu0 0
  %2287 = vmatmul.mubr.bf16.gmra.mrb[0].mxu0 %v1901
  %v2288 = vpop.f32.mrb[0].mxu0
  %v2289 = vadd.f32 %v1952, %v2288
  %v2290 = vpop.f32.mrb[0].mxu0
  %v2291 = vadd.f32 %v1956, %v2290
  %v2292 = vpop.f32.mrb[0].mxu0
  %v2293 = vadd.f32 %v1952, %v2292
  %v2294 = vpop.f32.mrb[0].mxu0
  %v2295 = vadd.f32 %v1956, %v2294
  %2296 = vmatprep.mubr.bf16.mxu0 0
  %2297 = vmatmul.mubr.bf16.gmra.mrb[0].mxu0 %v1902
  %v2298 = vpop.f32.mrb[0].mxu0
  %v2299 = vadd.f32 %v1952, %v2298
  %v2300 = vpop.f32.mrb[0].mxu0
  %v2301 = vadd.f32 %v1956, %v2300
  %v2302 = vpop.f32.mrb[0].mxu0
  %v2303 = vadd.f32 %v1952, %v2302
  %v2304 = vpop.f32.mrb[0].mxu0
  %v2305 = vadd.f32 %v1956, %v2304
  %2306 = vmatprep.mubr.bf16.mxu0 0
  %2307 = vmatmul.mubr.bf16.gmra.mrb[0].mxu0 %v1903
  %v2308 = vpop.f32.mrb[0].mxu0
  %v2309 = vadd.f32 %v1952, %v2308
  %v2310 = vpop.f32.mrb[0].mxu0
  %v2311 = vadd.f32 %v1956, %v2310
  %v2312 = vpop.f32.mrb[0].mxu0
  %v2313 = vadd.f32 %v1952, %v2312
  %v2314 = vpop.f32.mrb[0].mxu0
  %v2315 = vadd.f32 %v1956, %v2314
  %2316 = vmatprep.mubr.bf16.mxu0 0
  %2317 = vmatmul.mubr.bf16.gmra.mrb[0].mxu0 %v1904
  %v2318 = vpop.f32.mrb[0].mxu0
  %v2319 = vadd.f32 %v1952, %v2318
  %v2320 = vpop.f32.mrb[0].mxu0
  %v2321 = vadd.f32 %v1956, %v2320
  %v2322 = vpop.f32.mrb[0].mxu0
  %v2323 = vadd.f32 %v1952, %v2322
  %v2324 = vpop.f32.mrb[0].mxu0
  %v2325 = vadd.f32 %v1956, %v2324
  %2326 = vmatprep.mubr.bf16.mxu0 0
  %2327 = vmatmul.mubr.bf16.gmra.mrb[0].mxu0 %v1905
  %v2328 = vpop.f32.mrb[0].mxu0
  %v2329 = vadd.f32 %v1952, %v2328
  %v2330 = vpop.f32.mrb[0].mxu0
  %v2331 = vadd.f32 %v1956, %v2330
  %v2332 = vpop.f32.mrb[0].mxu0
  %v2333 = vadd.f32 %v1952, %v2332
  %v2334 = vpop.f32.mrb[0].mxu0
  %v2335 = vadd.f32 %v1956, %v2334
  %2336 = vmatprep.mubr.bf16.mxu0 0
  %2337 = vmatmul.mubr.bf16.gmra.mrb[0].mxu0 %v1906
  %v2338 = vpop.f32.mrb[0].mxu0
  %v2339 = vadd.f32 %v1952, %v2338
  %v2340 = vpop.f32.mrb[0].mxu0
  %v2341 = vadd.f32 %v1956, %v2340
  %v2342 = vpop.f32.mrb[0].mxu0
  %v2343 = vadd.f32 %v1952, %v2342
  %v2344 = vpop.f32.mrb[0].mxu0
  %v2345 = vadd.f32 %v1956, %v2344
  %2346 = vdwg.mxu0
  %v2347 = vld [vmem:[%s5] sm:$0xff]
  %v2348 = vld [vmem:[%s5 + $0x8] sm:$0xff]
  %v2349 = vld [vmem:[%s5 + $0x10] sm:$0xff]
  %v2350 = vld [vmem:[%s5 + $0x18] sm:$0xff]
  %v2351 = vld [vmem:[%s5 + $0x20] sm:$0xff]
  %v2352 = vld [vmem:[%s5 + $0x28] sm:$0xff]
  %v2353 = vld [vmem:[%s5 + $0x30] sm:$0xff]
  %v2354 = vld [vmem:[%s5 + $0x38] sm:$0xff]
  %v2355 = vld [vmem:[%s5 + $0x40] sm:$0xff]
  %v2356 = vld [vmem:[%s5 + $0x48] sm:$0xff]
  %v2357 = vld [vmem:[%s5 + $0x50] sm:$0xff]
  %v2358 = vld [vmem:[%s5 + $0x58] sm:$0xff]
  %v2359 = vld [vmem:[%s5 + $0x60] sm:$0xff]
  %v2360 = vld [vmem:[%s5 + $0x68] sm:$0xff]
  %v2361 = vld [vmem:[%s5 + $0x70] sm:$0xff]
  %v2362 = vld [vmem:[%s5 + $0x78] sm:$0xff]
  %v2363 = vld [vmem:[%s5 + $0x80] sm:$0xff]
  %v2364 = vld [vmem:[%s5 + $0x88] sm:$0xff]
  %v2365 = vld [vmem:[%s5 + $0x90] sm:$0xff]
  %v2366 = vld [vmem:[%s5 + $0x98] sm:$0xff]
  %v2367 = vld [vmem:[%s5 + $0xa0] sm:$0xff]
  %v2368 = vld [vmem:[%s5 + $0xa8] sm:$0xff]
  %v2369 = vld [vmem:[%s5 + $0xb0] sm:$0xff]
  %v2370 = vld [vmem:[%s5 + $0xb8] sm:$0xff]
  %v2371 = vld [vmem:[%s5 + $0xc0] sm:$0xff]
  %v2372 = vld [vmem:[%s5 + $0xc8] sm:$0xff]
  %v2373 = vld [vmem:[%s5 + $0xd0] sm:$0xff]
  %v2374 = vld [vmem:[%s5 + $0xd8] sm:$0xff]
  %v2375 = vld [vmem:[%s5 + $0xe0] sm:$0xff]
  %v2376 = vld [vmem:[%s5 + $0xe8] sm:$0xff]
  %v2377 = vld [vmem:[%s5 + $0xf0] sm:$0xff]
  %v2378 = vld [vmem:[%s5 + $0xf8] sm:$0xff]
  %v2379 = vld [vmem:[#allocation3] sm:$0xff]
  %v2380 = vld [vmem:[#allocation5] sm:$0xff]
  %v2381 = vld [vmem:[#allocation5 + $0x8] sm:$0xff]
  %v2414 = vunpack.c.l.b16 %v2347
  %v2415 = vunpack.c.h.b16 %v2347
  %v2416 = vunpack.c.l.b16 %v2348
  %v2417 = vunpack.c.h.b16 %v2348
  %v2418 = vunpack.c.l.b16 %v2349
  %v2419 = vunpack.c.h.b16 %v2349
  %v2420 = vunpack.c.l.b16 %v2350
  %v2421 = vunpack.c.h.b16 %v2350
  %v2422 = vunpack.c.l.b16 %v2351
  %v2423 = vunpack.c.h.b16 %v2351
  %v2424 = vunpack.c.l.b16 %v2352
  %v2425 = vunpack.c.h.b16 %v2352
  %v2426 = vunpack.c.l.b16 %v2353
  %v2427 = vunpack.c.h.b16 %v2353
  %v2428 = vunpack.c.l.b16 %v2354
  %v2429 = vunpack.c.h.b16 %v2354
  %v2430 = vunpack.c.l.b16 %v2355
  %v2431 = vunpack.c.h.b16 %v2355
  %v2432 = vunpack.c.l.b16 %v2356
  %v2433 = vunpack.c.h.b16 %v2356
  %v2434 = vunpack.c.l.b16 %v2357
  %v2435 = vunpack.c.h.b16 %v2357
  %v2436 = vunpack.c.l.b16 %v2358
  %v2437 = vunpack.c.h.b16 %v2358
  %v2438 = vunpack.c.l.b16 %v2359
  %v2439 = vunpack.c.h.b16 %v2359
  %v2440 = vunpack.c.l.b16 %v2360
  %v2441 = vunpack.c.h.b16 %v2360
  %v2442 = vunpack.c.l.b16 %v2361
  %v2443 = vunpack.c.h.b16 %v2361
  %v2444 = vunpack.c.l.b16 %v2362
  %v2445 = vunpack.c.h.b16 %v2362
  %v2446 = vunpack.c.l.b16 %v2363
  %v2447 = vunpack.c.h.b16 %v2363
  %v2448 = vunpack.c.l.b16 %v2364
  %v2449 = vunpack.c.h.b16 %v2364
  %v2450 = vunpack.c.l.b16 %v2365
  %v2451 = vunpack.c.h.b16 %v2365
  %v2452 = vunpack.c.l.b16 %v2366
  %v2453 = vunpack.c.h.b16 %v2366
  %v2454 = vunpack.c.l.b16 %v2367
  %v2455 = vunpack.c.h.b16 %v2367
  %v2456 = vunpack.c.l.b16 %v2368
  %v2457 = vunpack.c.h.b16 %v2368
  %v2458 = vunpack.c.l.b16 %v2369
  %v2459 = vunpack.c.h.b16 %v2369
  %v2460 = vunpack.c.l.b16 %v2370
  %v2461 = vunpack.c.h.b16 %v2370
  %v2462 = vunpack.c.l.b16 %v2371
  %v2463 = vunpack.c.h.b16 %v2371
  %v2464 = vunpack.c.l.b16 %v2372
  %v2465 = vunpack.c.h.b16 %v2372
  %v2466 = vunpack.c.l.b16 %v2373
  %v2467 = vunpack.c.h.b16 %v2373
  %v2468 = vunpack.c.l.b16 %v2374
  %v2469 = vunpack.c.h.b16 %v2374
  %v2470 = vunpack.c.l.b16 %v2375
  %v2471 = vunpack.c.h.b16 %v2375
  %v2472 = vunpack.c.l.b16 %v2376
  %v2473 = vunpack.c.h.b16 %v2376
  %v2474 = vunpack.c.l.b16 %v2377
  %v2475 = vunpack.c.h.b16 %v2377
  %v2476 = vunpack.c.l.b16 %v2378
  %v2477 = vunpack.c.h.b16 %v2378
  %v2478 = vpack.c.b16 %v2418, %v2414
  %v2479 = vpack.c.b16 %v2419, %v2415
  %v2480 = vpack.c.b16 %v2420, %v2416
  %v2481 = vpack.c.b16 %v2421, %v2417
  %v2482 = vpack.c.b16 %v2426, %v2422
  %v2483 = vpack.c.b16 %v2427, %v2423
  %v2484 = vpack.c.b16 %v2428, %v2424
  %v2485 = vpack.c.b16 %v2429, %v2425
  %v2486 = vpack.c.b16 %v2434, %v2430
  %v2487 = vpack.c.b16 %v2435, %v2431
  %v2488 = vpack.c.b16 %v2436, %v2432
  %v2489 = vpack.c.b16 %v2437, %v2433
  %v2490 = vpack.c.b16 %v2442, %v2438
  %v2491 = vpack.c.b16 %v2443, %v2439
  %v2492 = vpack.c.b16 %v2444, %v2440
  %v2493 = vpack.c.b16 %v2445, %v2441
  %v2494 = vpack.c.b16 %v2450, %v2446
  %v2495 = vpack.c.b16 %v2451, %v2447
  %v2496 = vpack.c.b16 %v2452, %v2448
  %v2497 = vpack.c.b16 %v2453, %v2449
  %v2498 = vpack.c.b16 %v2458, %v2454
  %v2499 = vpack.c.b16 %v2459, %v2455
  %v2500 = vpack.c.b16 %v2460, %v2456
  %v2501 = vpack.c.b16 %v2461, %v2457
  %v2502 = vpack.c.b16 %v2466, %v2462
  %v2503 = vpack.c.b16 %v2467, %v2463
  %v2504 = vpack.c.b16 %v2468, %v2464
  %v2505 = vpack.c.b16 %v2469, %v2465
  %v2506 = vpack.c.b16 %v2474, %v2470
  %v2507 = vpack.c.b16 %v2475, %v2471
  %v2508 = vpack.c.b16 %v2476, %v2472
  %v2509 = vpack.c.b16 %v2477, %v2473
  %2542 = vmatprep.subr.bf16.mxu0 %v2479
  %2543 = vmatpush1.bf16.msra.mxu0 %v2478
  %2544 = vmatprep.subr.bf16.mxu0 %v2483
  %2545 = vmatpush1.bf16.msra.mxu0 %v2482
  %2546 = vmatprep.subr.bf16.mxu0 %v2487
  %2547 = vmatpush1.bf16.msra.mxu0 %v2486
  %2548 = vmatprep.subr.bf16.mxu0 %v2491
  %2549 = vmatpush1.bf16.msra.mxu0 %v2490
  %2550 = vmatprep.subr.bf16.mxu0 %v2495
  %2551 = vmatpush1.bf16.msra.mxu0 %v2494
  %2552 = vmatprep.subr.bf16.mxu0 %v2499
  %2553 = vmatpush1.bf16.msra.mxu0 %v2498
  %2554 = vmatprep.subr.bf16.mxu0 %v2503
  %2555 = vmatpush1.bf16.msra.mxu0 %v2502
  %2556 = vmatprep.subr.bf16.mxu0 %v2507
  %2557 = vmatpush1.bf16.msra.mxu0 %v2506
  %2558 = vmatprep.subr.bf16.mxu0 0
  %2559 = vmatpush1.bf16.msra.mxu0 0
  %2560 = vmatprep.subr.bf16.mxu0 0
  %2561 = vmatpush1.bf16.msra.mxu0 0
  %2562 = vmatprep.subr.bf16.mxu0 0
  %2563 = vmatpush1.bf16.msra.mxu0 0
  %2564 = vmatprep.subr.bf16.mxu0 0
  %2565 = vmatpush1.bf16.msra.mxu0 0
  %2566 = vmatprep.subr.bf16.mxu0 0
  %2567 = vmatpush1.bf16.msra.mxu0 0
  %2568 = vmatprep.subr.bf16.mxu0 0
  %2569 = vmatpush1.bf16.msra.mxu0 0
  %2570 = vmatprep.subr.bf16.mxu0 0
  %2571 = vmatpush1.bf16.msra.mxu0 0
  %2572 = vmatprep.subr.bf16.mxu0 0
  %2573 = vmatpush1.bf16.msra.mxu0 0
  %2574 = vmatprep.mubr.bf16.mxu0 0
  %2575 = vmatmul.mubr.bf16.gmra.mrb[0].mxu0 %v2379
  %v2576 = vpop.f32.mrb[0].mxu0
  %v2577 = vadd.f32 0.0, %v2576
  %v2578 = vpop.f32.mrb[0].mxu0
  %v2579 = vadd.f32 0.0, %v2578
  %v2580 = vpop.f32.mrb[0].mxu0
  %v2581 = vadd.f32 0.0, %v2580
  %v2582 = vpop.f32.mrb[0].mxu0
  %v2583 = vadd.f32 0.0, %v2582
  %2584 = vdwg.mxu0
  %2585 = vmatprep.subr.bf16.mxu0 %v2481
  %2586 = vmatpush1.bf16.msra.mxu0 %v2480
  %2587 = vmatprep.subr.bf16.mxu0 %v2485
  %2588 = vmatpush1.bf16.msra.mxu0 %v2484
  %2589 = vmatprep.subr.bf16.mxu0 %v2489
  %2590 = vmatpush1.bf16.msra.mxu0 %v2488
  %2591 = vmatprep.subr.bf16.mxu0 %v2493
  %2592 = vmatpush1.bf16.msra.mxu0 %v2492
  %2593 = vmatprep.subr.bf16.mxu0 %v2497
  %2594 = vmatpush1.bf16.msra.mxu0 %v2496
  %2595 = vmatprep.subr.bf16.mxu0 %v2501
  %2596 = vmatpush1.bf16.msra.mxu0 %v2500
  %2597 = vmatprep.subr.bf16.mxu0 %v2505
  %2598 = vmatpush1.bf16.msra.mxu0 %v2504
  %2599 = vmatprep.subr.bf16.mxu0 %v2509
  %2600 = vmatpush1.bf16.msra.mxu0 %v2508
  %2601 = vmatprep.subr.bf16.mxu0 0
  %2602 = vmatpush1.bf16.msra.mxu0 0
  %2603 = vmatprep.subr.bf16.mxu0 0
  %2604 = vmatpush1.bf16.msra.mxu0 0
  %2605 = vmatprep.subr.bf16.mxu0 0
  %2606 = vmatpush1.bf16.msra.mxu0 0
  %2607 = vmatprep.subr.bf16.mxu0 0
  %2608 = vmatpush1.bf16.msra.mxu0 0
  %2609 = vmatprep.subr.bf16.mxu0 0
  %2610 = vmatpush1.bf16.msra.mxu0 0
  %2611 = vmatprep.subr.bf16.mxu0 0
  %2612 = vmatpush1.bf16.msra.mxu0 0
  %2613 = vmatprep.subr.bf16.mxu0 0
  %2614 = vmatpush1.bf16.msra.mxu0 0
  %2615 = vmatprep.subr.bf16.mxu0 0
  %2616 = vmatpush1.bf16.msra.mxu0 0
  %2617 = vmatprep.mubr.bf16.mxu0 0
  %2618 = vmatmul.mubr.bf16.gmra.mrb[0].mxu0 %v2379
  %v2619 = vpop.f32.mrb[0].mxu0
  %v2620 = vadd.f32 0.0, %v2619
  %v2621 = vpop.f32.mrb[0].mxu0
  %v2622 = vadd.f32 0.0, %v2621
  %v2623 = vpop.f32.mrb[0].mxu0
  %v2624 = vadd.f32 0.0, %v2623
  %v2625 = vpop.f32.mrb[0].mxu0
  %v2626 = vadd.f32 0.0, %v2625
  %2627 = vdwg.mxu0
  %v2628 = vadd.f32 %v2156, %v2577
  %v2629 = vadd.f32 %v2158, %v2579
  %v2630 = vadd.f32 %v2269, %v2620
  %v2631 = vadd.f32 %v2271, %v2622
  %v2632 = vadd.f32 %v2160, %v2581
  %v2633 = vadd.f32 %v2162, %v2583
  %v2634 = vadd.f32 %v2273, %v2624
  %v2635 = vadd.f32 %v2275, %v2626
  %v2636 = vxor.u32 %v2628, 2147483648
  %v2637 = vxor.u32 %v2632, 2147483648
  %v2638 = vmul.f32 %v2636, 1.442695
  %v2639 = vpow.pop %v2638
  %v2640 = vmul.f32 %v2637, 1.442695
  %v2641 = vpow.pop %v2640
  %v2642 = vadd.f32 %v2639, 1.0
  %v2643 = vadd.f32 %v2641, 1.0
  %v2644 = vrcp.pop %v2642
  %v2645 = vmul.f32 1.0, %v2644
  %v2646 = vrcp.pop %v2643
  %v2647 = vmul.f32 1.0, %v2646
  %v2648 = vxor.u32 %v2629, 2147483648
  %v2649 = vxor.u32 %v2633, 2147483648
  %v2650 = vmul.f32 %v2648, 1.442695
  %v2651 = vpow.pop %v2650
  %v2652 = vmul.f32 %v2649, 1.442695
  %v2653 = vpow.pop %v2652
  %v2654 = vadd.f32 %v2651, 1.0
  %v2655 = vadd.f32 %v2653, 1.0
  %v2656 = vrcp.pop %v2654
  %v2657 = vmul.f32 1.0, %v2656
  %v2658 = vrcp.pop %v2655
  %v2659 = vmul.f32 1.0, %v2658
  %v2660 = vtanh.pop %v2630
  %v2661 = vtanh.pop %v2634
  %v2662 = vxor.u32 %v2631, 2147483648
  %v2663 = vxor.u32 %v2635, 2147483648
  %v2664 = vmul.f32 %v2662, 1.442695
  %v2665 = vpow.pop %v2664
  %v2666 = vmul.f32 %v2663, 1.442695
  %v2667 = vpow.pop %v2666
  %v2668 = vadd.f32 %v2665, 1.0
  %v2669 = vadd.f32 %v2667, 1.0
  %v2670 = vrcp.pop %v2668
  %v2671 = vmul.f32 1.0, %v2670
  %v2672 = vrcp.pop %v2669
  %v2673 = vmul.f32 1.0, %v2672
  %v2674 = vmul.f32 %v2657, %v2380
  %v2675 = vmul.f32 %v2659, %v2381
  %v2676 = vmul.f32 %v2645, %v2660
  %v2677 = vmul.f32 %v2647, %v2661
  %v2678 = vadd.f32 %v2674, %v2676
  %v2679 = vadd.f32 %v2675, %v2677
  %v2680 = vtanh.pop %v2678
  %v2681 = vtanh.pop %v2679
  %v2682 = vmul.f32 %v2671, %v2680
  %v2683 = vmul.f32 %v2673, %v2681
  %v2684 = vpack.c.bf16 %v2683, %v2682
  %2685 = vmatprep.subr.bf16.mxu0 %v2479
  %2686 = vmatpush1.bf16.msra.mxu0 %v2478
  %2687 = vmatprep.subr.bf16.mxu0 %v2483
  %2688 = vmatpush1.bf16.msra.mxu0 %v2482
  %2689 = vmatprep.subr.bf16.mxu0 %v2487
  %2690 = vmatpush1.bf16.msra.mxu0 %v2486
  %2691 = vmatprep.subr.bf16.mxu0 %v2491
  %2692 = vmatpush1.bf16.msra.mxu0 %v2490
  %2693 = vmatprep.subr.bf16.mxu0 %v2495
  %2694 = vmatpush1.bf16.msra.mxu0 %v2494
  %2695 = vmatprep.subr.bf16.mxu0 %v2499
  %2696 = vmatpush1.bf16.msra.mxu0 %v2498
  %2697 = vmatprep.subr.bf16.mxu0 %v2503
  %2698 = vmatpush1.bf16.msra.mxu0 %v2502
  %2699 = vmatprep.subr.bf16.mxu0 %v2507
  %2700 = vmatpush1.bf16.msra.mxu0 %v2506
  %2701 = vmatprep.subr.bf16.mxu0 0
  %2702 = vmatpush1.bf16.msra.mxu0 0
  %2703 = vmatprep.subr.bf16.mxu0 0
  %2704 = vmatpush1.bf16.msra.mxu0 0
  %2705 = vmatprep.subr.bf16.mxu0 0
  %2706 = vmatpush1.bf16.msra.mxu0 0
  %2707 = vmatprep.subr.bf16.mxu0 0
  %2708 = vmatpush1.bf16.msra.mxu0 0
  %2709 = vmatprep.subr.bf16.mxu0 0
  %2710 = vmatpush1.bf16.msra.mxu0 0
  %2711 = vmatprep.subr.bf16.mxu0 0
  %2712 = vmatpush1.bf16.msra.mxu0 0
  %2713 = vmatprep.subr.bf16.mxu0 0
  %2714 = vmatpush1.bf16.msra.mxu0 0
  %2715 = vmatprep.subr.bf16.mxu0 0
  %2716 = vmatpush1.bf16.msra.mxu0 0
  %2717 = vmatprep.mubr.bf16.mxu0 0
  %2718 = vmatmul.mubr.bf16.gmra.mrb[0].mxu0 %v2684
  %v2719 = vpop.f32.mrb[0].mxu0
  %v2720 = vadd.f32 0.0, %v2719
  %v2721 = vpop.f32.mrb[0].mxu0
  %v2722 = vadd.f32 0.0, %v2721
  %v2723 = vpop.f32.mrb[0].mxu0
  %v2724 = vadd.f32 0.0, %v2723
  %v2725 = vpop.f32.mrb[0].mxu0
  %v2726 = vadd.f32 0.0, %v2725
  %2727 = vdwg.mxu0
  %2728 = vmatprep.subr.bf16.mxu0 %v2481
  %2729 = vmatpush1.bf16.msra.mxu0 %v2480
  %2730 = vmatprep.subr.bf16.mxu0 %v2485
  %2731 = vmatpush1.bf16.msra.mxu0 %v2484
  %2732 = vmatprep.subr.bf16.mxu0 %v2489
  %2733 = vmatpush1.bf16.msra.mxu0 %v2488
  %2734 = vmatprep.subr.bf16.mxu0 %v2493
  %2735 = vmatpush1.bf16.msra.mxu0 %v2492
  %2736 = vmatprep.subr.bf16.mxu0 %v2497
  %2737 = vmatpush1.bf16.msra.mxu0 %v2496
  %2738 = vmatprep.subr.bf16.mxu0 %v2501
  %2739 = vmatpush1.bf16.msra.mxu0 %v2500
  %2740 = vmatprep.subr.bf16.mxu0 %v2505
  %2741 = vmatpush1.bf16.msra.mxu0 %v2504
  %2742 = vmatprep.subr.bf16.mxu0 %v2509
  %2743 = vmatpush1.bf16.msra.mxu0 %v2508
  %2744 = vmatprep.subr.bf16.mxu0 0
  %2745 = vmatpush1.bf16.msra.mxu0 0
  %2746 = vmatprep.subr.bf16.mxu0 0
  %2747 = vmatpush1.bf16.msra.mxu0 0
  %2748 = vmatprep.subr.bf16.mxu0 0
  %2749 = vmatpush1.bf16.msra.mxu0 0
  %2750 = vmatprep.subr.bf16.mxu0 0
  %2751 = vmatpush1.bf16.msra.mxu0 0
  %2752 = vmatprep.subr.bf16.mxu0 0
  %2753 = vmatpush1.bf16.msra.mxu0 0
  %2754 = vmatprep.subr.bf16.mxu0 0
  %2755 = vmatpush1.bf16.msra.mxu0 0
  %2756 = vmatprep.subr.bf16.mxu0 0
  %2757 = vmatpush1.bf16.msra.mxu0 0
  %2758 = vmatprep.subr.bf16.mxu0 0
  %2759 = vmatpush1.bf16.msra.mxu0 0
  %2760 = vmatprep.mubr.bf16.mxu0 0
  %2761 = vmatmul.mubr.bf16.gmra.mrb[0].mxu0 %v2684
  %v2762 = vpop.f32.mrb[0].mxu0
  %v2763 = vadd.f32 0.0, %v2762
  %v2764 = vpop.f32.mrb[0].mxu0
  %v2765 = vadd.f32 0.0, %v2764
  %v2766 = vpop.f32.mrb[0].mxu0
  %v2767 = vadd.f32 0.0, %v2766
  %v2768 = vpop.f32.mrb[0].mxu0
  %v2769 = vadd.f32 0.0, %v2768
  %2770 = vdwg.mxu0
  %v2771 = vadd.f32 %v2166, %v2720
  %v2772 = vadd.f32 %v2168, %v2722
  %v2773 = vadd.f32 %v2279, %v2763
  %v2774 = vadd.f32 %v2281, %v2765
  %v2775 = vadd.f32 %v2170, %v2724
  %v2776 = vadd.f32 %v2172, %v2726
  %v2777 = vadd.f32 %v2283, %v2767
  %v2778 = vadd.f32 %v2285, %v2769
  %v2779 = vxor.u32 %v2771, 2147483648
  %v2780 = vxor.u32 %v2775, 2147483648
  %v2781 = vmul.f32 %v2779, 1.442695
  %v2782 = vpow.pop %v2781
  %v2783 = vmul.f32 %v2780, 1.442695
  %v2784 = vpow.pop %v2783
  %v2785 = vadd.f32 %v2782, 1.0
  %v2786 = vadd.f32 %v2784, 1.0
  %v2787 = vrcp.pop %v2785
  %v2788 = vmul.f32 1.0, %v2787
  %v2789 = vrcp.pop %v2786
  %v2790 = vmul.f32 1.0, %v2789
  %v2791 = vxor.u32 %v2772, 2147483648
  %v2792 = vxor.u32 %v2776, 2147483648
  %v2793 = vmul.f32 %v2791, 1.442695
  %v2794 = vpow.pop %v2793
  %v2795 = vmul.f32 %v2792, 1.442695
  %v2796 = vpow.pop %v2795
  %v2797 = vadd.f32 %v2794, 1.0
  %v2798 = vadd.f32 %v2796, 1.0
  %v2799 = vrcp.pop %v2797
  %v2800 = vmul.f32 1.0, %v2799
  %v2801 = vrcp.pop %v2798
  %v2802 = vmul.f32 1.0, %v2801
  %v2803 = vtanh.pop %v2773
  %v2804 = vtanh.pop %v2777
  %v2805 = vxor.u32 %v2774, 2147483648
  %v2806 = vxor.u32 %v2778, 2147483648
  %v2807 = vmul.f32 %v2805, 1.442695
  %v2808 = vpow.pop %v2807
  %v2809 = vmul.f32 %v2806, 1.442695
  %v2810 = vpow.pop %v2809
  %v2811 = vadd.f32 %v2808, 1.0
  %v2812 = vadd.f32 %v2810, 1.0
  %v2813 = vrcp.pop %v2811
  %v2814 = vmul.f32 1.0, %v2813
  %v2815 = vrcp.pop %v2812
  %v2816 = vmul.f32 1.0, %v2815
  %v2817 = vmul.f32 %v2800, %v2678
  %v2818 = vmul.f32 %v2802, %v2679
  %v2819 = vmul.f32 %v2788, %v2803
  %v2820 = vmul.f32 %v2790, %v2804
  %v2821 = vadd.f32 %v2817, %v2819
  %v2822 = vadd.f32 %v2818, %v2820
  %v2823 = vtanh.pop %v2821
  %v2824 = vtanh.pop %v2822
  %v2825 = vmul.f32 %v2814, %v2823
  %v2826 = vmul.f32 %v2816, %v2824
  %v2827 = vpack.c.bf16 %v2826, %v2825
  %2828 = vmatprep.subr.bf16.mxu0 %v2479
  %2829 = vmatpush1.bf16.msra.mxu0 %v2478
  %2830 = vmatprep.subr.bf16.mxu0 %v2483
  %2831 = vmatpush1.bf16.msra.mxu0 %v2482
  %2832 = vmatprep.subr.bf16.mxu0 %v2487
  %2833 = vmatpush1.bf16.msra.mxu0 %v2486
  %2834 = vmatprep.subr.bf16.mxu0 %v2491
  %2835 = vmatpush1.bf16.msra.mxu0 %v2490
  %2836 = vmatprep.subr.bf16.mxu0 %v2495
  %2837 = vmatpush1.bf16.msra.mxu0 %v2494
  %2838 = vmatprep.subr.bf16.mxu0 %v2499
  %2839 = vmatpush1.bf16.msra.mxu0 %v2498
  %2840 = vmatprep.subr.bf16.mxu0 %v2503
  %2841 = vmatpush1.bf16.msra.mxu0 %v2502
  %2842 = vmatprep.subr.bf16.mxu0 %v2507
  %2843 = vmatpush1.bf16.msra.mxu0 %v2506
  %2844 = vmatprep.subr.bf16.mxu0 0
  %2845 = vmatpush1.bf16.msra.mxu0 0
  %2846 = vmatprep.subr.bf16.mxu0 0
  %2847 = vmatpush1.bf16.msra.mxu0 0
  %2848 = vmatprep.subr.bf16.mxu0 0
  %2849 = vmatpush1.bf16.msra.mxu0 0
  %2850 = vmatprep.subr.bf16.mxu0 0
  %2851 = vmatpush1.bf16.msra.mxu0 0
  %2852 = vmatprep.subr.bf16.mxu0 0
  %2853 = vmatpush1.bf16.msra.mxu0 0
  %2854 = vmatprep.subr.bf16.mxu0 0
  %2855 = vmatpush1.bf16.msra.mxu0 0
  %2856 = vmatprep.subr.bf16.mxu0 0
  %2857 = vmatpush1.bf16.msra.mxu0 0
  %2858 = vmatprep.subr.bf16.mxu0 0
  %2859 = vmatpush1.bf16.msra.mxu0 0
  %2860 = vmatprep.mubr.bf16.mxu0 0
  %2861 = vmatmul.mubr.bf16.gmra.mrb[0].mxu0 %v2827
  %v2862 = vpop.f32.mrb[0].mxu0
  %v2863 = vadd.f32 0.0, %v2862
  %v2864 = vpop.f32.mrb[0].mxu0
  %v2865 = vadd.f32 0.0, %v2864
  %v2866 = vpop.f32.mrb[0].mxu0
  %v2867 = vadd.f32 0.0, %v2866
  %v2868 = vpop.f32.mrb[0].mxu0
  %v2869 = vadd.f32 0.0, %v2868
  %2870 = vdwg.mxu0
  %2871 = vmatprep.subr.bf16.mxu0 %v2481
  %2872 = vmatpush1.bf16.msra.mxu0 %v2480
  %2873 = vmatprep.subr.bf16.mxu0 %v2485
  %2874 = vmatpush1.bf16.msra.mxu0 %v2484
  %2875 = vmatprep.subr.bf16.mxu0 %v2489
  %2876 = vmatpush1.bf16.msra.mxu0 %v2488
  %2877 = vmatprep.subr.bf16.mxu0 %v2493
  %2878 = vmatpush1.bf16.msra.mxu0 %v2492
  %2879 = vmatprep.subr.bf16.mxu0 %v2497
  %2880 = vmatpush1.bf16.msra.mxu0 %v2496
  %2881 = vmatprep.subr.bf16.mxu0 %v2501
  %2882 = vmatpush1.bf16.msra.mxu0 %v2500
  %2883 = vmatprep.subr.bf16.mxu0 %v2505
  %2884 = vmatpush1.bf16.msra.mxu0 %v2504
  %2885 = vmatprep.subr.bf16.mxu0 %v2509
  %2886 = vmatpush1.bf16.msra.mxu0 %v2508
  %2887 = vmatprep.subr.bf16.mxu0 0
  %2888 = vmatpush1.bf16.msra.mxu0 0
  %2889 = vmatprep.subr.bf16.mxu0 0
  %2890 = vmatpush1.bf16.msra.mxu0 0
  %2891 = vmatprep.subr.bf16.mxu0 0
  %2892 = vmatpush1.bf16.msra.mxu0 0
  %2893 = vmatprep.subr.bf16.mxu0 0
  %2894 = vmatpush1.bf16.msra.mxu0 0
  %2895 = vmatprep.subr.bf16.mxu0 0
  %2896 = vmatpush1.bf16.msra.mxu0 0
  %2897 = vmatprep.subr.bf16.mxu0 0
  %2898 = vmatpush1.bf16.msra.mxu0 0
  %2899 = vmatprep.subr.bf16.mxu0 0
  %2900 = vmatpush1.bf16.msra.mxu0 0
  %2901 = vmatprep.subr.bf16.mxu0 0
  %2902 = vmatpush1.bf16.msra.mxu0 0
  %2903 = vmatprep.mubr.bf16.mxu0 0
  %2904 = vmatmul.mubr.bf16.gmra.mrb[0].mxu0 %v2827
  %v2905 = vpop.f32.mrb[0].mxu0
  %v2906 = vadd.f32 0.0, %v2905
  %v2907 = vpop.f32.mrb[0].mxu0
  %v2908 = vadd.f32 0.0, %v2907
  %v2909 = vpop.f32.mrb[0].mxu0
  %v2910 = vadd.f32 0.0, %v2909
  %v2911 = vpop.f32.mrb[0].mxu0
  %v2912 = vadd.f32 0.0, %v2911
  %2913 = vdwg.mxu0
  %v2914 = vadd.f32 %v2176, %v2863
  %v2915 = vadd.f32 %v2178, %v2865
  %v2916 = vadd.f32 %v2289, %v2906
  %v2917 = vadd.f32 %v2291, %v2908
  %v2918 = vadd.f32 %v2180, %v2867
  %v2919 = vadd.f32 %v2182, %v2869
  %v2920 = vadd.f32 %v2293, %v2910
  %v2921 = vadd.f32 %v2295, %v2912
  %v2922 = vxor.u32 %v2914, 2147483648
  %v2923 = vxor.u32 %v2918, 2147483648
  %v2924 = vmul.f32 %v2922, 1.442695
  %v2925 = vpow.pop %v2924
  %v2926 = vmul.f32 %v2923, 1.442695
  %v2927 = vpow.pop %v2926
  %v2928 = vadd.f32 %v2925, 1.0
  %v2929 = vadd.f32 %v2927, 1.0
  %v2930 = vrcp.pop %v2928
  %v2931 = vmul.f32 1.0, %v2930
  %v2932 = vrcp.pop %v2929
  %v2933 = vmul.f32 1.0, %v2932
  %v2934 = vxor.u32 %v2915, 2147483648
  %v2935 = vxor.u32 %v2919, 2147483648
  %v2936 = vmul.f32 %v2934, 1.442695
  %v2937 = vpow.pop %v2936
  %v2938 = vmul.f32 %v2935, 1.442695
  %v2939 = vpow.pop %v2938
  %v2940 = vadd.f32 %v2937, 1.0
  %v2941 = vadd.f32 %v2939, 1.0
  %v2942 = vrcp.pop %v2940
  %v2943 = vmul.f32 1.0, %v2942
  %v2944 = vrcp.pop %v2941
  %v2945 = vmul.f32 1.0, %v2944
  %v2946 = vtanh.pop %v2916
  %v2947 = vtanh.pop %v2920
  %v2948 = vxor.u32 %v2917, 2147483648
  %v2949 = vxor.u32 %v2921, 2147483648
  %v2950 = vmul.f32 %v2948, 1.442695
  %v2951 = vpow.pop %v2950
  %v2952 = vmul.f32 %v2949, 1.442695
  %v2953 = vpow.pop %v2952
  %v2954 = vadd.f32 %v2951, 1.0
  %v2955 = vadd.f32 %v2953, 1.0
  %v2956 = vrcp.pop %v2954
  %v2957 = vmul.f32 1.0, %v2956
  %v2958 = vrcp.pop %v2955
  %v2959 = vmul.f32 1.0, %v2958
  %v2960 = vmul.f32 %v2943, %v2821
  %v2961 = vmul.f32 %v2945, %v2822
  %v2962 = vmul.f32 %v2931, %v2946
  %v2963 = vmul.f32 %v2933, %v2947
  %v2964 = vadd.f32 %v2960, %v2962
  %v2965 = vadd.f32 %v2961, %v2963
  %v2966 = vtanh.pop %v2964
  %v2967 = vtanh.pop %v2965
  %v2968 = vmul.f32 %v2957, %v2966
  %v2969 = vmul.f32 %v2959, %v2967
  %v2970 = vpack.c.bf16 %v2969, %v2968
  %2971 = vmatprep.subr.bf16.mxu0 %v2479
  %2972 = vmatpush1.bf16.msra.mxu0 %v2478
  %2973 = vmatprep.subr.bf16.mxu0 %v2483
  %2974 = vmatpush1.bf16.msra.mxu0 %v2482
  %2975 = vmatprep.subr.bf16.mxu0 %v2487
  %2976 = vmatpush1.bf16.msra.mxu0 %v2486
  %2977 = vmatprep.subr.bf16.mxu0 %v2491
  %2978 = vmatpush1.bf16.msra.mxu0 %v2490
  %2979 = vmatprep.subr.bf16.mxu0 %v2495
  %2980 = vmatpush1.bf16.msra.mxu0 %v2494
  %2981 = vmatprep.subr.bf16.mxu0 %v2499
  %2982 = vmatpush1.bf16.msra.mxu0 %v2498
  %2983 = vmatprep.subr.bf16.mxu0 %v2503
  %2984 = vmatpush1.bf16.msra.mxu0 %v2502
  %2985 = vmatprep.subr.bf16.mxu0 %v2507
  %2986 = vmatpush1.bf16.msra.mxu0 %v2506
  %2987 = vmatprep.subr.bf16.mxu0 0
  %2988 = vmatpush1.bf16.msra.mxu0 0
  %2989 = vmatprep.subr.bf16.mxu0 0
  %2990 = vmatpush1.bf16.msra.mxu0 0
  %2991 = vmatprep.subr.bf16.mxu0 0
  %2992 = vmatpush1.bf16.msra.mxu0 0
  %2993 = vmatprep.subr.bf16.mxu0 0
  %2994 = vmatpush1.bf16.msra.mxu0 0
  %2995 = vmatprep.subr.bf16.mxu0 0
  %2996 = vmatpush1.bf16.msra.mxu0 0
  %2997 = vmatprep.subr.bf16.mxu0 0
  %2998 = vmatpush1.bf16.msra.mxu0 0
  %2999 = vmatprep.subr.bf16.mxu0 0
  %3000 = vmatpush1.bf16.msra.mxu0 0
  %3001 = vmatprep.subr.bf16.mxu0 0
  %3002 = vmatpush1.bf16.msra.mxu0 0
  %3003 = vmatprep.mubr.bf16.mxu0 0
  %3004 = vmatmul.mubr.bf16.gmra.mrb[0].mxu0 %v2970
  %v3005 = vpop.f32.mrb[0].mxu0
  %v3006 = vadd.f32 0.0, %v3005
  %v3007 = vpop.f32.mrb[0].mxu0
  %v3008 = vadd.f32 0.0, %v3007
  %v3009 = vpop.f32.mrb[0].mxu0
  %v3010 = vadd.f32 0.0, %v3009
  %v3011 = vpop.f32.mrb[0].mxu0
  %v3012 = vadd.f32 0.0, %v3011
  %3013 = vdwg.mxu0
  %3014 = vmatprep.subr.bf16.mxu0 %v2481
  %3015 = vmatpush1.bf16.msra.mxu0 %v2480
  %3016 = vmatprep.subr.bf16.mxu0 %v2485
  %3017 = vmatpush1.bf16.msra.mxu0 %v2484
  %3018 = vmatprep.subr.bf16.mxu0 %v2489
  %3019 = vmatpush1.bf16.msra.mxu0 %v2488
  %3020 = vmatprep.subr.bf16.mxu0 %v2493
  %3021 = vmatpush1.bf16.msra.mxu0 %v2492
  %3022 = vmatprep.subr.bf16.mxu0 %v2497
  %3023 = vmatpush1.bf16.msra.mxu0 %v2496
  %3024 = vmatprep.subr.bf16.mxu0 %v2501
  %3025 = vmatpush1.bf16.msra.mxu0 %v2500
  %3026 = vmatprep.subr.bf16.mxu0 %v2505
  %3027 = vmatpush1.bf16.msra.mxu0 %v2504
  %3028 = vmatprep.subr.bf16.mxu0 %v2509
  %3029 = vmatpush1.bf16.msra.mxu0 %v2508
  %3030 = vmatprep.subr.bf16.mxu0 0
  %3031 = vmatpush1.bf16.msra.mxu0 0
  %3032 = vmatprep.subr.bf16.mxu0 0
  %3033 = vmatpush1.bf16.msra.mxu0 0
  %3034 = vmatprep.subr.bf16.mxu0 0
  %3035 = vmatpush1.bf16.msra.mxu0 0
  %3036 = vmatprep.subr.bf16.mxu0 0
  %3037 = vmatpush1.bf16.msra.mxu0 0
  %3038 = vmatprep.subr.bf16.mxu0 0
  %3039 = vmatpush1.bf16.msra.mxu0 0
  %3040 = vmatprep.subr.bf16.mxu0 0
  %3041 = vmatpush1.bf16.msra.mxu0 0
  %3042 = vmatprep.subr.bf16.mxu0 0
  %3043 = vmatpush1.bf16.msra.mxu0 0
  %3044 = vmatprep.subr.bf16.mxu0 0
  %3045 = vmatpush1.bf16.msra.mxu0 0
  %3046 = vmatprep.mubr.bf16.mxu0 0
  %3047 = vmatmul.mubr.bf16.gmra.mrb[0].mxu0 %v2970
  %v3048 = vpop.f32.mrb[0].mxu0
  %v3049 = vadd.f32 0.0, %v3048
  %v3050 = vpop.f32.mrb[0].mxu0
  %v3051 = vadd.f32 0.0, %v3050
  %v3052 = vpop.f32.mrb[0].mxu0
  %v3053 = vadd.f32 0.0, %v3052
  %v3054 = vpop.f32.mrb[0].mxu0
  %v3055 = vadd.f32 0.0, %v3054
  %3056 = vdwg.mxu0
  %v3057 = vadd.f32 %v2186, %v3006
  %v3058 = vadd.f32 %v2188, %v3008
  %v3059 = vadd.f32 %v2299, %v3049
  %v3060 = vadd.f32 %v2301, %v3051
  %v3061 = vadd.f32 %v2190, %v3010
  %v3062 = vadd.f32 %v2192, %v3012
  %v3063 = vadd.f32 %v2303, %v3053
  %v3064 = vadd.f32 %v2305, %v3055
  %v3065 = vxor.u32 %v3057, 2147483648
  %v3066 = vxor.u32 %v3061, 2147483648
  %v3067 = vmul.f32 %v3065, 1.442695
  %v3068 = vpow.pop %v3067
  %v3069 = vmul.f32 %v3066, 1.442695
  %v3070 = vpow.pop %v3069
  %v3071 = vadd.f32 %v3068, 1.0
  %v3072 = vadd.f32 %v3070, 1.0
  %v3073 = vrcp.pop %v3071
  %v3074 = vmul.f32 1.0, %v3073
  %v3075 = vrcp.pop %v3072
  %v3076 = vmul.f32 1.0, %v3075
  %v3077 = vxor.u32 %v3058, 2147483648
  %v3078 = vxor.u32 %v3062, 2147483648
  %v3079 = vmul.f32 %v3077, 1.442695
  %v3080 = vpow.pop %v3079
  %v3081 = vmul.f32 %v3078, 1.442695
  %v3082 = vpow.pop %v3081
  %v3083 = vadd.f32 %v3080, 1.0
  %v3084 = vadd.f32 %v3082, 1.0
  %v3085 = vrcp.pop %v3083
  %v3086 = vmul.f32 1.0, %v3085
  %v3087 = vrcp.pop %v3084
  %v3088 = vmul.f32 1.0, %v3087
  %v3089 = vtanh.pop %v3059
  %v3090 = vtanh.pop %v3063
  %v3091 = vxor.u32 %v3060, 2147483648
  %v3092 = vxor.u32 %v3064, 2147483648
  %v3093 = vmul.f32 %v3091, 1.442695
  %v3094 = vpow.pop %v3093
  %v3095 = vmul.f32 %v3092, 1.442695
  %v3096 = vpow.pop %v3095
  %v3097 = vadd.f32 %v3094, 1.0
  %v3098 = vadd.f32 %v3096, 1.0
  %v3099 = vrcp.pop %v3097
  %v3100 = vmul.f32 1.0, %v3099
  %v3101 = vrcp.pop %v3098
  %v3102 = vmul.f32 1.0, %v3101
  %v3103 = vmul.f32 %v3086, %v2964
  %v3104 = vmul.f32 %v3088, %v2965
  %v3105 = vmul.f32 %v3074, %v3089
  %v3106 = vmul.f32 %v3076, %v3090
  %v3107 = vadd.f32 %v3103, %v3105
  %v3108 = vadd.f32 %v3104, %v3106
  %v3109 = vtanh.pop %v3107
  %v3110 = vtanh.pop %v3108
  %v3111 = vmul.f32 %v3100, %v3109
  %v3112 = vmul.f32 %v3102, %v3110
  %v3113 = vpack.c.bf16 %v3112, %v3111
  %3114 = vmatprep.subr.bf16.mxu0 %v2479
  %3115 = vmatpush1.bf16.msra.mxu0 %v2478
  %3116 = vmatprep.subr.bf16.mxu0 %v2483
  %3117 = vmatpush1.bf16.msra.mxu0 %v2482
  %3118 = vmatprep.subr.bf16.mxu0 %v2487
  %3119 = vmatpush1.bf16.msra.mxu0 %v2486
  %3120 = vmatprep.subr.bf16.mxu0 %v2491
  %3121 = vmatpush1.bf16.msra.mxu0 %v2490
  %3122 = vmatprep.subr.bf16.mxu0 %v2495
  %3123 = vmatpush1.bf16.msra.mxu0 %v2494
  %3124 = vmatprep.subr.bf16.mxu0 %v2499
  %3125 = vmatpush1.bf16.msra.mxu0 %v2498
  %3126 = vmatprep.subr.bf16.mxu0 %v2503
  %3127 = vmatpush1.bf16.msra.mxu0 %v2502
  %3128 = vmatprep.subr.bf16.mxu0 %v2507
  %3129 = vmatpush1.bf16.msra.mxu0 %v2506
  %3130 = vmatprep.subr.bf16.mxu0 0
  %3131 = vmatpush1.bf16.msra.mxu0 0
  %3132 = vmatprep.subr.bf16.mxu0 0
  %3133 = vmatpush1.bf16.msra.mxu0 0
  %3134 = vmatprep.subr.bf16.mxu0 0
  %3135 = vmatpush1.bf16.msra.mxu0 0
  %3136 = vmatprep.subr.bf16.mxu0 0
  %3137 = vmatpush1.bf16.msra.mxu0 0
  %3138 = vmatprep.subr.bf16.mxu0 0
  %3139 = vmatpush1.bf16.msra.mxu0 0
  %3140 = vmatprep.subr.bf16.mxu0 0
  %3141 = vmatpush1.bf16.msra.mxu0 0
  %3142 = vmatprep.subr.bf16.mxu0 0
  %3143 = vmatpush1.bf16.msra.mxu0 0
  %3144 = vmatprep.subr.bf16.mxu0 0
  %3145 = vmatpush1.bf16.msra.mxu0 0
  %3146 = vmatprep.mubr.bf16.mxu0 0
  %3147 = vmatmul.mubr.bf16.gmra.mrb[0].mxu0 %v3113
  %v3148 = vpop.f32.mrb[0].mxu0
  %v3149 = vadd.f32 0.0, %v3148
  %v3150 = vpop.f32.mrb[0].mxu0
  %v3151 = vadd.f32 0.0, %v3150
  %v3152 = vpop.f32.mrb[0].mxu0
  %v3153 = vadd.f32 0.0, %v3152
  %v3154 = vpop.f32.mrb[0].mxu0
  %v3155 = vadd.f32 0.0, %v3154
  %3156 = vdwg.mxu0
  %3157 = vmatprep.subr.bf16.mxu0 %v2481
  %3158 = vmatpush1.bf16.msra.mxu0 %v2480
  %3159 = vmatprep.subr.bf16.mxu0 %v2485
  %3160 = vmatpush1.bf16.msra.mxu0 %v2484
  %3161 = vmatprep.subr.bf16.mxu0 %v2489
  %3162 = vmatpush1.bf16.msra.mxu0 %v2488
  %3163 = vmatprep.subr.bf16.mxu0 %v2493
  %3164 = vmatpush1.bf16.msra.mxu0 %v2492
  %3165 = vmatprep.subr.bf16.mxu0 %v2497
  %3166 = vmatpush1.bf16.msra.mxu0 %v2496
  %3167 = vmatprep.subr.bf16.mxu0 %v2501
  %3168 = vmatpush1.bf16.msra.mxu0 %v2500
  %3169 = vmatprep.subr.bf16.mxu0 %v2505
  %3170 = vmatpush1.bf16.msra.mxu0 %v2504
  %3171 = vmatprep.subr.bf16.mxu0 %v2509
  %3172 = vmatpush1.bf16.msra.mxu0 %v2508
  %3173 = vmatprep.subr.bf16.mxu0 0
  %3174 = vmatpush1.bf16.msra.mxu0 0
  %3175 = vmatprep.subr.bf16.mxu0 0
  %3176 = vmatpush1.bf16.msra.mxu0 0
  %3177 = vmatprep.subr.bf16.mxu0 0
  %3178 = vmatpush1.bf16.msra.mxu0 0
  %3179 = vmatprep.subr.bf16.mxu0 0
  %3180 = vmatpush1.bf16.msra.mxu0 0
  %3181 = vmatprep.subr.bf16.mxu0 0
  %3182 = vmatpush1.bf16.msra.mxu0 0
  %3183 = vmatprep.subr.bf16.mxu0 0
  %3184 = vmatpush1.bf16.msra.mxu0 0
  %3185 = vmatprep.subr.bf16.mxu0 0
  %3186 = vmatpush1.bf16.msra.mxu0 0
  %3187 = vmatprep.subr.bf16.mxu0 0
  %3188 = vmatpush1.bf16.msra.mxu0 0
  %3189 = vmatprep.mubr.bf16.mxu0 0
  %3190 = vmatmul.mubr.bf16.gmra.mrb[0].mxu0 %v3113
  %v3191 = vpop.f32.mrb[0].mxu0
  %v3192 = vadd.f32 0.0, %v3191
  %v3193 = vpop.f32.mrb[0].mxu0
  %v3194 = vadd.f32 0.0, %v3193
  %v3195 = vpop.f32.mrb[0].mxu0
  %v3196 = vadd.f32 0.0, %v3195
  %v3197 = vpop.f32.mrb[0].mxu0
  %v3198 = vadd.f32 0.0, %v3197
  %3199 = vdwg.mxu0
  %v3200 = vadd.f32 %v2196, %v3149
  %v3201 = vadd.f32 %v2198, %v3151
  %v3202 = vadd.f32 %v2309, %v3192
  %v3203 = vadd.f32 %v2311, %v3194
  %v3204 = vadd.f32 %v2200, %v3153
  %v3205 = vadd.f32 %v2202, %v3155
  %v3206 = vadd.f32 %v2313, %v3196
  %v3207 = vadd.f32 %v2315, %v3198
  %v3208 = vxor.u32 %v3200, 2147483648
  %v3209 = vxor.u32 %v3204, 2147483648
  %v3210 = vmul.f32 %v3208, 1.442695
  %v3211 = vpow.pop %v3210
  %v3212 = vmul.f32 %v3209, 1.442695
  %v3213 = vpow.pop %v3212
  %v3214 = vadd.f32 %v3211, 1.0
  %v3215 = vadd.f32 %v3213, 1.0
  %v3216 = vrcp.pop %v3214
  %v3217 = vmul.f32 1.0, %v3216
  %v3218 = vrcp.pop %v3215
  %v3219 = vmul.f32 1.0, %v3218
  %v3220 = vxor.u32 %v3201, 2147483648
  %v3221 = vxor.u32 %v3205, 2147483648
  %v3222 = vmul.f32 %v3220, 1.442695
  %v3223 = vpow.pop %v3222
  %v3224 = vmul.f32 %v3221, 1.442695
  %v3225 = vpow.pop %v3224
  %v3226 = vadd.f32 %v3223, 1.0
  %v3227 = vadd.f32 %v3225, 1.0
  %v3228 = vrcp.pop %v3226
  %v3229 = vmul.f32 1.0, %v3228
  %v3230 = vrcp.pop %v3227
  %v3231 = vmul.f32 1.0, %v3230
  %v3232 = vtanh.pop %v3202
  %v3233 = vtanh.pop %v3206
  %v3234 = vxor.u32 %v3203, 2147483648
  %v3235 = vxor.u32 %v3207, 2147483648
  %v3236 = vmul.f32 %v3234, 1.442695
  %v3237 = vpow.pop %v3236
  %v3238 = vmul.f32 %v3235, 1.442695
  %v3239 = vpow.pop %v3238
  %v3240 = vadd.f32 %v3237, 1.0
  %v3241 = vadd.f32 %v3239, 1.0
  %v3242 = vrcp.pop %v3240
  %v3243 = vmul.f32 1.0, %v3242
  %v3244 = vrcp.pop %v3241
  %v3245 = vmul.f32 1.0, %v3244
  %v3246 = vmul.f32 %v3229, %v3107
  %v3247 = vmul.f32 %v3231, %v3108
  %v3248 = vmul.f32 %v3217, %v3232
  %v3249 = vmul.f32 %v3219, %v3233
  %v3250 = vadd.f32 %v3246, %v3248
  %v3251 = vadd.f32 %v3247, %v3249
  %v3252 = vtanh.pop %v3250
  %v3253 = vtanh.pop %v3251
  %v3254 = vmul.f32 %v3243, %v3252
  %v3255 = vmul.f32 %v3245, %v3253
  %v3256 = vpack.c.bf16 %v3255, %v3254
  %3257 = vmatprep.subr.bf16.mxu0 %v2479
  %3258 = vmatpush1.bf16.msra.mxu0 %v2478
  %3259 = vmatprep.subr.bf16.mxu0 %v2483
  %3260 = vmatpush1.bf16.msra.mxu0 %v2482
  %3261 = vmatprep.subr.bf16.mxu0 %v2487
  %3262 = vmatpush1.bf16.msra.mxu0 %v2486
  %3263 = vmatprep.subr.bf16.mxu0 %v2491
  %3264 = vmatpush1.bf16.msra.mxu0 %v2490
  %3265 = vmatprep.subr.bf16.mxu0 %v2495
  %3266 = vmatpush1.bf16.msra.mxu0 %v2494
  %3267 = vmatprep.subr.bf16.mxu0 %v2499
  %3268 = vmatpush1.bf16.msra.mxu0 %v2498
  %3269 = vmatprep.subr.bf16.mxu0 %v2503
  %3270 = vmatpush1.bf16.msra.mxu0 %v2502
  %3271 = vmatprep.subr.bf16.mxu0 %v2507
  %3272 = vmatpush1.bf16.msra.mxu0 %v2506
  %3273 = vmatprep.subr.bf16.mxu0 0
  %3274 = vmatpush1.bf16.msra.mxu0 0
  %3275 = vmatprep.subr.bf16.mxu0 0
  %3276 = vmatpush1.bf16.msra.mxu0 0
  %3277 = vmatprep.subr.bf16.mxu0 0
  %3278 = vmatpush1.bf16.msra.mxu0 0
  %3279 = vmatprep.subr.bf16.mxu0 0
  %3280 = vmatpush1.bf16.msra.mxu0 0
  %3281 = vmatprep.subr.bf16.mxu0 0
  %3282 = vmatpush1.bf16.msra.mxu0 0
  %3283 = vmatprep.subr.bf16.mxu0 0
  %3284 = vmatpush1.bf16.msra.mxu0 0
  %3285 = vmatprep.subr.bf16.mxu0 0
  %3286 = vmatpush1.bf16.msra.mxu0 0
  %3287 = vmatprep.subr.bf16.mxu0 0
  %3288 = vmatpush1.bf16.msra.mxu0 0
  %3289 = vmatprep.mubr.bf16.mxu0 0
  %3290 = vmatmul.mubr.bf16.gmra.mrb[0].mxu0 %v3256
  %v3291 = vpop.f32.mrb[0].mxu0
  %v3292 = vadd.f32 0.0, %v3291
  %v3293 = vpop.f32.mrb[0].mxu0
  %v3294 = vadd.f32 0.0, %v3293
  %v3295 = vpop.f32.mrb[0].mxu0
  %v3296 = vadd.f32 0.0, %v3295
  %v3297 = vpop.f32.mrb[0].mxu0
  %v3298 = vadd.f32 0.0, %v3297
  %3299 = vdwg.mxu0
  %3300 = vmatprep.subr.bf16.mxu0 %v2481
  %3301 = vmatpush1.bf16.msra.mxu0 %v2480
  %3302 = vmatprep.subr.bf16.mxu0 %v2485
  %3303 = vmatpush1.bf16.msra.mxu0 %v2484
  %3304 = vmatprep.subr.bf16.mxu0 %v2489
  %3305 = vmatpush1.bf16.msra.mxu0 %v2488
  %3306 = vmatprep.subr.bf16.mxu0 %v2493
  %3307 = vmatpush1.bf16.msra.mxu0 %v2492
  %3308 = vmatprep.subr.bf16.mxu0 %v2497
  %3309 = vmatpush1.bf16.msra.mxu0 %v2496
  %3310 = vmatprep.subr.bf16.mxu0 %v2501
  %3311 = vmatpush1.bf16.msra.mxu0 %v2500
  %3312 = vmatprep.subr.bf16.mxu0 %v2505
  %3313 = vmatpush1.bf16.msra.mxu0 %v2504
  %3314 = vmatprep.subr.bf16.mxu0 %v2509
  %3315 = vmatpush1.bf16.msra.mxu0 %v2508
  %3316 = vmatprep.subr.bf16.mxu0 0
  %3317 = vmatpush1.bf16.msra.mxu0 0
  %3318 = vmatprep.subr.bf16.mxu0 0
  %3319 = vmatpush1.bf16.msra.mxu0 0
  %3320 = vmatprep.subr.bf16.mxu0 0
  %3321 = vmatpush1.bf16.msra.mxu0 0
  %3322 = vmatprep.subr.bf16.mxu0 0
  %3323 = vmatpush1.bf16.msra.mxu0 0
  %3324 = vmatprep.subr.bf16.mxu0 0
  %3325 = vmatpush1.bf16.msra.mxu0 0
  %3326 = vmatprep.subr.bf16.mxu0 0
  %3327 = vmatpush1.bf16.msra.mxu0 0
  %3328 = vmatprep.subr.bf16.mxu0 0
  %3329 = vmatpush1.bf16.msra.mxu0 0
  %3330 = vmatprep.subr.bf16.mxu0 0
  %3331 = vmatpush1.bf16.msra.mxu0 0
  %3332 = vmatprep.mubr.bf16.mxu0 0
  %3333 = vmatmul.mubr.bf16.gmra.mrb[0].mxu0 %v3256
  %v3334 = vpop.f32.mrb[0].mxu0
  %v3335 = vadd.f32 0.0, %v3334
  %v3336 = vpop.f32.mrb[0].mxu0
  %v3337 = vadd.f32 0.0, %v3336
  %v3338 = vpop.f32.mrb[0].mxu0
  %v3339 = vadd.f32 0.0, %v3338
  %v3340 = vpop.f32.mrb[0].mxu0
  %v3341 = vadd.f32 0.0, %v3340
  %3342 = vdwg.mxu0
  %v3343 = vadd.f32 %v2206, %v3292
  %v3344 = vadd.f32 %v2208, %v3294
  %v3345 = vadd.f32 %v2319, %v3335
  %v3346 = vadd.f32 %v2321, %v3337
  %v3347 = vadd.f32 %v2210, %v3296
  %v3348 = vadd.f32 %v2212, %v3298
  %v3349 = vadd.f32 %v2323, %v3339
  %v3350 = vadd.f32 %v2325, %v3341
  %v3351 = vxor.u32 %v3343, 2147483648
  %v3352 = vxor.u32 %v3347, 2147483648
  %v3353 = vmul.f32 %v3351, 1.442695
  %v3354 = vpow.pop %v3353
  %v3355 = vmul.f32 %v3352, 1.442695
  %v3356 = vpow.pop %v3355
  %v3357 = vadd.f32 %v3354, 1.0
  %v3358 = vadd.f32 %v3356, 1.0
  %v3359 = vrcp.pop %v3357
  %v3360 = vmul.f32 1.0, %v3359
  %v3361 = vrcp.pop %v3358
  %v3362 = vmul.f32 1.0, %v3361
  %v3363 = vxor.u32 %v3344, 2147483648
  %v3364 = vxor.u32 %v3348, 2147483648
  %v3365 = vmul.f32 %v3363, 1.442695
  %v3366 = vpow.pop %v3365
  %v3367 = vmul.f32 %v3364, 1.442695
  %v3368 = vpow.pop %v3367
  %v3369 = vadd.f32 %v3366, 1.0
  %v3370 = vadd.f32 %v3368, 1.0
  %v3371 = vrcp.pop %v3369
  %v3372 = vmul.f32 1.0, %v3371
  %v3373 = vrcp.pop %v3370
  %v3374 = vmul.f32 1.0, %v3373
  %v3375 = vtanh.pop %v3345
  %v3376 = vtanh.pop %v3349
  %v3377 = vxor.u32 %v3346, 2147483648
  %v3378 = vxor.u32 %v3350, 2147483648
  %v3379 = vmul.f32 %v3377, 1.442695
  %v3380 = vpow.pop %v3379
  %v3381 = vmul.f32 %v3378, 1.442695
  %v3382 = vpow.pop %v3381
  %v3383 = vadd.f32 %v3380, 1.0
  %v3384 = vadd.f32 %v3382, 1.0
  %v3385 = vrcp.pop %v3383
  %v3386 = vmul.f32 1.0, %v3385
  %v3387 = vrcp.pop %v3384
  %v3388 = vmul.f32 1.0, %v3387
  %v3389 = vmul.f32 %v3372, %v3250
  %v3390 = vmul.f32 %v3374, %v3251
  %v3391 = vmul.f32 %v3360, %v3375
  %v3392 = vmul.f32 %v3362, %v3376
  %v3393 = vadd.f32 %v3389, %v3391
  %v3394 = vadd.f32 %v3390, %v3392
  %v3395 = vtanh.pop %v3393
  %v3396 = vtanh.pop %v3394
  %v3397 = vmul.f32 %v3386, %v3395
  %v3398 = vmul.f32 %v3388, %v3396
  %v3399 = vpack.c.bf16 %v3398, %v3397
  %3400 = vmatprep.subr.bf16.mxu0 %v2479
  %3401 = vmatpush1.bf16.msra.mxu0 %v2478
  %3402 = vmatprep.subr.bf16.mxu0 %v2483
  %3403 = vmatpush1.bf16.msra.mxu0 %v2482
  %3404 = vmatprep.subr.bf16.mxu0 %v2487
  %3405 = vmatpush1.bf16.msra.mxu0 %v2486
  %3406 = vmatprep.subr.bf16.mxu0 %v2491
  %3407 = vmatpush1.bf16.msra.mxu0 %v2490
  %3408 = vmatprep.subr.bf16.mxu0 %v2495
  %3409 = vmatpush1.bf16.msra.mxu0 %v2494
  %3410 = vmatprep.subr.bf16.mxu0 %v2499
  %3411 = vmatpush1.bf16.msra.mxu0 %v2498
  %3412 = vmatprep.subr.bf16.mxu0 %v2503
  %3413 = vmatpush1.bf16.msra.mxu0 %v2502
  %3414 = vmatprep.subr.bf16.mxu0 %v2507
  %3415 = vmatpush1.bf16.msra.mxu0 %v2506
  %3416 = vmatprep.subr.bf16.mxu0 0
  %3417 = vmatpush1.bf16.msra.mxu0 0
  %3418 = vmatprep.subr.bf16.mxu0 0
  %3419 = vmatpush1.bf16.msra.mxu0 0
  %3420 = vmatprep.subr.bf16.mxu0 0
  %3421 = vmatpush1.bf16.msra.mxu0 0
  %3422 = vmatprep.subr.bf16.mxu0 0
  %3423 = vmatpush1.bf16.msra.mxu0 0
  %3424 = vmatprep.subr.bf16.mxu0 0
  %3425 = vmatpush1.bf16.msra.mxu0 0
  %3426 = vmatprep.subr.bf16.mxu0 0
  %3427 = vmatpush1.bf16.msra.mxu0 0
  %3428 = vmatprep.subr.bf16.mxu0 0
  %3429 = vmatpush1.bf16.msra.mxu0 0
  %3430 = vmatprep.subr.bf16.mxu0 0
  %3431 = vmatpush1.bf16.msra.mxu0 0
  %3432 = vmatprep.mubr.bf16.mxu0 0
  %3433 = vmatmul.mubr.bf16.gmra.mrb[0].mxu0 %v3399
  %v3434 = vpop.f32.mrb[0].mxu0
  %v3435 = vadd.f32 0.0, %v3434
  %v3436 = vpop.f32.mrb[0].mxu0
  %v3437 = vadd.f32 0.0, %v3436
  %v3438 = vpop.f32.mrb[0].mxu0
  %v3439 = vadd.f32 0.0, %v3438
  %v3440 = vpop.f32.mrb[0].mxu0
  %v3441 = vadd.f32 0.0, %v3440
  %3442 = vdwg.mxu0
  %3443 = vmatprep.subr.bf16.mxu0 %v2481
  %3444 = vmatpush1.bf16.msra.mxu0 %v2480
  %3445 = vmatprep.subr.bf16.mxu0 %v2485
  %3446 = vmatpush1.bf16.msra.mxu0 %v2484
  %3447 = vmatprep.subr.bf16.mxu0 %v2489
  %3448 = vmatpush1.bf16.msra.mxu0 %v2488
  %3449 = vmatprep.subr.bf16.mxu0 %v2493
  %3450 = vmatpush1.bf16.msra.mxu0 %v2492
  %3451 = vmatprep.subr.bf16.mxu0 %v2497
  %3452 = vmatpush1.bf16.msra.mxu0 %v2496
  %3453 = vmatprep.subr.bf16.mxu0 %v2501
  %3454 = vmatpush1.bf16.msra.mxu0 %v2500
  %3455 = vmatprep.subr.bf16.mxu0 %v2505
  %3456 = vmatpush1.bf16.msra.mxu0 %v2504
  %3457 = vmatprep.subr.bf16.mxu0 %v2509
  %3458 = vmatpush1.bf16.msra.mxu0 %v2508
  %3459 = vmatprep.subr.bf16.mxu0 0
  %3460 = vmatpush1.bf16.msra.mxu0 0
  %3461 = vmatprep.subr.bf16.mxu0 0
  %3462 = vmatpush1.bf16.msra.mxu0 0
  %3463 = vmatprep.subr.bf16.mxu0 0
  %3464 = vmatpush1.bf16.msra.mxu0 0
  %3465 = vmatprep.subr.bf16.mxu0 0
  %3466 = vmatpush1.bf16.msra.mxu0 0
  %3467 = vmatprep.subr.bf16.mxu0 0
  %3468 = vmatpush1.bf16.msra.mxu0 0
  %3469 = vmatprep.subr.bf16.mxu0 0
  %3470 = vmatpush1.bf16.msra.mxu0 0
  %3471 = vmatprep.subr.bf16.mxu0 0
  %3472 = vmatpush1.bf16.msra.mxu0 0
  %3473 = vmatprep.subr.bf16.mxu0 0
  %3474 = vmatpush1.bf16.msra.mxu0 0
  %3475 = vmatprep.mubr.bf16.mxu0 0
  %3476 = vmatmul.mubr.bf16.gmra.mrb[0].mxu0 %v3399
  %v3477 = vpop.f32.mrb[0].mxu0
  %v3478 = vadd.f32 0.0, %v3477
  %v3479 = vpop.f32.mrb[0].mxu0
  %v3480 = vadd.f32 0.0, %v3479
  %v3481 = vpop.f32.mrb[0].mxu0
  %v3482 = vadd.f32 0.0, %v3481
  %v3483 = vpop.f32.mrb[0].mxu0
  %v3484 = vadd.f32 0.0, %v3483
  %3485 = vdwg.mxu0
  %v3486 = vadd.f32 %v2216, %v3435
  %v3487 = vadd.f32 %v2218, %v3437
  %v3488 = vadd.f32 %v2329, %v3478
  %v3489 = vadd.f32 %v2331, %v3480
  %v3490 = vadd.f32 %v2220, %v3439
  %v3491 = vadd.f32 %v2222, %v3441
  %v3492 = vadd.f32 %v2333, %v3482
  %v3493 = vadd.f32 %v2335, %v3484
  %v3494 = vxor.u32 %v3486, 2147483648
  %v3495 = vxor.u32 %v3490, 2147483648
  %v3496 = vmul.f32 %v3494, 1.442695
  %v3497 = vpow.pop %v3496
  %v3498 = vmul.f32 %v3495, 1.442695
  %v3499 = vpow.pop %v3498
  %v3500 = vadd.f32 %v3497, 1.0
  %v3501 = vadd.f32 %v3499, 1.0
  %v3502 = vrcp.pop %v3500
  %v3503 = vmul.f32 1.0, %v3502
  %v3504 = vrcp.pop %v3501
  %v3505 = vmul.f32 1.0, %v3504
  %v3506 = vxor.u32 %v3487, 2147483648
  %v3507 = vxor.u32 %v3491, 2147483648
  %v3508 = vmul.f32 %v3506, 1.442695
  %v3509 = vpow.pop %v3508
  %v3510 = vmul.f32 %v3507, 1.442695
  %v3511 = vpow.pop %v3510
  %v3512 = vadd.f32 %v3509, 1.0
  %v3513 = vadd.f32 %v3511, 1.0
  %v3514 = vrcp.pop %v3512
  %v3515 = vmul.f32 1.0, %v3514
  %v3516 = vrcp.pop %v3513
  %v3517 = vmul.f32 1.0, %v3516
  %v3518 = vtanh.pop %v3488
  %v3519 = vtanh.pop %v3492
  %v3520 = vxor.u32 %v3489, 2147483648
  %v3521 = vxor.u32 %v3493, 2147483648
  %v3522 = vmul.f32 %v3520, 1.442695
  %v3523 = vpow.pop %v3522
  %v3524 = vmul.f32 %v3521, 1.442695
  %v3525 = vpow.pop %v3524
  %v3526 = vadd.f32 %v3523, 1.0
  %v3527 = vadd.f32 %v3525, 1.0
  %v3528 = vrcp.pop %v3526
  %v3529 = vmul.f32 1.0, %v3528
  %v3530 = vrcp.pop %v3527
  %v3531 = vmul.f32 1.0, %v3530
  %v3532 = vmul.f32 %v3515, %v3393
  %v3533 = vmul.f32 %v3517, %v3394
  %v3534 = vmul.f32 %v3503, %v3518
  %v3535 = vmul.f32 %v3505, %v3519
  %v3536 = vadd.f32 %v3532, %v3534
  %v3537 = vadd.f32 %v3533, %v3535
  %v3538 = vtanh.pop %v3536
  %v3539 = vtanh.pop %v3537
  %v3540 = vmul.f32 %v3529, %v3538
  %v3541 = vmul.f32 %v3531, %v3539
  %v3542 = vpack.c.bf16 %v3541, %v3540
  %3543 = vmatprep.subr.bf16.mxu0 %v2479
  %3544 = vmatpush1.bf16.msra.mxu0 %v2478
  %3545 = vmatprep.subr.bf16.mxu0 %v2483
  %3546 = vmatpush1.bf16.msra.mxu0 %v2482
  %3547 = vmatprep.subr.bf16.mxu0 %v2487
  %3548 = vmatpush1.bf16.msra.mxu0 %v2486
  %3549 = vmatprep.subr.bf16.mxu0 %v2491
  %3550 = vmatpush1.bf16.msra.mxu0 %v2490
  %3551 = vmatprep.subr.bf16.mxu0 %v2495
  %3552 = vmatpush1.bf16.msra.mxu0 %v2494
  %3553 = vmatprep.subr.bf16.mxu0 %v2499
  %3554 = vmatpush1.bf16.msra.mxu0 %v2498
  %3555 = vmatprep.subr.bf16.mxu0 %v2503
  %3556 = vmatpush1.bf16.msra.mxu0 %v2502
  %3557 = vmatprep.subr.bf16.mxu0 %v2507
  %3558 = vmatpush1.bf16.msra.mxu0 %v2506
  %3559 = vmatprep.subr.bf16.mxu0 0
  %3560 = vmatpush1.bf16.msra.mxu0 0
  %3561 = vmatprep.subr.bf16.mxu0 0
  %3562 = vmatpush1.bf16.msra.mxu0 0
  %3563 = vmatprep.subr.bf16.mxu0 0
  %3564 = vmatpush1.bf16.msra.mxu0 0
  %3565 = vmatprep.subr.bf16.mxu0 0
  %3566 = vmatpush1.bf16.msra.mxu0 0
  %3567 = vmatprep.subr.bf16.mxu0 0
  %3568 = vmatpush1.bf16.msra.mxu0 0
  %3569 = vmatprep.subr.bf16.mxu0 0
  %3570 = vmatpush1.bf16.msra.mxu0 0
  %3571 = vmatprep.subr.bf16.mxu0 0
  %3572 = vmatpush1.bf16.msra.mxu0 0
  %3573 = vmatprep.subr.bf16.mxu0 0
  %3574 = vmatpush1.bf16.msra.mxu0 0
  %3575 = vmatprep.mubr.bf16.mxu0 0
  %3576 = vmatmul.mubr.bf16.gmra.mrb[0].mxu0 %v3542
  %v3577 = vpop.f32.mrb[0].mxu0
  %v3578 = vadd.f32 0.0, %v3577
  %v3579 = vpop.f32.mrb[0].mxu0
  %v3580 = vadd.f32 0.0, %v3579
  %v3581 = vpop.f32.mrb[0].mxu0
  %v3582 = vadd.f32 0.0, %v3581
  %v3583 = vpop.f32.mrb[0].mxu0
  %v3584 = vadd.f32 0.0, %v3583
  %3585 = vdwg.mxu0
  %3586 = vmatprep.subr.bf16.mxu0 %v2481
  %3587 = vmatpush1.bf16.msra.mxu0 %v2480
  %3588 = vmatprep.subr.bf16.mxu0 %v2485
  %3589 = vmatpush1.bf16.msra.mxu0 %v2484
  %3590 = vmatprep.subr.bf16.mxu0 %v2489
  %3591 = vmatpush1.bf16.msra.mxu0 %v2488
  %3592 = vmatprep.subr.bf16.mxu0 %v2493
  %3593 = vmatpush1.bf16.msra.mxu0 %v2492
  %3594 = vmatprep.subr.bf16.mxu0 %v2497
  %3595 = vmatpush1.bf16.msra.mxu0 %v2496
  %3596 = vmatprep.subr.bf16.mxu0 %v2501
  %3597 = vmatpush1.bf16.msra.mxu0 %v2500
  %3598 = vmatprep.subr.bf16.mxu0 %v2505
  %3599 = vmatpush1.bf16.msra.mxu0 %v2504
  %3600 = vmatprep.subr.bf16.mxu0 %v2509
  %3601 = vmatpush1.bf16.msra.mxu0 %v2508
  %3602 = vmatprep.subr.bf16.mxu0 0
  %3603 = vmatpush1.bf16.msra.mxu0 0
  %3604 = vmatprep.subr.bf16.mxu0 0
  %3605 = vmatpush1.bf16.msra.mxu0 0
  %3606 = vmatprep.subr.bf16.mxu0 0
  %3607 = vmatpush1.bf16.msra.mxu0 0
  %3608 = vmatprep.subr.bf16.mxu0 0
  %3609 = vmatpush1.bf16.msra.mxu0 0
  %3610 = vmatprep.subr.bf16.mxu0 0
  %3611 = vmatpush1.bf16.msra.mxu0 0
  %3612 = vmatprep.subr.bf16.mxu0 0
  %3613 = vmatpush1.bf16.msra.mxu0 0
  %3614 = vmatprep.subr.bf16.mxu0 0
  %3615 = vmatpush1.bf16.msra.mxu0 0
  %3616 = vmatprep.subr.bf16.mxu0 0
  %3617 = vmatpush1.bf16.msra.mxu0 0
  %3618 = vmatprep.mubr.bf16.mxu0 0
  %3619 = vmatmul.mubr.bf16.gmra.mrb[0].mxu0 %v3542
  %v3620 = vpop.f32.mrb[0].mxu0
  %v3621 = vadd.f32 0.0, %v3620
  %v3622 = vpop.f32.mrb[0].mxu0
  %v3623 = vadd.f32 0.0, %v3622
  %v3624 = vpop.f32.mrb[0].mxu0
  %v3625 = vadd.f32 0.0, %v3624
  %v3626 = vpop.f32.mrb[0].mxu0
  %v3627 = vadd.f32 0.0, %v3626
  %3628 = vdwg.mxu0
  %v3629 = vadd.f32 %v2226, %v3578
  %v3630 = vadd.f32 %v2228, %v3580
  %v3631 = vadd.f32 %v2339, %v3621
  %v3632 = vadd.f32 %v2341, %v3623
  %v3633 = vadd.f32 %v2230, %v3582
  %v3634 = vadd.f32 %v2232, %v3584
  %v3635 = vadd.f32 %v2343, %v3625
  %v3636 = vadd.f32 %v2345, %v3627
  %v3637 = vxor.u32 %v3629, 2147483648
  %v3638 = vxor.u32 %v3633, 2147483648
  %v3639 = vmul.f32 %v3637, 1.442695
  %v3640 = vpow.pop %v3639
  %v3641 = vmul.f32 %v3638, 1.442695
  %v3642 = vpow.pop %v3641
  %v3643 = vadd.f32 %v3640, 1.0
  %v3644 = vadd.f32 %v3642, 1.0
  %v3645 = vrcp.pop %v3643
  %v3646 = vmul.f32 1.0, %v3645
  %v3647 = vrcp.pop %v3644
  %v3648 = vmul.f32 1.0, %v3647
  %v3649 = vxor.u32 %v3630, 2147483648
  %v3650 = vxor.u32 %v3634, 2147483648
  %v3651 = vmul.f32 %v3649, 1.442695
  %v3652 = vpow.pop %v3651
  %v3653 = vmul.f32 %v3650, 1.442695
  %v3654 = vpow.pop %v3653
  %v3655 = vadd.f32 %v3652, 1.0
  %v3656 = vadd.f32 %v3654, 1.0
  %v3657 = vrcp.pop %v3655
  %v3658 = vmul.f32 1.0, %v3657
  %v3659 = vrcp.pop %v3656
  %v3660 = vmul.f32 1.0, %v3659
  %v3661 = vtanh.pop %v3631
  %v3662 = vtanh.pop %v3635
  %v3663 = vxor.u32 %v3632, 2147483648
  %v3664 = vxor.u32 %v3636, 2147483648
  %v3665 = vmul.f32 %v3663, 1.442695
  %v3666 = vpow.pop %v3665
  %v3667 = vmul.f32 %v3664, 1.442695
  %v3668 = vpow.pop %v3667
  %v3669 = vadd.f32 %v3666, 1.0
  %v3670 = vadd.f32 %v3668, 1.0
  %v3671 = vrcp.pop %v3669
  %v3672 = vmul.f32 1.0, %v3671
  %v3673 = vrcp.pop %v3670
  %v3674 = vmul.f32 1.0, %v3673
  %v3675 = vmul.f32 %v3658, %v3536
  %v3676 = vmul.f32 %v3660, %v3537
  %v3677 = vmul.f32 %v3646, %v3661
  %v3678 = vmul.f32 %v3648, %v3662
  %v3679 = vadd.f32 %v3675, %v3677
  %v3680 = vadd.f32 %v3676, %v3678
  %v3681 = vtanh.pop %v3679
  %v3682 = vtanh.pop %v3680
  %v3683 = vmul.f32 %v3672, %v3681
  %v3684 = vmul.f32 %v3674, %v3682
  %v3685 = vpack.c.bf16 %v3684, %v3683
  %3686 = vst [vmem:[#allocation3] sm:$0xff] %v3685
  %3687 = vst [vmem:[#allocation5] sm:$0xff] %v3679
  %3688 = vst [vmem:[#allocation5 + $0x8] sm:$0xff] %v3680
  // Predicated region
  $region42: #{_lambda_.1} parent=0 // pred_check
    %p3689 = pneg %p33
  $region43: #{_lambda_.1} parent=0 // pred_check_branch
    %3691 = sbr.rel (%p3689) target = $region45
  $region44: #{_lambda_.1} parent=0 // pred_region
    %v3692 = vld [vmem:[#allocation3] sm:$0xff]
    %v3693 = vld [vmem:[%s7] sm:$0xf]
    %v3694 = vld [vmem:[%s7 + $0x4] sm:$0xf]
    %v3695 = vld [vmem:[%s7 + $0x8] sm:$0xf]
    %v3696 = vld [vmem:[%s7 + $0xc] sm:$0xf]
    %v3697 = vld [vmem:[%s7 + $0x10] sm:$0xf]
    %v3698 = vld [vmem:[%s7 + $0x14] sm:$0xf]
    %v3699 = vld [vmem:[%s7 + $0x18] sm:$0xf]
    %v3700 = vld [vmem:[%s7 + $0x1c] sm:$0xf]
    %v3701 = vld [vmem:[%s7 + $0x20] sm:$0xf]
    %v3702 = vld [vmem:[%s7 + $0x24] sm:$0xf]
    %v3703 = vld [vmem:[%s7 + $0x28] sm:$0xf]
    %v3704 = vld [vmem:[%s7 + $0x2c] sm:$0xf]
    %v3705 = vld [vmem:[%s7 + $0x30] sm:$0xf]
    %v3706 = vld [vmem:[%s7 + $0x34] sm:$0xf]
    %v3707 = vld [vmem:[%s7 + $0x38] sm:$0xf]
    %v3708 = vld [vmem:[%s7 + $0x3c] sm:$0xf]
    %v3709 = vld [vmem:[%s8] sm:$0x1]
    %v3711 = vlaneseq
    %v3712 = vshrl.u32 %v3711, 7
    %v3713 = vsub.s32 0, %v3712
    %v3714 = vrot.slane %v3709, %v3713
    %v3732 = vunpack.c.l.b16 %v3693
    %v3733 = vunpack.c.l.b16 %v3694
    %v3734 = vunpack.c.l.b16 %v3695
    %v3735 = vunpack.c.l.b16 %v3696
    %v3736 = vunpack.c.l.b16 %v3697
    %v3737 = vunpack.c.l.b16 %v3698
    %v3738 = vunpack.c.l.b16 %v3699
    %v3739 = vunpack.c.l.b16 %v3700
    %v3740 = vunpack.c.l.b16 %v3701
    %v3741 = vunpack.c.l.b16 %v3702
    %v3742 = vunpack.c.l.b16 %v3703
    %v3743 = vunpack.c.l.b16 %v3704
    %v3744 = vunpack.c.l.b16 %v3705
    %v3745 = vunpack.c.l.b16 %v3706
    %v3746 = vunpack.c.l.b16 %v3707
    %v3747 = vunpack.c.l.b16 %v3708
    %v3748 = vpack.c.b16 %v3733, %v3732
    %v3749 = vpack.c.b16 %v3735, %v3734
    %v3750 = vpack.c.b16 %v3737, %v3736
    %v3751 = vpack.c.b16 %v3739, %v3738
    %v3752 = vpack.c.b16 %v3741, %v3740
    %v3753 = vpack.c.b16 %v3743, %v3742
    %v3754 = vpack.c.b16 %v3745, %v3744
    %v3755 = vpack.c.b16 %v3747, %v3746
    %3764 = vmatprep.subr.bf16.mxu0 0
    %3765 = vmatpush1.bf16.msra.mxu0 %v3748
    %3766 = vmatprep.subr.bf16.mxu0 0
    %3767 = vmatpush1.bf16.msra.mxu0 %v3749
    %3768 = vmatprep.subr.bf16.mxu0 0
    %3769 = vmatpush1.bf16.msra.mxu0 %v3750
    %3770 = vmatprep.subr.bf16.mxu0 0
    %3771 = vmatpush1.bf16.msra.mxu0 %v3751
    %3772 = vmatprep.subr.bf16.mxu0 0
    %3773 = vmatpush1.bf16.msra.mxu0 %v3752
    %3774 = vmatprep.subr.bf16.mxu0 0
    %3775 = vmatpush1.bf16.msra.mxu0 %v3753
    %3776 = vmatprep.subr.bf16.mxu0 0
    %3777 = vmatpush1.bf16.msra.mxu0 %v3754
    %3778 = vmatprep.subr.bf16.mxu0 0
    %3779 = vmatpush1.bf16.msra.mxu0 %v3755
    %3780 = vmatprep.subr.bf16.mxu0 0
    %3781 = vmatpush1.bf16.msra.mxu0 0
    %3782 = vmatprep.subr.bf16.mxu0 0
    %3783 = vmatpush1.bf16.msra.mxu0 0
    %3784 = vmatprep.subr.bf16.mxu0 0
    %3785 = vmatpush1.bf16.msra.mxu0 0
    %3786 = vmatprep.subr.bf16.mxu0 0
    %3787 = vmatpush1.bf16.msra.mxu0 0
    %3788 = vmatprep.subr.bf16.mxu0 0
    %3789 = vmatpush1.bf16.msra.mxu0 0
    %3790 = vmatprep.subr.bf16.mxu0 0
    %3791 = vmatpush1.bf16.msra.mxu0 0
    %3792 = vmatprep.subr.bf16.mxu0 0
    %3793 = vmatpush1.bf16.msra.mxu0 0
    %3794 = vmatprep.subr.bf16.mxu0 0
    %3795 = vmatpush1.bf16.msra.mxu0 0
    %3796 = vmatprep.mubr.bf16.mxu0 0
    %3797 = vmatmul.mubr.bf16.gmra.mrb[0].mxu0 %v3692
    %v3798 = vpop.f32.mrb[0].mxu0
    %v3799 = vadd.f32 %v3714, %v3798
    %v3800 = vpop.f32.mrb[0].mxu0
    %v3801 = vpop.f32.mrb[0].mxu0
    %v3802 = vadd.f32 %v3714, %v3801
    %v3803 = vpop.f32.mrb[0].mxu0
    %3804 = vdwg.mxu0
    %3805 = vst [vmem:[%s9] sm:$0xff] %v3799
    %3806 = vst [vmem:[%s9 + $0x8] sm:$0xff] %v3802
  $region45: #{_lambda_.1} parent=0 // pred_fallthru
    _
  // Predicated region
  $region46: #{_lambda_.1} parent=0 // pred_check
    _
  $region47: #{_lambda_.1} parent=0 // pred_check_branch
    %3808 = sbr.rel (0) target = $region49
  $region48: #{_lambda_.1} parent=0 // pred_region
    _
  $region49: #{_lambda_.1} parent=0 // pred_fallthru
    _
  // Predicated region
  $region50: #{_lambda_.1} parent=0 // pred_check
    _
  $region51: #{_lambda_.1} parent=0 // pred_check_branch
    %3810 = sbr.rel (0) target = $region53
  $region52: #{_lambda_.1} parent=0 // pred_region
    _
  $region53: #{_lambda_.1} parent=0 // pred_fallthru
    _

</llo_original>
